<compile_context>
chip_gen: v7x
topology: tpu7x:2x2x1
jax: 0.10.0
libtpu: 0.0.40
codegen_flags: <defaults>
</compile_context>

<pallas_src>
import numpy as np
import jax
import jax.numpy as jnp
from jax.experimental import pallas as pl
from jax.experimental.pallas import tpu as pltpu

_MEAN = (0.4914, 0.4822, 0.4465)
_STD = (0.2023, 0.1994, 0.201)


# ----------------------------- in-kernel helpers -----------------------------

def _lum(r, g, b):
    return 0.2989 * r + 0.5870 * g + 0.1140 * b


def _rgb_to_hsv(r, g, b):
    maxc = jnp.maximum(jnp.maximum(r, g), b)
    minc = jnp.minimum(jnp.minimum(r, g), b)
    v = maxc
    delta = maxc - minc
    s = jnp.where(maxc > 0.0, delta / jnp.maximum(maxc, 1e-8), 0.0)
    dd = jnp.maximum(delta, 1e-8)
    rc = (maxc - r) / dd
    gc = (maxc - g) / dd
    bc = (maxc - b) / dd
    h = jnp.where(r == maxc, bc - gc,
        jnp.where(g == maxc, 2.0 + rc - bc, 4.0 + gc - rc))
    h = (h / 6.0) % 1.0
    h = jnp.where(delta > 0.0, h, 0.0)
    return h, s, v


def _hsv_to_rgb(h, s, v):
    h6 = h * 6.0
    i = jnp.floor(h6)
    f = h6 - i
    p = v * (1.0 - s)
    q = v * (1.0 - s * f)
    t = v * (1.0 - s * (1.0 - f))
    i = i % 6.0
    r = jnp.where(i == 0.0, v, jnp.where(i == 1.0, q, jnp.where(i == 2.0, p,
        jnp.where(i == 3.0, p, jnp.where(i == 4.0, t, v)))))
    g = jnp.where(i == 0.0, t, jnp.where(i == 1.0, v, jnp.where(i == 2.0, v,
        jnp.where(i == 3.0, q, jnp.where(i == 4.0, p, p)))))
    b = jnp.where(i == 0.0, p, jnp.where(i == 1.0, p, jnp.where(i == 2.0, t,
        jnp.where(i == 3.0, v, jnp.where(i == 4.0, v, q)))))
    return r, g, b


# --------------------------------- kernel ------------------------------------

def _augment_kernel(params_ref, x_ref, ry_ref, rxT3_ref, by_ref, bxT3_ref, out_ref):
    # Block shapes:
    #   params_ref : (G, 1, 8)   f32   [jit_flag, bright, contr, satur, hue, gray_flag, 0, 0]
    #   x_ref      : (G, C, H, W) int8 (bitcast view of uint8 pixels)
    #   ry_ref     : (G, H, H)    bf16 crop+resize rows
    #   rxT3_ref   : (G, 3W, 3W)  bf16 block-diag crop+resize cols (flip baked in)
    #   by_ref     : (G, H, H)    bf16 blur rows (identity if not applied)
    #   bxT3_ref   : (G, 3W, 3W)  bf16 block-diag blur cols
    #   out_ref    : (G, C, H, W) f32
    G, C, H, W = x_ref.shape

    p = params_ref[...]                       # (G, 1, 8)
    jit_f  = p[:, :, 0:1]                     # (G, 1, 1) broadcasts vs (G, H, W)
    bright = p[:, :, 1:2]
    contr  = p[:, :, 2:3]
    satur  = p[:, :, 3:4]
    hue    = p[:, :, 4:5]
    gray_f = p[:, :, 5:6]

    # uint8 -> float32 in [0, 1], done in-kernel (1 byte/pixel over HBM).
    def load_chan(c):
        v = x_ref[:, c].astype(jnp.float32)              # int8 view of uint8
        v = jnp.where(v < 0.0, v + 256.0, v)             # undo two's complement
        return v * jnp.float32(1.0 / 255.0)              # (G, H, W)

    # Channels stacked along lanes -> (G, H, 3W) so the matmuls are 3x wider.
    xw = jnp.concatenate([load_chan(c) for c in range(C)], axis=-1)

    # ---- RandomResizedCrop + RandomHorizontalFlip: 2 batched MXU matmuls ----
    t = jnp.einsum('ghi,giw->ghw', ry_ref[...], xw.astype(jnp.bfloat16),
                   preferred_element_type=jnp.float32)
    t = jnp.einsum('ghw,gwv->ghv', t.astype(jnp.bfloat16), rxT3_ref[...],
                   preferred_element_type=jnp.float32)   # (G, H, 3W)

    r = jnp.clip(t[:, :, 0 * W:1 * W], 0.0, 1.0)          # (G, H, W)
    g = jnp.clip(t[:, :, 1 * W:2 * W], 0.0, 1.0)
    b = jnp.clip(t[:, :, 2 * W:3 * W], 0.0, 1.0)

    # ---- ColorJitter(0.4, 0.4, 0.4, 0.1), applied with p = 0.8 ----
    rj = jnp.clip(r * bright, 0.0, 1.0)
    gj = jnp.clip(g * bright, 0.0, 1.0)
    bj = jnp.clip(b * bright, 0.0, 1.0)

    lum = _lum(rj, gj, bj)
    m = jnp.mean(jnp.mean(lum, axis=2, keepdims=True), axis=1, keepdims=True)
    rj = jnp.clip(contr * rj + (1.0 - contr) * m, 0.0, 1.0)
    gj = jnp.clip(contr * gj + (1.0 - contr) * m, 0.0, 1.0)
    bj = jnp.clip(contr * bj + (1.0 - contr) * m, 0.0, 1.0)

    gl = _lum(rj, gj, bj)
    rj = jnp.clip(satur * rj + (1.0 - satur) * gl, 0.0, 1.0)
    gj = jnp.clip(satur * gj + (1.0 - satur) * gl, 0.0, 1.0)
    bj = jnp.clip(satur * bj + (1.0 - satur) * gl, 0.0, 1.0)

    h_, s_, v_ = _rgb_to_hsv(rj, gj, bj)
    h_ = (h_ + hue) % 1.0
    rj, gj, bj = _hsv_to_rgb(h_, s_, v_)

    apply_j = jit_f > 0.5
    r = jnp.where(apply_j, rj, r)
    g = jnp.where(apply_j, gj, g)
    b = jnp.where(apply_j, bj, b)

    # ---- RandomGrayscale(p=0.2) ----
    gl = _lum(r, g, b)
    apply_g = gray_f > 0.5
    r = jnp.where(apply_g, gl, r)
    g = jnp.where(apply_g, gl, g)
    b = jnp.where(apply_g, gl, b)

    # ---- GaussianBlur (p=0.5; identity matrices when not applied) ----
    cat = jnp.concatenate([r, g, b], axis=-1).astype(jnp.bfloat16)   # (G, H, 3W)
    u = jnp.einsum('ghi,giw->ghw', by_ref[...], cat,
                   preferred_element_type=jnp.float32)
    u = jnp.einsum('ghw,gwv->ghv', u.astype(jnp.bfloat16), bxT3_ref[...],
                   preferred_element_type=jnp.float32)               # (G, H, 3W)

    # ---- Normalize(mean, std) (clip first: bf16 matmuls can overshoot [0,1]) ----
    for c in range(C):
        ch = jnp.clip(u[:, :, c * W:(c + 1) * W], 0.0, 1.0)
        out_ref[:, c] = (ch - np.float32(_MEAN[c])) * np.float32(1.0 / _STD[c])


def _pick_group_size(B):
    # Largest group that keeps >= 2 grid steps (so v7x's 2 TensorCores both work).
    for g in (8, 4, 2):
        if B % g == 0 and B // g >= 2:
            return g
    return 1


def augment_v2(x_uint8, params, ry, rxT3, by, bxT3):
    """x_uint8: (B, 3, H, W) uint8 -> normalized float32 (B, 3, H, W)."""
    B, C, H, W = x_uint8.shape
    assert C == 3
    G = _pick_group_size(B)
    CW = C * W
    # Free same-width reinterpret; the kernel undoes the two's-complement view,
    # so only 1 byte/pixel of image data crosses HBM.
    x_i8 = jax.lax.bitcast_convert_type(x_uint8, jnp.int8)
    return pl.pallas_call(
        _augment_kernel,
        out_shape=jax.ShapeDtypeStruct((B, C, H, W), jnp.float32),
        grid=(B // G,),
        in_specs=[
            pl.BlockSpec((G, 1, 8), lambda i: (i, 0, 0)),
            pl.BlockSpec((G, C, H, W), lambda i: (i, 0, 0, 0)),
            pl.BlockSpec((G, H, H), lambda i: (i, 0, 0)),
            pl.BlockSpec((G, CW, CW), lambda i: (i, 0, 0)),
            pl.BlockSpec((G, H, H), lambda i: (i, 0, 0)),
            pl.BlockSpec((G, CW, CW), lambda i: (i, 0, 0)),
        ],
        out_specs=pl.BlockSpec((G, C, H, W), lambda i: (i, 0, 0, 0)),
        compiler_params=pltpu.CompilerParams(dimension_semantics=("parallel",)),
    )(params, x_i8, ry, rxT3, by, bxT3)


# --------------------------- host-side glue (sampling) -----------------------

def _resize_matrices(out_size, in_size, start, length):
    """Batched bilinear (align_corners=False) crop+resize matrices (B, out, in)."""
    Bn = start.shape[0]
    d = np.arange(out_size)[None, :]
    ln = length[:, None].astype(np.float64)
    src = (d + 0.5) * (ln / out_size) - 0.5
    src = np.clip(src, 0.0, ln - 1.0)
    lo = np.floor(src).astype(np.int64)
    hi = np.minimum(lo + 1, length[:, None] - 1)
    frac = (src - lo).astype(np.float32)
    bidx = np.broadcast_to(np.arange(Bn)[:, None], lo.shape)
    didx = np.broadcast_to(d, lo.shape)
    M = np.zeros((Bn, out_size, in_size), np.float32)
    np.add.at(M, (bidx, didx, start[:, None] + lo), 1.0 - frac)
    np.add.at(M, (bidx, didx, start[:, None] + hi), frac)
    return M


def _blur_matrices(n, weights):
    """Batched 1-D gaussian blur with reflect padding as (B, n, n) band matrices."""
    Bn, k = weights.shape
    rad = k // 2
    i = np.arange(n)[None, :, None]
    off = np.arange(-rad, rad + 1)[None, None, :]
    j = i + off
    j = np.where(j < 0, -j, j)
    j = np.where(j >= n, 2 * n - 2 - j, j)
    j = np.broadcast_to(j, (Bn, n, k))
    bidx = np.broadcast_to(np.arange(Bn)[:, None, None], j.shape)
    iidx = np.broadcast_to(i, j.shape)
    w = np.broadcast_to(weights[:, None, :], j.shape)
    M = np.zeros((Bn, n, n), np.float32)
    np.add.at(M, (bidx, iidx, j), w)
    return M


def _block_diag3(m):
    """(B, n, n) -> (B, 3n, 3n) block-diagonal (same block per RGB channel)."""
    Bn, n, _ = m.shape
    out = np.zeros((Bn, 3 * n, 3 * n), m.dtype)
    for c in range(3):
        out[:, c * n:(c + 1) * n, c * n:(c + 1) * n] = m
    return out


def sample_augment_params(key, B, image_size):
    H = W = image_size
    ks = int(0.1 * image_size)
    if ks % 2 == 0:
        ks += 1

    keys = jax.random.split(key, 13)

    def u(i, lo=0.0, hi=1.0):
        return np.asarray(jax.random.uniform(keys[i], (B,), minval=lo, maxval=hi),
                          dtype=np.float64)

    scale  = u(0, 0.2, 1.0)
    logr   = u(1, np.log(3.0 / 4.0), np.log(4.0 / 3.0))
    u_i    = u(2)
    u_j    = u(3)
    p_jit  = u(4)
    bright = u(5, 0.6, 1.4)
    contr  = u(6, 0.6, 1.4)
    satur  = u(7, 0.6, 1.4)
    hue    = u(8, -0.1, 0.1)
    p_gray = u(9)
    p_blur = u(10)
    sigma  = u(11, 0.1, 2.0)
    p_flip = u(12)

    # RandomResizedCrop box (simplified single clamped draw)
    area = H * W * scale
    aspect = np.exp(logr)
    w_c = np.clip(np.round(np.sqrt(area * aspect)).astype(np.int64), 1, W)
    h_c = np.clip(np.round(np.sqrt(area / aspect)).astype(np.int64), 1, H)
    i0 = np.minimum((u_i * (H - h_c + 1)).astype(np.int64), H - h_c)
    j0 = np.minimum((u_j * (W - w_c + 1)).astype(np.int64), W - w_c)

    ry = _resize_matrices(H, H, i0, h_c)                       # (B, H, H)
    rx = _resize_matrices(W, W, j0, w_c)                       # (B, W, W)
    flip = (p_flip < 0.5)[:, None, None]
    rx = np.where(flip, rx[:, ::-1, :], rx)                    # RandomHorizontalFlip
    rxT3 = _block_diag3(np.transpose(rx, (0, 2, 1)))           # (B, 3W, 3W)

    # GaussianBlur matrices (identity when not applied)
    xs = np.arange(ks, dtype=np.float64) - (ks - 1) / 2.0
    w = np.exp(-0.5 * (xs[None, :] / sigma[:, None]) ** 2)
    w = (w / w.sum(-1, keepdims=True)).astype(np.float32)      # (B, ks)
    blur_on = (p_blur < 0.5)[:, None, None]
    by = np.where(blur_on, _blur_matrices(H, w), np.eye(H, dtype=np.float32)[None])
    bx = np.where(blur_on, _blur_matrices(W, w), np.eye(W, dtype=np.float32)[None])
    bxT3 = _block_diag3(np.transpose(bx, (0, 2, 1)))           # (B, 3W, 3W)

    params = np.zeros((B, 1, 8), np.float32)
    params[:, 0, 0] = (p_jit < 0.8).astype(np.float32)         # RandomApply(ColorJitter)
    params[:, 0, 1] = bright
    params[:, 0, 2] = contr
    params[:, 0, 3] = satur
    params[:, 0, 4] = hue
    params[:, 0, 5] = (p_gray < 0.2).astype(np.float32)        # RandomGrayscale

    bf16 = jnp.bfloat16
    return (jnp.asarray(params),
            jnp.asarray(ry, dtype=bf16), jnp.asarray(rxT3, dtype=bf16),
            jnp.asarray(by, dtype=bf16), jnp.asarray(bxT3, dtype=bf16))


# ---------------------------------- main --------------------------------------

if __name__ == "__main__":
    IMAGE_SIZE = 32
    B, C = 8, 3

    key = jax.random.PRNGKey(0)
    kx, kp = jax.random.split(key)

    x = jax.random.randint(kx, (B, C, IMAGE_SIZE, IMAGE_SIZE), 0, 256,
                           dtype=jnp.int32).astype(jnp.uint8)
    params, ry, rxT3, by, bxT3 = sample_augment_params(kp, B, IMAGE_SIZE)

    out = augment_v2(x, params, ry, rxT3, by, bxT3)
    out = jax.block_until_ready(out)

    assert out.shape == (B, C, IMAGE_SIZE, IMAGE_SIZE)
    assert out.dtype == jnp.float32
    assert bool(jnp.all(jnp.isfinite(out)))
    print("KERNEL_OK")
</pallas_src>

<mosaic_0001>
module attributes {stable_mosaic.version = 11 : i64} {
  func.func @_augment_kernel(%arg0: i32, %arg1: memref<4x1x8xf32, #tpu.memory_space<vmem>>, %arg2: memref<4x3x32x32xi8, #tpu.memory_space<vmem>>, %arg3: memref<4x32x32xbf16, #tpu.memory_space<vmem>>, %arg4: memref<4x96x96xbf16, #tpu.memory_space<vmem>>, %arg5: memref<4x32x32xbf16, #tpu.memory_space<vmem>>, %arg6: memref<4x96x96xbf16, #tpu.memory_space<vmem>>, %arg7: memref<4x3x32x32xf32, #tpu.memory_space<vmem>>) attributes {dimension_semantics = [#tpu.dimension_semantics<parallel>], iteration_bounds = array<i64: 2>, scalar_prefetch = 0 : i64, scratch_operands = 0 : i64, tpu.core_type = #tpu.core_type<tc>, window_params = [{transform_indices = @transform_0, window_bounds = array<i64: 4, 1, 8>}, {transform_indices = @transform_1, window_bounds = array<i64: 4, 3, 32, 32>}, {transform_indices = @transform_2, window_bounds = array<i64: 4, 32, 32>}, {transform_indices = @transform_3, window_bounds = array<i64: 4, 96, 96>}, {transform_indices = @transform_4, window_bounds = array<i64: 4, 32, 32>}, {transform_indices = @transform_5, window_bounds = array<i64: 4, 96, 96>}, {transform_indices = @transform_6, window_bounds = array<i64: 4, 3, 32, 32>}]} {
    %c0 = arith.constant 0 : index
    %c0_0 = arith.constant 0 : index
    %c0_1 = arith.constant 0 : index
    %0 = vector.load %arg1[%c0, %c0_0, %c0_1] : memref<4x1x8xf32, #tpu.memory_space<vmem>>, vector<4x1x8xf32>
    %1 = vector.extract_strided_slice %0 {offsets = [0, 0, 0], sizes = [4, 1, 1], strides = [1, 1, 1]} : vector<4x1x8xf32> to vector<4x1x1xf32>
    %2 = vector.extract_strided_slice %0 {offsets = [0, 0, 1], sizes = [4, 1, 1], strides = [1, 1, 1]} : vector<4x1x8xf32> to vector<4x1x1xf32>
    %3 = vector.extract_strided_slice %0 {offsets = [0, 0, 2], sizes = [4, 1, 1], strides = [1, 1, 1]} : vector<4x1x8xf32> to vector<4x1x1xf32>
    %4 = vector.extract_strided_slice %0 {offsets = [0, 0, 3], sizes = [4, 1, 1], strides = [1, 1, 1]} : vector<4x1x8xf32> to vector<4x1x1xf32>
    %5 = vector.extract_strided_slice %0 {offsets = [0, 0, 4], sizes = [4, 1, 1], strides = [1, 1, 1]} : vector<4x1x8xf32> to vector<4x1x1xf32>
    %6 = vector.extract_strided_slice %0 {offsets = [0, 0, 5], sizes = [4, 1, 1], strides = [1, 1, 1]} : vector<4x1x8xf32> to vector<4x1x1xf32>
    %c0_2 = arith.constant 0 : index
    %c0_3 = arith.constant 0 : index
    %c0_4 = arith.constant 0 : index
    %c0_5 = arith.constant 0 : index
    %7 = vector.load %arg2[%c0_2, %c0_3, %c0_4, %c0_5] : memref<4x3x32x32xi8, #tpu.memory_space<vmem>>, vector<4x1x32x32xi8>
    %8 = vector.shape_cast %7 : vector<4x1x32x32xi8> to vector<4x32x32xi8>
    %9 = arith.sitofp %8 : vector<4x32x32xi8> to vector<4x32x32xf32>
    %cst = arith.constant 0.000000e+00 : f32
    %10 = vector.broadcast %cst : f32 to vector<4x32x32xf32>
    %11 = arith.cmpf olt, %9, %10 : vector<4x32x32xf32>
    %cst_6 = arith.constant 2.560000e+02 : f32
    %12 = vector.broadcast %cst_6 : f32 to vector<4x32x32xf32>
    %13 = arith.addf %9, %12 : vector<4x32x32xf32>
    %14 = arith.select %11, %13, %9 : vector<4x32x32xi1>, vector<4x32x32xf32>
    %cst_7 = arith.constant 0.00392156886 : f32
    %15 = vector.broadcast %cst_7 : f32 to vector<4x32x32xf32>
    %16 = arith.mulf %14, %15 : vector<4x32x32xf32>
    %c0_8 = arith.constant 0 : index
    %c1 = arith.constant 1 : index
    %c0_9 = arith.constant 0 : index
    %c0_10 = arith.constant 0 : index
    %17 = vector.load %arg2[%c0_8, %c1, %c0_9, %c0_10] : memref<4x3x32x32xi8, #tpu.memory_space<vmem>>, vector<4x1x32x32xi8>
    %18 = vector.shape_cast %17 : vector<4x1x32x32xi8> to vector<4x32x32xi8>
    %19 = arith.sitofp %18 : vector<4x32x32xi8> to vector<4x32x32xf32>
    %cst_11 = arith.constant 0.000000e+00 : f32
    %20 = vector.broadcast %cst_11 : f32 to vector<4x32x32xf32>
    %21 = arith.cmpf olt, %19, %20 : vector<4x32x32xf32>
    %cst_12 = arith.constant 2.560000e+02 : f32
    %22 = vector.broadcast %cst_12 : f32 to vector<4x32x32xf32>
    %23 = arith.addf %19, %22 : vector<4x32x32xf32>
    %24 = arith.select %21, %23, %19 : vector<4x32x32xi1>, vector<4x32x32xf32>
    %cst_13 = arith.constant 0.00392156886 : f32
    %25 = vector.broadcast %cst_13 : f32 to vector<4x32x32xf32>
    %26 = arith.mulf %24, %25 : vector<4x32x32xf32>
    %c0_14 = arith.constant 0 : index
    %c2 = arith.constant 2 : index
    %c0_15 = arith.constant 0 : index
    %c0_16 = arith.constant 0 : index
    %27 = vector.load %arg2[%c0_14, %c2, %c0_15, %c0_16] : memref<4x3x32x32xi8, #tpu.memory_space<vmem>>, vector<4x1x32x32xi8>
    %28 = vector.shape_cast %27 : vector<4x1x32x32xi8> to vector<4x32x32xi8>
    %29 = arith.sitofp %28 : vector<4x32x32xi8> to vector<4x32x32xf32>
    %cst_17 = arith.constant 0.000000e+00 : f32
    %30 = vector.broadcast %cst_17 : f32 to vector<4x32x32xf32>
    %31 = arith.cmpf olt, %29, %30 : vector<4x32x32xf32>
    %cst_18 = arith.constant 2.560000e+02 : f32
    %32 = vector.broadcast %cst_18 : f32 to vector<4x32x32xf32>
    %33 = arith.addf %29, %32 : vector<4x32x32xf32>
    %34 = arith.select %31, %33, %29 : vector<4x32x32xi1>, vector<4x32x32xf32>
    %cst_19 = arith.constant 0.00392156886 : f32
    %35 = vector.broadcast %cst_19 : f32 to vector<4x32x32xf32>
    %36 = arith.mulf %34, %35 : vector<4x32x32xf32>
    %37 = tpu.concatenate %16, %26, %36 in 2 : vector<4x32x32xf32>, vector<4x32x32xf32>, vector<4x32x32xf32> -> vector<4x32x96xf32>
    %c0_20 = arith.constant 0 : index
    %c0_21 = arith.constant 0 : index
    %c0_22 = arith.constant 0 : index
    %38 = vector.load %arg3[%c0_20, %c0_21, %c0_22] : memref<4x32x32xbf16, #tpu.memory_space<vmem>>, vector<4x32x32xbf16>
    %39 = arith.truncf %37 : vector<4x32x96xf32> to vector<4x32x96xbf16>
    "tpu.trace_start"() <{level = 10 : i32, message = "ghi,giw->ghw"}> : () -> ()
    %cst_23 = arith.constant dense<0.000000e+00> : vector<4x32x96xf32>
    %40 = tpu.matmul %38, %39, %cst_23 {dimension_numbers = #tpu.dot_dimension_numbers<[2], [1], [1], [2], [0, 0, 0, 1, 1, 2], [0], [0]>} : vector<4x32x32xbf16>, vector<4x32x96xbf16>, vector<4x32x96xf32> -> vector<4x32x96xf32>
    "tpu.trace_stop"() : () -> ()
    %41 = arith.truncf %40 : vector<4x32x96xf32> to vector<4x32x96xbf16>
    %c0_24 = arith.constant 0 : index
    %c0_25 = arith.constant 0 : index
    %c0_26 = arith.constant 0 : index
    %42 = vector.load %arg4[%c0_24, %c0_25, %c0_26] : memref<4x96x96xbf16, #tpu.memory_space<vmem>>, vector<4x96x96xbf16>
    "tpu.trace_start"() <{level = 10 : i32, message = "ghw,gwv->ghv"}> : () -> ()
    %cst_27 = arith.constant dense<0.000000e+00> : vector<4x32x96xf32>
    %43 = tpu.matmul %41, %42, %cst_27 {dimension_numbers = #tpu.dot_dimension_numbers<[2], [1], [1], [2], [0, 0, 0, 1, 1, 2], [0], [0]>} : vector<4x32x96xbf16>, vector<4x96x96xbf16>, vector<4x32x96xf32> -> vector<4x32x96xf32>
    "tpu.trace_stop"() : () -> ()
    %44 = vector.extract_strided_slice %43 {offsets = [0, 0, 0], sizes = [4, 32, 32], strides = [1, 1, 1]} : vector<4x32x96xf32> to vector<4x32x32xf32>
    %cst_28 = arith.constant 0.000000e+00 : f32
    %cst_29 = arith.constant 1.000000e+00 : f32
    %45 = vector.broadcast %cst_28 : f32 to vector<4x32x32xf32>
    %46 = arith.maximumf %45, %44 : vector<4x32x32xf32>
    %47 = vector.broadcast %cst_29 : f32 to vector<4x32x32xf32>
    %48 = arith.minimumf %47, %46 : vector<4x32x32xf32>
    %49 = vector.extract_strided_slice %43 {offsets = [0, 0, 32], sizes = [4, 32, 32], strides = [1, 1, 1]} : vector<4x32x96xf32> to vector<4x32x32xf32>
    %cst_30 = arith.constant 0.000000e+00 : f32
    %cst_31 = arith.constant 1.000000e+00 : f32
    %50 = vector.broadcast %cst_30 : f32 to vector<4x32x32xf32>
    %51 = arith.maximumf %50, %49 : vector<4x32x32xf32>
    %52 = vector.broadcast %cst_31 : f32 to vector<4x32x32xf32>
    %53 = arith.minimumf %52, %51 : vector<4x32x32xf32>
    %54 = vector.extract_strided_slice %43 {offsets = [0, 0, 64], sizes = [4, 32, 32], strides = [1, 1, 1]} : vector<4x32x96xf32> to vector<4x32x32xf32>
    %cst_32 = arith.constant 0.000000e+00 : f32
    %cst_33 = arith.constant 1.000000e+00 : f32
    %55 = vector.broadcast %cst_32 : f32 to vector<4x32x32xf32>
    %56 = arith.maximumf %55, %54 : vector<4x32x32xf32>
    %57 = vector.broadcast %cst_33 : f32 to vector<4x32x32xf32>
    %58 = arith.minimumf %57, %56 : vector<4x32x32xf32>
    %59 = vector.broadcast %2 : vector<4x1x1xf32> to vector<4x32x32xf32>
    %60 = arith.mulf %48, %59 : vector<4x32x32xf32>
    %cst_34 = arith.constant 0.000000e+00 : f32
    %cst_35 = arith.constant 1.000000e+00 : f32
    %61 = vector.broadcast %cst_34 : f32 to vector<4x32x32xf32>
    %62 = arith.maximumf %61, %60 : vector<4x32x32xf32>
    %63 = vector.broadcast %cst_35 : f32 to vector<4x32x32xf32>
    %64 = arith.minimumf %63, %62 : vector<4x32x32xf32>
    %65 = vector.broadcast %2 : vector<4x1x1xf32> to vector<4x32x32xf32>
    %66 = arith.mulf %53, %65 : vector<4x32x32xf32>
    %cst_36 = arith.constant 0.000000e+00 : f32
    %cst_37 = arith.constant 1.000000e+00 : f32
    %67 = vector.broadcast %cst_36 : f32 to vector<4x32x32xf32>
    %68 = arith.maximumf %67, %66 : vector<4x32x32xf32>
    %69 = vector.broadcast %cst_37 : f32 to vector<4x32x32xf32>
    %70 = arith.minimumf %69, %68 : vector<4x32x32xf32>
    %71 = vector.broadcast %2 : vector<4x1x1xf32> to vector<4x32x32xf32>
    %72 = arith.mulf %58, %71 : vector<4x32x32xf32>
    %cst_38 = arith.constant 0.000000e+00 : f32
    %cst_39 = arith.constant 1.000000e+00 : f32
    %73 = vector.broadcast %cst_38 : f32 to vector<4x32x32xf32>
    %74 = arith.maximumf %73, %72 : vector<4x32x32xf32>
    %75 = vector.broadcast %cst_39 : f32 to vector<4x32x32xf32>
    %76 = arith.minimumf %75, %74 : vector<4x32x32xf32>
    %cst_40 = arith.constant 2.989000e-01 : f32
    %77 = vector.broadcast %cst_40 : f32 to vector<4x32x32xf32>
    %78 = arith.mulf %77, %64 : vector<4x32x32xf32>
    %cst_41 = arith.constant 5.870000e-01 : f32
    %79 = vector.broadcast %cst_41 : f32 to vector<4x32x32xf32>
    %80 = arith.mulf %79, %70 : vector<4x32x32xf32>
    %81 = arith.addf %78, %80 : vector<4x32x32xf32>
    %cst_42 = arith.constant 1.140000e-01 : f32
    %82 = vector.broadcast %cst_42 : f32 to vector<4x32x32xf32>
    %83 = arith.mulf %82, %76 : vector<4x32x32xf32>
    %84 = arith.addf %81, %83 : vector<4x32x32xf32>
    %cst_43 = arith.constant dense<0.000000e+00> : vector<4x32xf32>
    %85 = vector.multi_reduction <add>, %84, %cst_43 [2] : vector<4x32x32xf32> to vector<4x32xf32>
    %86 = vector.shape_cast %85 : vector<4x32xf32> to vector<4x32x1xf32>
    %cst_44 = arith.constant 3.200000e+01 : f32
    %87 = vector.broadcast %cst_44 : f32 to vector<4x32x1xf32>
    %88 = arith.divf %86, %87 : vector<4x32x1xf32>
    %cst_45 = arith.constant dense<0.000000e+00> : vector<4x1xf32>
    %89 = vector.multi_reduction <add>, %88, %cst_45 [1] : vector<4x32x1xf32> to vector<4x1xf32>
    %90 = vector.shape_cast %89 : vector<4x1xf32> to vector<4x1x1xf32>
    %cst_46 = arith.constant 3.200000e+01 : f32
    %91 = vector.broadcast %cst_46 : f32 to vector<4x1x1xf32>
    %92 = arith.divf %90, %91 : vector<4x1x1xf32>
    %93 = vector.broadcast %3 : vector<4x1x1xf32> to vector<4x32x32xf32>
    %94 = arith.mulf %93, %64 : vector<4x32x32xf32>
    %cst_47 = arith.constant 1.000000e+00 : f32
    %95 = vector.broadcast %cst_47 : f32 to vector<4x1x1xf32>
    %96 = arith.subf %95, %3 : vector<4x1x1xf32>
    %97 = arith.mulf %96, %92 : vector<4x1x1xf32>
    %98 = vector.broadcast %97 : vector<4x1x1xf32> to vector<4x32x32xf32>
    %99 = arith.addf %94, %98 : vector<4x32x32xf32>
    %cst_48 = arith.constant 0.000000e+00 : f32
    %cst_49 = arith.constant 1.000000e+00 : f32
    %100 = vector.broadcast %cst_48 : f32 to vector<4x32x32xf32>
    %101 = arith.maximumf %100, %99 : vector<4x32x32xf32>
    %102 = vector.broadcast %cst_49 : f32 to vector<4x32x32xf32>
    %103 = arith.minimumf %102, %101 : vector<4x32x32xf32>
    %104 = vector.broadcast %3 : vector<4x1x1xf32> to vector<4x32x32xf32>
    %105 = arith.mulf %104, %70 : vector<4x32x32xf32>
    %cst_50 = arith.constant 1.000000e+00 : f32
    %106 = vector.broadcast %cst_50 : f32 to vector<4x1x1xf32>
    %107 = arith.subf %106, %3 : vector<4x1x1xf32>
    %108 = arith.mulf %107, %92 : vector<4x1x1xf32>
    %109 = vector.broadcast %108 : vector<4x1x1xf32> to vector<4x32x32xf32>
    %110 = arith.addf %105, %109 : vector<4x32x32xf32>
    %cst_51 = arith.constant 0.000000e+00 : f32
    %cst_52 = arith.constant 1.000000e+00 : f32
    %111 = vector.broadcast %cst_51 : f32 to vector<4x32x32xf32>
    %112 = arith.maximumf %111, %110 : vector<4x32x32xf32>
    %113 = vector.broadcast %cst_52 : f32 to vector<4x32x32xf32>
    %114 = arith.minimumf %113, %112 : vector<4x32x32xf32>
    %115 = vector.broadcast %3 : vector<4x1x1xf32> to vector<4x32x32xf32>
    %116 = arith.mulf %115, %76 : vector<4x32x32xf32>
    %cst_53 = arith.constant 1.000000e+00 : f32
    %117 = vector.broadcast %cst_53 : f32 to vector<4x1x1xf32>
    %118 = arith.subf %117, %3 : vector<4x1x1xf32>
    %119 = arith.mulf %118, %92 : vector<4x1x1xf32>
    %120 = vector.broadcast %119 : vector<4x1x1xf32> to vector<4x32x32xf32>
    %121 = arith.addf %116, %120 : vector<4x32x32xf32>
    %cst_54 = arith.constant 0.000000e+00 : f32
    %cst_55 = arith.constant 1.000000e+00 : f32
    %122 = vector.broadcast %cst_54 : f32 to vector<4x32x32xf32>
    %123 = arith.maximumf %122, %121 : vector<4x32x32xf32>
    %124 = vector.broadcast %cst_55 : f32 to vector<4x32x32xf32>
    %125 = arith.minimumf %124, %123 : vector<4x32x32xf32>
    %cst_56 = arith.constant 2.989000e-01 : f32
    %126 = vector.broadcast %cst_56 : f32 to vector<4x32x32xf32>
    %127 = arith.mulf %126, %103 : vector<4x32x32xf32>
    %cst_57 = arith.constant 5.870000e-01 : f32
    %128 = vector.broadcast %cst_57 : f32 to vector<4x32x32xf32>
    %129 = arith.mulf %128, %114 : vector<4x32x32xf32>
    %130 = arith.addf %127, %129 : vector<4x32x32xf32>
    %cst_58 = arith.constant 1.140000e-01 : f32
    %131 = vector.broadcast %cst_58 : f32 to vector<4x32x32xf32>
    %132 = arith.mulf %131, %125 : vector<4x32x32xf32>
    %133 = arith.addf %130, %132 : vector<4x32x32xf32>
    %134 = vector.broadcast %4 : vector<4x1x1xf32> to vector<4x32x32xf32>
    %135 = arith.mulf %134, %103 : vector<4x32x32xf32>
    %cst_59 = arith.constant 1.000000e+00 : f32
    %136 = vector.broadcast %cst_59 : f32 to vector<4x1x1xf32>
    %137 = arith.subf %136, %4 : vector<4x1x1xf32>
    %138 = vector.broadcast %137 : vector<4x1x1xf32> to vector<4x32x32xf32>
    %139 = arith.mulf %138, %133 : vector<4x32x32xf32>
    %140 = arith.addf %135, %139 : vector<4x32x32xf32>
    %cst_60 = arith.constant 0.000000e+00 : f32
    %cst_61 = arith.constant 1.000000e+00 : f32
    %141 = vector.broadcast %cst_60 : f32 to vector<4x32x32xf32>
    %142 = arith.maximumf %141, %140 : vector<4x32x32xf32>
    %143 = vector.broadcast %cst_61 : f32 to vector<4x32x32xf32>
    %144 = arith.minimumf %143, %142 : vector<4x32x32xf32>
    %145 = vector.broadcast %4 : vector<4x1x1xf32> to vector<4x32x32xf32>
    %146 = arith.mulf %145, %114 : vector<4x32x32xf32>
    %cst_62 = arith.constant 1.000000e+00 : f32
    %147 = vector.broadcast %cst_62 : f32 to vector<4x1x1xf32>
    %148 = arith.subf %147, %4 : vector<4x1x1xf32>
    %149 = vector.broadcast %148 : vector<4x1x1xf32> to vector<4x32x32xf32>
    %150 = arith.mulf %149, %133 : vector<4x32x32xf32>
    %151 = arith.addf %146, %150 : vector<4x32x32xf32>
    %cst_63 = arith.constant 0.000000e+00 : f32
    %cst_64 = arith.constant 1.000000e+00 : f32
    %152 = vector.broadcast %cst_63 : f32 to vector<4x32x32xf32>
    %153 = arith.maximumf %152, %151 : vector<4x32x32xf32>
    %154 = vector.broadcast %cst_64 : f32 to vector<4x32x32xf32>
    %155 = arith.minimumf %154, %153 : vector<4x32x32xf32>
    %156 = vector.broadcast %4 : vector<4x1x1xf32> to vector<4x32x32xf32>
    %157 = arith.mulf %156, %125 : vector<4x32x32xf32>
    %cst_65 = arith.constant 1.000000e+00 : f32
    %158 = vector.broadcast %cst_65 : f32 to vector<4x1x1xf32>
    %159 = arith.subf %158, %4 : vector<4x1x1xf32>
    %160 = vector.broadcast %159 : vector<4x1x1xf32> to vector<4x32x32xf32>
    %161 = arith.mulf %160, %133 : vector<4x32x32xf32>
    %162 = arith.addf %157, %161 : vector<4x32x32xf32>
    %cst_66 = arith.constant 0.000000e+00 : f32
    %cst_67 = arith.constant 1.000000e+00 : f32
    %163 = vector.broadcast %cst_66 : f32 to vector<4x32x32xf32>
    %164 = arith.maximumf %163, %162 : vector<4x32x32xf32>
    %165 = vector.broadcast %cst_67 : f32 to vector<4x32x32xf32>
    %166 = arith.minimumf %165, %164 : vector<4x32x32xf32>
    %167 = arith.maximumf %144, %155 : vector<4x32x32xf32>
    %168 = arith.maximumf %167, %166 : vector<4x32x32xf32>
    %169 = arith.minimumf %144, %155 : vector<4x32x32xf32>
    %170 = arith.minimumf %169, %166 : vector<4x32x32xf32>
    %171 = arith.subf %168, %170 : vector<4x32x32xf32>
    %cst_68 = arith.constant 0.000000e+00 : f32
    %172 = vector.broadcast %cst_68 : f32 to vector<4x32x32xf32>
    %173 = arith.cmpf ogt, %168, %172 : vector<4x32x32xf32>
    %cst_69 = arith.constant 9.99999993E-9 : f32
    %174 = vector.broadcast %cst_69 : f32 to vector<4x32x32xf32>
    %175 = arith.maximumf %168, %174 : vector<4x32x32xf32>
    %176 = arith.divf %171, %175 : vector<4x32x32xf32>
    %cst_70 = arith.constant 0.000000e+00 : f32
    %177 = vector.broadcast %cst_70 : f32 to vector<4x32x32xf32>
    %178 = arith.select %173, %176, %177 : vector<4x32x32xi1>, vector<4x32x32xf32>
    %cst_71 = arith.constant 9.99999993E-9 : f32
    %179 = vector.broadcast %cst_71 : f32 to vector<4x32x32xf32>
    %180 = arith.maximumf %171, %179 : vector<4x32x32xf32>
    %181 = arith.subf %168, %144 : vector<4x32x32xf32>
    %182 = arith.divf %181, %180 : vector<4x32x32xf32>
    %183 = arith.subf %168, %155 : vector<4x32x32xf32>
    %184 = arith.divf %183, %180 : vector<4x32x32xf32>
    %185 = arith.subf %168, %166 : vector<4x32x32xf32>
    %186 = arith.divf %185, %180 : vector<4x32x32xf32>
    %187 = arith.cmpf oeq, %144, %168 : vector<4x32x32xf32>
    %188 = arith.subf %186, %184 : vector<4x32x32xf32>
    %189 = arith.cmpf oeq, %155, %168 : vector<4x32x32xf32>
    %cst_72 = arith.constant 2.000000e+00 : f32
    %190 = vector.broadcast %cst_72 : f32 to vector<4x32x32xf32>
    %191 = arith.addf %190, %182 : vector<4x32x32xf32>
    %192 = arith.subf %191, %186 : vector<4x32x32xf32>
    %cst_73 = arith.constant 4.000000e+00 : f32
    %193 = vector.broadcast %cst_73 : f32 to vector<4x32x32xf32>
    %194 = arith.addf %193, %184 : vector<4x32x32xf32>
    %195 = arith.subf %194, %182 : vector<4x32x32xf32>
    %196 = arith.select %189, %192, %195 : vector<4x32x32xi1>, vector<4x32x32xf32>
    %197 = arith.select %187, %188, %196 : vector<4x32x32xi1>, vector<4x32x32xf32>
    %cst_74 = arith.constant 6.000000e+00 : f32
    %198 = vector.broadcast %cst_74 : f32 to vector<4x32x32xf32>
    %199 = arith.divf %197, %198 : vector<4x32x32xf32>
    %cst_75 = arith.constant 1.000000e+00 : f32
    %200 = vector.broadcast %cst_75 : f32 to vector<4x32x32xf32>
    %201 = arith.remf %199, %200 : vector<4x32x32xf32>
    %cst_76 = arith.constant 0.000000e+00 : f32
    %202 = vector.broadcast %cst_76 : f32 to vector<4x32x32xf32>
    %203 = arith.cmpf one, %201, %202 : vector<4x32x32xf32>
    %cst_77 = arith.constant 0.000000e+00 : f32
    %204 = vector.broadcast %cst_77 : f32 to vector<4x32x32xf32>
    %205 = arith.cmpf olt, %201, %204 : vector<4x32x32xf32>
    %cst_78 = arith.constant 0.000000e+00 : f32
    %206 = arith.cmpf olt, %cst_75, %cst_78 : f32
    %207 = vector.broadcast %206 : i1 to vector<4x32x32xi1>
    %208 = vector.broadcast %207 : vector<4x32x32xi1> to vector<4x32x32xi1>
    %209 = arith.xori %205, %208 : vector<4x32x32xi1>
    %210 = arith.andi %209, %203 : vector<4x32x32xi1>
    %211 = vector.broadcast %cst_75 : f32 to vector<4x32x32xf32>
    %212 = arith.addf %201, %211 : vector<4x32x32xf32>
    %213 = arith.select %210, %212, %201 : vector<4x32x32xi1>, vector<4x32x32xf32>
    %cst_79 = arith.constant 0.000000e+00 : f32
    %214 = vector.broadcast %cst_79 : f32 to vector<4x32x32xf32>
    %215 = arith.cmpf ogt, %171, %214 : vector<4x32x32xf32>
    %cst_80 = arith.constant 0.000000e+00 : f32
    %216 = vector.broadcast %cst_80 : f32 to vector<4x32x32xf32>
    %217 = arith.select %215, %213, %216 : vector<4x32x32xi1>, vector<4x32x32xf32>
    %218 = vector.broadcast %5 : vector<4x1x1xf32> to vector<4x32x32xf32>
    %219 = arith.addf %217, %218 : vector<4x32x32xf32>
    %cst_81 = arith.constant 1.000000e+00 : f32
    %220 = vector.broadcast %cst_81 : f32 to vector<4x32x32xf32>
    %221 = arith.remf %219, %220 : vector<4x32x32xf32>
    %cst_82 = arith.constant 0.000000e+00 : f32
    %222 = vector.broadcast %cst_82 : f32 to vector<4x32x32xf32>
    %223 = arith.cmpf one, %221, %222 : vector<4x32x32xf32>
    %cst_83 = arith.constant 0.000000e+00 : f32
    %224 = vector.broadcast %cst_83 : f32 to vector<4x32x32xf32>
    %225 = arith.cmpf olt, %221, %224 : vector<4x32x32xf32>
    %cst_84 = arith.constant 0.000000e+00 : f32
    %226 = arith.cmpf olt, %cst_81, %cst_84 : f32
    %227 = vector.broadcast %226 : i1 to vector<4x32x32xi1>
    %228 = vector.broadcast %227 : vector<4x32x32xi1> to vector<4x32x32xi1>
    %229 = arith.xori %225, %228 : vector<4x32x32xi1>
    %230 = arith.andi %229, %223 : vector<4x32x32xi1>
    %231 = vector.broadcast %cst_81 : f32 to vector<4x32x32xf32>
    %232 = arith.addf %221, %231 : vector<4x32x32xf32>
    %233 = arith.select %230, %232, %221 : vector<4x32x32xi1>, vector<4x32x32xf32>
    %cst_85 = arith.constant 6.000000e+00 : f32
    %234 = vector.broadcast %cst_85 : f32 to vector<4x32x32xf32>
    %235 = arith.mulf %233, %234 : vector<4x32x32xf32>
    %236 = math.floor %235 : vector<4x32x32xf32>
    %237 = arith.subf %235, %236 : vector<4x32x32xf32>
    %cst_86 = arith.constant 1.000000e+00 : f32
    %238 = vector.broadcast %cst_86 : f32 to vector<4x32x32xf32>
    %239 = arith.subf %238, %178 : vector<4x32x32xf32>
    %240 = arith.mulf %168, %239 : vector<4x32x32xf32>
    %241 = arith.mulf %178, %237 : vector<4x32x32xf32>
    %cst_87 = arith.constant 1.000000e+00 : f32
    %242 = vector.broadcast %cst_87 : f32 to vector<4x32x32xf32>
    %243 = arith.subf %242, %241 : vector<4x32x32xf32>
    %244 = arith.mulf %168, %243 : vector<4x32x32xf32>
    %cst_88 = arith.constant 1.000000e+00 : f32
    %245 = vector.broadcast %cst_88 : f32 to vector<4x32x32xf32>
    %246 = arith.subf %245, %237 : vector<4x32x32xf32>
    %247 = arith.mulf %178, %246 : vector<4x32x32xf32>
    %cst_89 = arith.constant 1.000000e+00 : f32
    %248 = vector.broadcast %cst_89 : f32 to vector<4x32x32xf32>
    %249 = arith.subf %248, %247 : vector<4x32x32xf32>
    %250 = arith.mulf %168, %249 : vector<4x32x32xf32>
    %cst_90 = arith.constant 6.000000e+00 : f32
    %251 = vector.broadcast %cst_90 : f32 to vector<4x32x32xf32>
    %252 = arith.remf %236, %251 : vector<4x32x32xf32>
    %cst_91 = arith.constant 0.000000e+00 : f32
    %253 = vector.broadcast %cst_91 : f32 to vector<4x32x32xf32>
    %254 = arith.cmpf one, %252, %253 : vector<4x32x32xf32>
    %cst_92 = arith.constant 0.000000e+00 : f32
    %255 = vector.broadcast %cst_92 : f32 to vector<4x32x32xf32>
    %256 = arith.cmpf olt, %252, %255 : vector<4x32x32xf32>
    %cst_93 = arith.constant 0.000000e+00 : f32
    %257 = arith.cmpf olt, %cst_90, %cst_93 : f32
    %258 = vector.broadcast %257 : i1 to vector<4x32x32xi1>
    %259 = vector.broadcast %258 : vector<4x32x32xi1> to vector<4x32x32xi1>
    %260 = arith.xori %256, %259 : vector<4x32x32xi1>
    %261 = arith.andi %260, %254 : vector<4x32x32xi1>
    %262 = vector.broadcast %cst_90 : f32 to vector<4x32x32xf32>
    %263 = arith.addf %252, %262 : vector<4x32x32xf32>
    %264 = arith.select %261, %263, %252 : vector<4x32x32xi1>, vector<4x32x32xf32>
    %cst_94 = arith.constant 0.000000e+00 : f32
    %265 = vector.broadcast %cst_94 : f32 to vector<4x32x32xf32>
    %266 = arith.cmpf oeq, %264, %265 : vector<4x32x32xf32>
    %cst_95 = arith.constant 1.000000e+00 : f32
    %267 = vector.broadcast %cst_95 : f32 to vector<4x32x32xf32>
    %268 = arith.cmpf oeq, %264, %267 : vector<4x32x32xf32>
    %cst_96 = arith.constant 2.000000e+00 : f32
    %269 = vector.broadcast %cst_96 : f32 to vector<4x32x32xf32>
    %270 = arith.cmpf oeq, %264, %269 : vector<4x32x32xf32>
    %cst_97 = arith.constant 3.000000e+00 : f32
    %271 = vector.broadcast %cst_97 : f32 to vector<4x32x32xf32>
    %272 = arith.cmpf oeq, %264, %271 : vector<4x32x32xf32>
    %cst_98 = arith.constant 4.000000e+00 : f32
    %273 = vector.broadcast %cst_98 : f32 to vector<4x32x32xf32>
    %274 = arith.cmpf oeq, %264, %273 : vector<4x32x32xf32>
    %275 = arith.select %274, %250, %168 : vector<4x32x32xi1>, vector<4x32x32xf32>
    %276 = arith.select %272, %240, %275 : vector<4x32x32xi1>, vector<4x32x32xf32>
    %277 = arith.select %270, %240, %276 : vector<4x32x32xi1>, vector<4x32x32xf32>
    %278 = arith.select %268, %244, %277 : vector<4x32x32xi1>, vector<4x32x32xf32>
    %279 = arith.select %266, %168, %278 : vector<4x32x32xi1>, vector<4x32x32xf32>
    %cst_99 = arith.constant 0.000000e+00 : f32
    %280 = vector.broadcast %cst_99 : f32 to vector<4x32x32xf32>
    %281 = arith.cmpf oeq, %264, %280 : vector<4x32x32xf32>
    %cst_100 = arith.constant 1.000000e+00 : f32
    %282 = vector.broadcast %cst_100 : f32 to vector<4x32x32xf32>
    %283 = arith.cmpf oeq, %264, %282 : vector<4x32x32xf32>
    %cst_101 = arith.constant 2.000000e+00 : f32
    %284 = vector.broadcast %cst_101 : f32 to vector<4x32x32xf32>
    %285 = arith.cmpf oeq, %264, %284 : vector<4x32x32xf32>
    %cst_102 = arith.constant 3.000000e+00 : f32
    %286 = vector.broadcast %cst_102 : f32 to vector<4x32x32xf32>
    %287 = arith.cmpf oeq, %264, %286 : vector<4x32x32xf32>
    %cst_103 = arith.constant 4.000000e+00 : f32
    %288 = vector.broadcast %cst_103 : f32 to vector<4x32x32xf32>
    %289 = arith.cmpf oeq, %264, %288 : vector<4x32x32xf32>
    %290 = arith.select %289, %240, %240 : vector<4x32x32xi1>, vector<4x32x32xf32>
    %291 = arith.select %287, %244, %290 : vector<4x32x32xi1>, vector<4x32x32xf32>
    %292 = arith.select %285, %168, %291 : vector<4x32x32xi1>, vector<4x32x32xf32>
    %293 = arith.select %283, %168, %292 : vector<4x32x32xi1>, vector<4x32x32xf32>
    %294 = arith.select %281, %250, %293 : vector<4x32x32xi1>, vector<4x32x32xf32>
    %cst_104 = arith.constant 0.000000e+00 : f32
    %295 = vector.broadcast %cst_104 : f32 to vector<4x32x32xf32>
    %296 = arith.cmpf oeq, %264, %295 : vector<4x32x32xf32>
    %cst_105 = arith.constant 1.000000e+00 : f32
    %297 = vector.broadcast %cst_105 : f32 to vector<4x32x32xf32>
    %298 = arith.cmpf oeq, %264, %297 : vector<4x32x32xf32>
    %cst_106 = arith.constant 2.000000e+00 : f32
    %299 = vector.broadcast %cst_106 : f32 to vector<4x32x32xf32>
    %300 = arith.cmpf oeq, %264, %299 : vector<4x32x32xf32>
    %cst_107 = arith.constant 3.000000e+00 : f32
    %301 = vector.broadcast %cst_107 : f32 to vector<4x32x32xf32>
    %302 = arith.cmpf oeq, %264, %301 : vector<4x32x32xf32>
    %cst_108 = arith.constant 4.000000e+00 : f32
    %303 = vector.broadcast %cst_108 : f32 to vector<4x32x32xf32>
    %304 = arith.cmpf oeq, %264, %303 : vector<4x32x32xf32>
    %305 = arith.select %304, %168, %244 : vector<4x32x32xi1>, vector<4x32x32xf32>
    %306 = arith.select %302, %168, %305 : vector<4x32x32xi1>, vector<4x32x32xf32>
    %307 = arith.select %300, %250, %306 : vector<4x32x32xi1>, vector<4x32x32xf32>
    %308 = arith.select %298, %240, %307 : vector<4x32x32xi1>, vector<4x32x32xf32>
    %309 = arith.select %296, %240, %308 : vector<4x32x32xi1>, vector<4x32x32xf32>
    %cst_109 = arith.constant 5.000000e-01 : f32
    %310 = vector.broadcast %cst_109 : f32 to vector<4x1x1xf32>
    %311 = arith.cmpf ogt, %1, %310 : vector<4x1x1xf32>
    %312 = vector.shape_cast %311 : vector<4x1x1xi1> to vector<4x1x1xi1>
    %313 = vector.broadcast %312 : vector<4x1x1xi1> to vector<4x32x32xi1>
    %314 = arith.select %313, %279, %48 : vector<4x32x32xi1>, vector<4x32x32xf32>
    %315 = vector.shape_cast %311 : vector<4x1x1xi1> to vector<4x1x1xi1>
    %316 = vector.broadcast %315 : vector<4x1x1xi1> to vector<4x32x32xi1>
    %317 = arith.select %316, %294, %53 : vector<4x32x32xi1>, vector<4x32x32xf32>
    %318 = vector.shape_cast %311 : vector<4x1x1xi1> to vector<4x1x1xi1>
    %319 = vector.broadcast %318 : vector<4x1x1xi1> to vector<4x32x32xi1>
    %320 = arith.select %319, %309, %58 : vector<4x32x32xi1>, vector<4x32x32xf32>
    %cst_110 = arith.constant 2.989000e-01 : f32
    %321 = vector.broadcast %cst_110 : f32 to vector<4x32x32xf32>
    %322 = arith.mulf %321, %314 : vector<4x32x32xf32>
    %cst_111 = arith.constant 5.870000e-01 : f32
    %323 = vector.broadcast %cst_111 : f32 to vector<4x32x32xf32>
    %324 = arith.mulf %323, %317 : vector<4x32x32xf32>
    %325 = arith.addf %322, %324 : vector<4x32x32xf32>
    %cst_112 = arith.constant 1.140000e-01 : f32
    %326 = vector.broadcast %cst_112 : f32 to vector<4x32x32xf32>
    %327 = arith.mulf %326, %320 : vector<4x32x32xf32>
    %328 = arith.addf %325, %327 : vector<4x32x32xf32>
    %cst_113 = arith.constant 5.000000e-01 : f32
    %329 = vector.broadcast %cst_113 : f32 to vector<4x1x1xf32>
    %330 = arith.cmpf ogt, %6, %329 : vector<4x1x1xf32>
    %331 = vector.shape_cast %330 : vector<4x1x1xi1> to vector<4x1x1xi1>
    %332 = vector.broadcast %331 : vector<4x1x1xi1> to vector<4x32x32xi1>
    %333 = arith.select %332, %328, %314 : vector<4x32x32xi1>, vector<4x32x32xf32>
    %334 = vector.shape_cast %330 : vector<4x1x1xi1> to vector<4x1x1xi1>
    %335 = vector.broadcast %334 : vector<4x1x1xi1> to vector<4x32x32xi1>
    %336 = arith.select %335, %328, %317 : vector<4x32x32xi1>, vector<4x32x32xf32>
    %337 = vector.shape_cast %330 : vector<4x1x1xi1> to vector<4x1x1xi1>
    %338 = vector.broadcast %337 : vector<4x1x1xi1> to vector<4x32x32xi1>
    %339 = arith.select %338, %328, %320 : vector<4x32x32xi1>, vector<4x32x32xf32>
    %340 = tpu.concatenate %333, %336, %339 in 2 : vector<4x32x32xf32>, vector<4x32x32xf32>, vector<4x32x32xf32> -> vector<4x32x96xf32>
    %341 = arith.truncf %340 : vector<4x32x96xf32> to vector<4x32x96xbf16>
    %c0_114 = arith.constant 0 : index
    %c0_115 = arith.constant 0 : index
    %c0_116 = arith.constant 0 : index
    %342 = vector.load %arg5[%c0_114, %c0_115, %c0_116] : memref<4x32x32xbf16, #tpu.memory_space<vmem>>, vector<4x32x32xbf16>
    "tpu.trace_start"() <{level = 10 : i32, message = "ghi,giw->ghw"}> : () -> ()
    %cst_117 = arith.constant dense<0.000000e+00> : vector<4x32x96xf32>
    %343 = tpu.matmul %342, %341, %cst_117 {dimension_numbers = #tpu.dot_dimension_numbers<[2], [1], [1], [2], [0, 0, 0, 1, 1, 2], [0], [0]>} : vector<4x32x32xbf16>, vector<4x32x96xbf16>, vector<4x32x96xf32> -> vector<4x32x96xf32>
    "tpu.trace_stop"() : () -> ()
    %344 = arith.truncf %343 : vector<4x32x96xf32> to vector<4x32x96xbf16>
    %c0_118 = arith.constant 0 : index
    %c0_119 = arith.constant 0 : index
    %c0_120 = arith.constant 0 : index
    %345 = vector.load %arg6[%c0_118, %c0_119, %c0_120] : memref<4x96x96xbf16, #tpu.memory_space<vmem>>, vector<4x96x96xbf16>
    "tpu.trace_start"() <{level = 10 : i32, message = "ghw,gwv->ghv"}> : () -> ()
    %cst_121 = arith.constant dense<0.000000e+00> : vector<4x32x96xf32>
    %346 = tpu.matmul %344, %345, %cst_121 {dimension_numbers = #tpu.dot_dimension_numbers<[2], [1], [1], [2], [0, 0, 0, 1, 1, 2], [0], [0]>} : vector<4x32x96xbf16>, vector<4x96x96xbf16>, vector<4x32x96xf32> -> vector<4x32x96xf32>
    "tpu.trace_stop"() : () -> ()
    %347 = vector.extract_strided_slice %346 {offsets = [0, 0, 0], sizes = [4, 32, 32], strides = [1, 1, 1]} : vector<4x32x96xf32> to vector<4x32x32xf32>
    %cst_122 = arith.constant 0.000000e+00 : f32
    %cst_123 = arith.constant 1.000000e+00 : f32
    %348 = vector.broadcast %cst_122 : f32 to vector<4x32x32xf32>
    %349 = arith.maximumf %348, %347 : vector<4x32x32xf32>
    %350 = vector.broadcast %cst_123 : f32 to vector<4x32x32xf32>
    %351 = arith.minimumf %350, %349 : vector<4x32x32xf32>
    %cst_124 = arith.constant 4.914000e-01 : f32
    %352 = vector.broadcast %cst_124 : f32 to vector<4x32x32xf32>
    %353 = arith.subf %351, %352 : vector<4x32x32xf32>
    %cst_125 = arith.constant 4.94315386 : f32
    %354 = vector.broadcast %cst_125 : f32 to vector<4x32x32xf32>
    %355 = arith.mulf %353, %354 : vector<4x32x32xf32>
    %c0_126 = arith.constant 0 : index
    %c0_127 = arith.constant 0 : index
    %c0_128 = arith.constant 0 : index
    %c0_129 = arith.constant 0 : index
    %356 = vector.load %arg7[%c0_126, %c0_127, %c0_128, %c0_129] : memref<4x3x32x32xf32, #tpu.memory_space<vmem>>, vector<4x1x32x32xf32>
    %357 = vector.shape_cast %356 : vector<4x1x32x32xf32> to vector<4x32x32xf32>
    %358 = vector.shape_cast %355 : vector<4x32x32xf32> to vector<4x1x32x32xf32>
    tpu.vector_store %arg7[%c0_126, %c0_127, %c0_128, %c0_129], %358 {strides = array<i32>} : memref<4x3x32x32xf32, #tpu.memory_space<vmem>>, vector<4x1x32x32xf32>,
    %359 = vector.extract_strided_slice %346 {offsets = [0, 0, 32], sizes = [4, 32, 32], strides = [1, 1, 1]} : vector<4x32x96xf32> to vector<4x32x32xf32>
    %cst_130 = arith.constant 0.000000e+00 : f32
    %cst_131 = arith.constant 1.000000e+00 : f32
    %360 = vector.broadcast %cst_130 : f32 to vector<4x32x32xf32>
    %361 = arith.maximumf %360, %359 : vector<4x32x32xf32>
    %362 = vector.broadcast %cst_131 : f32 to vector<4x32x32xf32>
    %363 = arith.minimumf %362, %361 : vector<4x32x32xf32>
    %cst_132 = arith.constant 4.822000e-01 : f32
    %364 = vector.broadcast %cst_132 : f32 to vector<4x32x32xf32>
    %365 = arith.subf %363, %364 : vector<4x32x32xf32>
    %cst_133 = arith.constant 5.01504517 : f32
    %366 = vector.broadcast %cst_133 : f32 to vector<4x32x32xf32>
    %367 = arith.mulf %365, %366 : vector<4x32x32xf32>
    %c0_134 = arith.constant 0 : index
    %c1_135 = arith.constant 1 : index
    %c0_136 = arith.constant 0 : index
    %c0_137 = arith.constant 0 : index
    %368 = vector.load %arg7[%c0_134, %c1_135, %c0_136, %c0_137] : memref<4x3x32x32xf32, #tpu.memory_space<vmem>>, vector<4x1x32x32xf32>
    %369 = vector.shape_cast %368 : vector<4x1x32x32xf32> to vector<4x32x32xf32>
    %370 = vector.shape_cast %367 : vector<4x32x32xf32> to vector<4x1x32x32xf32>
    tpu.vector_store %arg7[%c0_134, %c1_135, %c0_136, %c0_137], %370 {strides = array<i32>} : memref<4x3x32x32xf32, #tpu.memory_space<vmem>>, vector<4x1x32x32xf32>,
    %371 = vector.extract_strided_slice %346 {offsets = [0, 0, 64], sizes = [4, 32, 32], strides = [1, 1, 1]} : vector<4x32x96xf32> to vector<4x32x32xf32>
    %cst_138 = arith.constant 0.000000e+00 : f32
    %cst_139 = arith.constant 1.000000e+00 : f32
    %372 = vector.broadcast %cst_138 : f32 to vector<4x32x32xf32>
    %373 = arith.maximumf %372, %371 : vector<4x32x32xf32>
    %374 = vector.broadcast %cst_139 : f32 to vector<4x32x32xf32>
    %375 = arith.minimumf %374, %373 : vector<4x32x32xf32>
    %cst_140 = arith.constant 4.465000e-01 : f32
    %376 = vector.broadcast %cst_140 : f32 to vector<4x32x32xf32>
    %377 = arith.subf %375, %376 : vector<4x32x32xf32>
    %cst_141 = arith.constant 4.97512436 : f32
    %378 = vector.broadcast %cst_141 : f32 to vector<4x32x32xf32>
    %379 = arith.mulf %377, %378 : vector<4x32x32xf32>
    %c0_142 = arith.constant 0 : index
    %c2_143 = arith.constant 2 : index
    %c0_144 = arith.constant 0 : index
    %c0_145 = arith.constant 0 : index
    %380 = vector.load %arg7[%c0_142, %c2_143, %c0_144, %c0_145] : memref<4x3x32x32xf32, #tpu.memory_space<vmem>>, vector<4x1x32x32xf32>
    %381 = vector.shape_cast %380 : vector<4x1x32x32xf32> to vector<4x32x32xf32>
    %382 = vector.shape_cast %379 : vector<4x32x32xf32> to vector<4x1x32x32xf32>
    tpu.vector_store %arg7[%c0_142, %c2_143, %c0_144, %c0_145], %382 {strides = array<i32>} : memref<4x3x32x32xf32, #tpu.memory_space<vmem>>, vector<4x1x32x32xf32>,
    return
  }
  func.func @transform_0(%arg0: i32) -> (i32, i32, i32) {
    %c0_i32 = arith.constant 0 : i32
    %c0_i32_0 = arith.constant 0 : i32
    %c0_i32_1 = arith.constant 0 : i32
    return %arg0, %c0_i32, %c0_i32_0 : i32, i32, i32
  }
  func.func @transform_1(%arg0: i32) -> (i32, i32, i32, i32) {
    %c0_i32 = arith.constant 0 : i32
    %c0_i32_0 = arith.constant 0 : i32
    %c0_i32_1 = arith.constant 0 : i32
    %c0_i32_2 = arith.constant 0 : i32
    return %arg0, %c0_i32, %c0_i32_0, %c0_i32_1 : i32, i32, i32, i32
  }
  func.func @transform_2(%arg0: i32) -> (i32, i32, i32) {
    %c0_i32 = arith.constant 0 : i32
    %c0_i32_0 = arith.constant 0 : i32
    %c0_i32_1 = arith.constant 0 : i32
    return %arg0, %c0_i32, %c0_i32_0 : i32, i32, i32
  }
  func.func @transform_3(%arg0: i32) -> (i32, i32, i32) {
    %c0_i32 = arith.constant 0 : i32
    %c0_i32_0 = arith.constant 0 : i32
    %c0_i32_1 = arith.constant 0 : i32
    return %arg0, %c0_i32, %c0_i32_0 : i32, i32, i32
  }
  func.func @transform_4(%arg0: i32) -> (i32, i32, i32) {
    %c0_i32 = arith.constant 0 : i32
    %c0_i32_0 = arith.constant 0 : i32
    %c0_i32_1 = arith.constant 0 : i32
    return %arg0, %c0_i32, %c0_i32_0 : i32, i32, i32
  }
  func.func @transform_5(%arg0: i32) -> (i32, i32, i32) {
    %c0_i32 = arith.constant 0 : i32
    %c0_i32_0 = arith.constant 0 : i32
    %c0_i32_1 = arith.constant 0 : i32
    return %arg0, %c0_i32, %c0_i32_0 : i32, i32, i32
  }
  func.func @transform_6(%arg0: i32) -> (i32, i32, i32, i32) {
    %c0_i32 = arith.constant 0 : i32
    %c0_i32_0 = arith.constant 0 : i32
    %c0_i32_1 = arith.constant 0 : i32
    %c0_i32_2 = arith.constant 0 : i32
    return %arg0, %c0_i32, %c0_i32_0, %c0_i32_1 : i32, i32, i32, i32
  }
}

</mosaic_0001>

<llo_original>
// kernel: tpu_custom_call.1
$region0: #{tpu_custom_call.1}
  #allocation0 [shape = 'u32[]', space=smem, size = 0x4, offset = 0x4, fixed_abs, tag = 'smem constant byte address 0x4 - core index']
  #allocation1 [shape = 'u32[144,128]{1,0:T(1,128)}', space=vmem, size = 0x12000, scoped, tag = 'internal scratch']
  %s0 = inlined_call_operand.hbm [shape: f32[8,1,8], index: 0, kind: input, shape index: {}]
  %s1 = inlined_call_operand.hbm [shape: s8[8,3,32,32], index: 1, kind: input, shape index: {}]
  %s2 = inlined_call_operand.hbm [shape: bf16[8,32,32], index: 2, kind: input, shape index: {}]
  %s3 = inlined_call_operand.hbm [shape: bf16[8,96,96], index: 3, kind: input, shape index: {}]
  %s4 = inlined_call_operand.hbm [shape: bf16[8,32,32], index: 4, kind: input, shape index: {}]
  %s5 = inlined_call_operand.hbm [shape: bf16[8,96,96], index: 5, kind: input, shape index: {}]
  %s6 = inlined_call_operand.hbm [shape: f32[8,3,32,32], index: 6, kind: output, shape index: {}]
  %s7 = sld [smem:[#allocation0]]
  $region81: #{tpu_custom_call.1} parent=0
    _
  %s9 = ssub.s32 1, %s7
  %s10 = scalar_select 0, %s9, %s7
  $region1: #{tpu_custom_call.1} parent=0
    #allocation2 [shape = 'u8[4096]{0}', space=vmem, size = 0x1000, scoped, tag = 'input window, operand 0']
    #allocation3 [shape = 's32[2]{0}', space=sflag, size = 0x8, scoped, tag = 'scoped memory for tpu_custom_call.1']
    #allocation4 [shape = 's32[2]{0}', space=sflag, size = 0x8, scoped, tag = 'scoped memory for tpu_custom_call.1']
    #allocation5 [shape = 'u8[98304]{0}', space=vmem, size = 0x18000, scoped, tag = 'input window, operand 1']
    #allocation6 [shape = 's32[2]{0}', space=sflag, size = 0x8, scoped, tag = 'scoped memory for tpu_custom_call.1']
    #allocation7 [shape = 'u8[65536]{0}', space=vmem, size = 0x10000, scoped, tag = 'input window, operand 2']
    #allocation8 [shape = 'u8[196608]{0}', space=vmem, size = 0x30000, scoped, tag = 'input window, operand 3']
    #allocation9 [shape = 's32[2]{0}', space=sflag, size = 0x8, scoped, tag = 'scoped memory for tpu_custom_call.1']
    #allocation10 [shape = 'u8[65536]{0}', space=vmem, size = 0x10000, scoped, tag = 'input window, operand 4']
    #allocation11 [shape = 'u8[196608]{0}', space=vmem, size = 0x30000, scoped, tag = 'input window, operand 5']
    #allocation12 [shape = 's32[2]{0}', space=sflag, size = 0x8, scoped, tag = 'scoped memory for tpu_custom_call.1']
    #allocation13 [shape = 'u8[393216]{0}', space=vmem, size = 0x60000, scoped, tag = 'output window, operand 0']
    %11 = vsyncpa [#allocation3], 0
    %s12 = scalar_lea.sflag [#allocation3], 1
    %13 = vsyncpa %s12, 0
    %14 = vsyncpa [#allocation6], 0
    %s15 = scalar_lea.sflag [#allocation6], 1
    %16 = vsyncpa %s15, 0
    %17 = vsyncpa [#allocation9], 0
    %s18 = scalar_lea.sflag [#allocation9], 1
    %19 = vsyncpa %s18, 0
    %20 = vsyncpa [#allocation12], 0
    %s21 = scalar_lea.sflag [#allocation12], 1
    %22 = vsyncpa %s21, 0
    %23 = vsyncpa [#allocation4], 0
    %s24 = scalar_lea.sflag [#allocation4], 1
    %25 = vsyncpa %s24, 0
    loop: start=0, step=1, limit=4
    $region2: #{tpu_custom_call.1} parent=1 // loop_pre_header
      _
    $region3: #{tpu_custom_call.1} parent=1 // loop_header
      %s27 = sphi 0, %s31
      %p28 = scmp.ge.s32.totalorder %s27, 4
      %s37 = sphi 0, %s39
      %s40 = sphi 0, %s37
      %s41 = sphi 0, %s40
      %s57 = sphi 0, %s41
      %s63 = sphi 0, %s65
      %s66 = sphi 0, %s63
      %s67 = sphi 0, %s66
      %s83 = sphi 0, %s67
      %s89 = sphi 0, %s91
      %s92 = sphi 0, %s89
      %s93 = sphi 0, %s92
      %s109 = sphi 0, %s93
      %s115 = sphi 0, %s117
      %s118 = sphi 0, %s115
      %s119 = sphi 0, %s118
      %s135 = sphi 0, %s119
      %s141 = sphi 0, %s143
      %s144 = sphi 0, %s141
      %s145 = sphi 0, %s144
      %s161 = sphi 0, %s145
      %s167 = sphi 0, %s169
      %s170 = sphi 0, %s167
      %s171 = sphi 0, %s170
      %s187 = sphi 0, %s171
      %s193 = sphi 0, %s195
      %s196 = sphi 0, %s193
      %s197 = sphi 0, %s196
      %s213 = sphi 0, %s197
    $region4: #{tpu_custom_call.1} parent=1 // loop_header_branch
      %30 = sbr.rel (%p28) target = $region8
    $region5: #{tpu_custom_call.1} parent=1 // loop_body
      %s32 = ssub.s32 %s27, 1
      %s33 = ssub.s32 %s27, 2
      %s34 = sadd.s32 %s27, 1
      %s35 = ssub.s32 %s27, %s34
      %p36 = scmp.eq.s32.totalorder %s35, 0
      %s38 = sadd.s32 %s37, 1
      %s39 = scalar_select %p36, %s37, %s38
      %p42 = pneg %p36
      %p43 = scmp.eq.s32.totalorder %s27, 1
      %p44 = por %p42, %p43
      %p45 = scmp.ne.s32.totalorder %s37, %s40
      %p46 = scmp.eq.s32.totalorder %s27, 0
      %p47 = por %p45, %p46
      %p48 = scmp.ne.s32.totalorder %s37, %s40
      %p49 = scmp.eq.s32.totalorder %s32, 1
      %p50 = por %p48, %p49
      %p51 = scmp.ne.s32.totalorder %s40, %s41
      %p52 = scmp.eq.s32.totalorder %s32, 0
      %p53 = por %p51, %p52
      %p54 = scmp.ne.s32.totalorder %s40, %s41
      %p55 = scmp.eq.s32.totalorder %s33, 1
      %p56 = por %p54, %p55
      %p58 = scmp.ne.s32.totalorder %s41, %s57
      %p59 = scmp.eq.s32.totalorder %s33, 0
      %p60 = por %p58, %p59
      %s61 = ssub.s32 %s27, %s34
      %p62 = scmp.eq.s32.totalorder %s61, 0
      %s64 = sadd.s32 %s63, 1
      %s65 = scalar_select %p62, %s63, %s64
      %p68 = pneg %p62
      %p69 = scmp.eq.s32.totalorder %s27, 1
      %p70 = por %p68, %p69
      %p71 = scmp.ne.s32.totalorder %s63, %s66
      %p72 = scmp.eq.s32.totalorder %s27, 0
      %p73 = por %p71, %p72
      %p74 = scmp.ne.s32.totalorder %s63, %s66
      %p75 = scmp.eq.s32.totalorder %s32, 1
      %p76 = por %p74, %p75
      %p77 = scmp.ne.s32.totalorder %s66, %s67
      %p78 = scmp.eq.s32.totalorder %s32, 0
      %p79 = por %p77, %p78
      %p80 = scmp.ne.s32.totalorder %s66, %s67
      %p81 = scmp.eq.s32.totalorder %s33, 1
      %p82 = por %p80, %p81
      %p84 = scmp.ne.s32.totalorder %s67, %s83
      %p85 = scmp.eq.s32.totalorder %s33, 0
      %p86 = por %p84, %p85
      %s87 = ssub.s32 %s27, %s34
      %p88 = scmp.eq.s32.totalorder %s87, 0
      %s90 = sadd.s32 %s89, 1
      %s91 = scalar_select %p88, %s89, %s90
      %p94 = pneg %p88
      %p95 = scmp.eq.s32.totalorder %s27, 1
      %p96 = por %p94, %p95
      %p97 = scmp.ne.s32.totalorder %s89, %s92
      %p98 = scmp.eq.s32.totalorder %s27, 0
      %p99 = por %p97, %p98
      %p100 = scmp.ne.s32.totalorder %s89, %s92
      %p101 = scmp.eq.s32.totalorder %s32, 1
      %p102 = por %p100, %p101
      %p103 = scmp.ne.s32.totalorder %s92, %s93
      %p104 = scmp.eq.s32.totalorder %s32, 0
      %p105 = por %p103, %p104
      %p106 = scmp.ne.s32.totalorder %s92, %s93
      %p107 = scmp.eq.s32.totalorder %s33, 1
      %p108 = por %p106, %p107
      %p110 = scmp.ne.s32.totalorder %s93, %s109
      %p111 = scmp.eq.s32.totalorder %s33, 0
      %p112 = por %p110, %p111
      %s113 = ssub.s32 %s27, %s34
      %p114 = scmp.eq.s32.totalorder %s113, 0
      %s116 = sadd.s32 %s115, 1
      %s117 = scalar_select %p114, %s115, %s116
      %p120 = pneg %p114
      %p121 = scmp.eq.s32.totalorder %s27, 1
      %p122 = por %p120, %p121
      %p123 = scmp.ne.s32.totalorder %s115, %s118
      %p124 = scmp.eq.s32.totalorder %s27, 0
      %p125 = por %p123, %p124
      %p126 = scmp.ne.s32.totalorder %s115, %s118
      %p127 = scmp.eq.s32.totalorder %s32, 1
      %p128 = por %p126, %p127
      %p129 = scmp.ne.s32.totalorder %s118, %s119
      %p130 = scmp.eq.s32.totalorder %s32, 0
      %p131 = por %p129, %p130
      %p132 = scmp.ne.s32.totalorder %s118, %s119
      %p133 = scmp.eq.s32.totalorder %s33, 1
      %p134 = por %p132, %p133
      %p136 = scmp.ne.s32.totalorder %s119, %s135
      %p137 = scmp.eq.s32.totalorder %s33, 0
      %p138 = por %p136, %p137
      %s139 = ssub.s32 %s27, %s34
      %p140 = scmp.eq.s32.totalorder %s139, 0
      %s142 = sadd.s32 %s141, 1
      %s143 = scalar_select %p140, %s141, %s142
      %p146 = pneg %p140
      %p147 = scmp.eq.s32.totalorder %s27, 1
      %p148 = por %p146, %p147
      %p149 = scmp.ne.s32.totalorder %s141, %s144
      %p150 = scmp.eq.s32.totalorder %s27, 0
      %p151 = por %p149, %p150
      %p152 = scmp.ne.s32.totalorder %s141, %s144
      %p153 = scmp.eq.s32.totalorder %s32, 1
      %p154 = por %p152, %p153
      %p155 = scmp.ne.s32.totalorder %s144, %s145
      %p156 = scmp.eq.s32.totalorder %s32, 0
      %p157 = por %p155, %p156
      %p158 = scmp.ne.s32.totalorder %s144, %s145
      %p159 = scmp.eq.s32.totalorder %s33, 1
      %p160 = por %p158, %p159
      %p162 = scmp.ne.s32.totalorder %s145, %s161
      %p163 = scmp.eq.s32.totalorder %s33, 0
      %p164 = por %p162, %p163
      %s165 = ssub.s32 %s27, %s34
      %p166 = scmp.eq.s32.totalorder %s165, 0
      %s168 = sadd.s32 %s167, 1
      %s169 = scalar_select %p166, %s167, %s168
      %p172 = pneg %p166
      %p173 = scmp.eq.s32.totalorder %s27, 1
      %p174 = por %p172, %p173
      %p175 = scmp.ne.s32.totalorder %s167, %s170
      %p176 = scmp.eq.s32.totalorder %s27, 0
      %p177 = por %p175, %p176
      %p178 = scmp.ne.s32.totalorder %s167, %s170
      %p179 = scmp.eq.s32.totalorder %s32, 1
      %p180 = por %p178, %p179
      %p181 = scmp.ne.s32.totalorder %s170, %s171
      %p182 = scmp.eq.s32.totalorder %s32, 0
      %p183 = por %p181, %p182
      %p184 = scmp.ne.s32.totalorder %s170, %s171
      %p185 = scmp.eq.s32.totalorder %s33, 1
      %p186 = por %p184, %p185
      %p188 = scmp.ne.s32.totalorder %s171, %s187
      %p189 = scmp.eq.s32.totalorder %s33, 0
      %p190 = por %p188, %p189
      %s191 = ssub.s32 %s27, %s34
      %p192 = scmp.eq.s32.totalorder %s191, 0
      %s194 = sadd.s32 %s193, 1
      %s195 = scalar_select %p192, %s193, %s194
      %p198 = pneg %p192
      %p199 = scmp.eq.s32.totalorder %s27, 1
      %p200 = por %p198, %p199
      %p201 = scmp.ne.s32.totalorder %s193, %s196
      %p202 = scmp.eq.s32.totalorder %s27, 0
      %p203 = por %p201, %p202
      %p204 = scmp.ne.s32.totalorder %s193, %s196
      %p205 = scmp.eq.s32.totalorder %s32, 1
      %p206 = por %p204, %p205
      %p207 = scmp.ne.s32.totalorder %s196, %s197
      %p208 = scmp.eq.s32.totalorder %s32, 0
      %p209 = por %p207, %p208
      %p210 = scmp.ne.s32.totalorder %s196, %s197
      %p211 = scmp.eq.s32.totalorder %s33, 1
      %p212 = por %p210, %p211
      %p214 = scmp.ne.s32.totalorder %s197, %s213
      %p215 = scmp.eq.s32.totalorder %s33, 0
      %p216 = por %p214, %p215
      %p217 = scmp.le.s32.totalorder 1, %s27
      %p218 = scmp.lt.s32.totalorder %s27, 3
      %p219 = pnand %p217, %p218
      %p220 = pneg %p219
      // Predicated region
      $region9: #{tpu_custom_call.1} parent=5 // pred_check
        _
      $region10: #{tpu_custom_call.1} parent=5 // pred_check_branch
        %222 = sbr.rel (%p219) target = $region12
      $region11: #{tpu_custom_call.1} parent=5 // pred_region
        %s223 = ssub.s32 %s27, 1
      $region12: #{tpu_custom_call.1} parent=5 // pred_fallthru
        _
      %p224 = scmp.lt.s32.totalorder %s27, 2
      // Predicated region
      $region13: #{tpu_custom_call.1} parent=5 // pred_check
        %p225 = pneg %p224
      $region14: #{tpu_custom_call.1} parent=5 // pred_check_branch
        %227 = sbr.rel (%p225) target = $region16
      $region15: #{tpu_custom_call.1} parent=5 // pred_region
        // Predicated region
        $region17: #{tpu_custom_call.1} parent=15 // pred_check
          %p228 = pneg %p47
        $region18: #{tpu_custom_call.1} parent=15 // pred_check_branch
          %230 = sbr.rel (%p228) target = $region20
        $region19: #{tpu_custom_call.1} parent=15 // pred_region
          %s231 = sand.u32 %s37, 1
          %s232 = scalar_lea.sflag [#allocation3], %s231
          %s233 = sand.u32 %s37, 1
          %s234 = smul.addr %s233, 4
          %s235 = scalar_lea.vmem [#allocation2], %s234
          %s236 = smul.u32 4, %s27
          %s238 = ssub.s32 64, 64
          %239 = vsyncadd %s232, %s238
          %s240 = smul.addr %s236, 16
          %s241 = scalar_lea.hbm %s0, %s240
          %s242 = sshll.u32 %s235, 4
          %s243 = int_to_ptr.vmem [resolvable:$true] %s242
          %248 = dma.hbm_to_vmem [thread:$0]  %s241, 64, %s243, %s232, 16, 16, 1
        $region20: #{tpu_custom_call.1} parent=15 // pred_fallthru
          _
        // Predicated region
        $region21: #{tpu_custom_call.1} parent=15 // pred_check
          %p249 = pneg %p73
        $region22: #{tpu_custom_call.1} parent=15 // pred_check_branch
          %251 = sbr.rel (%p249) target = $region24
        $region23: #{tpu_custom_call.1} parent=15 // pred_region
          %s252 = sand.u32 %s27, 1
          %s253 = scalar_lea.sflag [#allocation6], %s252
          %s254 = sand.u32 %s63, 1
          %s255 = smul.addr %s254, 96
          %s256 = scalar_lea.vmem [#allocation5], %s255
          %s257 = smul.u32 4, %s27
          %s259 = ssub.s32 1536, 1536
          %260 = vsyncadd %s253, %s259
          %s261 = smul.addr %s257, 3
          %s262 = smul.addr %s261, 128
          %s263 = scalar_lea.hbm %s1, %s262
          %s264 = sshll.u32 %s256, 4
          %s265 = int_to_ptr.vmem [resolvable:$true] %s264
          %270 = dma.hbm_to_vmem [thread:$0]  %s263, 1536, %s265, %s253, 128, 128, 8
        $region24: #{tpu_custom_call.1} parent=15 // pred_fallthru
          _
        // Predicated region
        $region25: #{tpu_custom_call.1} parent=15 // pred_check
          %p271 = pneg %p99
        $region26: #{tpu_custom_call.1} parent=15 // pred_check_branch
          %273 = sbr.rel (%p271) target = $region28
        $region27: #{tpu_custom_call.1} parent=15 // pred_region
          %s274 = sand.u32 %s27, 1
          %s275 = scalar_lea.sflag [#allocation6], %s274
          %s276 = sand.u32 %s89, 1
          %s277 = smul.addr %s276, 64
          %s278 = scalar_lea.vmem [#allocation7], %s277
          %s279 = smul.u32 4, %s27
          %s281 = ssub.s32 1024, 1024
          %282 = vsyncadd %s275, %s281
          %s283 = smul.addr %s279, 4
          %s284 = smul.addr %s283, 64
          %s285 = scalar_lea.hbm %s2, %s284
          %s286 = sshll.u32 %s278, 4
          %s287 = int_to_ptr.vmem [resolvable:$true] %s286
          %292 = dma.hbm_to_vmem [thread:$0]  %s285, 1024, %s287, %s275, 64, 64, 4
        $region28: #{tpu_custom_call.1} parent=15 // pred_fallthru
          _
        // Predicated region
        $region29: #{tpu_custom_call.1} parent=15 // pred_check
          %p293 = pneg %p125
        $region30: #{tpu_custom_call.1} parent=15 // pred_check_branch
          %295 = sbr.rel (%p293) target = $region32
        $region31: #{tpu_custom_call.1} parent=15 // pred_region
          %s296 = sand.u32 %s27, 1
          %s297 = scalar_lea.sflag [#allocation9], %s296
          %s298 = sand.u32 %s115, 1
          %s299 = smul.addr %s298, 192
          %s300 = scalar_lea.vmem [#allocation8], %s299
          %s301 = smul.u32 4, %s27
          %s303 = ssub.s32 3072, 3072
          %304 = vsyncadd %s297, %s303
          %s305 = smul.addr %s301, 12
          %s306 = smul.addr %s305, 64
          %s307 = scalar_lea.hbm %s3, %s306
          %s308 = sshll.u32 %s300, 4
          %s309 = int_to_ptr.vmem [resolvable:$true] %s308
          %314 = dma.hbm_to_vmem [thread:$0]  %s307, 3072, %s309, %s297, 64, 64, 4
        $region32: #{tpu_custom_call.1} parent=15 // pred_fallthru
          _
        // Predicated region
        $region33: #{tpu_custom_call.1} parent=15 // pred_check
          %p315 = pneg %p151
        $region34: #{tpu_custom_call.1} parent=15 // pred_check_branch
          %317 = sbr.rel (%p315) target = $region36
        $region35: #{tpu_custom_call.1} parent=15 // pred_region
          %s318 = sand.u32 %s27, 1
          %s319 = scalar_lea.sflag [#allocation9], %s318
          %s320 = sand.u32 %s141, 1
          %s321 = smul.addr %s320, 64
          %s322 = scalar_lea.vmem [#allocation10], %s321
          %s323 = smul.u32 4, %s27
          %s325 = ssub.s32 1024, 1024
          %326 = vsyncadd %s319, %s325
          %s327 = smul.addr %s323, 4
          %s328 = smul.addr %s327, 64
          %s329 = scalar_lea.hbm %s4, %s328
          %s330 = sshll.u32 %s322, 4
          %s331 = int_to_ptr.vmem [resolvable:$true] %s330
          %336 = dma.hbm_to_vmem [thread:$0]  %s329, 1024, %s331, %s319, 64, 64, 4
        $region36: #{tpu_custom_call.1} parent=15 // pred_fallthru
          _
        // Predicated region
        $region37: #{tpu_custom_call.1} parent=15 // pred_check
          %p337 = pneg %p177
        $region38: #{tpu_custom_call.1} parent=15 // pred_check_branch
          %339 = sbr.rel (%p337) target = $region40
        $region39: #{tpu_custom_call.1} parent=15 // pred_region
          %s340 = sand.u32 %s167, 1
          %s341 = scalar_lea.sflag [#allocation12], %s340
          %s342 = sand.u32 %s167, 1
          %s343 = smul.addr %s342, 192
          %s344 = scalar_lea.vmem [#allocation11], %s343
          %s345 = smul.u32 4, %s27
          %s347 = ssub.s32 3072, 3072
          %348 = vsyncadd %s341, %s347
          %s349 = smul.addr %s345, 12
          %s350 = smul.addr %s349, 64
          %s351 = scalar_lea.hbm %s5, %s350
          %s352 = sshll.u32 %s344, 4
          %s353 = int_to_ptr.vmem [resolvable:$true] %s352
          %358 = dma.hbm_to_vmem [thread:$0]  %s351, 3072, %s353, %s341, 64, 64, 4
        $region40: #{tpu_custom_call.1} parent=15 // pred_fallthru
          _
      $region16: #{tpu_custom_call.1} parent=5 // pred_fallthru
        _
      %p359 = scmp.le.s32.totalorder 1, %s27
      %p360 = scmp.lt.s32.totalorder %s27, 3
      %p361 = pnand %p359, %p360
      %p362 = pneg %p361
      // Predicated region
      $region41: #{tpu_custom_call.1} parent=5 // pred_check
        _
      $region42: #{tpu_custom_call.1} parent=5 // pred_check_branch
        %364 = sbr.rel (%p361) target = $region44
      $region43: #{tpu_custom_call.1} parent=5 // pred_region
        %s365 = ssub.s32 %s27, 1
        %s366 = sand.u32 %s40, 1
        %s367 = scalar_lea.sflag [#allocation3], %s366
        %s368 = sand.u32 %s40, 1
        %s369 = smul.addr %s368, 4
        %s370 = scalar_lea.vmem [#allocation2], %s369
        // Predicated region
        $region45: #{tpu_custom_call.1} parent=43 // pred_check
          %p371 = pneg %p53
        $region46: #{tpu_custom_call.1} parent=43 // pred_check_branch
          %373 = sbr.rel (%p371) target = $region48
        $region47: #{tpu_custom_call.1} parent=43 // pred_region
          %374 = dma.done %s367, 64
        $region48: #{tpu_custom_call.1} parent=43 // pred_fallthru
          _
        %s375 = sand.u32 %s32, 1
        %s376 = scalar_lea.sflag [#allocation6], %s375
        %s377 = sand.u32 %s66, 1
        %s378 = smul.addr %s377, 96
        %s379 = scalar_lea.vmem [#allocation5], %s378
        // Predicated region
        $region49: #{tpu_custom_call.1} parent=43 // pred_check
          %p380 = pneg %p79
        $region50: #{tpu_custom_call.1} parent=43 // pred_check_branch
          %382 = sbr.rel (%p380) target = $region52
        $region51: #{tpu_custom_call.1} parent=43 // pred_region
          %383 = dma.done %s376, 1536
        $region52: #{tpu_custom_call.1} parent=43 // pred_fallthru
          _
        %s384 = sand.u32 %s32, 1
        %s385 = scalar_lea.sflag [#allocation6], %s384
        %s386 = sand.u32 %s92, 1
        %s387 = smul.addr %s386, 64
        %s388 = scalar_lea.vmem [#allocation7], %s387
        // Predicated region
        $region53: #{tpu_custom_call.1} parent=43 // pred_check
          %p389 = pneg %p105
        $region54: #{tpu_custom_call.1} parent=43 // pred_check_branch
          %391 = sbr.rel (%p389) target = $region56
        $region55: #{tpu_custom_call.1} parent=43 // pred_region
          %392 = dma.done %s385, 1024
        $region56: #{tpu_custom_call.1} parent=43 // pred_fallthru
          _
        %s393 = sand.u32 %s32, 1
        %s394 = scalar_lea.sflag [#allocation9], %s393
        %s395 = sand.u32 %s118, 1
        %s396 = smul.addr %s395, 192
        %s397 = scalar_lea.vmem [#allocation8], %s396
        // Predicated region
        $region57: #{tpu_custom_call.1} parent=43 // pred_check
          %p398 = pneg %p131
        $region58: #{tpu_custom_call.1} parent=43 // pred_check_branch
          %400 = sbr.rel (%p398) target = $region60
        $region59: #{tpu_custom_call.1} parent=43 // pred_region
          %401 = dma.done %s394, 3072
        $region60: #{tpu_custom_call.1} parent=43 // pred_fallthru
          _
        %s402 = sand.u32 %s32, 1
        %s403 = scalar_lea.sflag [#allocation9], %s402
        %s404 = sand.u32 %s144, 1
        %s405 = smul.addr %s404, 64
        %s406 = scalar_lea.vmem [#allocation10], %s405
        // Predicated region
        $region61: #{tpu_custom_call.1} parent=43 // pred_check
          %p407 = pneg %p157
        $region62: #{tpu_custom_call.1} parent=43 // pred_check_branch
          %409 = sbr.rel (%p407) target = $region64
        $region63: #{tpu_custom_call.1} parent=43 // pred_region
          %410 = dma.done %s403, 1024
        $region64: #{tpu_custom_call.1} parent=43 // pred_fallthru
          _
        %s411 = sand.u32 %s170, 1
        %s412 = scalar_lea.sflag [#allocation12], %s411
        %s413 = sand.u32 %s170, 1
        %s414 = smul.addr %s413, 192
        %s415 = scalar_lea.vmem [#allocation11], %s414
        // Predicated region
        $region65: #{tpu_custom_call.1} parent=43 // pred_check
          %p416 = pneg %p183
        $region66: #{tpu_custom_call.1} parent=43 // pred_check_branch
          %418 = sbr.rel (%p416) target = $region68
        $region67: #{tpu_custom_call.1} parent=43 // pred_region
          %419 = dma.done %s412, 3072
        $region68: #{tpu_custom_call.1} parent=43 // pred_fallthru
          _
        %s420 = sand.u32 %s40, 1
        %s421 = scalar_lea.sflag [#allocation3], %s420
        %s422 = sand.u32 %s40, 1
        %s423 = smul.addr %s422, 4
        %s424 = scalar_lea.vmem [#allocation2], %s423
        %p425 = pneg %p53
        %p426 = pneg %p50
        %s427 = sand.u32 %s32, 1
        %s428 = scalar_lea.sflag [#allocation6], %s427
        %s429 = sand.u32 %s66, 1
        %s430 = smul.addr %s429, 96
        %s431 = scalar_lea.vmem [#allocation5], %s430
        %p432 = pneg %p79
        %p433 = pneg %p76
        %s434 = sand.u32 %s32, 1
        %s435 = scalar_lea.sflag [#allocation6], %s434
        %s436 = sand.u32 %s92, 1
        %s437 = smul.addr %s436, 64
        %s438 = scalar_lea.vmem [#allocation7], %s437
        %p439 = pneg %p105
        %p440 = pneg %p102
        %s441 = sand.u32 %s32, 1
        %s442 = scalar_lea.sflag [#allocation9], %s441
        %s443 = sand.u32 %s118, 1
        %s444 = smul.addr %s443, 192
        %s445 = scalar_lea.vmem [#allocation8], %s444
        %p446 = pneg %p131
        %p447 = pneg %p128
        %s448 = sand.u32 %s32, 1
        %s449 = scalar_lea.sflag [#allocation9], %s448
        %s450 = sand.u32 %s144, 1
        %s451 = smul.addr %s450, 64
        %s452 = scalar_lea.vmem [#allocation10], %s451
        %p453 = pneg %p157
        %p454 = pneg %p154
        %s455 = sand.u32 %s170, 1
        %s456 = scalar_lea.sflag [#allocation12], %s455
        %s457 = sand.u32 %s170, 1
        %s458 = smul.addr %s457, 192
        %s459 = scalar_lea.vmem [#allocation11], %s458
        %p460 = pneg %p183
        %p461 = pneg %p180
        %p462 = pneg %p209
        %p463 = pneg %p206
        %s464 = sand.u32 %s196, 1
        %s465 = scalar_lea.sflag [#allocation4], %s464
        %s466 = sand.u32 %s196, 1
        %s467 = smul.addr %s466, 384
        %s468 = scalar_lea.vmem [#allocation13], %s467
        %s469 = smul.u32 4, %s32
        %s470 = smul.u32 4, %s32
        %s471 = smul.u32 4, %s32
        %s472 = smul.u32 4, %s32
        %s473 = smul.u32 4, %s32
        %s474 = smul.u32 4, %s32
        %s475 = smul.u32 4, %s32
        %v477 = vld [vmem:[%s370] sm:$0x1]
        %v478 = vld [vmem:[%s370 + $0x1] sm:$0x1]
        %v479 = vld [vmem:[%s370 + $0x2] sm:$0x1]
        %v480 = vld [vmem:[%s370 + $0x3] sm:$0x1]
        %v481 = vld [vmem:[%s379] sm:$0xff]
        %v482 = vld [vmem:[%s379 + $0x18] sm:$0xff]
        %v483 = vld [vmem:[%s379 + $0x30] sm:$0xff]
        %v484 = vld [vmem:[%s379 + $0x48] sm:$0xff]
        %v485 = vunpack.c.0.s8 %v481
        %v486 = vunpack.c.1.s8 %v481
        %v487 = vunpack.c.2.s8 %v481
        %v488 = vunpack.c.3.s8 %v481
        %v489 = vunpack.c.0.s8 %v482
        %v490 = vunpack.c.1.s8 %v482
        %v491 = vunpack.c.2.s8 %v482
        %v492 = vunpack.c.3.s8 %v482
        %v493 = vunpack.c.0.s8 %v483
        %v494 = vunpack.c.1.s8 %v483
        %v495 = vunpack.c.2.s8 %v483
        %v496 = vunpack.c.3.s8 %v483
        %v497 = vunpack.c.0.s8 %v484
        %v498 = vunpack.c.1.s8 %v484
        %v499 = vunpack.c.2.s8 %v484
        %v500 = vunpack.c.3.s8 %v484
        %v501 = vcvt.s32.f32 %v485
        %v502 = vcvt.s32.f32 %v486
        %v503 = vcvt.s32.f32 %v487
        %v504 = vcvt.s32.f32 %v488
        %v505 = vcvt.s32.f32 %v489
        %v506 = vcvt.s32.f32 %v490
        %v507 = vcvt.s32.f32 %v491
        %v508 = vcvt.s32.f32 %v492
        %v509 = vcvt.s32.f32 %v493
        %v510 = vcvt.s32.f32 %v494
        %v511 = vcvt.s32.f32 %v495
        %v512 = vcvt.s32.f32 %v496
        %v513 = vcvt.s32.f32 %v497
        %v514 = vcvt.s32.f32 %v498
        %v515 = vcvt.s32.f32 %v499
        %v516 = vcvt.s32.f32 %v500
        %vm517 = vcmp.lt.f32.partialorder %v501, 0.0
        %vm518 = vcmp.lt.f32.partialorder %v502, 0.0
        %vm519 = vcmp.lt.f32.partialorder %v503, 0.0
        %vm520 = vcmp.lt.f32.partialorder %v504, 0.0
        %vm521 = vcmp.lt.f32.partialorder %v505, 0.0
        %vm522 = vcmp.lt.f32.partialorder %v506, 0.0
        %vm523 = vcmp.lt.f32.partialorder %v507, 0.0
        %vm524 = vcmp.lt.f32.partialorder %v508, 0.0
        %vm525 = vcmp.lt.f32.partialorder %v509, 0.0
        %vm526 = vcmp.lt.f32.partialorder %v510, 0.0
        %vm527 = vcmp.lt.f32.partialorder %v511, 0.0
        %vm528 = vcmp.lt.f32.partialorder %v512, 0.0
        %vm529 = vcmp.lt.f32.partialorder %v513, 0.0
        %vm530 = vcmp.lt.f32.partialorder %v514, 0.0
        %vm531 = vcmp.lt.f32.partialorder %v515, 0.0
        %vm532 = vcmp.lt.f32.partialorder %v516, 0.0
        %v533 = vadd.f32 %v501, 256.0
        %v534 = vadd.f32 %v502, 256.0
        %v535 = vadd.f32 %v503, 256.0
        %v536 = vadd.f32 %v504, 256.0
        %v537 = vadd.f32 %v505, 256.0
        %v538 = vadd.f32 %v506, 256.0
        %v539 = vadd.f32 %v507, 256.0
        %v540 = vadd.f32 %v508, 256.0
        %v541 = vadd.f32 %v509, 256.0
        %v542 = vadd.f32 %v510, 256.0
        %v543 = vadd.f32 %v511, 256.0
        %v544 = vadd.f32 %v512, 256.0
        %v545 = vadd.f32 %v513, 256.0
        %v546 = vadd.f32 %v514, 256.0
        %v547 = vadd.f32 %v515, 256.0
        %v548 = vadd.f32 %v516, 256.0
        %v549 = vsel %vm517, %v533, %v501
        %v550 = vsel %vm518, %v534, %v502
        %v551 = vsel %vm519, %v535, %v503
        %v552 = vsel %vm520, %v536, %v504
        %v553 = vsel %vm521, %v537, %v505
        %v554 = vsel %vm522, %v538, %v506
        %v555 = vsel %vm523, %v539, %v507
        %v556 = vsel %vm524, %v540, %v508
        %v557 = vsel %vm525, %v541, %v509
        %v558 = vsel %vm526, %v542, %v510
        %v559 = vsel %vm527, %v543, %v511
        %v560 = vsel %vm528, %v544, %v512
        %v561 = vsel %vm529, %v545, %v513
        %v562 = vsel %vm530, %v546, %v514
        %v563 = vsel %vm531, %v547, %v515
        %v564 = vsel %vm532, %v548, %v516
        %v565 = vmul.f32 %v549, 0.003921569
        %v566 = vmul.f32 %v550, 0.003921569
        %v567 = vmul.f32 %v551, 0.003921569
        %v568 = vmul.f32 %v552, 0.003921569
        %v569 = vmul.f32 %v553, 0.003921569
        %v570 = vmul.f32 %v554, 0.003921569
        %v571 = vmul.f32 %v555, 0.003921569
        %v572 = vmul.f32 %v556, 0.003921569
        %v573 = vmul.f32 %v557, 0.003921569
        %v574 = vmul.f32 %v558, 0.003921569
        %v575 = vmul.f32 %v559, 0.003921569
        %v576 = vmul.f32 %v560, 0.003921569
        %v577 = vmul.f32 %v561, 0.003921569
        %v578 = vmul.f32 %v562, 0.003921569
        %v579 = vmul.f32 %v563, 0.003921569
        %v580 = vmul.f32 %v564, 0.003921569
        %s581 = scalar_lea.vmem %s379, 8 [#allocation5]
        %v582 = vld [vmem:[%s581] sm:$0xff]
        %v583 = vld [vmem:[%s581 + $0x18] sm:$0xff]
        %v584 = vld [vmem:[%s581 + $0x30] sm:$0xff]
        %v585 = vld [vmem:[%s581 + $0x48] sm:$0xff]
        %v586 = vunpack.c.0.s8 %v582
        %v587 = vunpack.c.1.s8 %v582
        %v588 = vunpack.c.2.s8 %v582
        %v589 = vunpack.c.3.s8 %v582
        %v590 = vunpack.c.0.s8 %v583
        %v591 = vunpack.c.1.s8 %v583
        %v592 = vunpack.c.2.s8 %v583
        %v593 = vunpack.c.3.s8 %v583
        %v594 = vunpack.c.0.s8 %v584
        %v595 = vunpack.c.1.s8 %v584
        %v596 = vunpack.c.2.s8 %v584
        %v597 = vunpack.c.3.s8 %v584
        %v598 = vunpack.c.0.s8 %v585
        %v599 = vunpack.c.1.s8 %v585
        %v600 = vunpack.c.2.s8 %v585
        %v601 = vunpack.c.3.s8 %v585
        %v602 = vcvt.s32.f32 %v586
        %v603 = vcvt.s32.f32 %v587
        %v604 = vcvt.s32.f32 %v588
        %v605 = vcvt.s32.f32 %v589
        %v606 = vcvt.s32.f32 %v590
        %v607 = vcvt.s32.f32 %v591
        %v608 = vcvt.s32.f32 %v592
        %v609 = vcvt.s32.f32 %v593
        %v610 = vcvt.s32.f32 %v594
        %v611 = vcvt.s32.f32 %v595
        %v612 = vcvt.s32.f32 %v596
        %v613 = vcvt.s32.f32 %v597
        %v614 = vcvt.s32.f32 %v598
        %v615 = vcvt.s32.f32 %v599
        %v616 = vcvt.s32.f32 %v600
        %v617 = vcvt.s32.f32 %v601
        %vm618 = vcmp.lt.f32.partialorder %v602, 0.0
        %vm619 = vcmp.lt.f32.partialorder %v603, 0.0
        %vm620 = vcmp.lt.f32.partialorder %v604, 0.0
        %vm621 = vcmp.lt.f32.partialorder %v605, 0.0
        %vm622 = vcmp.lt.f32.partialorder %v606, 0.0
        %vm623 = vcmp.lt.f32.partialorder %v607, 0.0
        %vm624 = vcmp.lt.f32.partialorder %v608, 0.0
        %vm625 = vcmp.lt.f32.partialorder %v609, 0.0
        %vm626 = vcmp.lt.f32.partialorder %v610, 0.0
        %vm627 = vcmp.lt.f32.partialorder %v611, 0.0
        %vm628 = vcmp.lt.f32.partialorder %v612, 0.0
        %vm629 = vcmp.lt.f32.partialorder %v613, 0.0
        %vm630 = vcmp.lt.f32.partialorder %v614, 0.0
        %vm631 = vcmp.lt.f32.partialorder %v615, 0.0
        %vm632 = vcmp.lt.f32.partialorder %v616, 0.0
        %vm633 = vcmp.lt.f32.partialorder %v617, 0.0
        %v634 = vadd.f32 %v602, 256.0
        %v635 = vadd.f32 %v603, 256.0
        %v636 = vadd.f32 %v604, 256.0
        %v637 = vadd.f32 %v605, 256.0
        %v638 = vadd.f32 %v606, 256.0
        %v639 = vadd.f32 %v607, 256.0
        %v640 = vadd.f32 %v608, 256.0
        %v641 = vadd.f32 %v609, 256.0
        %v642 = vadd.f32 %v610, 256.0
        %v643 = vadd.f32 %v611, 256.0
        %v644 = vadd.f32 %v612, 256.0
        %v645 = vadd.f32 %v613, 256.0
        %v646 = vadd.f32 %v614, 256.0
        %v647 = vadd.f32 %v615, 256.0
        %v648 = vadd.f32 %v616, 256.0
        %v649 = vadd.f32 %v617, 256.0
        %v650 = vsel %vm618, %v634, %v602
        %v651 = vsel %vm619, %v635, %v603
        %v652 = vsel %vm620, %v636, %v604
        %v653 = vsel %vm621, %v637, %v605
        %v654 = vsel %vm622, %v638, %v606
        %v655 = vsel %vm623, %v639, %v607
        %v656 = vsel %vm624, %v640, %v608
        %v657 = vsel %vm625, %v641, %v609
        %v658 = vsel %vm626, %v642, %v610
        %v659 = vsel %vm627, %v643, %v611
        %v660 = vsel %vm628, %v644, %v612
        %v661 = vsel %vm629, %v645, %v613
        %v662 = vsel %vm630, %v646, %v614
        %v663 = vsel %vm631, %v647, %v615
        %v664 = vsel %vm632, %v648, %v616
        %v665 = vsel %vm633, %v649, %v617
        %v666 = vmul.f32 %v650, 0.003921569
        %v667 = vmul.f32 %v651, 0.003921569
        %v668 = vmul.f32 %v652, 0.003921569
        %v669 = vmul.f32 %v653, 0.003921569
        %v670 = vmul.f32 %v654, 0.003921569
        %v671 = vmul.f32 %v655, 0.003921569
        %v672 = vmul.f32 %v656, 0.003921569
        %v673 = vmul.f32 %v657, 0.003921569
        %v674 = vmul.f32 %v658, 0.003921569
        %v675 = vmul.f32 %v659, 0.003921569
        %v676 = vmul.f32 %v660, 0.003921569
        %v677 = vmul.f32 %v661, 0.003921569
        %v678 = vmul.f32 %v662, 0.003921569
        %v679 = vmul.f32 %v663, 0.003921569
        %v680 = vmul.f32 %v664, 0.003921569
        %v681 = vmul.f32 %v665, 0.003921569
        %s682 = scalar_lea.vmem %s379, 16 [#allocation5]
        %v683 = vld [vmem:[%s682] sm:$0xff]
        %v684 = vld [vmem:[%s682 + $0x18] sm:$0xff]
        %v685 = vld [vmem:[%s682 + $0x30] sm:$0xff]
        %v686 = vld [vmem:[%s682 + $0x48] sm:$0xff]
        %v687 = vunpack.c.0.s8 %v683
        %v688 = vunpack.c.1.s8 %v683
        %v689 = vunpack.c.2.s8 %v683
        %v690 = vunpack.c.3.s8 %v683
        %v691 = vunpack.c.0.s8 %v684
        %v692 = vunpack.c.1.s8 %v684
        %v693 = vunpack.c.2.s8 %v684
        %v694 = vunpack.c.3.s8 %v684
        %v695 = vunpack.c.0.s8 %v685
        %v696 = vunpack.c.1.s8 %v685
        %v697 = vunpack.c.2.s8 %v685
        %v698 = vunpack.c.3.s8 %v685
        %v699 = vunpack.c.0.s8 %v686
        %v700 = vunpack.c.1.s8 %v686
        %v701 = vunpack.c.2.s8 %v686
        %v702 = vunpack.c.3.s8 %v686
        %v703 = vcvt.s32.f32 %v687
        %v704 = vcvt.s32.f32 %v688
        %v705 = vcvt.s32.f32 %v689
        %v706 = vcvt.s32.f32 %v690
        %v707 = vcvt.s32.f32 %v691
        %v708 = vcvt.s32.f32 %v692
        %v709 = vcvt.s32.f32 %v693
        %v710 = vcvt.s32.f32 %v694
        %v711 = vcvt.s32.f32 %v695
        %v712 = vcvt.s32.f32 %v696
        %v713 = vcvt.s32.f32 %v697
        %v714 = vcvt.s32.f32 %v698
        %v715 = vcvt.s32.f32 %v699
        %v716 = vcvt.s32.f32 %v700
        %v717 = vcvt.s32.f32 %v701
        %v718 = vcvt.s32.f32 %v702
        %vm719 = vcmp.lt.f32.partialorder %v703, 0.0
        %vm720 = vcmp.lt.f32.partialorder %v704, 0.0
        %vm721 = vcmp.lt.f32.partialorder %v705, 0.0
        %vm722 = vcmp.lt.f32.partialorder %v706, 0.0
        %vm723 = vcmp.lt.f32.partialorder %v707, 0.0
        %vm724 = vcmp.lt.f32.partialorder %v708, 0.0
        %vm725 = vcmp.lt.f32.partialorder %v709, 0.0
        %vm726 = vcmp.lt.f32.partialorder %v710, 0.0
        %vm727 = vcmp.lt.f32.partialorder %v711, 0.0
        %vm728 = vcmp.lt.f32.partialorder %v712, 0.0
        %vm729 = vcmp.lt.f32.partialorder %v713, 0.0
        %vm730 = vcmp.lt.f32.partialorder %v714, 0.0
        %vm731 = vcmp.lt.f32.partialorder %v715, 0.0
        %vm732 = vcmp.lt.f32.partialorder %v716, 0.0
        %vm733 = vcmp.lt.f32.partialorder %v717, 0.0
        %vm734 = vcmp.lt.f32.partialorder %v718, 0.0
        %v735 = vadd.f32 %v703, 256.0
        %v736 = vadd.f32 %v704, 256.0
        %v737 = vadd.f32 %v705, 256.0
        %v738 = vadd.f32 %v706, 256.0
        %v739 = vadd.f32 %v707, 256.0
        %v740 = vadd.f32 %v708, 256.0
        %v741 = vadd.f32 %v709, 256.0
        %v742 = vadd.f32 %v710, 256.0
        %v743 = vadd.f32 %v711, 256.0
        %v744 = vadd.f32 %v712, 256.0
        %v745 = vadd.f32 %v713, 256.0
        %v746 = vadd.f32 %v714, 256.0
        %v747 = vadd.f32 %v715, 256.0
        %v748 = vadd.f32 %v716, 256.0
        %v749 = vadd.f32 %v717, 256.0
        %v750 = vadd.f32 %v718, 256.0
        %v751 = vsel %vm719, %v735, %v703
        %v752 = vsel %vm720, %v736, %v704
        %v753 = vsel %vm721, %v737, %v705
        %v754 = vsel %vm722, %v738, %v706
        %v755 = vsel %vm723, %v739, %v707
        %v756 = vsel %vm724, %v740, %v708
        %v757 = vsel %vm725, %v741, %v709
        %v758 = vsel %vm726, %v742, %v710
        %v759 = vsel %vm727, %v743, %v711
        %v760 = vsel %vm728, %v744, %v712
        %v761 = vsel %vm729, %v745, %v713
        %v762 = vsel %vm730, %v746, %v714
        %v763 = vsel %vm731, %v747, %v715
        %v764 = vsel %vm732, %v748, %v716
        %v765 = vsel %vm733, %v749, %v717
        %v766 = vsel %vm734, %v750, %v718
        %v767 = vmul.f32 %v751, 0.003921569
        %v768 = vmul.f32 %v752, 0.003921569
        %v769 = vmul.f32 %v753, 0.003921569
        %v770 = vmul.f32 %v754, 0.003921569
        %v771 = vmul.f32 %v755, 0.003921569
        %v772 = vmul.f32 %v756, 0.003921569
        %v773 = vmul.f32 %v757, 0.003921569
        %v774 = vmul.f32 %v758, 0.003921569
        %v775 = vmul.f32 %v759, 0.003921569
        %v776 = vmul.f32 %v760, 0.003921569
        %v777 = vmul.f32 %v761, 0.003921569
        %v778 = vmul.f32 %v762, 0.003921569
        %v779 = vmul.f32 %v763, 0.003921569
        %v780 = vmul.f32 %v764, 0.003921569
        %v781 = vmul.f32 %v765, 0.003921569
        %v782 = vmul.f32 %v766, 0.003921569
        %799 = vrot.lane.b32.xlu0 %v666, 32
        %v800 = vpop.permute.xlu0 %799
        %801 = vrot.lane.b32.xlu0 %v667, 32
        %v802 = vpop.permute.xlu0 %801
        %803 = vrot.lane.b32.xlu0 %v668, 32
        %v804 = vpop.permute.xlu0 %803
        %805 = vrot.lane.b32.xlu0 %v669, 32
        %v806 = vpop.permute.xlu0 %805
        %807 = vrot.lane.b32.xlu0 %v670, 32
        %v808 = vpop.permute.xlu0 %807
        %809 = vrot.lane.b32.xlu0 %v671, 32
        %v810 = vpop.permute.xlu0 %809
        %811 = vrot.lane.b32.xlu0 %v672, 32
        %v812 = vpop.permute.xlu0 %811
        %813 = vrot.lane.b32.xlu0 %v673, 32
        %v814 = vpop.permute.xlu0 %813
        %815 = vrot.lane.b32.xlu0 %v674, 32
        %v816 = vpop.permute.xlu0 %815
        %817 = vrot.lane.b32.xlu0 %v675, 32
        %v818 = vpop.permute.xlu0 %817
        %819 = vrot.lane.b32.xlu0 %v676, 32
        %v820 = vpop.permute.xlu0 %819
        %821 = vrot.lane.b32.xlu0 %v677, 32
        %v822 = vpop.permute.xlu0 %821
        %823 = vrot.lane.b32.xlu0 %v678, 32
        %v824 = vpop.permute.xlu0 %823
        %825 = vrot.lane.b32.xlu0 %v679, 32
        %v826 = vpop.permute.xlu0 %825
        %827 = vrot.lane.b32.xlu0 %v680, 32
        %v828 = vpop.permute.xlu0 %827
        %829 = vrot.lane.b32.xlu0 %v681, 32
        %v830 = vpop.permute.xlu0 %829
        %863 = vrot.lane.b32.xlu0 %v767, 64
        %v864 = vpop.permute.xlu0 %863
        %865 = vrot.lane.b32.xlu0 %v768, 64
        %v866 = vpop.permute.xlu0 %865
        %867 = vrot.lane.b32.xlu0 %v769, 64
        %v868 = vpop.permute.xlu0 %867
        %869 = vrot.lane.b32.xlu0 %v770, 64
        %v870 = vpop.permute.xlu0 %869
        %871 = vrot.lane.b32.xlu0 %v771, 64
        %v872 = vpop.permute.xlu0 %871
        %873 = vrot.lane.b32.xlu0 %v772, 64
        %v874 = vpop.permute.xlu0 %873
        %875 = vrot.lane.b32.xlu0 %v773, 64
        %v876 = vpop.permute.xlu0 %875
        %877 = vrot.lane.b32.xlu0 %v774, 64
        %v878 = vpop.permute.xlu0 %877
        %879 = vrot.lane.b32.xlu0 %v775, 64
        %v880 = vpop.permute.xlu0 %879
        %881 = vrot.lane.b32.xlu0 %v776, 64
        %v882 = vpop.permute.xlu0 %881
        %883 = vrot.lane.b32.xlu0 %v777, 64
        %v884 = vpop.permute.xlu0 %883
        %885 = vrot.lane.b32.xlu0 %v778, 64
        %v886 = vpop.permute.xlu0 %885
        %887 = vrot.lane.b32.xlu0 %v779, 64
        %v888 = vpop.permute.xlu0 %887
        %889 = vrot.lane.b32.xlu0 %v780, 64
        %v890 = vpop.permute.xlu0 %889
        %891 = vrot.lane.b32.xlu0 %v781, 64
        %v892 = vpop.permute.xlu0 %891
        %893 = vrot.lane.b32.xlu0 %v782, 64
        %v894 = vpop.permute.xlu0 %893
        %vm911 = vcmask 261120
        %v912 = vsel %vm911, %v565, %v800
        %v913 = vsel %vm911, %v566, %v802
        %v914 = vsel %vm911, %v567, %v804
        %v915 = vsel %vm911, %v568, %v806
        %v916 = vsel %vm911, %v569, %v808
        %v917 = vsel %vm911, %v570, %v810
        %v918 = vsel %vm911, %v571, %v812
        %v919 = vsel %vm911, %v572, %v814
        %v920 = vsel %vm911, %v573, %v816
        %v921 = vsel %vm911, %v574, %v818
        %v922 = vsel %vm911, %v575, %v820
        %v923 = vsel %vm911, %v576, %v822
        %v924 = vsel %vm911, %v577, %v824
        %v925 = vsel %vm911, %v578, %v826
        %v926 = vsel %vm911, %v579, %v828
        %v927 = vsel %vm911, %v580, %v830
        %vm928 = vcmask 523264
        %v929 = vsel %vm928, %v912, %v864
        %v930 = vsel %vm928, %v913, %v866
        %v931 = vsel %vm928, %v914, %v868
        %v932 = vsel %vm928, %v915, %v870
        %v933 = vsel %vm928, %v916, %v872
        %v934 = vsel %vm928, %v917, %v874
        %v935 = vsel %vm928, %v918, %v876
        %v936 = vsel %vm928, %v919, %v878
        %v937 = vsel %vm928, %v920, %v880
        %v938 = vsel %vm928, %v921, %v882
        %v939 = vsel %vm928, %v922, %v884
        %v940 = vsel %vm928, %v923, %v886
        %v941 = vsel %vm928, %v924, %v888
        %v942 = vsel %vm928, %v925, %v890
        %v943 = vsel %vm928, %v926, %v892
        %v944 = vsel %vm928, %v927, %v894
        %v945 = vld [vmem:[%s388] sm:$0xf]
        %v946 = vld [vmem:[%s388 + $0x4] sm:$0xf]
        %v947 = vld [vmem:[%s388 + $0x8] sm:$0xf]
        %v948 = vld [vmem:[%s388 + $0xc] sm:$0xf]
        %v949 = vld [vmem:[%s388 + $0x10] sm:$0xf]
        %v950 = vld [vmem:[%s388 + $0x14] sm:$0xf]
        %v951 = vld [vmem:[%s388 + $0x18] sm:$0xf]
        %v952 = vld [vmem:[%s388 + $0x1c] sm:$0xf]
        %v953 = vld [vmem:[%s388 + $0x20] sm:$0xf]
        %v954 = vld [vmem:[%s388 + $0x24] sm:$0xf]
        %v955 = vld [vmem:[%s388 + $0x28] sm:$0xf]
        %v956 = vld [vmem:[%s388 + $0x2c] sm:$0xf]
        %v957 = vld [vmem:[%s388 + $0x30] sm:$0xf]
        %v958 = vld [vmem:[%s388 + $0x34] sm:$0xf]
        %v959 = vld [vmem:[%s388 + $0x38] sm:$0xf]
        %v960 = vld [vmem:[%s388 + $0x3c] sm:$0xf]
        %v961 = vpack.c.bf16 %v930, %v929
        %v962 = vpack.c.bf16 %v932, %v931
        %v963 = vpack.c.bf16 %v934, %v933
        %v964 = vpack.c.bf16 %v936, %v935
        %v965 = vpack.c.bf16 %v938, %v937
        %v966 = vpack.c.bf16 %v940, %v939
        %v967 = vpack.c.bf16 %v942, %v941
        %v968 = vpack.c.bf16 %v944, %v943
        %v973 = vunpack.c.l.b16 %v945
        %v974 = vunpack.c.l.b16 %v946
        %v975 = vunpack.c.l.b16 %v947
        %v976 = vunpack.c.l.b16 %v948
        %v977 = vpack.c.b16 %v974, %v973
        %v978 = vpack.c.b16 %v976, %v975
        %v980 = vsel %vm911, %v977, 0
        %v983 = vsel %vm911, %v978, 0
        %985 = vmatprep.subr.bf16.mxu0 0
        %986 = vmatpush1.bf16.msra.mxu0 %v961
        %987 = vmatprep.subr.bf16.mxu0 0
        %988 = vmatpush1.bf16.msra.mxu0 %v962
        %989 = vmatprep.subr.bf16.mxu0 0
        %990 = vmatpush1.bf16.msra.mxu0 0
        %991 = vmatprep.subr.bf16.mxu0 0
        %992 = vmatpush1.bf16.msra.mxu0 0
        %993 = vmatprep.subr.bf16.mxu0 0
        %994 = vmatpush1.bf16.msra.mxu0 0
        %995 = vmatprep.subr.bf16.mxu0 0
        %996 = vmatpush1.bf16.msra.mxu0 0
        %997 = vmatprep.subr.bf16.mxu0 0
        %998 = vmatpush1.bf16.msra.mxu0 0
        %999 = vmatprep.subr.bf16.mxu0 0
        %1000 = vmatpush1.bf16.msra.mxu0 0
        %1001 = vmatprep.subr.bf16.mxu0 0
        %1002 = vmatpush1.bf16.msra.mxu0 0
        %1003 = vmatprep.subr.bf16.mxu0 0
        %1004 = vmatpush1.bf16.msra.mxu0 0
        %1005 = vmatprep.subr.bf16.mxu0 0
        %1006 = vmatpush1.bf16.msra.mxu0 0
        %1007 = vmatprep.subr.bf16.mxu0 0
        %1008 = vmatpush1.bf16.msra.mxu0 0
        %1009 = vmatprep.subr.bf16.mxu0 0
        %1010 = vmatpush1.bf16.msra.mxu0 0
        %1011 = vmatprep.subr.bf16.mxu0 0
        %1012 = vmatpush1.bf16.msra.mxu0 0
        %1013 = vmatprep.subr.bf16.mxu0 0
        %1014 = vmatpush1.bf16.msra.mxu0 0
        %1015 = vmatprep.subr.bf16.mxu0 0
        %1016 = vmatpush1.bf16.msra.mxu0 0
        %1017 = vmatprep.mubr.bf16.mxu0 0
        %1018 = vmatmul.mubr.bf16.gmra.mrb[0].mxu0 %v980
        %v1019 = vpop.f32.mrb[0].mxu0
        %v1020 = vadd.f32 0.0, %v1019
        %v1021 = vpop.f32.mrb[0].mxu0
        %v1022 = vpop.f32.mrb[0].mxu0
        %v1023 = vadd.f32 0.0, %v1022
        %v1024 = vpop.f32.mrb[0].mxu0
        %1025 = vmatprep.mubr.bf16.mxu0 0
        %1026 = vmatmul.mubr.bf16.gmra.mrb[0].mxu0 %v983
        %v1027 = vpop.f32.mrb[0].mxu0
        %v1028 = vadd.f32 0.0, %v1027
        %v1029 = vpop.f32.mrb[0].mxu0
        %v1030 = vpop.f32.mrb[0].mxu0
        %v1031 = vadd.f32 0.0, %v1030
        %v1032 = vpop.f32.mrb[0].mxu0
        %1033 = vdwg.mxu0
        %v1038 = vunpack.c.l.b16 %v949
        %v1039 = vunpack.c.l.b16 %v950
        %v1040 = vunpack.c.l.b16 %v951
        %v1041 = vunpack.c.l.b16 %v952
        %v1042 = vpack.c.b16 %v1039, %v1038
        %v1043 = vpack.c.b16 %v1041, %v1040
        %v1045 = vsel %vm911, %v1042, 0
        %v1048 = vsel %vm911, %v1043, 0
        %1050 = vmatprep.subr.bf16.mxu0 0
        %1051 = vmatpush1.bf16.msra.mxu0 %v963
        %1052 = vmatprep.subr.bf16.mxu0 0
        %1053 = vmatpush1.bf16.msra.mxu0 %v964
        %1054 = vmatprep.subr.bf16.mxu0 0
        %1055 = vmatpush1.bf16.msra.mxu0 0
        %1056 = vmatprep.subr.bf16.mxu0 0
        %1057 = vmatpush1.bf16.msra.mxu0 0
        %1058 = vmatprep.subr.bf16.mxu0 0
        %1059 = vmatpush1.bf16.msra.mxu0 0
        %1060 = vmatprep.subr.bf16.mxu0 0
        %1061 = vmatpush1.bf16.msra.mxu0 0
        %1062 = vmatprep.subr.bf16.mxu0 0
        %1063 = vmatpush1.bf16.msra.mxu0 0
        %1064 = vmatprep.subr.bf16.mxu0 0
        %1065 = vmatpush1.bf16.msra.mxu0 0
        %1066 = vmatprep.subr.bf16.mxu0 0
        %1067 = vmatpush1.bf16.msra.mxu0 0
        %1068 = vmatprep.subr.bf16.mxu0 0
        %1069 = vmatpush1.bf16.msra.mxu0 0
        %1070 = vmatprep.subr.bf16.mxu0 0
        %1071 = vmatpush1.bf16.msra.mxu0 0
        %1072 = vmatprep.subr.bf16.mxu0 0
        %1073 = vmatpush1.bf16.msra.mxu0 0
        %1074 = vmatprep.subr.bf16.mxu0 0
        %1075 = vmatpush1.bf16.msra.mxu0 0
        %1076 = vmatprep.subr.bf16.mxu0 0
        %1077 = vmatpush1.bf16.msra.mxu0 0
        %1078 = vmatprep.subr.bf16.mxu0 0
        %1079 = vmatpush1.bf16.msra.mxu0 0
        %1080 = vmatprep.subr.bf16.mxu0 0
        %1081 = vmatpush1.bf16.msra.mxu0 0
        %1082 = vmatprep.mubr.bf16.mxu0 0
        %1083 = vmatmul.mubr.bf16.gmra.mrb[0].mxu0 %v1045
        %v1084 = vpop.f32.mrb[0].mxu0
        %v1085 = vadd.f32 0.0, %v1084
        %v1086 = vpop.f32.mrb[0].mxu0
        %v1087 = vpop.f32.mrb[0].mxu0
        %v1088 = vadd.f32 0.0, %v1087
        %v1089 = vpop.f32.mrb[0].mxu0
        %1090 = vmatprep.mubr.bf16.mxu0 0
        %1091 = vmatmul.mubr.bf16.gmra.mrb[0].mxu0 %v1048
        %v1092 = vpop.f32.mrb[0].mxu0
        %v1093 = vadd.f32 0.0, %v1092
        %v1094 = vpop.f32.mrb[0].mxu0
        %v1095 = vpop.f32.mrb[0].mxu0
        %v1096 = vadd.f32 0.0, %v1095
        %v1097 = vpop.f32.mrb[0].mxu0
        %1098 = vdwg.mxu0
        %v1103 = vunpack.c.l.b16 %v953
        %v1104 = vunpack.c.l.b16 %v954
        %v1105 = vunpack.c.l.b16 %v955
        %v1106 = vunpack.c.l.b16 %v956
        %v1107 = vpack.c.b16 %v1104, %v1103
        %v1108 = vpack.c.b16 %v1106, %v1105
        %v1110 = vsel %vm911, %v1107, 0
        %v1113 = vsel %vm911, %v1108, 0
        %1115 = vmatprep.subr.bf16.mxu0 0
        %1116 = vmatpush1.bf16.msra.mxu0 %v965
        %1117 = vmatprep.subr.bf16.mxu0 0
        %1118 = vmatpush1.bf16.msra.mxu0 %v966
        %1119 = vmatprep.subr.bf16.mxu0 0
        %1120 = vmatpush1.bf16.msra.mxu0 0
        %1121 = vmatprep.subr.bf16.mxu0 0
        %1122 = vmatpush1.bf16.msra.mxu0 0
        %1123 = vmatprep.subr.bf16.mxu0 0
        %1124 = vmatpush1.bf16.msra.mxu0 0
        %1125 = vmatprep.subr.bf16.mxu0 0
        %1126 = vmatpush1.bf16.msra.mxu0 0
        %1127 = vmatprep.subr.bf16.mxu0 0
        %1128 = vmatpush1.bf16.msra.mxu0 0
        %1129 = vmatprep.subr.bf16.mxu0 0
        %1130 = vmatpush1.bf16.msra.mxu0 0
        %1131 = vmatprep.subr.bf16.mxu0 0
        %1132 = vmatpush1.bf16.msra.mxu0 0
        %1133 = vmatprep.subr.bf16.mxu0 0
        %1134 = vmatpush1.bf16.msra.mxu0 0
        %1135 = vmatprep.subr.bf16.mxu0 0
        %1136 = vmatpush1.bf16.msra.mxu0 0
        %1137 = vmatprep.subr.bf16.mxu0 0
        %1138 = vmatpush1.bf16.msra.mxu0 0
        %1139 = vmatprep.subr.bf16.mxu0 0
        %1140 = vmatpush1.bf16.msra.mxu0 0
        %1141 = vmatprep.subr.bf16.mxu0 0
        %1142 = vmatpush1.bf16.msra.mxu0 0
        %1143 = vmatprep.subr.bf16.mxu0 0
        %1144 = vmatpush1.bf16.msra.mxu0 0
        %1145 = vmatprep.subr.bf16.mxu0 0
        %1146 = vmatpush1.bf16.msra.mxu0 0
        %1147 = vmatprep.mubr.bf16.mxu0 0
        %1148 = vmatmul.mubr.bf16.gmra.mrb[0].mxu0 %v1110
        %v1149 = vpop.f32.mrb[0].mxu0
        %v1150 = vadd.f32 0.0, %v1149
        %v1151 = vpop.f32.mrb[0].mxu0
        %v1152 = vpop.f32.mrb[0].mxu0
        %v1153 = vadd.f32 0.0, %v1152
        %v1154 = vpop.f32.mrb[0].mxu0
        %1155 = vmatprep.mubr.bf16.mxu0 0
        %1156 = vmatmul.mubr.bf16.gmra.mrb[0].mxu0 %v1113
        %v1157 = vpop.f32.mrb[0].mxu0
        %v1158 = vadd.f32 0.0, %v1157
        %v1159 = vpop.f32.mrb[0].mxu0
        %v1160 = vpop.f32.mrb[0].mxu0
        %v1161 = vadd.f32 0.0, %v1160
        %v1162 = vpop.f32.mrb[0].mxu0
        %1163 = vdwg.mxu0
        %v1168 = vunpack.c.l.b16 %v957
        %v1169 = vunpack.c.l.b16 %v958
        %v1170 = vunpack.c.l.b16 %v959
        %v1171 = vunpack.c.l.b16 %v960
        %v1172 = vpack.c.b16 %v1169, %v1168
        %v1173 = vpack.c.b16 %v1171, %v1170
        %v1175 = vsel %vm911, %v1172, 0
        %v1178 = vsel %vm911, %v1173, 0
        %1180 = vmatprep.subr.bf16.mxu0 0
        %1181 = vmatpush1.bf16.msra.mxu0 %v967
        %1182 = vmatprep.subr.bf16.mxu0 0
        %1183 = vmatpush1.bf16.msra.mxu0 %v968
        %1184 = vmatprep.subr.bf16.mxu0 0
        %1185 = vmatpush1.bf16.msra.mxu0 0
        %1186 = vmatprep.subr.bf16.mxu0 0
        %1187 = vmatpush1.bf16.msra.mxu0 0
        %1188 = vmatprep.subr.bf16.mxu0 0
        %1189 = vmatpush1.bf16.msra.mxu0 0
        %1190 = vmatprep.subr.bf16.mxu0 0
        %1191 = vmatpush1.bf16.msra.mxu0 0
        %1192 = vmatprep.subr.bf16.mxu0 0
        %1193 = vmatpush1.bf16.msra.mxu0 0
        %1194 = vmatprep.subr.bf16.mxu0 0
        %1195 = vmatpush1.bf16.msra.mxu0 0
        %1196 = vmatprep.subr.bf16.mxu0 0
        %1197 = vmatpush1.bf16.msra.mxu0 0
        %1198 = vmatprep.subr.bf16.mxu0 0
        %1199 = vmatpush1.bf16.msra.mxu0 0
        %1200 = vmatprep.subr.bf16.mxu0 0
        %1201 = vmatpush1.bf16.msra.mxu0 0
        %1202 = vmatprep.subr.bf16.mxu0 0
        %1203 = vmatpush1.bf16.msra.mxu0 0
        %1204 = vmatprep.subr.bf16.mxu0 0
        %1205 = vmatpush1.bf16.msra.mxu0 0
        %1206 = vmatprep.subr.bf16.mxu0 0
        %1207 = vmatpush1.bf16.msra.mxu0 0
        %1208 = vmatprep.subr.bf16.mxu0 0
        %1209 = vmatpush1.bf16.msra.mxu0 0
        %1210 = vmatprep.subr.bf16.mxu0 0
        %1211 = vmatpush1.bf16.msra.mxu0 0
        %1212 = vmatprep.mubr.bf16.mxu0 0
        %1213 = vmatmul.mubr.bf16.gmra.mrb[0].mxu0 %v1175
        %v1214 = vpop.f32.mrb[0].mxu0
        %v1215 = vadd.f32 0.0, %v1214
        %v1216 = vpop.f32.mrb[0].mxu0
        %v1217 = vpop.f32.mrb[0].mxu0
        %v1218 = vadd.f32 0.0, %v1217
        %v1219 = vpop.f32.mrb[0].mxu0
        %1220 = vmatprep.mubr.bf16.mxu0 0
        %1221 = vmatmul.mubr.bf16.gmra.mrb[0].mxu0 %v1178
        %v1222 = vpop.f32.mrb[0].mxu0
        %v1223 = vadd.f32 0.0, %v1222
        %v1224 = vpop.f32.mrb[0].mxu0
        %v1225 = vpop.f32.mrb[0].mxu0
        %v1226 = vadd.f32 0.0, %v1225
        %v1227 = vpop.f32.mrb[0].mxu0
        %1228 = vdwg.mxu0
        %v1229 = vpack.c.bf16 %v1023, %v1020
        %v1230 = vpack.c.bf16 %v1031, %v1028
        %v1231 = vpack.c.bf16 %v1088, %v1085
        %v1232 = vpack.c.bf16 %v1096, %v1093
        %v1233 = vpack.c.bf16 %v1153, %v1150
        %v1234 = vpack.c.bf16 %v1161, %v1158
        %v1235 = vpack.c.bf16 %v1218, %v1215
        %v1236 = vpack.c.bf16 %v1226, %v1223
        %v1237 = vld [vmem:[%s397] sm:$0xf]
        %v1238 = vld [vmem:[%s397 + $0x4] sm:$0xf]
        %v1239 = vld [vmem:[%s397 + $0x8] sm:$0xf]
        %v1240 = vld [vmem:[%s397 + $0xc] sm:$0xf]
        %v1241 = vld [vmem:[%s397 + $0x10] sm:$0xf]
        %v1242 = vld [vmem:[%s397 + $0x14] sm:$0xf]
        %v1243 = vld [vmem:[%s397 + $0x18] sm:$0xf]
        %v1244 = vld [vmem:[%s397 + $0x1c] sm:$0xf]
        %v1245 = vld [vmem:[%s397 + $0x20] sm:$0xf]
        %v1246 = vld [vmem:[%s397 + $0x24] sm:$0xf]
        %v1247 = vld [vmem:[%s397 + $0x28] sm:$0xf]
        %v1248 = vld [vmem:[%s397 + $0x2c] sm:$0xf]
        %v1249 = vld [vmem:[%s397 + $0x30] sm:$0xf]
        %v1250 = vld [vmem:[%s397 + $0x34] sm:$0xf]
        %v1251 = vld [vmem:[%s397 + $0x38] sm:$0xf]
        %v1252 = vld [vmem:[%s397 + $0x3c] sm:$0xf]
        %v1253 = vld [vmem:[%s397 + $0x40] sm:$0xf]
        %v1254 = vld [vmem:[%s397 + $0x44] sm:$0xf]
        %v1255 = vld [vmem:[%s397 + $0x48] sm:$0xf]
        %v1256 = vld [vmem:[%s397 + $0x4c] sm:$0xf]
        %v1257 = vld [vmem:[%s397 + $0x50] sm:$0xf]
        %v1258 = vld [vmem:[%s397 + $0x54] sm:$0xf]
        %v1259 = vld [vmem:[%s397 + $0x58] sm:$0xf]
        %v1260 = vld [vmem:[%s397 + $0x5c] sm:$0xf]
        %v1261 = vld [vmem:[%s397 + $0x60] sm:$0xf]
        %v1262 = vld [vmem:[%s397 + $0x64] sm:$0xf]
        %v1263 = vld [vmem:[%s397 + $0x68] sm:$0xf]
        %v1264 = vld [vmem:[%s397 + $0x6c] sm:$0xf]
        %v1265 = vld [vmem:[%s397 + $0x70] sm:$0xf]
        %v1266 = vld [vmem:[%s397 + $0x74] sm:$0xf]
        %v1267 = vld [vmem:[%s397 + $0x78] sm:$0xf]
        %v1268 = vld [vmem:[%s397 + $0x7c] sm:$0xf]
        %v1269 = vld [vmem:[%s397 + $0x80] sm:$0xf]
        %v1270 = vld [vmem:[%s397 + $0x84] sm:$0xf]
        %v1271 = vld [vmem:[%s397 + $0x88] sm:$0xf]
        %v1272 = vld [vmem:[%s397 + $0x8c] sm:$0xf]
        %v1273 = vld [vmem:[%s397 + $0x90] sm:$0xf]
        %v1274 = vld [vmem:[%s397 + $0x94] sm:$0xf]
        %v1275 = vld [vmem:[%s397 + $0x98] sm:$0xf]
        %v1276 = vld [vmem:[%s397 + $0x9c] sm:$0xf]
        %v1277 = vld [vmem:[%s397 + $0xa0] sm:$0xf]
        %v1278 = vld [vmem:[%s397 + $0xa4] sm:$0xf]
        %v1279 = vld [vmem:[%s397 + $0xa8] sm:$0xf]
        %v1280 = vld [vmem:[%s397 + $0xac] sm:$0xf]
        %v1281 = vld [vmem:[%s397 + $0xb0] sm:$0xf]
        %v1282 = vld [vmem:[%s397 + $0xb4] sm:$0xf]
        %v1283 = vld [vmem:[%s397 + $0xb8] sm:$0xf]
        %v1284 = vld [vmem:[%s397 + $0xbc] sm:$0xf]
        %v1297 = vunpack.c.l.b16 %v1237
        %v1298 = vunpack.c.l.b16 %v1238
        %v1299 = vunpack.c.l.b16 %v1239
        %v1300 = vunpack.c.l.b16 %v1240
        %v1301 = vunpack.c.l.b16 %v1241
        %v1302 = vunpack.c.l.b16 %v1242
        %v1303 = vunpack.c.l.b16 %v1243
        %v1304 = vunpack.c.l.b16 %v1244
        %v1305 = vunpack.c.l.b16 %v1245
        %v1306 = vunpack.c.l.b16 %v1246
        %v1307 = vunpack.c.l.b16 %v1247
        %v1308 = vunpack.c.l.b16 %v1248
        %v1309 = vpack.c.b16 %v1298, %v1297
        %v1310 = vpack.c.b16 %v1300, %v1299
        %v1311 = vpack.c.b16 %v1302, %v1301
        %v1312 = vpack.c.b16 %v1304, %v1303
        %v1313 = vpack.c.b16 %v1306, %v1305
        %v1314 = vpack.c.b16 %v1308, %v1307
        %vm1321 = vcmask 785408
        %v1323 = vsel %vm1321, %v1229, 0
        %v1326 = vsel %vm1321, %v1230, 0
        %1328 = vmatprep.subr.bf16.mxu0 0
        %1329 = vmatpush1.bf16.msra.mxu0 %v1309
        %1330 = vmatprep.subr.bf16.mxu0 0
        %1331 = vmatpush1.bf16.msra.mxu0 %v1310
        %1332 = vmatprep.subr.bf16.mxu0 0
        %1333 = vmatpush1.bf16.msra.mxu0 %v1311
        %1334 = vmatprep.subr.bf16.mxu0 0
        %1335 = vmatpush1.bf16.msra.mxu0 %v1312
        %1336 = vmatprep.subr.bf16.mxu0 0
        %1337 = vmatpush1.bf16.msra.mxu0 %v1313
        %1338 = vmatprep.subr.bf16.mxu0 0
        %1339 = vmatpush1.bf16.msra.mxu0 %v1314
        %1340 = vmatprep.subr.bf16.mxu0 0
        %1341 = vmatpush1.bf16.msra.mxu0 0
        %1342 = vmatprep.subr.bf16.mxu0 0
        %1343 = vmatpush1.bf16.msra.mxu0 0
        %1344 = vmatprep.subr.bf16.mxu0 0
        %1345 = vmatpush1.bf16.msra.mxu0 0
        %1346 = vmatprep.subr.bf16.mxu0 0
        %1347 = vmatpush1.bf16.msra.mxu0 0
        %1348 = vmatprep.subr.bf16.mxu0 0
        %1349 = vmatpush1.bf16.msra.mxu0 0
        %1350 = vmatprep.subr.bf16.mxu0 0
        %1351 = vmatpush1.bf16.msra.mxu0 0
        %1352 = vmatprep.subr.bf16.mxu0 0
        %1353 = vmatpush1.bf16.msra.mxu0 0
        %1354 = vmatprep.subr.bf16.mxu0 0
        %1355 = vmatpush1.bf16.msra.mxu0 0
        %1356 = vmatprep.subr.bf16.mxu0 0
        %1357 = vmatpush1.bf16.msra.mxu0 0
        %1358 = vmatprep.subr.bf16.mxu0 0
        %1359 = vmatpush1.bf16.msra.mxu0 0
        %1360 = vmatprep.mubr.bf16.mxu0 0
        %1361 = vmatmul.mubr.bf16.gmra.mrb[0].mxu0 %v1323
        %v1362 = vpop.f32.mrb[0].mxu0
        %v1363 = vadd.f32 0.0, %v1362
        %v1364 = vpop.f32.mrb[0].mxu0
        %v1365 = vpop.f32.mrb[0].mxu0
        %v1366 = vadd.f32 0.0, %v1365
        %v1367 = vpop.f32.mrb[0].mxu0
        %1368 = vmatprep.mubr.bf16.mxu0 0
        %1369 = vmatmul.mubr.bf16.gmra.mrb[0].mxu0 %v1326
        %v1370 = vpop.f32.mrb[0].mxu0
        %v1371 = vadd.f32 0.0, %v1370
        %v1372 = vpop.f32.mrb[0].mxu0
        %v1373 = vpop.f32.mrb[0].mxu0
        %v1374 = vadd.f32 0.0, %v1373
        %v1375 = vpop.f32.mrb[0].mxu0
        %1376 = vdwg.mxu0
        %v1389 = vunpack.c.l.b16 %v1249
        %v1390 = vunpack.c.l.b16 %v1250
        %v1391 = vunpack.c.l.b16 %v1251
        %v1392 = vunpack.c.l.b16 %v1252
        %v1393 = vunpack.c.l.b16 %v1253
        %v1394 = vunpack.c.l.b16 %v1254
        %v1395 = vunpack.c.l.b16 %v1255
        %v1396 = vunpack.c.l.b16 %v1256
        %v1397 = vunpack.c.l.b16 %v1257
        %v1398 = vunpack.c.l.b16 %v1258
        %v1399 = vunpack.c.l.b16 %v1259
        %v1400 = vunpack.c.l.b16 %v1260
        %v1401 = vpack.c.b16 %v1390, %v1389
        %v1402 = vpack.c.b16 %v1392, %v1391
        %v1403 = vpack.c.b16 %v1394, %v1393
        %v1404 = vpack.c.b16 %v1396, %v1395
        %v1405 = vpack.c.b16 %v1398, %v1397
        %v1406 = vpack.c.b16 %v1400, %v1399
        %v1414 = vsel %vm1321, %v1231, 0
        %v1417 = vsel %vm1321, %v1232, 0
        %1419 = vmatprep.subr.bf16.mxu0 0
        %1420 = vmatpush1.bf16.msra.mxu0 %v1401
        %1421 = vmatprep.subr.bf16.mxu0 0
        %1422 = vmatpush1.bf16.msra.mxu0 %v1402
        %1423 = vmatprep.subr.bf16.mxu0 0
        %1424 = vmatpush1.bf16.msra.mxu0 %v1403
        %1425 = vmatprep.subr.bf16.mxu0 0
        %1426 = vmatpush1.bf16.msra.mxu0 %v1404
        %1427 = vmatprep.subr.bf16.mxu0 0
        %1428 = vmatpush1.bf16.msra.mxu0 %v1405
        %1429 = vmatprep.subr.bf16.mxu0 0
        %1430 = vmatpush1.bf16.msra.mxu0 %v1406
        %1431 = vmatprep.subr.bf16.mxu0 0
        %1432 = vmatpush1.bf16.msra.mxu0 0
        %1433 = vmatprep.subr.bf16.mxu0 0
        %1434 = vmatpush1.bf16.msra.mxu0 0
        %1435 = vmatprep.subr.bf16.mxu0 0
        %1436 = vmatpush1.bf16.msra.mxu0 0
        %1437 = vmatprep.subr.bf16.mxu0 0
        %1438 = vmatpush1.bf16.msra.mxu0 0
        %1439 = vmatprep.subr.bf16.mxu0 0
        %1440 = vmatpush1.bf16.msra.mxu0 0
        %1441 = vmatprep.subr.bf16.mxu0 0
        %1442 = vmatpush1.bf16.msra.mxu0 0
        %1443 = vmatprep.subr.bf16.mxu0 0
        %1444 = vmatpush1.bf16.msra.mxu0 0
        %1445 = vmatprep.subr.bf16.mxu0 0
        %1446 = vmatpush1.bf16.msra.mxu0 0
        %1447 = vmatprep.subr.bf16.mxu0 0
        %1448 = vmatpush1.bf16.msra.mxu0 0
        %1449 = vmatprep.subr.bf16.mxu0 0
        %1450 = vmatpush1.bf16.msra.mxu0 0
        %1451 = vmatprep.mubr.bf16.mxu0 0
        %1452 = vmatmul.mubr.bf16.gmra.mrb[0].mxu0 %v1414
        %v1453 = vpop.f32.mrb[0].mxu0
        %v1454 = vadd.f32 0.0, %v1453
        %v1455 = vpop.f32.mrb[0].mxu0
        %v1456 = vpop.f32.mrb[0].mxu0
        %v1457 = vadd.f32 0.0, %v1456
        %v1458 = vpop.f32.mrb[0].mxu0
        %1459 = vmatprep.mubr.bf16.mxu0 0
        %1460 = vmatmul.mubr.bf16.gmra.mrb[0].mxu0 %v1417
        %v1461 = vpop.f32.mrb[0].mxu0
        %v1462 = vadd.f32 0.0, %v1461
        %v1463 = vpop.f32.mrb[0].mxu0
        %v1464 = vpop.f32.mrb[0].mxu0
        %v1465 = vadd.f32 0.0, %v1464
        %v1466 = vpop.f32.mrb[0].mxu0
        %1467 = vdwg.mxu0
        %v1480 = vunpack.c.l.b16 %v1261
        %v1481 = vunpack.c.l.b16 %v1262
        %v1482 = vunpack.c.l.b16 %v1263
        %v1483 = vunpack.c.l.b16 %v1264
        %v1484 = vunpack.c.l.b16 %v1265
        %v1485 = vunpack.c.l.b16 %v1266
        %v1486 = vunpack.c.l.b16 %v1267
        %v1487 = vunpack.c.l.b16 %v1268
        %v1488 = vunpack.c.l.b16 %v1269
        %v1489 = vunpack.c.l.b16 %v1270
        %v1490 = vunpack.c.l.b16 %v1271
        %v1491 = vunpack.c.l.b16 %v1272
        %v1492 = vpack.c.b16 %v1481, %v1480
        %v1493 = vpack.c.b16 %v1483, %v1482
        %v1494 = vpack.c.b16 %v1485, %v1484
        %v1495 = vpack.c.b16 %v1487, %v1486
        %v1496 = vpack.c.b16 %v1489, %v1488
        %v1497 = vpack.c.b16 %v1491, %v1490
        %v1505 = vsel %vm1321, %v1233, 0
        %v1508 = vsel %vm1321, %v1234, 0
        %1510 = vmatprep.subr.bf16.mxu0 0
        %1511 = vmatpush1.bf16.msra.mxu0 %v1492
        %1512 = vmatprep.subr.bf16.mxu0 0
        %1513 = vmatpush1.bf16.msra.mxu0 %v1493
        %1514 = vmatprep.subr.bf16.mxu0 0
        %1515 = vmatpush1.bf16.msra.mxu0 %v1494
        %1516 = vmatprep.subr.bf16.mxu0 0
        %1517 = vmatpush1.bf16.msra.mxu0 %v1495
        %1518 = vmatprep.subr.bf16.mxu0 0
        %1519 = vmatpush1.bf16.msra.mxu0 %v1496
        %1520 = vmatprep.subr.bf16.mxu0 0
        %1521 = vmatpush1.bf16.msra.mxu0 %v1497
        %1522 = vmatprep.subr.bf16.mxu0 0
        %1523 = vmatpush1.bf16.msra.mxu0 0
        %1524 = vmatprep.subr.bf16.mxu0 0
        %1525 = vmatpush1.bf16.msra.mxu0 0
        %1526 = vmatprep.subr.bf16.mxu0 0
        %1527 = vmatpush1.bf16.msra.mxu0 0
        %1528 = vmatprep.subr.bf16.mxu0 0
        %1529 = vmatpush1.bf16.msra.mxu0 0
        %1530 = vmatprep.subr.bf16.mxu0 0
        %1531 = vmatpush1.bf16.msra.mxu0 0
        %1532 = vmatprep.subr.bf16.mxu0 0
        %1533 = vmatpush1.bf16.msra.mxu0 0
        %1534 = vmatprep.subr.bf16.mxu0 0
        %1535 = vmatpush1.bf16.msra.mxu0 0
        %1536 = vmatprep.subr.bf16.mxu0 0
        %1537 = vmatpush1.bf16.msra.mxu0 0
        %1538 = vmatprep.subr.bf16.mxu0 0
        %1539 = vmatpush1.bf16.msra.mxu0 0
        %1540 = vmatprep.subr.bf16.mxu0 0
        %1541 = vmatpush1.bf16.msra.mxu0 0
        %1542 = vmatprep.mubr.bf16.mxu0 0
        %1543 = vmatmul.mubr.bf16.gmra.mrb[0].mxu0 %v1505
        %v1544 = vpop.f32.mrb[0].mxu0
        %v1545 = vadd.f32 0.0, %v1544
        %v1546 = vpop.f32.mrb[0].mxu0
        %v1547 = vpop.f32.mrb[0].mxu0
        %v1548 = vadd.f32 0.0, %v1547
        %v1549 = vpop.f32.mrb[0].mxu0
        %1550 = vmatprep.mubr.bf16.mxu0 0
        %1551 = vmatmul.mubr.bf16.gmra.mrb[0].mxu0 %v1508
        %v1552 = vpop.f32.mrb[0].mxu0
        %v1553 = vadd.f32 0.0, %v1552
        %v1554 = vpop.f32.mrb[0].mxu0
        %v1555 = vpop.f32.mrb[0].mxu0
        %v1556 = vadd.f32 0.0, %v1555
        %v1557 = vpop.f32.mrb[0].mxu0
        %1558 = vdwg.mxu0
        %v1571 = vunpack.c.l.b16 %v1273
        %v1572 = vunpack.c.l.b16 %v1274
        %v1573 = vunpack.c.l.b16 %v1275
        %v1574 = vunpack.c.l.b16 %v1276
        %v1575 = vunpack.c.l.b16 %v1277
        %v1576 = vunpack.c.l.b16 %v1278
        %v1577 = vunpack.c.l.b16 %v1279
        %v1578 = vunpack.c.l.b16 %v1280
        %v1579 = vunpack.c.l.b16 %v1281
        %v1580 = vunpack.c.l.b16 %v1282
        %v1581 = vunpack.c.l.b16 %v1283
        %v1582 = vunpack.c.l.b16 %v1284
        %v1583 = vpack.c.b16 %v1572, %v1571
        %v1584 = vpack.c.b16 %v1574, %v1573
        %v1585 = vpack.c.b16 %v1576, %v1575
        %v1586 = vpack.c.b16 %v1578, %v1577
        %v1587 = vpack.c.b16 %v1580, %v1579
        %v1588 = vpack.c.b16 %v1582, %v1581
        %v1596 = vsel %vm1321, %v1235, 0
        %v1599 = vsel %vm1321, %v1236, 0
        %1601 = vmatprep.subr.bf16.mxu0 0
        %1602 = vmatpush1.bf16.msra.mxu0 %v1583
        %1603 = vmatprep.subr.bf16.mxu0 0
        %1604 = vmatpush1.bf16.msra.mxu0 %v1584
        %1605 = vmatprep.subr.bf16.mxu0 0
        %1606 = vmatpush1.bf16.msra.mxu0 %v1585
        %1607 = vmatprep.subr.bf16.mxu0 0
        %1608 = vmatpush1.bf16.msra.mxu0 %v1586
        %1609 = vmatprep.subr.bf16.mxu0 0
        %1610 = vmatpush1.bf16.msra.mxu0 %v1587
        %1611 = vmatprep.subr.bf16.mxu0 0
        %1612 = vmatpush1.bf16.msra.mxu0 %v1588
        %1613 = vmatprep.subr.bf16.mxu0 0
        %1614 = vmatpush1.bf16.msra.mxu0 0
        %1615 = vmatprep.subr.bf16.mxu0 0
        %1616 = vmatpush1.bf16.msra.mxu0 0
        %1617 = vmatprep.subr.bf16.mxu0 0
        %1618 = vmatpush1.bf16.msra.mxu0 0
        %1619 = vmatprep.subr.bf16.mxu0 0
        %1620 = vmatpush1.bf16.msra.mxu0 0
        %1621 = vmatprep.subr.bf16.mxu0 0
        %1622 = vmatpush1.bf16.msra.mxu0 0
        %1623 = vmatprep.subr.bf16.mxu0 0
        %1624 = vmatpush1.bf16.msra.mxu0 0
        %1625 = vmatprep.subr.bf16.mxu0 0
        %1626 = vmatpush1.bf16.msra.mxu0 0
        %1627 = vmatprep.subr.bf16.mxu0 0
        %1628 = vmatpush1.bf16.msra.mxu0 0
        %1629 = vmatprep.subr.bf16.mxu0 0
        %1630 = vmatpush1.bf16.msra.mxu0 0
        %1631 = vmatprep.subr.bf16.mxu0 0
        %1632 = vmatpush1.bf16.msra.mxu0 0
        %1633 = vmatprep.mubr.bf16.mxu0 0
        %1634 = vmatmul.mubr.bf16.gmra.mrb[0].mxu0 %v1596
        %v1635 = vpop.f32.mrb[0].mxu0
        %v1636 = vadd.f32 0.0, %v1635
        %v1637 = vpop.f32.mrb[0].mxu0
        %v1638 = vpop.f32.mrb[0].mxu0
        %v1639 = vadd.f32 0.0, %v1638
        %v1640 = vpop.f32.mrb[0].mxu0
        %1641 = vmatprep.mubr.bf16.mxu0 0
        %1642 = vmatmul.mubr.bf16.gmra.mrb[0].mxu0 %v1599
        %v1643 = vpop.f32.mrb[0].mxu0
        %v1644 = vadd.f32 0.0, %v1643
        %v1645 = vpop.f32.mrb[0].mxu0
        %v1646 = vpop.f32.mrb[0].mxu0
        %v1647 = vadd.f32 0.0, %v1646
        %v1648 = vpop.f32.mrb[0].mxu0
        %1649 = vdwg.mxu0
        %v1650 = vmax.f32 %v1363, 0.0
        %v1651 = vmax.f32 %v1366, 0.0
        %v1652 = vmax.f32 %v1371, 0.0
        %v1653 = vmax.f32 %v1374, 0.0
        %v1654 = vmax.f32 %v1454, 0.0
        %v1655 = vmax.f32 %v1457, 0.0
        %v1656 = vmax.f32 %v1462, 0.0
        %v1657 = vmax.f32 %v1465, 0.0
        %v1658 = vmax.f32 %v1545, 0.0
        %v1659 = vmax.f32 %v1548, 0.0
        %v1660 = vmax.f32 %v1553, 0.0
        %v1661 = vmax.f32 %v1556, 0.0
        %v1662 = vmax.f32 %v1636, 0.0
        %v1663 = vmax.f32 %v1639, 0.0
        %v1664 = vmax.f32 %v1644, 0.0
        %v1665 = vmax.f32 %v1647, 0.0
        %v1666 = vmin.f32 %v1650, 1.0
        %v1667 = vmin.f32 %v1651, 1.0
        %v1668 = vmin.f32 %v1652, 1.0
        %v1669 = vmin.f32 %v1653, 1.0
        %v1670 = vmin.f32 %v1654, 1.0
        %v1671 = vmin.f32 %v1655, 1.0
        %v1672 = vmin.f32 %v1656, 1.0
        %v1673 = vmin.f32 %v1657, 1.0
        %v1674 = vmin.f32 %v1658, 1.0
        %v1675 = vmin.f32 %v1659, 1.0
        %v1676 = vmin.f32 %v1660, 1.0
        %v1677 = vmin.f32 %v1661, 1.0
        %v1678 = vmin.f32 %v1662, 1.0
        %v1679 = vmin.f32 %v1663, 1.0
        %v1680 = vmin.f32 %v1664, 1.0
        %v1681 = vmin.f32 %v1665, 1.0
        %v1686 = vlaneseq
        %v1687 = vshrl.u32 %v1686, 7
        %v1688 = vsub.s32 0, %v1687
        %v1689 = vrot.slane %v477, %v1688
        %v1690 = vlaneseq
        %v1691 = vshrl.u32 %v1690, 7
        %v1692 = vsub.s32 0, %v1691
        %v1693 = vrot.slane %v478, %v1692
        %v1694 = vlaneseq
        %v1695 = vshrl.u32 %v1694, 7
        %v1696 = vsub.s32 0, %v1695
        %v1697 = vrot.slane %v479, %v1696
        %v1698 = vlaneseq
        %v1699 = vshrl.u32 %v1698, 7
        %v1700 = vsub.s32 0, %v1699
        %v1701 = vrot.slane %v480, %v1700
        %1702 = vset.pattern.permute.xlu0 1
        %1703 = vperm.xlu0 %1702, %v1689
        %v1704 = vpop.permute.xlu0 %1703
        %1706 = vset.pattern.permute.xlu0 1
        %1707 = vperm.xlu0 %1706, %v1693
        %v1708 = vpop.permute.xlu0 %1707
        %1710 = vset.pattern.permute.xlu0 1
        %1711 = vperm.xlu0 %1710, %v1697
        %v1712 = vpop.permute.xlu0 %1711
        %1714 = vset.pattern.permute.xlu0 1
        %1715 = vperm.xlu0 %1714, %v1701
        %v1716 = vpop.permute.xlu0 %1715
        %v1718 = vmul.f32 %v1666, %v1704
        %v1719 = vmul.f32 %v1667, %v1704
        %v1720 = vmul.f32 %v1668, %v1704
        %v1721 = vmul.f32 %v1669, %v1704
        %v1722 = vmul.f32 %v1670, %v1708
        %v1723 = vmul.f32 %v1671, %v1708
        %v1724 = vmul.f32 %v1672, %v1708
        %v1725 = vmul.f32 %v1673, %v1708
        %v1726 = vmul.f32 %v1674, %v1712
        %v1727 = vmul.f32 %v1675, %v1712
        %v1728 = vmul.f32 %v1676, %v1712
        %v1729 = vmul.f32 %v1677, %v1712
        %v1730 = vmul.f32 %v1678, %v1716
        %v1731 = vmul.f32 %v1679, %v1716
        %v1732 = vmul.f32 %v1680, %v1716
        %v1733 = vmul.f32 %v1681, %v1716
        %v1734 = vmax.f32 %v1718, 0.0
        %v1735 = vmax.f32 %v1719, 0.0
        %v1736 = vmax.f32 %v1720, 0.0
        %v1737 = vmax.f32 %v1721, 0.0
        %v1738 = vmax.f32 %v1722, 0.0
        %v1739 = vmax.f32 %v1723, 0.0
        %v1740 = vmax.f32 %v1724, 0.0
        %v1741 = vmax.f32 %v1725, 0.0
        %v1742 = vmax.f32 %v1726, 0.0
        %v1743 = vmax.f32 %v1727, 0.0
        %v1744 = vmax.f32 %v1728, 0.0
        %v1745 = vmax.f32 %v1729, 0.0
        %v1746 = vmax.f32 %v1730, 0.0
        %v1747 = vmax.f32 %v1731, 0.0
        %v1748 = vmax.f32 %v1732, 0.0
        %v1749 = vmax.f32 %v1733, 0.0
        %v1750 = vmin.f32 %v1734, 1.0
        %v1751 = vmin.f32 %v1735, 1.0
        %v1752 = vmin.f32 %v1736, 1.0
        %v1753 = vmin.f32 %v1737, 1.0
        %v1754 = vmin.f32 %v1738, 1.0
        %v1755 = vmin.f32 %v1739, 1.0
        %v1756 = vmin.f32 %v1740, 1.0
        %v1757 = vmin.f32 %v1741, 1.0
        %v1758 = vmin.f32 %v1742, 1.0
        %v1759 = vmin.f32 %v1743, 1.0
        %v1760 = vmin.f32 %v1744, 1.0
        %v1761 = vmin.f32 %v1745, 1.0
        %v1762 = vmin.f32 %v1746, 1.0
        %v1763 = vmin.f32 %v1747, 1.0
        %v1764 = vmin.f32 %v1748, 1.0
        %v1765 = vmin.f32 %v1749, 1.0
        %v1766 = vmul.f32 %v1750, 0.2989
        %v1767 = vmul.f32 %v1751, 0.2989
        %v1768 = vmul.f32 %v1752, 0.2989
        %v1769 = vmul.f32 %v1753, 0.2989
        %v1770 = vmul.f32 %v1754, 0.2989
        %v1771 = vmul.f32 %v1755, 0.2989
        %v1772 = vmul.f32 %v1756, 0.2989
        %v1773 = vmul.f32 %v1757, 0.2989
        %v1774 = vmul.f32 %v1758, 0.2989
        %v1775 = vmul.f32 %v1759, 0.2989
        %v1776 = vmul.f32 %v1760, 0.2989
        %v1777 = vmul.f32 %v1761, 0.2989
        %v1778 = vmul.f32 %v1762, 0.2989
        %v1779 = vmul.f32 %v1763, 0.2989
        %v1780 = vmul.f32 %v1764, 0.2989
        %v1781 = vmul.f32 %v1765, 0.2989
        %v1782 = vmul.f32 %v1750, 0.587
        %v1783 = vmul.f32 %v1751, 0.587
        %v1784 = vmul.f32 %v1752, 0.587
        %v1785 = vmul.f32 %v1753, 0.587
        %v1786 = vmul.f32 %v1754, 0.587
        %v1787 = vmul.f32 %v1755, 0.587
        %v1788 = vmul.f32 %v1756, 0.587
        %v1789 = vmul.f32 %v1757, 0.587
        %v1790 = vmul.f32 %v1758, 0.587
        %v1791 = vmul.f32 %v1759, 0.587
        %v1792 = vmul.f32 %v1760, 0.587
        %v1793 = vmul.f32 %v1761, 0.587
        %v1794 = vmul.f32 %v1762, 0.587
        %v1795 = vmul.f32 %v1763, 0.587
        %v1796 = vmul.f32 %v1764, 0.587
        %v1797 = vmul.f32 %v1765, 0.587
        %1814 = vrot.lane.b32.xlu0 %v1782, 96
        %v1815 = vpop.permute.xlu0 %1814
        %1816 = vrot.lane.b32.xlu0 %v1783, 96
        %v1817 = vpop.permute.xlu0 %1816
        %1818 = vrot.lane.b32.xlu0 %v1784, 96
        %v1819 = vpop.permute.xlu0 %1818
        %1820 = vrot.lane.b32.xlu0 %v1785, 96
        %v1821 = vpop.permute.xlu0 %1820
        %1822 = vrot.lane.b32.xlu0 %v1786, 96
        %v1823 = vpop.permute.xlu0 %1822
        %1824 = vrot.lane.b32.xlu0 %v1787, 96
        %v1825 = vpop.permute.xlu0 %1824
        %1826 = vrot.lane.b32.xlu0 %v1788, 96
        %v1827 = vpop.permute.xlu0 %1826
        %1828 = vrot.lane.b32.xlu0 %v1789, 96
        %v1829 = vpop.permute.xlu0 %1828
        %1830 = vrot.lane.b32.xlu0 %v1790, 96
        %v1831 = vpop.permute.xlu0 %1830
        %1832 = vrot.lane.b32.xlu0 %v1791, 96
        %v1833 = vpop.permute.xlu0 %1832
        %1834 = vrot.lane.b32.xlu0 %v1792, 96
        %v1835 = vpop.permute.xlu0 %1834
        %1836 = vrot.lane.b32.xlu0 %v1793, 96
        %v1837 = vpop.permute.xlu0 %1836
        %1838 = vrot.lane.b32.xlu0 %v1794, 96
        %v1839 = vpop.permute.xlu0 %1838
        %1840 = vrot.lane.b32.xlu0 %v1795, 96
        %v1841 = vpop.permute.xlu0 %1840
        %1842 = vrot.lane.b32.xlu0 %v1796, 96
        %v1843 = vpop.permute.xlu0 %1842
        %1844 = vrot.lane.b32.xlu0 %v1797, 96
        %v1845 = vpop.permute.xlu0 %1844
        %v1862 = vadd.f32 %v1766, %v1815
        %v1863 = vadd.f32 %v1767, %v1817
        %v1864 = vadd.f32 %v1768, %v1819
        %v1865 = vadd.f32 %v1769, %v1821
        %v1866 = vadd.f32 %v1770, %v1823
        %v1867 = vadd.f32 %v1771, %v1825
        %v1868 = vadd.f32 %v1772, %v1827
        %v1869 = vadd.f32 %v1773, %v1829
        %v1870 = vadd.f32 %v1774, %v1831
        %v1871 = vadd.f32 %v1775, %v1833
        %v1872 = vadd.f32 %v1776, %v1835
        %v1873 = vadd.f32 %v1777, %v1837
        %v1874 = vadd.f32 %v1778, %v1839
        %v1875 = vadd.f32 %v1779, %v1841
        %v1876 = vadd.f32 %v1780, %v1843
        %v1877 = vadd.f32 %v1781, %v1845
        %v1878 = vmul.f32 %v1750, 0.114
        %v1879 = vmul.f32 %v1751, 0.114
        %v1880 = vmul.f32 %v1752, 0.114
        %v1881 = vmul.f32 %v1753, 0.114
        %v1882 = vmul.f32 %v1754, 0.114
        %v1883 = vmul.f32 %v1755, 0.114
        %v1884 = vmul.f32 %v1756, 0.114
        %v1885 = vmul.f32 %v1757, 0.114
        %v1886 = vmul.f32 %v1758, 0.114
        %v1887 = vmul.f32 %v1759, 0.114
        %v1888 = vmul.f32 %v1760, 0.114
        %v1889 = vmul.f32 %v1761, 0.114
        %v1890 = vmul.f32 %v1762, 0.114
        %v1891 = vmul.f32 %v1763, 0.114
        %v1892 = vmul.f32 %v1764, 0.114
        %v1893 = vmul.f32 %v1765, 0.114
        %1910 = vrot.lane.b32.xlu0 %v1878, 64
        %v1911 = vpop.permute.xlu0 %1910
        %1912 = vrot.lane.b32.xlu0 %v1879, 64
        %v1913 = vpop.permute.xlu0 %1912
        %1914 = vrot.lane.b32.xlu0 %v1880, 64
        %v1915 = vpop.permute.xlu0 %1914
        %1916 = vrot.lane.b32.xlu0 %v1881, 64
        %v1917 = vpop.permute.xlu0 %1916
        %1918 = vrot.lane.b32.xlu0 %v1882, 64
        %v1919 = vpop.permute.xlu0 %1918
        %1920 = vrot.lane.b32.xlu0 %v1883, 64
        %v1921 = vpop.permute.xlu0 %1920
        %1922 = vrot.lane.b32.xlu0 %v1884, 64
        %v1923 = vpop.permute.xlu0 %1922
        %1924 = vrot.lane.b32.xlu0 %v1885, 64
        %v1925 = vpop.permute.xlu0 %1924
        %1926 = vrot.lane.b32.xlu0 %v1886, 64
        %v1927 = vpop.permute.xlu0 %1926
        %1928 = vrot.lane.b32.xlu0 %v1887, 64
        %v1929 = vpop.permute.xlu0 %1928
        %1930 = vrot.lane.b32.xlu0 %v1888, 64
        %v1931 = vpop.permute.xlu0 %1930
        %1932 = vrot.lane.b32.xlu0 %v1889, 64
        %v1933 = vpop.permute.xlu0 %1932
        %1934 = vrot.lane.b32.xlu0 %v1890, 64
        %v1935 = vpop.permute.xlu0 %1934
        %1936 = vrot.lane.b32.xlu0 %v1891, 64
        %v1937 = vpop.permute.xlu0 %1936
        %1938 = vrot.lane.b32.xlu0 %v1892, 64
        %v1939 = vpop.permute.xlu0 %1938
        %1940 = vrot.lane.b32.xlu0 %v1893, 64
        %v1941 = vpop.permute.xlu0 %1940
        %v1958 = vadd.f32 %v1862, %v1911
        %v1959 = vadd.f32 %v1863, %v1913
        %v1960 = vadd.f32 %v1864, %v1915
        %v1961 = vadd.f32 %v1865, %v1917
        %v1962 = vadd.f32 %v1866, %v1919
        %v1963 = vadd.f32 %v1867, %v1921
        %v1964 = vadd.f32 %v1868, %v1923
        %v1965 = vadd.f32 %v1869, %v1925
        %v1966 = vadd.f32 %v1870, %v1927
        %v1967 = vadd.f32 %v1871, %v1929
        %v1968 = vadd.f32 %v1872, %v1931
        %v1969 = vadd.f32 %v1873, %v1933
        %v1970 = vadd.f32 %v1874, %v1935
        %v1971 = vadd.f32 %v1875, %v1937
        %v1972 = vadd.f32 %v1876, %v1939
        %v1973 = vadd.f32 %v1877, %v1941
        %v1974 = vsel %vm911, %v1958, 0.0
        %1975 = vadd.xlane.f32.xlu0 %v1974
        %v1976 = vpop.xlane.xlu0 %1975
        %v1977 = vsel %vm911, %v1959, 0.0
        %1978 = vadd.xlane.f32.xlu0 %v1977
        %v1979 = vpop.xlane.xlu0 %1978
        %v1980 = vsel %vm911, %v1960, 0.0
        %1981 = vadd.xlane.f32.xlu0 %v1980
        %v1982 = vpop.xlane.xlu0 %1981
        %v1983 = vsel %vm911, %v1961, 0.0
        %1984 = vadd.xlane.f32.xlu0 %v1983
        %v1985 = vpop.xlane.xlu0 %1984
        %v1986 = vsel %vm911, %v1962, 0.0
        %1987 = vadd.xlane.f32.xlu0 %v1986
        %v1988 = vpop.xlane.xlu0 %1987
        %v1989 = vsel %vm911, %v1963, 0.0
        %1990 = vadd.xlane.f32.xlu0 %v1989
        %v1991 = vpop.xlane.xlu0 %1990
        %v1992 = vsel %vm911, %v1964, 0.0
        %1993 = vadd.xlane.f32.xlu0 %v1992
        %v1994 = vpop.xlane.xlu0 %1993
        %v1995 = vsel %vm911, %v1965, 0.0
        %1996 = vadd.xlane.f32.xlu0 %v1995
        %v1997 = vpop.xlane.xlu0 %1996
        %v1998 = vsel %vm911, %v1966, 0.0
        %1999 = vadd.xlane.f32.xlu0 %v1998
        %v2000 = vpop.xlane.xlu0 %1999
        %v2001 = vsel %vm911, %v1967, 0.0
        %2002 = vadd.xlane.f32.xlu0 %v2001
        %v2003 = vpop.xlane.xlu0 %2002
        %v2004 = vsel %vm911, %v1968, 0.0
        %2005 = vadd.xlane.f32.xlu0 %v2004
        %v2006 = vpop.xlane.xlu0 %2005
        %v2007 = vsel %vm911, %v1969, 0.0
        %2008 = vadd.xlane.f32.xlu0 %v2007
        %v2009 = vpop.xlane.xlu0 %2008
        %v2010 = vsel %vm911, %v1970, 0.0
        %2011 = vadd.xlane.f32.xlu0 %v2010
        %v2012 = vpop.xlane.xlu0 %2011
        %v2013 = vsel %vm911, %v1971, 0.0
        %2014 = vadd.xlane.f32.xlu0 %v2013
        %v2015 = vpop.xlane.xlu0 %2014
        %v2016 = vsel %vm911, %v1972, 0.0
        %2017 = vadd.xlane.f32.xlu0 %v2016
        %v2018 = vpop.xlane.xlu0 %2017
        %v2019 = vsel %vm911, %v1973, 0.0
        %2020 = vadd.xlane.f32.xlu0 %v2019
        %v2021 = vpop.xlane.xlu0 %2020
        %v2022 = vrcp.pop 32.0
        %v2023 = vmul.f32 %v1976, %v2022
        %v2024 = vmul.f32 %v1979, %v2022
        %v2025 = vmul.f32 %v1982, %v2022
        %v2026 = vmul.f32 %v1985, %v2022
        %v2027 = vmul.f32 %v1988, %v2022
        %v2028 = vmul.f32 %v1991, %v2022
        %v2029 = vmul.f32 %v1994, %v2022
        %v2030 = vmul.f32 %v1997, %v2022
        %v2031 = vmul.f32 %v2000, %v2022
        %v2032 = vmul.f32 %v2003, %v2022
        %v2033 = vmul.f32 %v2006, %v2022
        %v2034 = vmul.f32 %v2009, %v2022
        %v2035 = vmul.f32 %v2012, %v2022
        %v2036 = vmul.f32 %v2015, %v2022
        %v2037 = vmul.f32 %v2018, %v2022
        %v2038 = vmul.f32 %v2021, %v2022
        %v2039 = vadd.f32 %v2023, %v2024
        %v2040 = vadd.f32 %v2039, %v2025
        %v2041 = vadd.f32 %v2040, %v2026
        %v2042 = vrot.slane %v2041, 4
        %v2043 = vadd.f32 %v2041, %v2042
        %v2044 = vrot.slane %v2043, 2
        %v2045 = vadd.f32 %v2043, %v2044
        %v2046 = vrot.slane %v2045, 1
        %v2047 = vadd.f32 %v2045, %v2046
        %v2048 = vadd.f32 %v2027, %v2028
        %v2049 = vadd.f32 %v2048, %v2029
        %v2050 = vadd.f32 %v2049, %v2030
        %v2051 = vrot.slane %v2050, 4
        %v2052 = vadd.f32 %v2050, %v2051
        %v2053 = vrot.slane %v2052, 2
        %v2054 = vadd.f32 %v2052, %v2053
        %v2055 = vrot.slane %v2054, 1
        %v2056 = vadd.f32 %v2054, %v2055
        %v2057 = vadd.f32 %v2031, %v2032
        %v2058 = vadd.f32 %v2057, %v2033
        %v2059 = vadd.f32 %v2058, %v2034
        %v2060 = vrot.slane %v2059, 4
        %v2061 = vadd.f32 %v2059, %v2060
        %v2062 = vrot.slane %v2061, 2
        %v2063 = vadd.f32 %v2061, %v2062
        %v2064 = vrot.slane %v2063, 1
        %v2065 = vadd.f32 %v2063, %v2064
        %v2066 = vadd.f32 %v2035, %v2036
        %v2067 = vadd.f32 %v2066, %v2037
        %v2068 = vadd.f32 %v2067, %v2038
        %v2069 = vrot.slane %v2068, 4
        %v2070 = vadd.f32 %v2068, %v2069
        %v2071 = vrot.slane %v2070, 2
        %v2072 = vadd.f32 %v2070, %v2071
        %v2073 = vrot.slane %v2072, 1
        %v2074 = vadd.f32 %v2072, %v2073
        %v2075 = vmul.f32 %v2047, %v2022
        %v2076 = vmul.f32 %v2056, %v2022
        %v2077 = vmul.f32 %v2065, %v2022
        %v2078 = vmul.f32 %v2074, %v2022
        %2079 = vset.pattern.permute.xlu0 2
        %2080 = vperm.xlu0 %2079, %v1689
        %v2081 = vpop.permute.xlu0 %2080
        %2083 = vset.pattern.permute.xlu0 2
        %2084 = vperm.xlu0 %2083, %v1693
        %v2085 = vpop.permute.xlu0 %2084
        %2087 = vset.pattern.permute.xlu0 2
        %2088 = vperm.xlu0 %2087, %v1697
        %v2089 = vpop.permute.xlu0 %2088
        %2091 = vset.pattern.permute.xlu0 2
        %2092 = vperm.xlu0 %2091, %v1701
        %v2093 = vpop.permute.xlu0 %2092
        %v2095 = vmul.f32 %v2081, %v1750
        %v2096 = vmul.f32 %v2081, %v1751
        %v2097 = vmul.f32 %v2081, %v1752
        %v2098 = vmul.f32 %v2081, %v1753
        %v2099 = vmul.f32 %v2085, %v1754
        %v2100 = vmul.f32 %v2085, %v1755
        %v2101 = vmul.f32 %v2085, %v1756
        %v2102 = vmul.f32 %v2085, %v1757
        %v2103 = vmul.f32 %v2089, %v1758
        %v2104 = vmul.f32 %v2089, %v1759
        %v2105 = vmul.f32 %v2089, %v1760
        %v2106 = vmul.f32 %v2089, %v1761
        %v2107 = vmul.f32 %v2093, %v1762
        %v2108 = vmul.f32 %v2093, %v1763
        %v2109 = vmul.f32 %v2093, %v1764
        %v2110 = vmul.f32 %v2093, %v1765
        %v2111 = vsub.f32 1.0, %v477
        %v2112 = vsub.f32 1.0, %v478
        %v2113 = vsub.f32 1.0, %v479
        %v2114 = vsub.f32 1.0, %v480
        %v2115 = vmul.f32 %v2111, %v2075
        %v2116 = vmul.f32 %v2112, %v2076
        %v2117 = vmul.f32 %v2113, %v2077
        %v2118 = vmul.f32 %v2114, %v2078
        %v2123 = vlaneseq
        %v2124 = vshrl.u32 %v2123, 7
        %v2125 = vsub.s32 0, %v2124
        %v2126 = vrot.slane %v2115, %v2125
        %v2127 = vlaneseq
        %v2128 = vshrl.u32 %v2127, 7
        %v2129 = vsub.s32 0, %v2128
        %v2130 = vrot.slane %v2116, %v2129
        %v2131 = vlaneseq
        %v2132 = vshrl.u32 %v2131, 7
        %v2133 = vsub.s32 0, %v2132
        %v2134 = vrot.slane %v2117, %v2133
        %v2135 = vlaneseq
        %v2136 = vshrl.u32 %v2135, 7
        %v2137 = vsub.s32 0, %v2136
        %v2138 = vrot.slane %v2118, %v2137
        %2139 = vset.pattern.permute.xlu0 2
        %2140 = vperm.xlu0 %2139, %v2126
        %v2141 = vpop.permute.xlu0 %2140
        %2143 = vset.pattern.permute.xlu0 2
        %2144 = vperm.xlu0 %2143, %v2130
        %v2145 = vpop.permute.xlu0 %2144
        %2147 = vset.pattern.permute.xlu0 2
        %2148 = vperm.xlu0 %2147, %v2134
        %v2149 = vpop.permute.xlu0 %2148
        %2151 = vset.pattern.permute.xlu0 2
        %2152 = vperm.xlu0 %2151, %v2138
        %v2153 = vpop.permute.xlu0 %2152
        %v2155 = vadd.f32 %v2095, %v2141
        %v2156 = vadd.f32 %v2096, %v2141
        %v2157 = vadd.f32 %v2097, %v2141
        %v2158 = vadd.f32 %v2098, %v2141
        %v2159 = vadd.f32 %v2099, %v2145
        %v2160 = vadd.f32 %v2100, %v2145
        %v2161 = vadd.f32 %v2101, %v2145
        %v2162 = vadd.f32 %v2102, %v2145
        %v2163 = vadd.f32 %v2103, %v2149
        %v2164 = vadd.f32 %v2104, %v2149
        %v2165 = vadd.f32 %v2105, %v2149
        %v2166 = vadd.f32 %v2106, %v2149
        %v2167 = vadd.f32 %v2107, %v2153
        %v2168 = vadd.f32 %v2108, %v2153
        %v2169 = vadd.f32 %v2109, %v2153
        %v2170 = vadd.f32 %v2110, %v2153
        %v2171 = vmax.f32 %v2155, 0.0
        %v2172 = vmax.f32 %v2156, 0.0
        %v2173 = vmax.f32 %v2157, 0.0
        %v2174 = vmax.f32 %v2158, 0.0
        %v2175 = vmax.f32 %v2159, 0.0
        %v2176 = vmax.f32 %v2160, 0.0
        %v2177 = vmax.f32 %v2161, 0.0
        %v2178 = vmax.f32 %v2162, 0.0
        %v2179 = vmax.f32 %v2163, 0.0
        %v2180 = vmax.f32 %v2164, 0.0
        %v2181 = vmax.f32 %v2165, 0.0
        %v2182 = vmax.f32 %v2166, 0.0
        %v2183 = vmax.f32 %v2167, 0.0
        %v2184 = vmax.f32 %v2168, 0.0
        %v2185 = vmax.f32 %v2169, 0.0
        %v2186 = vmax.f32 %v2170, 0.0
        %v2187 = vmin.f32 %v2171, 1.0
        %v2188 = vmin.f32 %v2172, 1.0
        %v2189 = vmin.f32 %v2173, 1.0
        %v2190 = vmin.f32 %v2174, 1.0
        %v2191 = vmin.f32 %v2175, 1.0
        %v2192 = vmin.f32 %v2176, 1.0
        %v2193 = vmin.f32 %v2177, 1.0
        %v2194 = vmin.f32 %v2178, 1.0
        %v2195 = vmin.f32 %v2179, 1.0
        %v2196 = vmin.f32 %v2180, 1.0
        %v2197 = vmin.f32 %v2181, 1.0
        %v2198 = vmin.f32 %v2182, 1.0
        %v2199 = vmin.f32 %v2183, 1.0
        %v2200 = vmin.f32 %v2184, 1.0
        %v2201 = vmin.f32 %v2185, 1.0
        %v2202 = vmin.f32 %v2186, 1.0
        %v2203 = vmul.f32 %v2187, 0.2989
        %v2204 = vmul.f32 %v2188, 0.2989
        %v2205 = vmul.f32 %v2189, 0.2989
        %v2206 = vmul.f32 %v2190, 0.2989
        %v2207 = vmul.f32 %v2191, 0.2989
        %v2208 = vmul.f32 %v2192, 0.2989
        %v2209 = vmul.f32 %v2193, 0.2989
        %v2210 = vmul.f32 %v2194, 0.2989
        %v2211 = vmul.f32 %v2195, 0.2989
        %v2212 = vmul.f32 %v2196, 0.2989
        %v2213 = vmul.f32 %v2197, 0.2989
        %v2214 = vmul.f32 %v2198, 0.2989
        %v2215 = vmul.f32 %v2199, 0.2989
        %v2216 = vmul.f32 %v2200, 0.2989
        %v2217 = vmul.f32 %v2201, 0.2989
        %v2218 = vmul.f32 %v2202, 0.2989
        %v2219 = vmul.f32 %v2187, 0.587
        %v2220 = vmul.f32 %v2188, 0.587
        %v2221 = vmul.f32 %v2189, 0.587
        %v2222 = vmul.f32 %v2190, 0.587
        %v2223 = vmul.f32 %v2191, 0.587
        %v2224 = vmul.f32 %v2192, 0.587
        %v2225 = vmul.f32 %v2193, 0.587
        %v2226 = vmul.f32 %v2194, 0.587
        %v2227 = vmul.f32 %v2195, 0.587
        %v2228 = vmul.f32 %v2196, 0.587
        %v2229 = vmul.f32 %v2197, 0.587
        %v2230 = vmul.f32 %v2198, 0.587
        %v2231 = vmul.f32 %v2199, 0.587
        %v2232 = vmul.f32 %v2200, 0.587
        %v2233 = vmul.f32 %v2201, 0.587
        %v2234 = vmul.f32 %v2202, 0.587
        %2251 = vrot.lane.b32.xlu0 %v2219, 96
        %v2252 = vpop.permute.xlu0 %2251
        %2253 = vrot.lane.b32.xlu0 %v2220, 96
        %v2254 = vpop.permute.xlu0 %2253
        %2255 = vrot.lane.b32.xlu0 %v2221, 96
        %v2256 = vpop.permute.xlu0 %2255
        %2257 = vrot.lane.b32.xlu0 %v2222, 96
        %v2258 = vpop.permute.xlu0 %2257
        %2259 = vrot.lane.b32.xlu0 %v2223, 96
        %v2260 = vpop.permute.xlu0 %2259
        %2261 = vrot.lane.b32.xlu0 %v2224, 96
        %v2262 = vpop.permute.xlu0 %2261
        %2263 = vrot.lane.b32.xlu0 %v2225, 96
        %v2264 = vpop.permute.xlu0 %2263
        %2265 = vrot.lane.b32.xlu0 %v2226, 96
        %v2266 = vpop.permute.xlu0 %2265
        %2267 = vrot.lane.b32.xlu0 %v2227, 96
        %v2268 = vpop.permute.xlu0 %2267
        %2269 = vrot.lane.b32.xlu0 %v2228, 96
        %v2270 = vpop.permute.xlu0 %2269
        %2271 = vrot.lane.b32.xlu0 %v2229, 96
        %v2272 = vpop.permute.xlu0 %2271
        %2273 = vrot.lane.b32.xlu0 %v2230, 96
        %v2274 = vpop.permute.xlu0 %2273
        %2275 = vrot.lane.b32.xlu0 %v2231, 96
        %v2276 = vpop.permute.xlu0 %2275
        %2277 = vrot.lane.b32.xlu0 %v2232, 96
        %v2278 = vpop.permute.xlu0 %2277
        %2279 = vrot.lane.b32.xlu0 %v2233, 96
        %v2280 = vpop.permute.xlu0 %2279
        %2281 = vrot.lane.b32.xlu0 %v2234, 96
        %v2282 = vpop.permute.xlu0 %2281
        %v2299 = vadd.f32 %v2203, %v2252
        %v2300 = vadd.f32 %v2204, %v2254
        %v2301 = vadd.f32 %v2205, %v2256
        %v2302 = vadd.f32 %v2206, %v2258
        %v2303 = vadd.f32 %v2207, %v2260
        %v2304 = vadd.f32 %v2208, %v2262
        %v2305 = vadd.f32 %v2209, %v2264
        %v2306 = vadd.f32 %v2210, %v2266
        %v2307 = vadd.f32 %v2211, %v2268
        %v2308 = vadd.f32 %v2212, %v2270
        %v2309 = vadd.f32 %v2213, %v2272
        %v2310 = vadd.f32 %v2214, %v2274
        %v2311 = vadd.f32 %v2215, %v2276
        %v2312 = vadd.f32 %v2216, %v2278
        %v2313 = vadd.f32 %v2217, %v2280
        %v2314 = vadd.f32 %v2218, %v2282
        %v2315 = vmul.f32 %v2187, 0.114
        %v2316 = vmul.f32 %v2188, 0.114
        %v2317 = vmul.f32 %v2189, 0.114
        %v2318 = vmul.f32 %v2190, 0.114
        %v2319 = vmul.f32 %v2191, 0.114
        %v2320 = vmul.f32 %v2192, 0.114
        %v2321 = vmul.f32 %v2193, 0.114
        %v2322 = vmul.f32 %v2194, 0.114
        %v2323 = vmul.f32 %v2195, 0.114
        %v2324 = vmul.f32 %v2196, 0.114
        %v2325 = vmul.f32 %v2197, 0.114
        %v2326 = vmul.f32 %v2198, 0.114
        %v2327 = vmul.f32 %v2199, 0.114
        %v2328 = vmul.f32 %v2200, 0.114
        %v2329 = vmul.f32 %v2201, 0.114
        %v2330 = vmul.f32 %v2202, 0.114
        %2347 = vrot.lane.b32.xlu0 %v2315, 64
        %v2348 = vpop.permute.xlu0 %2347
        %2349 = vrot.lane.b32.xlu0 %v2316, 64
        %v2350 = vpop.permute.xlu0 %2349
        %2351 = vrot.lane.b32.xlu0 %v2317, 64
        %v2352 = vpop.permute.xlu0 %2351
        %2353 = vrot.lane.b32.xlu0 %v2318, 64
        %v2354 = vpop.permute.xlu0 %2353
        %2355 = vrot.lane.b32.xlu0 %v2319, 64
        %v2356 = vpop.permute.xlu0 %2355
        %2357 = vrot.lane.b32.xlu0 %v2320, 64
        %v2358 = vpop.permute.xlu0 %2357
        %2359 = vrot.lane.b32.xlu0 %v2321, 64
        %v2360 = vpop.permute.xlu0 %2359
        %2361 = vrot.lane.b32.xlu0 %v2322, 64
        %v2362 = vpop.permute.xlu0 %2361
        %2363 = vrot.lane.b32.xlu0 %v2323, 64
        %v2364 = vpop.permute.xlu0 %2363
        %2365 = vrot.lane.b32.xlu0 %v2324, 64
        %v2366 = vpop.permute.xlu0 %2365
        %2367 = vrot.lane.b32.xlu0 %v2325, 64
        %v2368 = vpop.permute.xlu0 %2367
        %2369 = vrot.lane.b32.xlu0 %v2326, 64
        %v2370 = vpop.permute.xlu0 %2369
        %2371 = vrot.lane.b32.xlu0 %v2327, 64
        %v2372 = vpop.permute.xlu0 %2371
        %2373 = vrot.lane.b32.xlu0 %v2328, 64
        %v2374 = vpop.permute.xlu0 %2373
        %2375 = vrot.lane.b32.xlu0 %v2329, 64
        %v2376 = vpop.permute.xlu0 %2375
        %2377 = vrot.lane.b32.xlu0 %v2330, 64
        %v2378 = vpop.permute.xlu0 %2377
        %v2395 = vadd.f32 %v2299, %v2348
        %v2396 = vadd.f32 %v2300, %v2350
        %v2397 = vadd.f32 %v2301, %v2352
        %v2398 = vadd.f32 %v2302, %v2354
        %v2399 = vadd.f32 %v2303, %v2356
        %v2400 = vadd.f32 %v2304, %v2358
        %v2401 = vadd.f32 %v2305, %v2360
        %v2402 = vadd.f32 %v2306, %v2362
        %v2403 = vadd.f32 %v2307, %v2364
        %v2404 = vadd.f32 %v2308, %v2366
        %v2405 = vadd.f32 %v2309, %v2368
        %v2406 = vadd.f32 %v2310, %v2370
        %v2407 = vadd.f32 %v2311, %v2372
        %v2408 = vadd.f32 %v2312, %v2374
        %v2409 = vadd.f32 %v2313, %v2376
        %v2410 = vadd.f32 %v2314, %v2378
        %2411 = vset.pattern.permute.xlu0 3
        %2412 = vperm.xlu0 %2411, %v1689
        %v2413 = vpop.permute.xlu0 %2412
        %2415 = vset.pattern.permute.xlu0 3
        %2416 = vperm.xlu0 %2415, %v1693
        %v2417 = vpop.permute.xlu0 %2416
        %2419 = vset.pattern.permute.xlu0 3
        %2420 = vperm.xlu0 %2419, %v1697
        %v2421 = vpop.permute.xlu0 %2420
        %2423 = vset.pattern.permute.xlu0 3
        %2424 = vperm.xlu0 %2423, %v1701
        %v2425 = vpop.permute.xlu0 %2424
        %v2427 = vmul.f32 %v2413, %v2187
        %v2428 = vmul.f32 %v2413, %v2188
        %v2429 = vmul.f32 %v2413, %v2189
        %v2430 = vmul.f32 %v2413, %v2190
        %v2431 = vmul.f32 %v2417, %v2191
        %v2432 = vmul.f32 %v2417, %v2192
        %v2433 = vmul.f32 %v2417, %v2193
        %v2434 = vmul.f32 %v2417, %v2194
        %v2435 = vmul.f32 %v2421, %v2195
        %v2436 = vmul.f32 %v2421, %v2196
        %v2437 = vmul.f32 %v2421, %v2197
        %v2438 = vmul.f32 %v2421, %v2198
        %v2439 = vmul.f32 %v2425, %v2199
        %v2440 = vmul.f32 %v2425, %v2200
        %v2441 = vmul.f32 %v2425, %v2201
        %v2442 = vmul.f32 %v2425, %v2202
        %v2447 = vlaneseq
        %v2448 = vshrl.u32 %v2447, 7
        %v2449 = vsub.s32 0, %v2448
        %v2450 = vrot.slane %v2111, %v2449
        %v2451 = vlaneseq
        %v2452 = vshrl.u32 %v2451, 7
        %v2453 = vsub.s32 0, %v2452
        %v2454 = vrot.slane %v2112, %v2453
        %v2455 = vlaneseq
        %v2456 = vshrl.u32 %v2455, 7
        %v2457 = vsub.s32 0, %v2456
        %v2458 = vrot.slane %v2113, %v2457
        %v2459 = vlaneseq
        %v2460 = vshrl.u32 %v2459, 7
        %v2461 = vsub.s32 0, %v2460
        %v2462 = vrot.slane %v2114, %v2461
        %2463 = vset.pattern.permute.xlu0 3
        %2464 = vperm.xlu0 %2463, %v2450
        %v2465 = vpop.permute.xlu0 %2464
        %2467 = vset.pattern.permute.xlu0 3
        %2468 = vperm.xlu0 %2467, %v2454
        %v2469 = vpop.permute.xlu0 %2468
        %2471 = vset.pattern.permute.xlu0 3
        %2472 = vperm.xlu0 %2471, %v2458
        %v2473 = vpop.permute.xlu0 %2472
        %2475 = vset.pattern.permute.xlu0 3
        %2476 = vperm.xlu0 %2475, %v2462
        %v2477 = vpop.permute.xlu0 %2476
        %v2479 = vmul.f32 %v2465, %v2395
        %v2480 = vmul.f32 %v2465, %v2396
        %v2481 = vmul.f32 %v2465, %v2397
        %v2482 = vmul.f32 %v2465, %v2398
        %v2483 = vmul.f32 %v2469, %v2399
        %v2484 = vmul.f32 %v2469, %v2400
        %v2485 = vmul.f32 %v2469, %v2401
        %v2486 = vmul.f32 %v2469, %v2402
        %v2487 = vmul.f32 %v2473, %v2403
        %v2488 = vmul.f32 %v2473, %v2404
        %v2489 = vmul.f32 %v2473, %v2405
        %v2490 = vmul.f32 %v2473, %v2406
        %v2491 = vmul.f32 %v2477, %v2407
        %v2492 = vmul.f32 %v2477, %v2408
        %v2493 = vmul.f32 %v2477, %v2409
        %v2494 = vmul.f32 %v2477, %v2410
        %v2495 = vadd.f32 %v2427, %v2479
        %v2496 = vadd.f32 %v2428, %v2480
        %v2497 = vadd.f32 %v2429, %v2481
        %v2498 = vadd.f32 %v2430, %v2482
        %v2499 = vadd.f32 %v2431, %v2483
        %v2500 = vadd.f32 %v2432, %v2484
        %v2501 = vadd.f32 %v2433, %v2485
        %v2502 = vadd.f32 %v2434, %v2486
        %v2503 = vadd.f32 %v2435, %v2487
        %v2504 = vadd.f32 %v2436, %v2488
        %v2505 = vadd.f32 %v2437, %v2489
        %v2506 = vadd.f32 %v2438, %v2490
        %v2507 = vadd.f32 %v2439, %v2491
        %v2508 = vadd.f32 %v2440, %v2492
        %v2509 = vadd.f32 %v2441, %v2493
        %v2510 = vadd.f32 %v2442, %v2494
        %v2511 = vmax.f32 %v2495, 0.0
        %v2512 = vmax.f32 %v2496, 0.0
        %v2513 = vmax.f32 %v2497, 0.0
        %v2514 = vmax.f32 %v2498, 0.0
        %v2515 = vmax.f32 %v2499, 0.0
        %v2516 = vmax.f32 %v2500, 0.0
        %v2517 = vmax.f32 %v2501, 0.0
        %v2518 = vmax.f32 %v2502, 0.0
        %v2519 = vmax.f32 %v2503, 0.0
        %v2520 = vmax.f32 %v2504, 0.0
        %v2521 = vmax.f32 %v2505, 0.0
        %v2522 = vmax.f32 %v2506, 0.0
        %v2523 = vmax.f32 %v2507, 0.0
        %v2524 = vmax.f32 %v2508, 0.0
        %v2525 = vmax.f32 %v2509, 0.0
        %v2526 = vmax.f32 %v2510, 0.0
        %v2527 = vmin.f32 %v2511, 1.0
        %v2528 = vmin.f32 %v2512, 1.0
        %v2529 = vmin.f32 %v2513, 1.0
        %v2530 = vmin.f32 %v2514, 1.0
        %v2531 = vmin.f32 %v2515, 1.0
        %v2532 = vmin.f32 %v2516, 1.0
        %v2533 = vmin.f32 %v2517, 1.0
        %v2534 = vmin.f32 %v2518, 1.0
        %v2535 = vmin.f32 %v2519, 1.0
        %v2536 = vmin.f32 %v2520, 1.0
        %v2537 = vmin.f32 %v2521, 1.0
        %v2538 = vmin.f32 %v2522, 1.0
        %v2539 = vmin.f32 %v2523, 1.0
        %v2540 = vmin.f32 %v2524, 1.0
        %v2541 = vmin.f32 %v2525, 1.0
        %v2542 = vmin.f32 %v2526, 1.0
        %2559 = vrot.lane.b32.xlu0 %v2479, 32
        %v2560 = vpop.permute.xlu0 %2559
        %2561 = vrot.lane.b32.xlu0 %v2480, 32
        %v2562 = vpop.permute.xlu0 %2561
        %2563 = vrot.lane.b32.xlu0 %v2481, 32
        %v2564 = vpop.permute.xlu0 %2563
        %2565 = vrot.lane.b32.xlu0 %v2482, 32
        %v2566 = vpop.permute.xlu0 %2565
        %2567 = vrot.lane.b32.xlu0 %v2483, 32
        %v2568 = vpop.permute.xlu0 %2567
        %2569 = vrot.lane.b32.xlu0 %v2484, 32
        %v2570 = vpop.permute.xlu0 %2569
        %2571 = vrot.lane.b32.xlu0 %v2485, 32
        %v2572 = vpop.permute.xlu0 %2571
        %2573 = vrot.lane.b32.xlu0 %v2486, 32
        %v2574 = vpop.permute.xlu0 %2573
        %2575 = vrot.lane.b32.xlu0 %v2487, 32
        %v2576 = vpop.permute.xlu0 %2575
        %2577 = vrot.lane.b32.xlu0 %v2488, 32
        %v2578 = vpop.permute.xlu0 %2577
        %2579 = vrot.lane.b32.xlu0 %v2489, 32
        %v2580 = vpop.permute.xlu0 %2579
        %2581 = vrot.lane.b32.xlu0 %v2490, 32
        %v2582 = vpop.permute.xlu0 %2581
        %2583 = vrot.lane.b32.xlu0 %v2491, 32
        %v2584 = vpop.permute.xlu0 %2583
        %2585 = vrot.lane.b32.xlu0 %v2492, 32
        %v2586 = vpop.permute.xlu0 %2585
        %2587 = vrot.lane.b32.xlu0 %v2493, 32
        %v2588 = vpop.permute.xlu0 %2587
        %2589 = vrot.lane.b32.xlu0 %v2494, 32
        %v2590 = vpop.permute.xlu0 %2589
        %v2607 = vadd.f32 %v2427, %v2560
        %v2608 = vadd.f32 %v2428, %v2562
        %v2609 = vadd.f32 %v2429, %v2564
        %v2610 = vadd.f32 %v2430, %v2566
        %v2611 = vadd.f32 %v2431, %v2568
        %v2612 = vadd.f32 %v2432, %v2570
        %v2613 = vadd.f32 %v2433, %v2572
        %v2614 = vadd.f32 %v2434, %v2574
        %v2615 = vadd.f32 %v2435, %v2576
        %v2616 = vadd.f32 %v2436, %v2578
        %v2617 = vadd.f32 %v2437, %v2580
        %v2618 = vadd.f32 %v2438, %v2582
        %v2619 = vadd.f32 %v2439, %v2584
        %v2620 = vadd.f32 %v2440, %v2586
        %v2621 = vadd.f32 %v2441, %v2588
        %v2622 = vadd.f32 %v2442, %v2590
        %v2623 = vmax.f32 %v2607, 0.0
        %v2624 = vmax.f32 %v2608, 0.0
        %v2625 = vmax.f32 %v2609, 0.0
        %v2626 = vmax.f32 %v2610, 0.0
        %v2627 = vmax.f32 %v2611, 0.0
        %v2628 = vmax.f32 %v2612, 0.0
        %v2629 = vmax.f32 %v2613, 0.0
        %v2630 = vmax.f32 %v2614, 0.0
        %v2631 = vmax.f32 %v2615, 0.0
        %v2632 = vmax.f32 %v2616, 0.0
        %v2633 = vmax.f32 %v2617, 0.0
        %v2634 = vmax.f32 %v2618, 0.0
        %v2635 = vmax.f32 %v2619, 0.0
        %v2636 = vmax.f32 %v2620, 0.0
        %v2637 = vmax.f32 %v2621, 0.0
        %v2638 = vmax.f32 %v2622, 0.0
        %v2639 = vmin.f32 %v2623, 1.0
        %v2640 = vmin.f32 %v2624, 1.0
        %v2641 = vmin.f32 %v2625, 1.0
        %v2642 = vmin.f32 %v2626, 1.0
        %v2643 = vmin.f32 %v2627, 1.0
        %v2644 = vmin.f32 %v2628, 1.0
        %v2645 = vmin.f32 %v2629, 1.0
        %v2646 = vmin.f32 %v2630, 1.0
        %v2647 = vmin.f32 %v2631, 1.0
        %v2648 = vmin.f32 %v2632, 1.0
        %v2649 = vmin.f32 %v2633, 1.0
        %v2650 = vmin.f32 %v2634, 1.0
        %v2651 = vmin.f32 %v2635, 1.0
        %v2652 = vmin.f32 %v2636, 1.0
        %v2653 = vmin.f32 %v2637, 1.0
        %v2654 = vmin.f32 %v2638, 1.0
        %2655 = vrot.lane.b32.xlu0 %v2479, 64
        %v2656 = vpop.permute.xlu0 %2655
        %2657 = vrot.lane.b32.xlu0 %v2480, 64
        %v2658 = vpop.permute.xlu0 %2657
        %2659 = vrot.lane.b32.xlu0 %v2481, 64
        %v2660 = vpop.permute.xlu0 %2659
        %2661 = vrot.lane.b32.xlu0 %v2482, 64
        %v2662 = vpop.permute.xlu0 %2661
        %2663 = vrot.lane.b32.xlu0 %v2483, 64
        %v2664 = vpop.permute.xlu0 %2663
        %2665 = vrot.lane.b32.xlu0 %v2484, 64
        %v2666 = vpop.permute.xlu0 %2665
        %2667 = vrot.lane.b32.xlu0 %v2485, 64
        %v2668 = vpop.permute.xlu0 %2667
        %2669 = vrot.lane.b32.xlu0 %v2486, 64
        %v2670 = vpop.permute.xlu0 %2669
        %2671 = vrot.lane.b32.xlu0 %v2487, 64
        %v2672 = vpop.permute.xlu0 %2671
        %2673 = vrot.lane.b32.xlu0 %v2488, 64
        %v2674 = vpop.permute.xlu0 %2673
        %2675 = vrot.lane.b32.xlu0 %v2489, 64
        %v2676 = vpop.permute.xlu0 %2675
        %2677 = vrot.lane.b32.xlu0 %v2490, 64
        %v2678 = vpop.permute.xlu0 %2677
        %2679 = vrot.lane.b32.xlu0 %v2491, 64
        %v2680 = vpop.permute.xlu0 %2679
        %2681 = vrot.lane.b32.xlu0 %v2492, 64
        %v2682 = vpop.permute.xlu0 %2681
        %2683 = vrot.lane.b32.xlu0 %v2493, 64
        %v2684 = vpop.permute.xlu0 %2683
        %2685 = vrot.lane.b32.xlu0 %v2494, 64
        %v2686 = vpop.permute.xlu0 %2685
        %v2703 = vadd.f32 %v2427, %v2656
        %v2704 = vadd.f32 %v2428, %v2658
        %v2705 = vadd.f32 %v2429, %v2660
        %v2706 = vadd.f32 %v2430, %v2662
        %v2707 = vadd.f32 %v2431, %v2664
        %v2708 = vadd.f32 %v2432, %v2666
        %v2709 = vadd.f32 %v2433, %v2668
        %v2710 = vadd.f32 %v2434, %v2670
        %v2711 = vadd.f32 %v2435, %v2672
        %v2712 = vadd.f32 %v2436, %v2674
        %v2713 = vadd.f32 %v2437, %v2676
        %v2714 = vadd.f32 %v2438, %v2678
        %v2715 = vadd.f32 %v2439, %v2680
        %v2716 = vadd.f32 %v2440, %v2682
        %v2717 = vadd.f32 %v2441, %v2684
        %v2718 = vadd.f32 %v2442, %v2686
        %v2719 = vmax.f32 %v2703, 0.0
        %v2720 = vmax.f32 %v2704, 0.0
        %v2721 = vmax.f32 %v2705, 0.0
        %v2722 = vmax.f32 %v2706, 0.0
        %v2723 = vmax.f32 %v2707, 0.0
        %v2724 = vmax.f32 %v2708, 0.0
        %v2725 = vmax.f32 %v2709, 0.0
        %v2726 = vmax.f32 %v2710, 0.0
        %v2727 = vmax.f32 %v2711, 0.0
        %v2728 = vmax.f32 %v2712, 0.0
        %v2729 = vmax.f32 %v2713, 0.0
        %v2730 = vmax.f32 %v2714, 0.0
        %v2731 = vmax.f32 %v2715, 0.0
        %v2732 = vmax.f32 %v2716, 0.0
        %v2733 = vmax.f32 %v2717, 0.0
        %v2734 = vmax.f32 %v2718, 0.0
        %v2735 = vmin.f32 %v2719, 1.0
        %v2736 = vmin.f32 %v2720, 1.0
        %v2737 = vmin.f32 %v2721, 1.0
        %v2738 = vmin.f32 %v2722, 1.0
        %v2739 = vmin.f32 %v2723, 1.0
        %v2740 = vmin.f32 %v2724, 1.0
        %v2741 = vmin.f32 %v2725, 1.0
        %v2742 = vmin.f32 %v2726, 1.0
        %v2743 = vmin.f32 %v2727, 1.0
        %v2744 = vmin.f32 %v2728, 1.0
        %v2745 = vmin.f32 %v2729, 1.0
        %v2746 = vmin.f32 %v2730, 1.0
        %v2747 = vmin.f32 %v2731, 1.0
        %v2748 = vmin.f32 %v2732, 1.0
        %v2749 = vmin.f32 %v2733, 1.0
        %v2750 = vmin.f32 %v2734, 1.0
        %2767 = vrot.lane.b32.xlu0 %v2639, 96
        %v2768 = vpop.permute.xlu0 %2767
        %2769 = vrot.lane.b32.xlu0 %v2640, 96
        %v2770 = vpop.permute.xlu0 %2769
        %2771 = vrot.lane.b32.xlu0 %v2641, 96
        %v2772 = vpop.permute.xlu0 %2771
        %2773 = vrot.lane.b32.xlu0 %v2642, 96
        %v2774 = vpop.permute.xlu0 %2773
        %2775 = vrot.lane.b32.xlu0 %v2643, 96
        %v2776 = vpop.permute.xlu0 %2775
        %2777 = vrot.lane.b32.xlu0 %v2644, 96
        %v2778 = vpop.permute.xlu0 %2777
        %2779 = vrot.lane.b32.xlu0 %v2645, 96
        %v2780 = vpop.permute.xlu0 %2779
        %2781 = vrot.lane.b32.xlu0 %v2646, 96
        %v2782 = vpop.permute.xlu0 %2781
        %2783 = vrot.lane.b32.xlu0 %v2647, 96
        %v2784 = vpop.permute.xlu0 %2783
        %2785 = vrot.lane.b32.xlu0 %v2648, 96
        %v2786 = vpop.permute.xlu0 %2785
        %2787 = vrot.lane.b32.xlu0 %v2649, 96
        %v2788 = vpop.permute.xlu0 %2787
        %2789 = vrot.lane.b32.xlu0 %v2650, 96
        %v2790 = vpop.permute.xlu0 %2789
        %2791 = vrot.lane.b32.xlu0 %v2651, 96
        %v2792 = vpop.permute.xlu0 %2791
        %2793 = vrot.lane.b32.xlu0 %v2652, 96
        %v2794 = vpop.permute.xlu0 %2793
        %2795 = vrot.lane.b32.xlu0 %v2653, 96
        %v2796 = vpop.permute.xlu0 %2795
        %2797 = vrot.lane.b32.xlu0 %v2654, 96
        %v2798 = vpop.permute.xlu0 %2797
        %v2815 = vmax.f32 %v2527, %v2768
        %v2816 = vmax.f32 %v2528, %v2770
        %v2817 = vmax.f32 %v2529, %v2772
        %v2818 = vmax.f32 %v2530, %v2774
        %v2819 = vmax.f32 %v2531, %v2776
        %v2820 = vmax.f32 %v2532, %v2778
        %v2821 = vmax.f32 %v2533, %v2780
        %v2822 = vmax.f32 %v2534, %v2782
        %v2823 = vmax.f32 %v2535, %v2784
        %v2824 = vmax.f32 %v2536, %v2786
        %v2825 = vmax.f32 %v2537, %v2788
        %v2826 = vmax.f32 %v2538, %v2790
        %v2827 = vmax.f32 %v2539, %v2792
        %v2828 = vmax.f32 %v2540, %v2794
        %v2829 = vmax.f32 %v2541, %v2796
        %v2830 = vmax.f32 %v2542, %v2798
        %2847 = vrot.lane.b32.xlu0 %v2735, 64
        %v2848 = vpop.permute.xlu0 %2847
        %2849 = vrot.lane.b32.xlu0 %v2736, 64
        %v2850 = vpop.permute.xlu0 %2849
        %2851 = vrot.lane.b32.xlu0 %v2737, 64
        %v2852 = vpop.permute.xlu0 %2851
        %2853 = vrot.lane.b32.xlu0 %v2738, 64
        %v2854 = vpop.permute.xlu0 %2853
        %2855 = vrot.lane.b32.xlu0 %v2739, 64
        %v2856 = vpop.permute.xlu0 %2855
        %2857 = vrot.lane.b32.xlu0 %v2740, 64
        %v2858 = vpop.permute.xlu0 %2857
        %2859 = vrot.lane.b32.xlu0 %v2741, 64
        %v2860 = vpop.permute.xlu0 %2859
        %2861 = vrot.lane.b32.xlu0 %v2742, 64
        %v2862 = vpop.permute.xlu0 %2861
        %2863 = vrot.lane.b32.xlu0 %v2743, 64
        %v2864 = vpop.permute.xlu0 %2863
        %2865 = vrot.lane.b32.xlu0 %v2744, 64
        %v2866 = vpop.permute.xlu0 %2865
        %2867 = vrot.lane.b32.xlu0 %v2745, 64
        %v2868 = vpop.permute.xlu0 %2867
        %2869 = vrot.lane.b32.xlu0 %v2746, 64
        %v2870 = vpop.permute.xlu0 %2869
        %2871 = vrot.lane.b32.xlu0 %v2747, 64
        %v2872 = vpop.permute.xlu0 %2871
        %2873 = vrot.lane.b32.xlu0 %v2748, 64
        %v2874 = vpop.permute.xlu0 %2873
        %2875 = vrot.lane.b32.xlu0 %v2749, 64
        %v2876 = vpop.permute.xlu0 %2875
        %2877 = vrot.lane.b32.xlu0 %v2750, 64
        %v2878 = vpop.permute.xlu0 %2877
        %v2895 = vmax.f32 %v2815, %v2848
        %v2896 = vmax.f32 %v2816, %v2850
        %v2897 = vmax.f32 %v2817, %v2852
        %v2898 = vmax.f32 %v2818, %v2854
        %v2899 = vmax.f32 %v2819, %v2856
        %v2900 = vmax.f32 %v2820, %v2858
        %v2901 = vmax.f32 %v2821, %v2860
        %v2902 = vmax.f32 %v2822, %v2862
        %v2903 = vmax.f32 %v2823, %v2864
        %v2904 = vmax.f32 %v2824, %v2866
        %v2905 = vmax.f32 %v2825, %v2868
        %v2906 = vmax.f32 %v2826, %v2870
        %v2907 = vmax.f32 %v2827, %v2872
        %v2908 = vmax.f32 %v2828, %v2874
        %v2909 = vmax.f32 %v2829, %v2876
        %v2910 = vmax.f32 %v2830, %v2878
        %v2911 = vmin.f32 %v2527, %v2768
        %v2912 = vmin.f32 %v2528, %v2770
        %v2913 = vmin.f32 %v2529, %v2772
        %v2914 = vmin.f32 %v2530, %v2774
        %v2915 = vmin.f32 %v2531, %v2776
        %v2916 = vmin.f32 %v2532, %v2778
        %v2917 = vmin.f32 %v2533, %v2780
        %v2918 = vmin.f32 %v2534, %v2782
        %v2919 = vmin.f32 %v2535, %v2784
        %v2920 = vmin.f32 %v2536, %v2786
        %v2921 = vmin.f32 %v2537, %v2788
        %v2922 = vmin.f32 %v2538, %v2790
        %v2923 = vmin.f32 %v2539, %v2792
        %v2924 = vmin.f32 %v2540, %v2794
        %v2925 = vmin.f32 %v2541, %v2796
        %v2926 = vmin.f32 %v2542, %v2798
        %v2927 = vmin.f32 %v2911, %v2848
        %v2928 = vmin.f32 %v2912, %v2850
        %v2929 = vmin.f32 %v2913, %v2852
        %v2930 = vmin.f32 %v2914, %v2854
        %v2931 = vmin.f32 %v2915, %v2856
        %v2932 = vmin.f32 %v2916, %v2858
        %v2933 = vmin.f32 %v2917, %v2860
        %v2934 = vmin.f32 %v2918, %v2862
        %v2935 = vmin.f32 %v2919, %v2864
        %v2936 = vmin.f32 %v2920, %v2866
        %v2937 = vmin.f32 %v2921, %v2868
        %v2938 = vmin.f32 %v2922, %v2870
        %v2939 = vmin.f32 %v2923, %v2872
        %v2940 = vmin.f32 %v2924, %v2874
        %v2941 = vmin.f32 %v2925, %v2876
        %v2942 = vmin.f32 %v2926, %v2878
        %v2943 = vsub.f32 %v2895, %v2927
        %v2944 = vsub.f32 %v2896, %v2928
        %v2945 = vsub.f32 %v2897, %v2929
        %v2946 = vsub.f32 %v2898, %v2930
        %v2947 = vsub.f32 %v2899, %v2931
        %v2948 = vsub.f32 %v2900, %v2932
        %v2949 = vsub.f32 %v2901, %v2933
        %v2950 = vsub.f32 %v2902, %v2934
        %v2951 = vsub.f32 %v2903, %v2935
        %v2952 = vsub.f32 %v2904, %v2936
        %v2953 = vsub.f32 %v2905, %v2937
        %v2954 = vsub.f32 %v2906, %v2938
        %v2955 = vsub.f32 %v2907, %v2939
        %v2956 = vsub.f32 %v2908, %v2940
        %v2957 = vsub.f32 %v2909, %v2941
        %v2958 = vsub.f32 %v2910, %v2942
        %vm2959 = vcmp.gt.f32.partialorder %v2895, 0.0
        %vm2960 = vcmp.gt.f32.partialorder %v2896, 0.0
        %vm2961 = vcmp.gt.f32.partialorder %v2897, 0.0
        %vm2962 = vcmp.gt.f32.partialorder %v2898, 0.0
        %vm2963 = vcmp.gt.f32.partialorder %v2899, 0.0
        %vm2964 = vcmp.gt.f32.partialorder %v2900, 0.0
        %vm2965 = vcmp.gt.f32.partialorder %v2901, 0.0
        %vm2966 = vcmp.gt.f32.partialorder %v2902, 0.0
        %vm2967 = vcmp.gt.f32.partialorder %v2903, 0.0
        %vm2968 = vcmp.gt.f32.partialorder %v2904, 0.0
        %vm2969 = vcmp.gt.f32.partialorder %v2905, 0.0
        %vm2970 = vcmp.gt.f32.partialorder %v2906, 0.0
        %vm2971 = vcmp.gt.f32.partialorder %v2907, 0.0
        %vm2972 = vcmp.gt.f32.partialorder %v2908, 0.0
        %vm2973 = vcmp.gt.f32.partialorder %v2909, 0.0
        %vm2974 = vcmp.gt.f32.partialorder %v2910, 0.0
        %v2975 = vmax.f32 %v2895, 1e-08
        %v2976 = vmax.f32 %v2896, 1e-08
        %v2977 = vmax.f32 %v2897, 1e-08
        %v2978 = vmax.f32 %v2898, 1e-08
        %v2979 = vmax.f32 %v2899, 1e-08
        %v2980 = vmax.f32 %v2900, 1e-08
        %v2981 = vmax.f32 %v2901, 1e-08
        %v2982 = vmax.f32 %v2902, 1e-08
        %v2983 = vmax.f32 %v2903, 1e-08
        %v2984 = vmax.f32 %v2904, 1e-08
        %v2985 = vmax.f32 %v2905, 1e-08
        %v2986 = vmax.f32 %v2906, 1e-08
        %v2987 = vmax.f32 %v2907, 1e-08
        %v2988 = vmax.f32 %v2908, 1e-08
        %v2989 = vmax.f32 %v2909, 1e-08
        %v2990 = vmax.f32 %v2910, 1e-08
        %v2991 = vrcp.pop %v2975
        %v2992 = vmul.f32 %v2943, %v2991
        %v2993 = vrcp.pop %v2976
        %v2994 = vmul.f32 %v2944, %v2993
        %v2995 = vrcp.pop %v2977
        %v2996 = vmul.f32 %v2945, %v2995
        %v2997 = vrcp.pop %v2978
        %v2998 = vmul.f32 %v2946, %v2997
        %v2999 = vrcp.pop %v2979
        %v3000 = vmul.f32 %v2947, %v2999
        %v3001 = vrcp.pop %v2980
        %v3002 = vmul.f32 %v2948, %v3001
        %v3003 = vrcp.pop %v2981
        %v3004 = vmul.f32 %v2949, %v3003
        %v3005 = vrcp.pop %v2982
        %v3006 = vmul.f32 %v2950, %v3005
        %v3007 = vrcp.pop %v2983
        %v3008 = vmul.f32 %v2951, %v3007
        %v3009 = vrcp.pop %v2984
        %v3010 = vmul.f32 %v2952, %v3009
        %v3011 = vrcp.pop %v2985
        %v3012 = vmul.f32 %v2953, %v3011
        %v3013 = vrcp.pop %v2986
        %v3014 = vmul.f32 %v2954, %v3013
        %v3015 = vrcp.pop %v2987
        %v3016 = vmul.f32 %v2955, %v3015
        %v3017 = vrcp.pop %v2988
        %v3018 = vmul.f32 %v2956, %v3017
        %v3019 = vrcp.pop %v2989
        %v3020 = vmul.f32 %v2957, %v3019
        %v3021 = vrcp.pop %v2990
        %v3022 = vmul.f32 %v2958, %v3021
        %v3023 = vsel %vm2959, %v2992, 0.0
        %v3024 = vsel %vm2960, %v2994, 0.0
        %v3025 = vsel %vm2961, %v2996, 0.0
        %v3026 = vsel %vm2962, %v2998, 0.0
        %v3027 = vsel %vm2963, %v3000, 0.0
        %v3028 = vsel %vm2964, %v3002, 0.0
        %v3029 = vsel %vm2965, %v3004, 0.0
        %v3030 = vsel %vm2966, %v3006, 0.0
        %v3031 = vsel %vm2967, %v3008, 0.0
        %v3032 = vsel %vm2968, %v3010, 0.0
        %v3033 = vsel %vm2969, %v3012, 0.0
        %v3034 = vsel %vm2970, %v3014, 0.0
        %v3035 = vsel %vm2971, %v3016, 0.0
        %v3036 = vsel %vm2972, %v3018, 0.0
        %v3037 = vsel %vm2973, %v3020, 0.0
        %v3038 = vsel %vm2974, %v3022, 0.0
        %v3039 = vmax.f32 %v2943, 1e-08
        %v3040 = vmax.f32 %v2944, 1e-08
        %v3041 = vmax.f32 %v2945, 1e-08
        %v3042 = vmax.f32 %v2946, 1e-08
        %v3043 = vmax.f32 %v2947, 1e-08
        %v3044 = vmax.f32 %v2948, 1e-08
        %v3045 = vmax.f32 %v2949, 1e-08
        %v3046 = vmax.f32 %v2950, 1e-08
        %v3047 = vmax.f32 %v2951, 1e-08
        %v3048 = vmax.f32 %v2952, 1e-08
        %v3049 = vmax.f32 %v2953, 1e-08
        %v3050 = vmax.f32 %v2954, 1e-08
        %v3051 = vmax.f32 %v2955, 1e-08
        %v3052 = vmax.f32 %v2956, 1e-08
        %v3053 = vmax.f32 %v2957, 1e-08
        %v3054 = vmax.f32 %v2958, 1e-08
        %v3055 = vsub.f32 %v2895, %v2527
        %v3056 = vsub.f32 %v2896, %v2528
        %v3057 = vsub.f32 %v2897, %v2529
        %v3058 = vsub.f32 %v2898, %v2530
        %v3059 = vsub.f32 %v2899, %v2531
        %v3060 = vsub.f32 %v2900, %v2532
        %v3061 = vsub.f32 %v2901, %v2533
        %v3062 = vsub.f32 %v2902, %v2534
        %v3063 = vsub.f32 %v2903, %v2535
        %v3064 = vsub.f32 %v2904, %v2536
        %v3065 = vsub.f32 %v2905, %v2537
        %v3066 = vsub.f32 %v2906, %v2538
        %v3067 = vsub.f32 %v2907, %v2539
        %v3068 = vsub.f32 %v2908, %v2540
        %v3069 = vsub.f32 %v2909, %v2541
        %v3070 = vsub.f32 %v2910, %v2542
        %v3071 = vrcp.pop %v3039
        %v3072 = vmul.f32 %v3055, %v3071
        %v3073 = vrcp.pop %v3040
        %v3074 = vmul.f32 %v3056, %v3073
        %v3075 = vrcp.pop %v3041
        %v3076 = vmul.f32 %v3057, %v3075
        %v3077 = vrcp.pop %v3042
        %v3078 = vmul.f32 %v3058, %v3077
        %v3079 = vrcp.pop %v3043
        %v3080 = vmul.f32 %v3059, %v3079
        %v3081 = vrcp.pop %v3044
        %v3082 = vmul.f32 %v3060, %v3081
        %v3083 = vrcp.pop %v3045
        %v3084 = vmul.f32 %v3061, %v3083
        %v3085 = vrcp.pop %v3046
        %v3086 = vmul.f32 %v3062, %v3085
        %v3087 = vrcp.pop %v3047
        %v3088 = vmul.f32 %v3063, %v3087
        %v3089 = vrcp.pop %v3048
        %v3090 = vmul.f32 %v3064, %v3089
        %v3091 = vrcp.pop %v3049
        %v3092 = vmul.f32 %v3065, %v3091
        %v3093 = vrcp.pop %v3050
        %v3094 = vmul.f32 %v3066, %v3093
        %v3095 = vrcp.pop %v3051
        %v3096 = vmul.f32 %v3067, %v3095
        %v3097 = vrcp.pop %v3052
        %v3098 = vmul.f32 %v3068, %v3097
        %v3099 = vrcp.pop %v3053
        %v3100 = vmul.f32 %v3069, %v3099
        %v3101 = vrcp.pop %v3054
        %v3102 = vmul.f32 %v3070, %v3101
        %v3103 = vsub.f32 %v2895, %v2768
        %v3104 = vsub.f32 %v2896, %v2770
        %v3105 = vsub.f32 %v2897, %v2772
        %v3106 = vsub.f32 %v2898, %v2774
        %v3107 = vsub.f32 %v2899, %v2776
        %v3108 = vsub.f32 %v2900, %v2778
        %v3109 = vsub.f32 %v2901, %v2780
        %v3110 = vsub.f32 %v2902, %v2782
        %v3111 = vsub.f32 %v2903, %v2784
        %v3112 = vsub.f32 %v2904, %v2786
        %v3113 = vsub.f32 %v2905, %v2788
        %v3114 = vsub.f32 %v2906, %v2790
        %v3115 = vsub.f32 %v2907, %v2792
        %v3116 = vsub.f32 %v2908, %v2794
        %v3117 = vsub.f32 %v2909, %v2796
        %v3118 = vsub.f32 %v2910, %v2798
        %v3119 = vmul.f32 %v3103, %v3071
        %v3120 = vmul.f32 %v3104, %v3073
        %v3121 = vmul.f32 %v3105, %v3075
        %v3122 = vmul.f32 %v3106, %v3077
        %v3123 = vmul.f32 %v3107, %v3079
        %v3124 = vmul.f32 %v3108, %v3081
        %v3125 = vmul.f32 %v3109, %v3083
        %v3126 = vmul.f32 %v3110, %v3085
        %v3127 = vmul.f32 %v3111, %v3087
        %v3128 = vmul.f32 %v3112, %v3089
        %v3129 = vmul.f32 %v3113, %v3091
        %v3130 = vmul.f32 %v3114, %v3093
        %v3131 = vmul.f32 %v3115, %v3095
        %v3132 = vmul.f32 %v3116, %v3097
        %v3133 = vmul.f32 %v3117, %v3099
        %v3134 = vmul.f32 %v3118, %v3101
        %v3135 = vsub.f32 %v2895, %v2848
        %v3136 = vsub.f32 %v2896, %v2850
        %v3137 = vsub.f32 %v2897, %v2852
        %v3138 = vsub.f32 %v2898, %v2854
        %v3139 = vsub.f32 %v2899, %v2856
        %v3140 = vsub.f32 %v2900, %v2858
        %v3141 = vsub.f32 %v2901, %v2860
        %v3142 = vsub.f32 %v2902, %v2862
        %v3143 = vsub.f32 %v2903, %v2864
        %v3144 = vsub.f32 %v2904, %v2866
        %v3145 = vsub.f32 %v2905, %v2868
        %v3146 = vsub.f32 %v2906, %v2870
        %v3147 = vsub.f32 %v2907, %v2872
        %v3148 = vsub.f32 %v2908, %v2874
        %v3149 = vsub.f32 %v2909, %v2876
        %v3150 = vsub.f32 %v2910, %v2878
        %v3151 = vmul.f32 %v3135, %v3071
        %v3152 = vmul.f32 %v3136, %v3073
        %v3153 = vmul.f32 %v3137, %v3075
        %v3154 = vmul.f32 %v3138, %v3077
        %v3155 = vmul.f32 %v3139, %v3079
        %v3156 = vmul.f32 %v3140, %v3081
        %v3157 = vmul.f32 %v3141, %v3083
        %v3158 = vmul.f32 %v3142, %v3085
        %v3159 = vmul.f32 %v3143, %v3087
        %v3160 = vmul.f32 %v3144, %v3089
        %v3161 = vmul.f32 %v3145, %v3091
        %v3162 = vmul.f32 %v3146, %v3093
        %v3163 = vmul.f32 %v3147, %v3095
        %v3164 = vmul.f32 %v3148, %v3097
        %v3165 = vmul.f32 %v3149, %v3099
        %v3166 = vmul.f32 %v3150, %v3101
        %vm3167 = vcmp.eq.f32.partialorder %v2527, %v2895
        %vm3168 = vcmp.eq.f32.partialorder %v2528, %v2896
        %vm3169 = vcmp.eq.f32.partialorder %v2529, %v2897
        %vm3170 = vcmp.eq.f32.partialorder %v2530, %v2898
        %vm3171 = vcmp.eq.f32.partialorder %v2531, %v2899
        %vm3172 = vcmp.eq.f32.partialorder %v2532, %v2900
        %vm3173 = vcmp.eq.f32.partialorder %v2533, %v2901
        %vm3174 = vcmp.eq.f32.partialorder %v2534, %v2902
        %vm3175 = vcmp.eq.f32.partialorder %v2535, %v2903
        %vm3176 = vcmp.eq.f32.partialorder %v2536, %v2904
        %vm3177 = vcmp.eq.f32.partialorder %v2537, %v2905
        %vm3178 = vcmp.eq.f32.partialorder %v2538, %v2906
        %vm3179 = vcmp.eq.f32.partialorder %v2539, %v2907
        %vm3180 = vcmp.eq.f32.partialorder %v2540, %v2908
        %vm3181 = vcmp.eq.f32.partialorder %v2541, %v2909
        %vm3182 = vcmp.eq.f32.partialorder %v2542, %v2910
        %v3183 = vsub.f32 %v3151, %v3119
        %v3184 = vsub.f32 %v3152, %v3120
        %v3185 = vsub.f32 %v3153, %v3121
        %v3186 = vsub.f32 %v3154, %v3122
        %v3187 = vsub.f32 %v3155, %v3123
        %v3188 = vsub.f32 %v3156, %v3124
        %v3189 = vsub.f32 %v3157, %v3125
        %v3190 = vsub.f32 %v3158, %v3126
        %v3191 = vsub.f32 %v3159, %v3127
        %v3192 = vsub.f32 %v3160, %v3128
        %v3193 = vsub.f32 %v3161, %v3129
        %v3194 = vsub.f32 %v3162, %v3130
        %v3195 = vsub.f32 %v3163, %v3131
        %v3196 = vsub.f32 %v3164, %v3132
        %v3197 = vsub.f32 %v3165, %v3133
        %v3198 = vsub.f32 %v3166, %v3134
        %3215 = vrot.lane.b32.xlu0 %v2895, 32
        %v3216 = vpop.permute.xlu0 %3215
        %3217 = vrot.lane.b32.xlu0 %v2896, 32
        %v3218 = vpop.permute.xlu0 %3217
        %3219 = vrot.lane.b32.xlu0 %v2897, 32
        %v3220 = vpop.permute.xlu0 %3219
        %3221 = vrot.lane.b32.xlu0 %v2898, 32
        %v3222 = vpop.permute.xlu0 %3221
        %3223 = vrot.lane.b32.xlu0 %v2899, 32
        %v3224 = vpop.permute.xlu0 %3223
        %3225 = vrot.lane.b32.xlu0 %v2900, 32
        %v3226 = vpop.permute.xlu0 %3225
        %3227 = vrot.lane.b32.xlu0 %v2901, 32
        %v3228 = vpop.permute.xlu0 %3227
        %3229 = vrot.lane.b32.xlu0 %v2902, 32
        %v3230 = vpop.permute.xlu0 %3229
        %3231 = vrot.lane.b32.xlu0 %v2903, 32
        %v3232 = vpop.permute.xlu0 %3231
        %3233 = vrot.lane.b32.xlu0 %v2904, 32
        %v3234 = vpop.permute.xlu0 %3233
        %3235 = vrot.lane.b32.xlu0 %v2905, 32
        %v3236 = vpop.permute.xlu0 %3235
        %3237 = vrot.lane.b32.xlu0 %v2906, 32
        %v3238 = vpop.permute.xlu0 %3237
        %3239 = vrot.lane.b32.xlu0 %v2907, 32
        %v3240 = vpop.permute.xlu0 %3239
        %3241 = vrot.lane.b32.xlu0 %v2908, 32
        %v3242 = vpop.permute.xlu0 %3241
        %3243 = vrot.lane.b32.xlu0 %v2909, 32
        %v3244 = vpop.permute.xlu0 %3243
        %3245 = vrot.lane.b32.xlu0 %v2910, 32
        %v3246 = vpop.permute.xlu0 %3245
        %vm3263 = vcmp.eq.f32.partialorder %v2639, %v3216
        %vm3264 = vcmp.eq.f32.partialorder %v2640, %v3218
        %vm3265 = vcmp.eq.f32.partialorder %v2641, %v3220
        %vm3266 = vcmp.eq.f32.partialorder %v2642, %v3222
        %vm3267 = vcmp.eq.f32.partialorder %v2643, %v3224
        %vm3268 = vcmp.eq.f32.partialorder %v2644, %v3226
        %vm3269 = vcmp.eq.f32.partialorder %v2645, %v3228
        %vm3270 = vcmp.eq.f32.partialorder %v2646, %v3230
        %vm3271 = vcmp.eq.f32.partialorder %v2647, %v3232
        %vm3272 = vcmp.eq.f32.partialorder %v2648, %v3234
        %vm3273 = vcmp.eq.f32.partialorder %v2649, %v3236
        %vm3274 = vcmp.eq.f32.partialorder %v2650, %v3238
        %vm3275 = vcmp.eq.f32.partialorder %v2651, %v3240
        %vm3276 = vcmp.eq.f32.partialorder %v2652, %v3242
        %vm3277 = vcmp.eq.f32.partialorder %v2653, %v3244
        %vm3278 = vcmp.eq.f32.partialorder %v2654, %v3246
        %v3279 = vadd.f32 %v3072, 2.0
        %v3280 = vadd.f32 %v3074, 2.0
        %v3281 = vadd.f32 %v3076, 2.0
        %v3282 = vadd.f32 %v3078, 2.0
        %v3283 = vadd.f32 %v3080, 2.0
        %v3284 = vadd.f32 %v3082, 2.0
        %v3285 = vadd.f32 %v3084, 2.0
        %v3286 = vadd.f32 %v3086, 2.0
        %v3287 = vadd.f32 %v3088, 2.0
        %v3288 = vadd.f32 %v3090, 2.0
        %v3289 = vadd.f32 %v3092, 2.0
        %v3290 = vadd.f32 %v3094, 2.0
        %v3291 = vadd.f32 %v3096, 2.0
        %v3292 = vadd.f32 %v3098, 2.0
        %v3293 = vadd.f32 %v3100, 2.0
        %v3294 = vadd.f32 %v3102, 2.0
        %v3295 = vsub.f32 %v3279, %v3151
        %v3296 = vsub.f32 %v3280, %v3152
        %v3297 = vsub.f32 %v3281, %v3153
        %v3298 = vsub.f32 %v3282, %v3154
        %v3299 = vsub.f32 %v3283, %v3155
        %v3300 = vsub.f32 %v3284, %v3156
        %v3301 = vsub.f32 %v3285, %v3157
        %v3302 = vsub.f32 %v3286, %v3158
        %v3303 = vsub.f32 %v3287, %v3159
        %v3304 = vsub.f32 %v3288, %v3160
        %v3305 = vsub.f32 %v3289, %v3161
        %v3306 = vsub.f32 %v3290, %v3162
        %v3307 = vsub.f32 %v3291, %v3163
        %v3308 = vsub.f32 %v3292, %v3164
        %v3309 = vsub.f32 %v3293, %v3165
        %v3310 = vsub.f32 %v3294, %v3166
        %v3311 = vadd.f32 %v3119, 4.0
        %v3312 = vadd.f32 %v3120, 4.0
        %v3313 = vadd.f32 %v3121, 4.0
        %v3314 = vadd.f32 %v3122, 4.0
        %v3315 = vadd.f32 %v3123, 4.0
        %v3316 = vadd.f32 %v3124, 4.0
        %v3317 = vadd.f32 %v3125, 4.0
        %v3318 = vadd.f32 %v3126, 4.0
        %v3319 = vadd.f32 %v3127, 4.0
        %v3320 = vadd.f32 %v3128, 4.0
        %v3321 = vadd.f32 %v3129, 4.0
        %v3322 = vadd.f32 %v3130, 4.0
        %v3323 = vadd.f32 %v3131, 4.0
        %v3324 = vadd.f32 %v3132, 4.0
        %v3325 = vadd.f32 %v3133, 4.0
        %v3326 = vadd.f32 %v3134, 4.0
        %v3327 = vsub.f32 %v3311, %v3072
        %v3328 = vsub.f32 %v3312, %v3074
        %v3329 = vsub.f32 %v3313, %v3076
        %v3330 = vsub.f32 %v3314, %v3078
        %v3331 = vsub.f32 %v3315, %v3080
        %v3332 = vsub.f32 %v3316, %v3082
        %v3333 = vsub.f32 %v3317, %v3084
        %v3334 = vsub.f32 %v3318, %v3086
        %v3335 = vsub.f32 %v3319, %v3088
        %v3336 = vsub.f32 %v3320, %v3090
        %v3337 = vsub.f32 %v3321, %v3092
        %v3338 = vsub.f32 %v3322, %v3094
        %v3339 = vsub.f32 %v3323, %v3096
        %v3340 = vsub.f32 %v3324, %v3098
        %v3341 = vsub.f32 %v3325, %v3100
        %v3342 = vsub.f32 %v3326, %v3102
        %3359 = vrot.lane.b32.xlu0 %v3295, 32
        %v3360 = vpop.permute.xlu0 %3359
        %3361 = vrot.lane.b32.xlu0 %v3296, 32
        %v3362 = vpop.permute.xlu0 %3361
        %3363 = vrot.lane.b32.xlu0 %v3297, 32
        %v3364 = vpop.permute.xlu0 %3363
        %3365 = vrot.lane.b32.xlu0 %v3298, 32
        %v3366 = vpop.permute.xlu0 %3365
        %3367 = vrot.lane.b32.xlu0 %v3299, 32
        %v3368 = vpop.permute.xlu0 %3367
        %3369 = vrot.lane.b32.xlu0 %v3300, 32
        %v3370 = vpop.permute.xlu0 %3369
        %3371 = vrot.lane.b32.xlu0 %v3301, 32
        %v3372 = vpop.permute.xlu0 %3371
        %3373 = vrot.lane.b32.xlu0 %v3302, 32
        %v3374 = vpop.permute.xlu0 %3373
        %3375 = vrot.lane.b32.xlu0 %v3303, 32
        %v3376 = vpop.permute.xlu0 %3375
        %3377 = vrot.lane.b32.xlu0 %v3304, 32
        %v3378 = vpop.permute.xlu0 %3377
        %3379 = vrot.lane.b32.xlu0 %v3305, 32
        %v3380 = vpop.permute.xlu0 %3379
        %3381 = vrot.lane.b32.xlu0 %v3306, 32
        %v3382 = vpop.permute.xlu0 %3381
        %3383 = vrot.lane.b32.xlu0 %v3307, 32
        %v3384 = vpop.permute.xlu0 %3383
        %3385 = vrot.lane.b32.xlu0 %v3308, 32
        %v3386 = vpop.permute.xlu0 %3385
        %3387 = vrot.lane.b32.xlu0 %v3309, 32
        %v3388 = vpop.permute.xlu0 %3387
        %3389 = vrot.lane.b32.xlu0 %v3310, 32
        %v3390 = vpop.permute.xlu0 %3389
        %3423 = vrot.lane.b32.xlu0 %v3327, 32
        %v3424 = vpop.permute.xlu0 %3423
        %3425 = vrot.lane.b32.xlu0 %v3328, 32
        %v3426 = vpop.permute.xlu0 %3425
        %3427 = vrot.lane.b32.xlu0 %v3329, 32
        %v3428 = vpop.permute.xlu0 %3427
        %3429 = vrot.lane.b32.xlu0 %v3330, 32
        %v3430 = vpop.permute.xlu0 %3429
        %3431 = vrot.lane.b32.xlu0 %v3331, 32
        %v3432 = vpop.permute.xlu0 %3431
        %3433 = vrot.lane.b32.xlu0 %v3332, 32
        %v3434 = vpop.permute.xlu0 %3433
        %3435 = vrot.lane.b32.xlu0 %v3333, 32
        %v3436 = vpop.permute.xlu0 %3435
        %3437 = vrot.lane.b32.xlu0 %v3334, 32
        %v3438 = vpop.permute.xlu0 %3437
        %3439 = vrot.lane.b32.xlu0 %v3335, 32
        %v3440 = vpop.permute.xlu0 %3439
        %3441 = vrot.lane.b32.xlu0 %v3336, 32
        %v3442 = vpop.permute.xlu0 %3441
        %3443 = vrot.lane.b32.xlu0 %v3337, 32
        %v3444 = vpop.permute.xlu0 %3443
        %3445 = vrot.lane.b32.xlu0 %v3338, 32
        %v3446 = vpop.permute.xlu0 %3445
        %3447 = vrot.lane.b32.xlu0 %v3339, 32
        %v3448 = vpop.permute.xlu0 %3447
        %3449 = vrot.lane.b32.xlu0 %v3340, 32
        %v3450 = vpop.permute.xlu0 %3449
        %3451 = vrot.lane.b32.xlu0 %v3341, 32
        %v3452 = vpop.permute.xlu0 %3451
        %3453 = vrot.lane.b32.xlu0 %v3342, 32
        %v3454 = vpop.permute.xlu0 %3453
        %v3471 = vsel %vm3263, %v3360, %v3424
        %v3472 = vsel %vm3264, %v3362, %v3426
        %v3473 = vsel %vm3265, %v3364, %v3428
        %v3474 = vsel %vm3266, %v3366, %v3430
        %v3475 = vsel %vm3267, %v3368, %v3432
        %v3476 = vsel %vm3268, %v3370, %v3434
        %v3477 = vsel %vm3269, %v3372, %v3436
        %v3478 = vsel %vm3270, %v3374, %v3438
        %v3479 = vsel %vm3271, %v3376, %v3440
        %v3480 = vsel %vm3272, %v3378, %v3442
        %v3481 = vsel %vm3273, %v3380, %v3444
        %v3482 = vsel %vm3274, %v3382, %v3446
        %v3483 = vsel %vm3275, %v3384, %v3448
        %v3484 = vsel %vm3276, %v3386, %v3450
        %v3485 = vsel %vm3277, %v3388, %v3452
        %v3486 = vsel %vm3278, %v3390, %v3454
        %3503 = vrot.lane.b32.xlu0 %v3471, 96
        %v3504 = vpop.permute.xlu0 %3503
        %3505 = vrot.lane.b32.xlu0 %v3472, 96
        %v3506 = vpop.permute.xlu0 %3505
        %3507 = vrot.lane.b32.xlu0 %v3473, 96
        %v3508 = vpop.permute.xlu0 %3507
        %3509 = vrot.lane.b32.xlu0 %v3474, 96
        %v3510 = vpop.permute.xlu0 %3509
        %3511 = vrot.lane.b32.xlu0 %v3475, 96
        %v3512 = vpop.permute.xlu0 %3511
        %3513 = vrot.lane.b32.xlu0 %v3476, 96
        %v3514 = vpop.permute.xlu0 %3513
        %3515 = vrot.lane.b32.xlu0 %v3477, 96
        %v3516 = vpop.permute.xlu0 %3515
        %3517 = vrot.lane.b32.xlu0 %v3478, 96
        %v3518 = vpop.permute.xlu0 %3517
        %3519 = vrot.lane.b32.xlu0 %v3479, 96
        %v3520 = vpop.permute.xlu0 %3519
        %3521 = vrot.lane.b32.xlu0 %v3480, 96
        %v3522 = vpop.permute.xlu0 %3521
        %3523 = vrot.lane.b32.xlu0 %v3481, 96
        %v3524 = vpop.permute.xlu0 %3523
        %3525 = vrot.lane.b32.xlu0 %v3482, 96
        %v3526 = vpop.permute.xlu0 %3525
        %3527 = vrot.lane.b32.xlu0 %v3483, 96
        %v3528 = vpop.permute.xlu0 %3527
        %3529 = vrot.lane.b32.xlu0 %v3484, 96
        %v3530 = vpop.permute.xlu0 %3529
        %3531 = vrot.lane.b32.xlu0 %v3485, 96
        %v3532 = vpop.permute.xlu0 %3531
        %3533 = vrot.lane.b32.xlu0 %v3486, 96
        %v3534 = vpop.permute.xlu0 %3533
        %v3551 = vsel %vm3167, %v3183, %v3504
        %v3552 = vsel %vm3168, %v3184, %v3506
        %v3553 = vsel %vm3169, %v3185, %v3508
        %v3554 = vsel %vm3170, %v3186, %v3510
        %v3555 = vsel %vm3171, %v3187, %v3512
        %v3556 = vsel %vm3172, %v3188, %v3514
        %v3557 = vsel %vm3173, %v3189, %v3516
        %v3558 = vsel %vm3174, %v3190, %v3518
        %v3559 = vsel %vm3175, %v3191, %v3520
        %v3560 = vsel %vm3176, %v3192, %v3522
        %v3561 = vsel %vm3177, %v3193, %v3524
        %v3562 = vsel %vm3178, %v3194, %v3526
        %v3563 = vsel %vm3179, %v3195, %v3528
        %v3564 = vsel %vm3180, %v3196, %v3530
        %v3565 = vsel %vm3181, %v3197, %v3532
        %v3566 = vsel %vm3182, %v3198, %v3534
        %v3567 = vrcp.pop 6.0
        %v3568 = vmul.f32 %v3551, %v3567
        %v3569 = vmul.f32 %v3552, %v3567
        %v3570 = vmul.f32 %v3553, %v3567
        %v3571 = vmul.f32 %v3554, %v3567
        %v3572 = vmul.f32 %v3555, %v3567
        %v3573 = vmul.f32 %v3556, %v3567
        %v3574 = vmul.f32 %v3557, %v3567
        %v3575 = vmul.f32 %v3558, %v3567
        %v3576 = vmul.f32 %v3559, %v3567
        %v3577 = vmul.f32 %v3560, %v3567
        %v3578 = vmul.f32 %v3561, %v3567
        %v3579 = vmul.f32 %v3562, %v3567
        %v3580 = vmul.f32 %v3563, %v3567
        %v3581 = vmul.f32 %v3564, %v3567
        %v3582 = vmul.f32 %v3565, %v3567
        %v3583 = vmul.f32 %v3566, %v3567
        %v3584 = vand.u32 2147483647, %v3568
        %v3585 = vrcp.pop 1.0
        %v3586 = vmul.f32 %v3584, %v3585
        %v3587 = vfloor.f32 %v3586
        %v3588 = vsub.f32 %v3584, %v3587
        %vm3589 = vcmp.eq.f32.partialorder %v3588, 1.0
        %v3590 = vsel %vm3589, 0.0, %v3588
        %v3591 = vand.u32 2147483647, %v3590
        %v3592 = vand.u32 %v3568, 2147483648
        %v3593 = vor.u32 %v3591, %v3592
        %v3594 = vand.u32 2147483647, %v3569
        %v3595 = vrcp.pop 1.0
        %v3596 = vmul.f32 %v3594, %v3595
        %v3597 = vfloor.f32 %v3596
        %v3598 = vsub.f32 %v3594, %v3597
        %vm3599 = vcmp.eq.f32.partialorder %v3598, 1.0
        %v3600 = vsel %vm3599, 0.0, %v3598
        %v3601 = vand.u32 2147483647, %v3600
        %v3602 = vand.u32 %v3569, 2147483648
        %v3603 = vor.u32 %v3601, %v3602
        %v3604 = vand.u32 2147483647, %v3570
        %v3605 = vrcp.pop 1.0
        %v3606 = vmul.f32 %v3604, %v3605
        %v3607 = vfloor.f32 %v3606
        %v3608 = vsub.f32 %v3604, %v3607
        %vm3609 = vcmp.eq.f32.partialorder %v3608, 1.0
        %v3610 = vsel %vm3609, 0.0, %v3608
        %v3611 = vand.u32 2147483647, %v3610
        %v3612 = vand.u32 %v3570, 2147483648
        %v3613 = vor.u32 %v3611, %v3612
        %v3614 = vand.u32 2147483647, %v3571
        %v3615 = vrcp.pop 1.0
        %v3616 = vmul.f32 %v3614, %v3615
        %v3617 = vfloor.f32 %v3616
        %v3618 = vsub.f32 %v3614, %v3617
        %vm3619 = vcmp.eq.f32.partialorder %v3618, 1.0
        %v3620 = vsel %vm3619, 0.0, %v3618
        %v3621 = vand.u32 2147483647, %v3620
        %v3622 = vand.u32 %v3571, 2147483648
        %v3623 = vor.u32 %v3621, %v3622
        %v3624 = vand.u32 2147483647, %v3572
        %v3625 = vrcp.pop 1.0
        %v3626 = vmul.f32 %v3624, %v3625
        %v3627 = vfloor.f32 %v3626
        %v3628 = vsub.f32 %v3624, %v3627
        %vm3629 = vcmp.eq.f32.partialorder %v3628, 1.0
        %v3630 = vsel %vm3629, 0.0, %v3628
        %v3631 = vand.u32 2147483647, %v3630
        %v3632 = vand.u32 %v3572, 2147483648
        %v3633 = vor.u32 %v3631, %v3632
        %v3634 = vand.u32 2147483647, %v3573
        %v3635 = vrcp.pop 1.0
        %v3636 = vmul.f32 %v3634, %v3635
        %v3637 = vfloor.f32 %v3636
        %v3638 = vsub.f32 %v3634, %v3637
        %vm3639 = vcmp.eq.f32.partialorder %v3638, 1.0
        %v3640 = vsel %vm3639, 0.0, %v3638
        %v3641 = vand.u32 2147483647, %v3640
        %v3642 = vand.u32 %v3573, 2147483648
        %v3643 = vor.u32 %v3641, %v3642
        %v3644 = vand.u32 2147483647, %v3574
        %v3645 = vrcp.pop 1.0
        %v3646 = vmul.f32 %v3644, %v3645
        %v3647 = vfloor.f32 %v3646
        %v3648 = vsub.f32 %v3644, %v3647
        %vm3649 = vcmp.eq.f32.partialorder %v3648, 1.0
        %v3650 = vsel %vm3649, 0.0, %v3648
        %v3651 = vand.u32 2147483647, %v3650
        %v3652 = vand.u32 %v3574, 2147483648
        %v3653 = vor.u32 %v3651, %v3652
        %v3654 = vand.u32 2147483647, %v3575
        %v3655 = vrcp.pop 1.0
        %v3656 = vmul.f32 %v3654, %v3655
        %v3657 = vfloor.f32 %v3656
        %v3658 = vsub.f32 %v3654, %v3657
        %vm3659 = vcmp.eq.f32.partialorder %v3658, 1.0
        %v3660 = vsel %vm3659, 0.0, %v3658
        %v3661 = vand.u32 2147483647, %v3660
        %v3662 = vand.u32 %v3575, 2147483648
        %v3663 = vor.u32 %v3661, %v3662
        %v3664 = vand.u32 2147483647, %v3576
        %v3665 = vrcp.pop 1.0
        %v3666 = vmul.f32 %v3664, %v3665
        %v3667 = vfloor.f32 %v3666
        %v3668 = vsub.f32 %v3664, %v3667
        %vm3669 = vcmp.eq.f32.partialorder %v3668, 1.0
        %v3670 = vsel %vm3669, 0.0, %v3668
        %v3671 = vand.u32 2147483647, %v3670
        %v3672 = vand.u32 %v3576, 2147483648
        %v3673 = vor.u32 %v3671, %v3672
        %v3674 = vand.u32 2147483647, %v3577
        %v3675 = vrcp.pop 1.0
        %v3676 = vmul.f32 %v3674, %v3675
        %v3677 = vfloor.f32 %v3676
        %v3678 = vsub.f32 %v3674, %v3677
        %vm3679 = vcmp.eq.f32.partialorder %v3678, 1.0
        %v3680 = vsel %vm3679, 0.0, %v3678
        %v3681 = vand.u32 2147483647, %v3680
        %v3682 = vand.u32 %v3577, 2147483648
        %v3683 = vor.u32 %v3681, %v3682
        %v3684 = vand.u32 2147483647, %v3578
        %v3685 = vrcp.pop 1.0
        %v3686 = vmul.f32 %v3684, %v3685
        %v3687 = vfloor.f32 %v3686
        %v3688 = vsub.f32 %v3684, %v3687
        %vm3689 = vcmp.eq.f32.partialorder %v3688, 1.0
        %v3690 = vsel %vm3689, 0.0, %v3688
        %v3691 = vand.u32 2147483647, %v3690
        %v3692 = vand.u32 %v3578, 2147483648
        %v3693 = vor.u32 %v3691, %v3692
        %v3694 = vand.u32 2147483647, %v3579
        %v3695 = vrcp.pop 1.0
        %v3696 = vmul.f32 %v3694, %v3695
        %v3697 = vfloor.f32 %v3696
        %v3698 = vsub.f32 %v3694, %v3697
        %vm3699 = vcmp.eq.f32.partialorder %v3698, 1.0
        %v3700 = vsel %vm3699, 0.0, %v3698
        %v3701 = vand.u32 2147483647, %v3700
        %v3702 = vand.u32 %v3579, 2147483648
        %v3703 = vor.u32 %v3701, %v3702
        %v3704 = vand.u32 2147483647, %v3580
        %v3705 = vrcp.pop 1.0
        %v3706 = vmul.f32 %v3704, %v3705
        %v3707 = vfloor.f32 %v3706
        %v3708 = vsub.f32 %v3704, %v3707
        %vm3709 = vcmp.eq.f32.partialorder %v3708, 1.0
        %v3710 = vsel %vm3709, 0.0, %v3708
        %v3711 = vand.u32 2147483647, %v3710
        %v3712 = vand.u32 %v3580, 2147483648
        %v3713 = vor.u32 %v3711, %v3712
        %v3714 = vand.u32 2147483647, %v3581
        %v3715 = vrcp.pop 1.0
        %v3716 = vmul.f32 %v3714, %v3715
        %v3717 = vfloor.f32 %v3716
        %v3718 = vsub.f32 %v3714, %v3717
        %vm3719 = vcmp.eq.f32.partialorder %v3718, 1.0
        %v3720 = vsel %vm3719, 0.0, %v3718
        %v3721 = vand.u32 2147483647, %v3720
        %v3722 = vand.u32 %v3581, 2147483648
        %v3723 = vor.u32 %v3721, %v3722
        %v3724 = vand.u32 2147483647, %v3582
        %v3725 = vrcp.pop 1.0
        %v3726 = vmul.f32 %v3724, %v3725
        %v3727 = vfloor.f32 %v3726
        %v3728 = vsub.f32 %v3724, %v3727
        %vm3729 = vcmp.eq.f32.partialorder %v3728, 1.0
        %v3730 = vsel %vm3729, 0.0, %v3728
        %v3731 = vand.u32 2147483647, %v3730
        %v3732 = vand.u32 %v3582, 2147483648
        %v3733 = vor.u32 %v3731, %v3732
        %v3734 = vand.u32 2147483647, %v3583
        %v3735 = vrcp.pop 1.0
        %v3736 = vmul.f32 %v3734, %v3735
        %v3737 = vfloor.f32 %v3736
        %v3738 = vsub.f32 %v3734, %v3737
        %vm3739 = vcmp.eq.f32.partialorder %v3738, 1.0
        %v3740 = vsel %vm3739, 0.0, %v3738
        %v3741 = vand.u32 2147483647, %v3740
        %v3742 = vand.u32 %v3583, 2147483648
        %v3743 = vor.u32 %v3741, %v3742
        %vm3744 = vcmp.ne.f32.partialorder %v3593, 0.0
        %vm3745 = vcmp.ne.f32.partialorder %v3603, 0.0
        %vm3746 = vcmp.ne.f32.partialorder %v3613, 0.0
        %vm3747 = vcmp.ne.f32.partialorder %v3623, 0.0
        %vm3748 = vcmp.ne.f32.partialorder %v3633, 0.0
        %vm3749 = vcmp.ne.f32.partialorder %v3643, 0.0
        %vm3750 = vcmp.ne.f32.partialorder %v3653, 0.0
        %vm3751 = vcmp.ne.f32.partialorder %v3663, 0.0
        %vm3752 = vcmp.ne.f32.partialorder %v3673, 0.0
        %vm3753 = vcmp.ne.f32.partialorder %v3683, 0.0
        %vm3754 = vcmp.ne.f32.partialorder %v3693, 0.0
        %vm3755 = vcmp.ne.f32.partialorder %v3703, 0.0
        %vm3756 = vcmp.ne.f32.partialorder %v3713, 0.0
        %vm3757 = vcmp.ne.f32.partialorder %v3723, 0.0
        %vm3758 = vcmp.ne.f32.partialorder %v3733, 0.0
        %vm3759 = vcmp.ne.f32.partialorder %v3743, 0.0
        %vm3760 = vcmp.lt.f32.partialorder %v3593, 0.0
        %vm3761 = vcmp.lt.f32.partialorder %v3603, 0.0
        %vm3762 = vcmp.lt.f32.partialorder %v3613, 0.0
        %vm3763 = vcmp.lt.f32.partialorder %v3623, 0.0
        %vm3764 = vcmp.lt.f32.partialorder %v3633, 0.0
        %vm3765 = vcmp.lt.f32.partialorder %v3643, 0.0
        %vm3766 = vcmp.lt.f32.partialorder %v3653, 0.0
        %vm3767 = vcmp.lt.f32.partialorder %v3663, 0.0
        %vm3768 = vcmp.lt.f32.partialorder %v3673, 0.0
        %vm3769 = vcmp.lt.f32.partialorder %v3683, 0.0
        %vm3770 = vcmp.lt.f32.partialorder %v3693, 0.0
        %vm3771 = vcmp.lt.f32.partialorder %v3703, 0.0
        %vm3772 = vcmp.lt.f32.partialorder %v3713, 0.0
        %vm3773 = vcmp.lt.f32.partialorder %v3723, 0.0
        %vm3774 = vcmp.lt.f32.partialorder %v3733, 0.0
        %vm3775 = vcmp.lt.f32.partialorder %v3743, 0.0
        %vm3776 = vmand %vm3760, %vm3744
        %vm3777 = vmand %vm3761, %vm3745
        %vm3778 = vmand %vm3762, %vm3746
        %vm3779 = vmand %vm3763, %vm3747
        %vm3780 = vmand %vm3764, %vm3748
        %vm3781 = vmand %vm3765, %vm3749
        %vm3782 = vmand %vm3766, %vm3750
        %vm3783 = vmand %vm3767, %vm3751
        %vm3784 = vmand %vm3768, %vm3752
        %vm3785 = vmand %vm3769, %vm3753
        %vm3786 = vmand %vm3770, %vm3754
        %vm3787 = vmand %vm3771, %vm3755
        %vm3788 = vmand %vm3772, %vm3756
        %vm3789 = vmand %vm3773, %vm3757
        %vm3790 = vmand %vm3774, %vm3758
        %vm3791 = vmand %vm3775, %vm3759
        %v3792 = vadd.f32 %v3593, 1.0
        %v3793 = vadd.f32 %v3603, 1.0
        %v3794 = vadd.f32 %v3613, 1.0
        %v3795 = vadd.f32 %v3623, 1.0
        %v3796 = vadd.f32 %v3633, 1.0
        %v3797 = vadd.f32 %v3643, 1.0
        %v3798 = vadd.f32 %v3653, 1.0
        %v3799 = vadd.f32 %v3663, 1.0
        %v3800 = vadd.f32 %v3673, 1.0
        %v3801 = vadd.f32 %v3683, 1.0
        %v3802 = vadd.f32 %v3693, 1.0
        %v3803 = vadd.f32 %v3703, 1.0
        %v3804 = vadd.f32 %v3713, 1.0
        %v3805 = vadd.f32 %v3723, 1.0
        %v3806 = vadd.f32 %v3733, 1.0
        %v3807 = vadd.f32 %v3743, 1.0
        %v3808 = vsel %vm3776, %v3792, %v3593
        %v3809 = vsel %vm3777, %v3793, %v3603
        %v3810 = vsel %vm3778, %v3794, %v3613
        %v3811 = vsel %vm3779, %v3795, %v3623
        %v3812 = vsel %vm3780, %v3796, %v3633
        %v3813 = vsel %vm3781, %v3797, %v3643
        %v3814 = vsel %vm3782, %v3798, %v3653
        %v3815 = vsel %vm3783, %v3799, %v3663
        %v3816 = vsel %vm3784, %v3800, %v3673
        %v3817 = vsel %vm3785, %v3801, %v3683
        %v3818 = vsel %vm3786, %v3802, %v3693
        %v3819 = vsel %vm3787, %v3803, %v3703
        %v3820 = vsel %vm3788, %v3804, %v3713
        %v3821 = vsel %vm3789, %v3805, %v3723
        %v3822 = vsel %vm3790, %v3806, %v3733
        %v3823 = vsel %vm3791, %v3807, %v3743
        %vm3824 = vcmp.gt.f32.partialorder %v2943, 0.0
        %vm3825 = vcmp.gt.f32.partialorder %v2944, 0.0
        %vm3826 = vcmp.gt.f32.partialorder %v2945, 0.0
        %vm3827 = vcmp.gt.f32.partialorder %v2946, 0.0
        %vm3828 = vcmp.gt.f32.partialorder %v2947, 0.0
        %vm3829 = vcmp.gt.f32.partialorder %v2948, 0.0
        %vm3830 = vcmp.gt.f32.partialorder %v2949, 0.0
        %vm3831 = vcmp.gt.f32.partialorder %v2950, 0.0
        %vm3832 = vcmp.gt.f32.partialorder %v2951, 0.0
        %vm3833 = vcmp.gt.f32.partialorder %v2952, 0.0
        %vm3834 = vcmp.gt.f32.partialorder %v2953, 0.0
        %vm3835 = vcmp.gt.f32.partialorder %v2954, 0.0
        %vm3836 = vcmp.gt.f32.partialorder %v2955, 0.0
        %vm3837 = vcmp.gt.f32.partialorder %v2956, 0.0
        %vm3838 = vcmp.gt.f32.partialorder %v2957, 0.0
        %vm3839 = vcmp.gt.f32.partialorder %v2958, 0.0
        %v3840 = vsel %vm3824, %v3808, 0.0
        %v3841 = vsel %vm3825, %v3809, 0.0
        %v3842 = vsel %vm3826, %v3810, 0.0
        %v3843 = vsel %vm3827, %v3811, 0.0
        %v3844 = vsel %vm3828, %v3812, 0.0
        %v3845 = vsel %vm3829, %v3813, 0.0
        %v3846 = vsel %vm3830, %v3814, 0.0
        %v3847 = vsel %vm3831, %v3815, 0.0
        %v3848 = vsel %vm3832, %v3816, 0.0
        %v3849 = vsel %vm3833, %v3817, 0.0
        %v3850 = vsel %vm3834, %v3818, 0.0
        %v3851 = vsel %vm3835, %v3819, 0.0
        %v3852 = vsel %vm3836, %v3820, 0.0
        %v3853 = vsel %vm3837, %v3821, 0.0
        %v3854 = vsel %vm3838, %v3822, 0.0
        %v3855 = vsel %vm3839, %v3823, 0.0
        %3856 = vset.pattern.permute.xlu0 4
        %3857 = vperm.xlu0 %3856, %v1689
        %v3858 = vpop.permute.xlu0 %3857
        %3860 = vset.pattern.permute.xlu0 4
        %3861 = vperm.xlu0 %3860, %v1693
        %v3862 = vpop.permute.xlu0 %3861
        %3864 = vset.pattern.permute.xlu0 4
        %3865 = vperm.xlu0 %3864, %v1697
        %v3866 = vpop.permute.xlu0 %3865
        %3868 = vset.pattern.permute.xlu0 4
        %3869 = vperm.xlu0 %3868, %v1701
        %v3870 = vpop.permute.xlu0 %3869
        %v3872 = vadd.f32 %v3840, %v3858
        %v3873 = vadd.f32 %v3841, %v3858
        %v3874 = vadd.f32 %v3842, %v3858
        %v3875 = vadd.f32 %v3843, %v3858
        %v3876 = vadd.f32 %v3844, %v3862
        %v3877 = vadd.f32 %v3845, %v3862
        %v3878 = vadd.f32 %v3846, %v3862
        %v3879 = vadd.f32 %v3847, %v3862
        %v3880 = vadd.f32 %v3848, %v3866
        %v3881 = vadd.f32 %v3849, %v3866
        %v3882 = vadd.f32 %v3850, %v3866
        %v3883 = vadd.f32 %v3851, %v3866
        %v3884 = vadd.f32 %v3852, %v3870
        %v3885 = vadd.f32 %v3853, %v3870
        %v3886 = vadd.f32 %v3854, %v3870
        %v3887 = vadd.f32 %v3855, %v3870
        %v3888 = vand.u32 2147483647, %v3872
        %v3889 = vrcp.pop 1.0
        %v3890 = vmul.f32 %v3888, %v3889
        %v3891 = vfloor.f32 %v3890
        %v3892 = vsub.f32 %v3888, %v3891
        %vm3893 = vcmp.eq.f32.partialorder %v3892, 1.0
        %v3894 = vsel %vm3893, 0.0, %v3892
        %v3895 = vand.u32 2147483647, %v3894
        %v3896 = vand.u32 %v3872, 2147483648
        %v3897 = vor.u32 %v3895, %v3896
        %v3898 = vand.u32 2147483647, %v3873
        %v3899 = vrcp.pop 1.0
        %v3900 = vmul.f32 %v3898, %v3899
        %v3901 = vfloor.f32 %v3900
        %v3902 = vsub.f32 %v3898, %v3901
        %vm3903 = vcmp.eq.f32.partialorder %v3902, 1.0
        %v3904 = vsel %vm3903, 0.0, %v3902
        %v3905 = vand.u32 2147483647, %v3904
        %v3906 = vand.u32 %v3873, 2147483648
        %v3907 = vor.u32 %v3905, %v3906
        %v3908 = vand.u32 2147483647, %v3874
        %v3909 = vrcp.pop 1.0
        %v3910 = vmul.f32 %v3908, %v3909
        %v3911 = vfloor.f32 %v3910
        %v3912 = vsub.f32 %v3908, %v3911
        %vm3913 = vcmp.eq.f32.partialorder %v3912, 1.0
        %v3914 = vsel %vm3913, 0.0, %v3912
        %v3915 = vand.u32 2147483647, %v3914
        %v3916 = vand.u32 %v3874, 2147483648
        %v3917 = vor.u32 %v3915, %v3916
        %v3918 = vand.u32 2147483647, %v3875
        %v3919 = vrcp.pop 1.0
        %v3920 = vmul.f32 %v3918, %v3919
        %v3921 = vfloor.f32 %v3920
        %v3922 = vsub.f32 %v3918, %v3921
        %vm3923 = vcmp.eq.f32.partialorder %v3922, 1.0
        %v3924 = vsel %vm3923, 0.0, %v3922
        %v3925 = vand.u32 2147483647, %v3924
        %v3926 = vand.u32 %v3875, 2147483648
        %v3927 = vor.u32 %v3925, %v3926
        %v3928 = vand.u32 2147483647, %v3876
        %v3929 = vrcp.pop 1.0
        %v3930 = vmul.f32 %v3928, %v3929
        %v3931 = vfloor.f32 %v3930
        %v3932 = vsub.f32 %v3928, %v3931
        %vm3933 = vcmp.eq.f32.partialorder %v3932, 1.0
        %v3934 = vsel %vm3933, 0.0, %v3932
        %v3935 = vand.u32 2147483647, %v3934
        %v3936 = vand.u32 %v3876, 2147483648
        %v3937 = vor.u32 %v3935, %v3936
        %v3938 = vand.u32 2147483647, %v3877
        %v3939 = vrcp.pop 1.0
        %v3940 = vmul.f32 %v3938, %v3939
        %v3941 = vfloor.f32 %v3940
        %v3942 = vsub.f32 %v3938, %v3941
        %vm3943 = vcmp.eq.f32.partialorder %v3942, 1.0
        %v3944 = vsel %vm3943, 0.0, %v3942
        %v3945 = vand.u32 2147483647, %v3944
        %v3946 = vand.u32 %v3877, 2147483648
        %v3947 = vor.u32 %v3945, %v3946
        %v3948 = vand.u32 2147483647, %v3878
        %v3949 = vrcp.pop 1.0
        %v3950 = vmul.f32 %v3948, %v3949
        %v3951 = vfloor.f32 %v3950
        %v3952 = vsub.f32 %v3948, %v3951
        %vm3953 = vcmp.eq.f32.partialorder %v3952, 1.0
        %v3954 = vsel %vm3953, 0.0, %v3952
        %v3955 = vand.u32 2147483647, %v3954
        %v3956 = vand.u32 %v3878, 2147483648
        %v3957 = vor.u32 %v3955, %v3956
        %v3958 = vand.u32 2147483647, %v3879
        %v3959 = vrcp.pop 1.0
        %v3960 = vmul.f32 %v3958, %v3959
        %v3961 = vfloor.f32 %v3960
        %v3962 = vsub.f32 %v3958, %v3961
        %vm3963 = vcmp.eq.f32.partialorder %v3962, 1.0
        %v3964 = vsel %vm3963, 0.0, %v3962
        %v3965 = vand.u32 2147483647, %v3964
        %v3966 = vand.u32 %v3879, 2147483648
        %v3967 = vor.u32 %v3965, %v3966
        %v3968 = vand.u32 2147483647, %v3880
        %v3969 = vrcp.pop 1.0
        %v3970 = vmul.f32 %v3968, %v3969
        %v3971 = vfloor.f32 %v3970
        %v3972 = vsub.f32 %v3968, %v3971
        %vm3973 = vcmp.eq.f32.partialorder %v3972, 1.0
        %v3974 = vsel %vm3973, 0.0, %v3972
        %v3975 = vand.u32 2147483647, %v3974
        %v3976 = vand.u32 %v3880, 2147483648
        %v3977 = vor.u32 %v3975, %v3976
        %v3978 = vand.u32 2147483647, %v3881
        %v3979 = vrcp.pop 1.0
        %v3980 = vmul.f32 %v3978, %v3979
        %v3981 = vfloor.f32 %v3980
        %v3982 = vsub.f32 %v3978, %v3981
        %vm3983 = vcmp.eq.f32.partialorder %v3982, 1.0
        %v3984 = vsel %vm3983, 0.0, %v3982
        %v3985 = vand.u32 2147483647, %v3984
        %v3986 = vand.u32 %v3881, 2147483648
        %v3987 = vor.u32 %v3985, %v3986
        %v3988 = vand.u32 2147483647, %v3882
        %v3989 = vrcp.pop 1.0
        %v3990 = vmul.f32 %v3988, %v3989
        %v3991 = vfloor.f32 %v3990
        %v3992 = vsub.f32 %v3988, %v3991
        %vm3993 = vcmp.eq.f32.partialorder %v3992, 1.0
        %v3994 = vsel %vm3993, 0.0, %v3992
        %v3995 = vand.u32 2147483647, %v3994
        %v3996 = vand.u32 %v3882, 2147483648
        %v3997 = vor.u32 %v3995, %v3996
        %v3998 = vand.u32 2147483647, %v3883
        %v3999 = vrcp.pop 1.0
        %v4000 = vmul.f32 %v3998, %v3999
        %v4001 = vfloor.f32 %v4000
        %v4002 = vsub.f32 %v3998, %v4001
        %vm4003 = vcmp.eq.f32.partialorder %v4002, 1.0
        %v4004 = vsel %vm4003, 0.0, %v4002
        %v4005 = vand.u32 2147483647, %v4004
        %v4006 = vand.u32 %v3883, 2147483648
        %v4007 = vor.u32 %v4005, %v4006
        %v4008 = vand.u32 2147483647, %v3884
        %v4009 = vrcp.pop 1.0
        %v4010 = vmul.f32 %v4008, %v4009
        %v4011 = vfloor.f32 %v4010
        %v4012 = vsub.f32 %v4008, %v4011
        %vm4013 = vcmp.eq.f32.partialorder %v4012, 1.0
        %v4014 = vsel %vm4013, 0.0, %v4012
        %v4015 = vand.u32 2147483647, %v4014
        %v4016 = vand.u32 %v3884, 2147483648
        %v4017 = vor.u32 %v4015, %v4016
        %v4018 = vand.u32 2147483647, %v3885
        %v4019 = vrcp.pop 1.0
        %v4020 = vmul.f32 %v4018, %v4019
        %v4021 = vfloor.f32 %v4020
        %v4022 = vsub.f32 %v4018, %v4021
        %vm4023 = vcmp.eq.f32.partialorder %v4022, 1.0
        %v4024 = vsel %vm4023, 0.0, %v4022
        %v4025 = vand.u32 2147483647, %v4024
        %v4026 = vand.u32 %v3885, 2147483648
        %v4027 = vor.u32 %v4025, %v4026
        %v4028 = vand.u32 2147483647, %v3886
        %v4029 = vrcp.pop 1.0
        %v4030 = vmul.f32 %v4028, %v4029
        %v4031 = vfloor.f32 %v4030
        %v4032 = vsub.f32 %v4028, %v4031
        %vm4033 = vcmp.eq.f32.partialorder %v4032, 1.0
        %v4034 = vsel %vm4033, 0.0, %v4032
        %v4035 = vand.u32 2147483647, %v4034
        %v4036 = vand.u32 %v3886, 2147483648
        %v4037 = vor.u32 %v4035, %v4036
        %v4038 = vand.u32 2147483647, %v3887
        %v4039 = vrcp.pop 1.0
        %v4040 = vmul.f32 %v4038, %v4039
        %v4041 = vfloor.f32 %v4040
        %v4042 = vsub.f32 %v4038, %v4041
        %vm4043 = vcmp.eq.f32.partialorder %v4042, 1.0
        %v4044 = vsel %vm4043, 0.0, %v4042
        %v4045 = vand.u32 2147483647, %v4044
        %v4046 = vand.u32 %v3887, 2147483648
        %v4047 = vor.u32 %v4045, %v4046
        %vm4048 = vcmp.ne.f32.partialorder %v3897, 0.0
        %vm4049 = vcmp.ne.f32.partialorder %v3907, 0.0
        %vm4050 = vcmp.ne.f32.partialorder %v3917, 0.0
        %vm4051 = vcmp.ne.f32.partialorder %v3927, 0.0
        %vm4052 = vcmp.ne.f32.partialorder %v3937, 0.0
        %vm4053 = vcmp.ne.f32.partialorder %v3947, 0.0
        %vm4054 = vcmp.ne.f32.partialorder %v3957, 0.0
        %vm4055 = vcmp.ne.f32.partialorder %v3967, 0.0
        %vm4056 = vcmp.ne.f32.partialorder %v3977, 0.0
        %vm4057 = vcmp.ne.f32.partialorder %v3987, 0.0
        %vm4058 = vcmp.ne.f32.partialorder %v3997, 0.0
        %vm4059 = vcmp.ne.f32.partialorder %v4007, 0.0
        %vm4060 = vcmp.ne.f32.partialorder %v4017, 0.0
        %vm4061 = vcmp.ne.f32.partialorder %v4027, 0.0
        %vm4062 = vcmp.ne.f32.partialorder %v4037, 0.0
        %vm4063 = vcmp.ne.f32.partialorder %v4047, 0.0
        %vm4064 = vcmp.lt.f32.partialorder %v3897, 0.0
        %vm4065 = vcmp.lt.f32.partialorder %v3907, 0.0
        %vm4066 = vcmp.lt.f32.partialorder %v3917, 0.0
        %vm4067 = vcmp.lt.f32.partialorder %v3927, 0.0
        %vm4068 = vcmp.lt.f32.partialorder %v3937, 0.0
        %vm4069 = vcmp.lt.f32.partialorder %v3947, 0.0
        %vm4070 = vcmp.lt.f32.partialorder %v3957, 0.0
        %vm4071 = vcmp.lt.f32.partialorder %v3967, 0.0
        %vm4072 = vcmp.lt.f32.partialorder %v3977, 0.0
        %vm4073 = vcmp.lt.f32.partialorder %v3987, 0.0
        %vm4074 = vcmp.lt.f32.partialorder %v3997, 0.0
        %vm4075 = vcmp.lt.f32.partialorder %v4007, 0.0
        %vm4076 = vcmp.lt.f32.partialorder %v4017, 0.0
        %vm4077 = vcmp.lt.f32.partialorder %v4027, 0.0
        %vm4078 = vcmp.lt.f32.partialorder %v4037, 0.0
        %vm4079 = vcmp.lt.f32.partialorder %v4047, 0.0
        %vm4080 = vmand %vm4064, %vm4048
        %vm4081 = vmand %vm4065, %vm4049
        %vm4082 = vmand %vm4066, %vm4050
        %vm4083 = vmand %vm4067, %vm4051
        %vm4084 = vmand %vm4068, %vm4052
        %vm4085 = vmand %vm4069, %vm4053
        %vm4086 = vmand %vm4070, %vm4054
        %vm4087 = vmand %vm4071, %vm4055
        %vm4088 = vmand %vm4072, %vm4056
        %vm4089 = vmand %vm4073, %vm4057
        %vm4090 = vmand %vm4074, %vm4058
        %vm4091 = vmand %vm4075, %vm4059
        %vm4092 = vmand %vm4076, %vm4060
        %vm4093 = vmand %vm4077, %vm4061
        %vm4094 = vmand %vm4078, %vm4062
        %vm4095 = vmand %vm4079, %vm4063
        %v4096 = vadd.f32 %v3897, 1.0
        %v4097 = vadd.f32 %v3907, 1.0
        %v4098 = vadd.f32 %v3917, 1.0
        %v4099 = vadd.f32 %v3927, 1.0
        %v4100 = vadd.f32 %v3937, 1.0
        %v4101 = vadd.f32 %v3947, 1.0
        %v4102 = vadd.f32 %v3957, 1.0
        %v4103 = vadd.f32 %v3967, 1.0
        %v4104 = vadd.f32 %v3977, 1.0
        %v4105 = vadd.f32 %v3987, 1.0
        %v4106 = vadd.f32 %v3997, 1.0
        %v4107 = vadd.f32 %v4007, 1.0
        %v4108 = vadd.f32 %v4017, 1.0
        %v4109 = vadd.f32 %v4027, 1.0
        %v4110 = vadd.f32 %v4037, 1.0
        %v4111 = vadd.f32 %v4047, 1.0
        %v4112 = vsel %vm4080, %v4096, %v3897
        %v4113 = vsel %vm4081, %v4097, %v3907
        %v4114 = vsel %vm4082, %v4098, %v3917
        %v4115 = vsel %vm4083, %v4099, %v3927
        %v4116 = vsel %vm4084, %v4100, %v3937
        %v4117 = vsel %vm4085, %v4101, %v3947
        %v4118 = vsel %vm4086, %v4102, %v3957
        %v4119 = vsel %vm4087, %v4103, %v3967
        %v4120 = vsel %vm4088, %v4104, %v3977
        %v4121 = vsel %vm4089, %v4105, %v3987
        %v4122 = vsel %vm4090, %v4106, %v3997
        %v4123 = vsel %vm4091, %v4107, %v4007
        %v4124 = vsel %vm4092, %v4108, %v4017
        %v4125 = vsel %vm4093, %v4109, %v4027
        %v4126 = vsel %vm4094, %v4110, %v4037
        %v4127 = vsel %vm4095, %v4111, %v4047
        %v4128 = vmul.f32 %v4112, 6.0
        %v4129 = vmul.f32 %v4113, 6.0
        %v4130 = vmul.f32 %v4114, 6.0
        %v4131 = vmul.f32 %v4115, 6.0
        %v4132 = vmul.f32 %v4116, 6.0
        %v4133 = vmul.f32 %v4117, 6.0
        %v4134 = vmul.f32 %v4118, 6.0
        %v4135 = vmul.f32 %v4119, 6.0
        %v4136 = vmul.f32 %v4120, 6.0
        %v4137 = vmul.f32 %v4121, 6.0
        %v4138 = vmul.f32 %v4122, 6.0
        %v4139 = vmul.f32 %v4123, 6.0
        %v4140 = vmul.f32 %v4124, 6.0
        %v4141 = vmul.f32 %v4125, 6.0
        %v4142 = vmul.f32 %v4126, 6.0
        %v4143 = vmul.f32 %v4127, 6.0
        %v4144 = vfloor.f32 %v4128
        %v4145 = vfloor.f32 %v4129
        %v4146 = vfloor.f32 %v4130
        %v4147 = vfloor.f32 %v4131
        %v4148 = vfloor.f32 %v4132
        %v4149 = vfloor.f32 %v4133
        %v4150 = vfloor.f32 %v4134
        %v4151 = vfloor.f32 %v4135
        %v4152 = vfloor.f32 %v4136
        %v4153 = vfloor.f32 %v4137
        %v4154 = vfloor.f32 %v4138
        %v4155 = vfloor.f32 %v4139
        %v4156 = vfloor.f32 %v4140
        %v4157 = vfloor.f32 %v4141
        %v4158 = vfloor.f32 %v4142
        %v4159 = vfloor.f32 %v4143
        %v4160 = vsub.f32 %v4128, %v4144
        %v4161 = vsub.f32 %v4129, %v4145
        %v4162 = vsub.f32 %v4130, %v4146
        %v4163 = vsub.f32 %v4131, %v4147
        %v4164 = vsub.f32 %v4132, %v4148
        %v4165 = vsub.f32 %v4133, %v4149
        %v4166 = vsub.f32 %v4134, %v4150
        %v4167 = vsub.f32 %v4135, %v4151
        %v4168 = vsub.f32 %v4136, %v4152
        %v4169 = vsub.f32 %v4137, %v4153
        %v4170 = vsub.f32 %v4138, %v4154
        %v4171 = vsub.f32 %v4139, %v4155
        %v4172 = vsub.f32 %v4140, %v4156
        %v4173 = vsub.f32 %v4141, %v4157
        %v4174 = vsub.f32 %v4142, %v4158
        %v4175 = vsub.f32 %v4143, %v4159
        %v4176 = vsub.f32 1.0, %v3023
        %v4177 = vsub.f32 1.0, %v3024
        %v4178 = vsub.f32 1.0, %v3025
        %v4179 = vsub.f32 1.0, %v3026
        %v4180 = vsub.f32 1.0, %v3027
        %v4181 = vsub.f32 1.0, %v3028
        %v4182 = vsub.f32 1.0, %v3029
        %v4183 = vsub.f32 1.0, %v3030
        %v4184 = vsub.f32 1.0, %v3031
        %v4185 = vsub.f32 1.0, %v3032
        %v4186 = vsub.f32 1.0, %v3033
        %v4187 = vsub.f32 1.0, %v3034
        %v4188 = vsub.f32 1.0, %v3035
        %v4189 = vsub.f32 1.0, %v3036
        %v4190 = vsub.f32 1.0, %v3037
        %v4191 = vsub.f32 1.0, %v3038
        %v4192 = vmul.f32 %v2895, %v4176
        %v4193 = vmul.f32 %v2896, %v4177
        %v4194 = vmul.f32 %v2897, %v4178
        %v4195 = vmul.f32 %v2898, %v4179
        %v4196 = vmul.f32 %v2899, %v4180
        %v4197 = vmul.f32 %v2900, %v4181
        %v4198 = vmul.f32 %v2901, %v4182
        %v4199 = vmul.f32 %v2902, %v4183
        %v4200 = vmul.f32 %v2903, %v4184
        %v4201 = vmul.f32 %v2904, %v4185
        %v4202 = vmul.f32 %v2905, %v4186
        %v4203 = vmul.f32 %v2906, %v4187
        %v4204 = vmul.f32 %v2907, %v4188
        %v4205 = vmul.f32 %v2908, %v4189
        %v4206 = vmul.f32 %v2909, %v4190
        %v4207 = vmul.f32 %v2910, %v4191
        %v4208 = vmul.f32 %v3023, %v4160
        %v4209 = vmul.f32 %v3024, %v4161
        %v4210 = vmul.f32 %v3025, %v4162
        %v4211 = vmul.f32 %v3026, %v4163
        %v4212 = vmul.f32 %v3027, %v4164
        %v4213 = vmul.f32 %v3028, %v4165
        %v4214 = vmul.f32 %v3029, %v4166
        %v4215 = vmul.f32 %v3030, %v4167
        %v4216 = vmul.f32 %v3031, %v4168
        %v4217 = vmul.f32 %v3032, %v4169
        %v4218 = vmul.f32 %v3033, %v4170
        %v4219 = vmul.f32 %v3034, %v4171
        %v4220 = vmul.f32 %v3035, %v4172
        %v4221 = vmul.f32 %v3036, %v4173
        %v4222 = vmul.f32 %v3037, %v4174
        %v4223 = vmul.f32 %v3038, %v4175
        %v4224 = vsub.f32 1.0, %v4208
        %v4225 = vsub.f32 1.0, %v4209
        %v4226 = vsub.f32 1.0, %v4210
        %v4227 = vsub.f32 1.0, %v4211
        %v4228 = vsub.f32 1.0, %v4212
        %v4229 = vsub.f32 1.0, %v4213
        %v4230 = vsub.f32 1.0, %v4214
        %v4231 = vsub.f32 1.0, %v4215
        %v4232 = vsub.f32 1.0, %v4216
        %v4233 = vsub.f32 1.0, %v4217
        %v4234 = vsub.f32 1.0, %v4218
        %v4235 = vsub.f32 1.0, %v4219
        %v4236 = vsub.f32 1.0, %v4220
        %v4237 = vsub.f32 1.0, %v4221
        %v4238 = vsub.f32 1.0, %v4222
        %v4239 = vsub.f32 1.0, %v4223
        %v4240 = vmul.f32 %v2895, %v4224
        %v4241 = vmul.f32 %v2896, %v4225
        %v4242 = vmul.f32 %v2897, %v4226
        %v4243 = vmul.f32 %v2898, %v4227
        %v4244 = vmul.f32 %v2899, %v4228
        %v4245 = vmul.f32 %v2900, %v4229
        %v4246 = vmul.f32 %v2901, %v4230
        %v4247 = vmul.f32 %v2902, %v4231
        %v4248 = vmul.f32 %v2903, %v4232
        %v4249 = vmul.f32 %v2904, %v4233
        %v4250 = vmul.f32 %v2905, %v4234
        %v4251 = vmul.f32 %v2906, %v4235
        %v4252 = vmul.f32 %v2907, %v4236
        %v4253 = vmul.f32 %v2908, %v4237
        %v4254 = vmul.f32 %v2909, %v4238
        %v4255 = vmul.f32 %v2910, %v4239
        %v4256 = vsub.f32 1.0, %v4160
        %v4257 = vsub.f32 1.0, %v4161
        %v4258 = vsub.f32 1.0, %v4162
        %v4259 = vsub.f32 1.0, %v4163
        %v4260 = vsub.f32 1.0, %v4164
        %v4261 = vsub.f32 1.0, %v4165
        %v4262 = vsub.f32 1.0, %v4166
        %v4263 = vsub.f32 1.0, %v4167
        %v4264 = vsub.f32 1.0, %v4168
        %v4265 = vsub.f32 1.0, %v4169
        %v4266 = vsub.f32 1.0, %v4170
        %v4267 = vsub.f32 1.0, %v4171
        %v4268 = vsub.f32 1.0, %v4172
        %v4269 = vsub.f32 1.0, %v4173
        %v4270 = vsub.f32 1.0, %v4174
        %v4271 = vsub.f32 1.0, %v4175
        %v4272 = vmul.f32 %v3023, %v4256
        %v4273 = vmul.f32 %v3024, %v4257
        %v4274 = vmul.f32 %v3025, %v4258
        %v4275 = vmul.f32 %v3026, %v4259
        %v4276 = vmul.f32 %v3027, %v4260
        %v4277 = vmul.f32 %v3028, %v4261
        %v4278 = vmul.f32 %v3029, %v4262
        %v4279 = vmul.f32 %v3030, %v4263
        %v4280 = vmul.f32 %v3031, %v4264
        %v4281 = vmul.f32 %v3032, %v4265
        %v4282 = vmul.f32 %v3033, %v4266
        %v4283 = vmul.f32 %v3034, %v4267
        %v4284 = vmul.f32 %v3035, %v4268
        %v4285 = vmul.f32 %v3036, %v4269
        %v4286 = vmul.f32 %v3037, %v4270
        %v4287 = vmul.f32 %v3038, %v4271
        %v4288 = vsub.f32 1.0, %v4272
        %v4289 = vsub.f32 1.0, %v4273
        %v4290 = vsub.f32 1.0, %v4274
        %v4291 = vsub.f32 1.0, %v4275
        %v4292 = vsub.f32 1.0, %v4276
        %v4293 = vsub.f32 1.0, %v4277
        %v4294 = vsub.f32 1.0, %v4278
        %v4295 = vsub.f32 1.0, %v4279
        %v4296 = vsub.f32 1.0, %v4280
        %v4297 = vsub.f32 1.0, %v4281
        %v4298 = vsub.f32 1.0, %v4282
        %v4299 = vsub.f32 1.0, %v4283
        %v4300 = vsub.f32 1.0, %v4284
        %v4301 = vsub.f32 1.0, %v4285
        %v4302 = vsub.f32 1.0, %v4286
        %v4303 = vsub.f32 1.0, %v4287
        %v4304 = vmul.f32 %v2895, %v4288
        %v4305 = vmul.f32 %v2896, %v4289
        %v4306 = vmul.f32 %v2897, %v4290
        %v4307 = vmul.f32 %v2898, %v4291
        %v4308 = vmul.f32 %v2899, %v4292
        %v4309 = vmul.f32 %v2900, %v4293
        %v4310 = vmul.f32 %v2901, %v4294
        %v4311 = vmul.f32 %v2902, %v4295
        %v4312 = vmul.f32 %v2903, %v4296
        %v4313 = vmul.f32 %v2904, %v4297
        %v4314 = vmul.f32 %v2905, %v4298
        %v4315 = vmul.f32 %v2906, %v4299
        %v4316 = vmul.f32 %v2907, %v4300
        %v4317 = vmul.f32 %v2908, %v4301
        %v4318 = vmul.f32 %v2909, %v4302
        %v4319 = vmul.f32 %v2910, %v4303
        %v4320 = vand.u32 2147483647, %v4144
        %v4321 = vrcp.pop 6.0
        %v4322 = vmul.f32 %v4320, %v4321
        %v4323 = vfloor.f32 %v4322
        %v4324 = vmul.f32 %v4323, 6.0
        %v4325 = vsub.f32 %v4320, %v4324
        %vm4326 = vcmp.eq.f32.partialorder %v4325, 6.0
        %v4327 = vsel %vm4326, 0.0, %v4325
        %v4328 = vand.u32 2147483647, %v4327
        %v4329 = vand.u32 %v4144, 2147483648
        %v4330 = vor.u32 %v4328, %v4329
        %v4331 = vand.u32 2147483647, %v4145
        %v4332 = vrcp.pop 6.0
        %v4333 = vmul.f32 %v4331, %v4332
        %v4334 = vfloor.f32 %v4333
        %v4335 = vmul.f32 %v4334, 6.0
        %v4336 = vsub.f32 %v4331, %v4335
        %vm4337 = vcmp.eq.f32.partialorder %v4336, 6.0
        %v4338 = vsel %vm4337, 0.0, %v4336
        %v4339 = vand.u32 2147483647, %v4338
        %v4340 = vand.u32 %v4145, 2147483648
        %v4341 = vor.u32 %v4339, %v4340
        %v4342 = vand.u32 2147483647, %v4146
        %v4343 = vrcp.pop 6.0
        %v4344 = vmul.f32 %v4342, %v4343
        %v4345 = vfloor.f32 %v4344
        %v4346 = vmul.f32 %v4345, 6.0
        %v4347 = vsub.f32 %v4342, %v4346
        %vm4348 = vcmp.eq.f32.partialorder %v4347, 6.0
        %v4349 = vsel %vm4348, 0.0, %v4347
        %v4350 = vand.u32 2147483647, %v4349
        %v4351 = vand.u32 %v4146, 2147483648
        %v4352 = vor.u32 %v4350, %v4351
        %v4353 = vand.u32 2147483647, %v4147
        %v4354 = vrcp.pop 6.0
        %v4355 = vmul.f32 %v4353, %v4354
        %v4356 = vfloor.f32 %v4355
        %v4357 = vmul.f32 %v4356, 6.0
        %v4358 = vsub.f32 %v4353, %v4357
        %vm4359 = vcmp.eq.f32.partialorder %v4358, 6.0
        %v4360 = vsel %vm4359, 0.0, %v4358
        %v4361 = vand.u32 2147483647, %v4360
        %v4362 = vand.u32 %v4147, 2147483648
        %v4363 = vor.u32 %v4361, %v4362
        %v4364 = vand.u32 2147483647, %v4148
        %v4365 = vrcp.pop 6.0
        %v4366 = vmul.f32 %v4364, %v4365
        %v4367 = vfloor.f32 %v4366
        %v4368 = vmul.f32 %v4367, 6.0
        %v4369 = vsub.f32 %v4364, %v4368
        %vm4370 = vcmp.eq.f32.partialorder %v4369, 6.0
        %v4371 = vsel %vm4370, 0.0, %v4369
        %v4372 = vand.u32 2147483647, %v4371
        %v4373 = vand.u32 %v4148, 2147483648
        %v4374 = vor.u32 %v4372, %v4373
        %v4375 = vand.u32 2147483647, %v4149
        %v4376 = vrcp.pop 6.0
        %v4377 = vmul.f32 %v4375, %v4376
        %v4378 = vfloor.f32 %v4377
        %v4379 = vmul.f32 %v4378, 6.0
        %v4380 = vsub.f32 %v4375, %v4379
        %vm4381 = vcmp.eq.f32.partialorder %v4380, 6.0
        %v4382 = vsel %vm4381, 0.0, %v4380
        %v4383 = vand.u32 2147483647, %v4382
        %v4384 = vand.u32 %v4149, 2147483648
        %v4385 = vor.u32 %v4383, %v4384
        %v4386 = vand.u32 2147483647, %v4150
        %v4387 = vrcp.pop 6.0
        %v4388 = vmul.f32 %v4386, %v4387
        %v4389 = vfloor.f32 %v4388
        %v4390 = vmul.f32 %v4389, 6.0
        %v4391 = vsub.f32 %v4386, %v4390
        %vm4392 = vcmp.eq.f32.partialorder %v4391, 6.0
        %v4393 = vsel %vm4392, 0.0, %v4391
        %v4394 = vand.u32 2147483647, %v4393
        %v4395 = vand.u32 %v4150, 2147483648
        %v4396 = vor.u32 %v4394, %v4395
        %v4397 = vand.u32 2147483647, %v4151
        %v4398 = vrcp.pop 6.0
        %v4399 = vmul.f32 %v4397, %v4398
        %v4400 = vfloor.f32 %v4399
        %v4401 = vmul.f32 %v4400, 6.0
        %v4402 = vsub.f32 %v4397, %v4401
        %vm4403 = vcmp.eq.f32.partialorder %v4402, 6.0
        %v4404 = vsel %vm4403, 0.0, %v4402
        %v4405 = vand.u32 2147483647, %v4404
        %v4406 = vand.u32 %v4151, 2147483648
        %v4407 = vor.u32 %v4405, %v4406
        %v4408 = vand.u32 2147483647, %v4152
        %v4409 = vrcp.pop 6.0
        %v4410 = vmul.f32 %v4408, %v4409
        %v4411 = vfloor.f32 %v4410
        %v4412 = vmul.f32 %v4411, 6.0
        %v4413 = vsub.f32 %v4408, %v4412
        %vm4414 = vcmp.eq.f32.partialorder %v4413, 6.0
        %v4415 = vsel %vm4414, 0.0, %v4413
        %v4416 = vand.u32 2147483647, %v4415
        %v4417 = vand.u32 %v4152, 2147483648
        %v4418 = vor.u32 %v4416, %v4417
        %v4419 = vand.u32 2147483647, %v4153
        %v4420 = vrcp.pop 6.0
        %v4421 = vmul.f32 %v4419, %v4420
        %v4422 = vfloor.f32 %v4421
        %v4423 = vmul.f32 %v4422, 6.0
        %v4424 = vsub.f32 %v4419, %v4423
        %vm4425 = vcmp.eq.f32.partialorder %v4424, 6.0
        %v4426 = vsel %vm4425, 0.0, %v4424
        %v4427 = vand.u32 2147483647, %v4426
        %v4428 = vand.u32 %v4153, 2147483648
        %v4429 = vor.u32 %v4427, %v4428
        %v4430 = vand.u32 2147483647, %v4154
        %v4431 = vrcp.pop 6.0
        %v4432 = vmul.f32 %v4430, %v4431
        %v4433 = vfloor.f32 %v4432
        %v4434 = vmul.f32 %v4433, 6.0
        %v4435 = vsub.f32 %v4430, %v4434
        %vm4436 = vcmp.eq.f32.partialorder %v4435, 6.0
        %v4437 = vsel %vm4436, 0.0, %v4435
        %v4438 = vand.u32 2147483647, %v4437
        %v4439 = vand.u32 %v4154, 2147483648
        %v4440 = vor.u32 %v4438, %v4439
        %v4441 = vand.u32 2147483647, %v4155
        %v4442 = vrcp.pop 6.0
        %v4443 = vmul.f32 %v4441, %v4442
        %v4444 = vfloor.f32 %v4443
        %v4445 = vmul.f32 %v4444, 6.0
        %v4446 = vsub.f32 %v4441, %v4445
        %vm4447 = vcmp.eq.f32.partialorder %v4446, 6.0
        %v4448 = vsel %vm4447, 0.0, %v4446
        %v4449 = vand.u32 2147483647, %v4448
        %v4450 = vand.u32 %v4155, 2147483648
        %v4451 = vor.u32 %v4449, %v4450
        %v4452 = vand.u32 2147483647, %v4156
        %v4453 = vrcp.pop 6.0
        %v4454 = vmul.f32 %v4452, %v4453
        %v4455 = vfloor.f32 %v4454
        %v4456 = vmul.f32 %v4455, 6.0
        %v4457 = vsub.f32 %v4452, %v4456
        %vm4458 = vcmp.eq.f32.partialorder %v4457, 6.0
        %v4459 = vsel %vm4458, 0.0, %v4457
        %v4460 = vand.u32 2147483647, %v4459
        %v4461 = vand.u32 %v4156, 2147483648
        %v4462 = vor.u32 %v4460, %v4461
        %v4463 = vand.u32 2147483647, %v4157
        %v4464 = vrcp.pop 6.0
        %v4465 = vmul.f32 %v4463, %v4464
        %v4466 = vfloor.f32 %v4465
        %v4467 = vmul.f32 %v4466, 6.0
        %v4468 = vsub.f32 %v4463, %v4467
        %vm4469 = vcmp.eq.f32.partialorder %v4468, 6.0
        %v4470 = vsel %vm4469, 0.0, %v4468
        %v4471 = vand.u32 2147483647, %v4470
        %v4472 = vand.u32 %v4157, 2147483648
        %v4473 = vor.u32 %v4471, %v4472
        %v4474 = vand.u32 2147483647, %v4158
        %v4475 = vrcp.pop 6.0
        %v4476 = vmul.f32 %v4474, %v4475
        %v4477 = vfloor.f32 %v4476
        %v4478 = vmul.f32 %v4477, 6.0
        %v4479 = vsub.f32 %v4474, %v4478
        %vm4480 = vcmp.eq.f32.partialorder %v4479, 6.0
        %v4481 = vsel %vm4480, 0.0, %v4479
        %v4482 = vand.u32 2147483647, %v4481
        %v4483 = vand.u32 %v4158, 2147483648
        %v4484 = vor.u32 %v4482, %v4483
        %v4485 = vand.u32 2147483647, %v4159
        %v4486 = vrcp.pop 6.0
        %v4487 = vmul.f32 %v4485, %v4486
        %v4488 = vfloor.f32 %v4487
        %v4489 = vmul.f32 %v4488, 6.0
        %v4490 = vsub.f32 %v4485, %v4489
        %vm4491 = vcmp.eq.f32.partialorder %v4490, 6.0
        %v4492 = vsel %vm4491, 0.0, %v4490
        %v4493 = vand.u32 2147483647, %v4492
        %v4494 = vand.u32 %v4159, 2147483648
        %v4495 = vor.u32 %v4493, %v4494
        %vm4496 = vcmp.ne.f32.partialorder %v4330, 0.0
        %vm4497 = vcmp.ne.f32.partialorder %v4341, 0.0
        %vm4498 = vcmp.ne.f32.partialorder %v4352, 0.0
        %vm4499 = vcmp.ne.f32.partialorder %v4363, 0.0
        %vm4500 = vcmp.ne.f32.partialorder %v4374, 0.0
        %vm4501 = vcmp.ne.f32.partialorder %v4385, 0.0
        %vm4502 = vcmp.ne.f32.partialorder %v4396, 0.0
        %vm4503 = vcmp.ne.f32.partialorder %v4407, 0.0
        %vm4504 = vcmp.ne.f32.partialorder %v4418, 0.0
        %vm4505 = vcmp.ne.f32.partialorder %v4429, 0.0
        %vm4506 = vcmp.ne.f32.partialorder %v4440, 0.0
        %vm4507 = vcmp.ne.f32.partialorder %v4451, 0.0
        %vm4508 = vcmp.ne.f32.partialorder %v4462, 0.0
        %vm4509 = vcmp.ne.f32.partialorder %v4473, 0.0
        %vm4510 = vcmp.ne.f32.partialorder %v4484, 0.0
        %vm4511 = vcmp.ne.f32.partialorder %v4495, 0.0
        %vm4512 = vcmp.lt.f32.partialorder %v4330, 0.0
        %vm4513 = vcmp.lt.f32.partialorder %v4341, 0.0
        %vm4514 = vcmp.lt.f32.partialorder %v4352, 0.0
        %vm4515 = vcmp.lt.f32.partialorder %v4363, 0.0
        %vm4516 = vcmp.lt.f32.partialorder %v4374, 0.0
        %vm4517 = vcmp.lt.f32.partialorder %v4385, 0.0
        %vm4518 = vcmp.lt.f32.partialorder %v4396, 0.0
        %vm4519 = vcmp.lt.f32.partialorder %v4407, 0.0
        %vm4520 = vcmp.lt.f32.partialorder %v4418, 0.0
        %vm4521 = vcmp.lt.f32.partialorder %v4429, 0.0
        %vm4522 = vcmp.lt.f32.partialorder %v4440, 0.0
        %vm4523 = vcmp.lt.f32.partialorder %v4451, 0.0
        %vm4524 = vcmp.lt.f32.partialorder %v4462, 0.0
        %vm4525 = vcmp.lt.f32.partialorder %v4473, 0.0
        %vm4526 = vcmp.lt.f32.partialorder %v4484, 0.0
        %vm4527 = vcmp.lt.f32.partialorder %v4495, 0.0
        %vm4528 = vmand %vm4512, %vm4496
        %vm4529 = vmand %vm4513, %vm4497
        %vm4530 = vmand %vm4514, %vm4498
        %vm4531 = vmand %vm4515, %vm4499
        %vm4532 = vmand %vm4516, %vm4500
        %vm4533 = vmand %vm4517, %vm4501
        %vm4534 = vmand %vm4518, %vm4502
        %vm4535 = vmand %vm4519, %vm4503
        %vm4536 = vmand %vm4520, %vm4504
        %vm4537 = vmand %vm4521, %vm4505
        %vm4538 = vmand %vm4522, %vm4506
        %vm4539 = vmand %vm4523, %vm4507
        %vm4540 = vmand %vm4524, %vm4508
        %vm4541 = vmand %vm4525, %vm4509
        %vm4542 = vmand %vm4526, %vm4510
        %vm4543 = vmand %vm4527, %vm4511
        %v4544 = vadd.f32 %v4330, 6.0
        %v4545 = vadd.f32 %v4341, 6.0
        %v4546 = vadd.f32 %v4352, 6.0
        %v4547 = vadd.f32 %v4363, 6.0
        %v4548 = vadd.f32 %v4374, 6.0
        %v4549 = vadd.f32 %v4385, 6.0
        %v4550 = vadd.f32 %v4396, 6.0
        %v4551 = vadd.f32 %v4407, 6.0
        %v4552 = vadd.f32 %v4418, 6.0
        %v4553 = vadd.f32 %v4429, 6.0
        %v4554 = vadd.f32 %v4440, 6.0
        %v4555 = vadd.f32 %v4451, 6.0
        %v4556 = vadd.f32 %v4462, 6.0
        %v4557 = vadd.f32 %v4473, 6.0
        %v4558 = vadd.f32 %v4484, 6.0
        %v4559 = vadd.f32 %v4495, 6.0
        %v4560 = vsel %vm4528, %v4544, %v4330
        %v4561 = vsel %vm4529, %v4545, %v4341
        %v4562 = vsel %vm4530, %v4546, %v4352
        %v4563 = vsel %vm4531, %v4547, %v4363
        %v4564 = vsel %vm4532, %v4548, %v4374
        %v4565 = vsel %vm4533, %v4549, %v4385
        %v4566 = vsel %vm4534, %v4550, %v4396
        %v4567 = vsel %vm4535, %v4551, %v4407
        %v4568 = vsel %vm4536, %v4552, %v4418
        %v4569 = vsel %vm4537, %v4553, %v4429
        %v4570 = vsel %vm4538, %v4554, %v4440
        %v4571 = vsel %vm4539, %v4555, %v4451
        %v4572 = vsel %vm4540, %v4556, %v4462
        %v4573 = vsel %vm4541, %v4557, %v4473
        %v4574 = vsel %vm4542, %v4558, %v4484
        %v4575 = vsel %vm4543, %v4559, %v4495
        %vm4576 = vcmp.eq.f32.partialorder %v4560, 0.0
        %vm4577 = vcmp.eq.f32.partialorder %v4561, 0.0
        %vm4578 = vcmp.eq.f32.partialorder %v4562, 0.0
        %vm4579 = vcmp.eq.f32.partialorder %v4563, 0.0
        %vm4580 = vcmp.eq.f32.partialorder %v4564, 0.0
        %vm4581 = vcmp.eq.f32.partialorder %v4565, 0.0
        %vm4582 = vcmp.eq.f32.partialorder %v4566, 0.0
        %vm4583 = vcmp.eq.f32.partialorder %v4567, 0.0
        %vm4584 = vcmp.eq.f32.partialorder %v4568, 0.0
        %vm4585 = vcmp.eq.f32.partialorder %v4569, 0.0
        %vm4586 = vcmp.eq.f32.partialorder %v4570, 0.0
        %vm4587 = vcmp.eq.f32.partialorder %v4571, 0.0
        %vm4588 = vcmp.eq.f32.partialorder %v4572, 0.0
        %vm4589 = vcmp.eq.f32.partialorder %v4573, 0.0
        %vm4590 = vcmp.eq.f32.partialorder %v4574, 0.0
        %vm4591 = vcmp.eq.f32.partialorder %v4575, 0.0
        %vm4592 = vcmp.eq.f32.partialorder %v4560, 1.0
        %vm4593 = vcmp.eq.f32.partialorder %v4561, 1.0
        %vm4594 = vcmp.eq.f32.partialorder %v4562, 1.0
        %vm4595 = vcmp.eq.f32.partialorder %v4563, 1.0
        %vm4596 = vcmp.eq.f32.partialorder %v4564, 1.0
        %vm4597 = vcmp.eq.f32.partialorder %v4565, 1.0
        %vm4598 = vcmp.eq.f32.partialorder %v4566, 1.0
        %vm4599 = vcmp.eq.f32.partialorder %v4567, 1.0
        %vm4600 = vcmp.eq.f32.partialorder %v4568, 1.0
        %vm4601 = vcmp.eq.f32.partialorder %v4569, 1.0
        %vm4602 = vcmp.eq.f32.partialorder %v4570, 1.0
        %vm4603 = vcmp.eq.f32.partialorder %v4571, 1.0
        %vm4604 = vcmp.eq.f32.partialorder %v4572, 1.0
        %vm4605 = vcmp.eq.f32.partialorder %v4573, 1.0
        %vm4606 = vcmp.eq.f32.partialorder %v4574, 1.0
        %vm4607 = vcmp.eq.f32.partialorder %v4575, 1.0
        %vm4608 = vcmp.eq.f32.partialorder %v4560, 2.0
        %vm4609 = vcmp.eq.f32.partialorder %v4561, 2.0
        %vm4610 = vcmp.eq.f32.partialorder %v4562, 2.0
        %vm4611 = vcmp.eq.f32.partialorder %v4563, 2.0
        %vm4612 = vcmp.eq.f32.partialorder %v4564, 2.0
        %vm4613 = vcmp.eq.f32.partialorder %v4565, 2.0
        %vm4614 = vcmp.eq.f32.partialorder %v4566, 2.0
        %vm4615 = vcmp.eq.f32.partialorder %v4567, 2.0
        %vm4616 = vcmp.eq.f32.partialorder %v4568, 2.0
        %vm4617 = vcmp.eq.f32.partialorder %v4569, 2.0
        %vm4618 = vcmp.eq.f32.partialorder %v4570, 2.0
        %vm4619 = vcmp.eq.f32.partialorder %v4571, 2.0
        %vm4620 = vcmp.eq.f32.partialorder %v4572, 2.0
        %vm4621 = vcmp.eq.f32.partialorder %v4573, 2.0
        %vm4622 = vcmp.eq.f32.partialorder %v4574, 2.0
        %vm4623 = vcmp.eq.f32.partialorder %v4575, 2.0
        %vm4624 = vcmp.eq.f32.partialorder %v4560, 3.0
        %vm4625 = vcmp.eq.f32.partialorder %v4561, 3.0
        %vm4626 = vcmp.eq.f32.partialorder %v4562, 3.0
        %vm4627 = vcmp.eq.f32.partialorder %v4563, 3.0
        %vm4628 = vcmp.eq.f32.partialorder %v4564, 3.0
        %vm4629 = vcmp.eq.f32.partialorder %v4565, 3.0
        %vm4630 = vcmp.eq.f32.partialorder %v4566, 3.0
        %vm4631 = vcmp.eq.f32.partialorder %v4567, 3.0
        %vm4632 = vcmp.eq.f32.partialorder %v4568, 3.0
        %vm4633 = vcmp.eq.f32.partialorder %v4569, 3.0
        %vm4634 = vcmp.eq.f32.partialorder %v4570, 3.0
        %vm4635 = vcmp.eq.f32.partialorder %v4571, 3.0
        %vm4636 = vcmp.eq.f32.partialorder %v4572, 3.0
        %vm4637 = vcmp.eq.f32.partialorder %v4573, 3.0
        %vm4638 = vcmp.eq.f32.partialorder %v4574, 3.0
        %vm4639 = vcmp.eq.f32.partialorder %v4575, 3.0
        %vm4640 = vcmp.eq.f32.partialorder %v4560, 4.0
        %vm4641 = vcmp.eq.f32.partialorder %v4561, 4.0
        %vm4642 = vcmp.eq.f32.partialorder %v4562, 4.0
        %vm4643 = vcmp.eq.f32.partialorder %v4563, 4.0
        %vm4644 = vcmp.eq.f32.partialorder %v4564, 4.0
        %vm4645 = vcmp.eq.f32.partialorder %v4565, 4.0
        %vm4646 = vcmp.eq.f32.partialorder %v4566, 4.0
        %vm4647 = vcmp.eq.f32.partialorder %v4567, 4.0
        %vm4648 = vcmp.eq.f32.partialorder %v4568, 4.0
        %vm4649 = vcmp.eq.f32.partialorder %v4569, 4.0
        %vm4650 = vcmp.eq.f32.partialorder %v4570, 4.0
        %vm4651 = vcmp.eq.f32.partialorder %v4571, 4.0
        %vm4652 = vcmp.eq.f32.partialorder %v4572, 4.0
        %vm4653 = vcmp.eq.f32.partialorder %v4573, 4.0
        %vm4654 = vcmp.eq.f32.partialorder %v4574, 4.0
        %vm4655 = vcmp.eq.f32.partialorder %v4575, 4.0
        %v4656 = vsel %vm4640, %v4304, %v2895
        %v4657 = vsel %vm4641, %v4305, %v2896
        %v4658 = vsel %vm4642, %v4306, %v2897
        %v4659 = vsel %vm4643, %v4307, %v2898
        %v4660 = vsel %vm4644, %v4308, %v2899
        %v4661 = vsel %vm4645, %v4309, %v2900
        %v4662 = vsel %vm4646, %v4310, %v2901
        %v4663 = vsel %vm4647, %v4311, %v2902
        %v4664 = vsel %vm4648, %v4312, %v2903
        %v4665 = vsel %vm4649, %v4313, %v2904
        %v4666 = vsel %vm4650, %v4314, %v2905
        %v4667 = vsel %vm4651, %v4315, %v2906
        %v4668 = vsel %vm4652, %v4316, %v2907
        %v4669 = vsel %vm4653, %v4317, %v2908
        %v4670 = vsel %vm4654, %v4318, %v2909
        %v4671 = vsel %vm4655, %v4319, %v2910
        %v4672 = vsel %vm4624, %v4192, %v4656
        %v4673 = vsel %vm4625, %v4193, %v4657
        %v4674 = vsel %vm4626, %v4194, %v4658
        %v4675 = vsel %vm4627, %v4195, %v4659
        %v4676 = vsel %vm4628, %v4196, %v4660
        %v4677 = vsel %vm4629, %v4197, %v4661
        %v4678 = vsel %vm4630, %v4198, %v4662
        %v4679 = vsel %vm4631, %v4199, %v4663
        %v4680 = vsel %vm4632, %v4200, %v4664
        %v4681 = vsel %vm4633, %v4201, %v4665
        %v4682 = vsel %vm4634, %v4202, %v4666
        %v4683 = vsel %vm4635, %v4203, %v4667
        %v4684 = vsel %vm4636, %v4204, %v4668
        %v4685 = vsel %vm4637, %v4205, %v4669
        %v4686 = vsel %vm4638, %v4206, %v4670
        %v4687 = vsel %vm4639, %v4207, %v4671
        %v4688 = vsel %vm4608, %v4192, %v4672
        %v4689 = vsel %vm4609, %v4193, %v4673
        %v4690 = vsel %vm4610, %v4194, %v4674
        %v4691 = vsel %vm4611, %v4195, %v4675
        %v4692 = vsel %vm4612, %v4196, %v4676
        %v4693 = vsel %vm4613, %v4197, %v4677
        %v4694 = vsel %vm4614, %v4198, %v4678
        %v4695 = vsel %vm4615, %v4199, %v4679
        %v4696 = vsel %vm4616, %v4200, %v4680
        %v4697 = vsel %vm4617, %v4201, %v4681
        %v4698 = vsel %vm4618, %v4202, %v4682
        %v4699 = vsel %vm4619, %v4203, %v4683
        %v4700 = vsel %vm4620, %v4204, %v4684
        %v4701 = vsel %vm4621, %v4205, %v4685
        %v4702 = vsel %vm4622, %v4206, %v4686
        %v4703 = vsel %vm4623, %v4207, %v4687
        %v4704 = vsel %vm4592, %v4240, %v4688
        %v4705 = vsel %vm4593, %v4241, %v4689
        %v4706 = vsel %vm4594, %v4242, %v4690
        %v4707 = vsel %vm4595, %v4243, %v4691
        %v4708 = vsel %vm4596, %v4244, %v4692
        %v4709 = vsel %vm4597, %v4245, %v4693
        %v4710 = vsel %vm4598, %v4246, %v4694
        %v4711 = vsel %vm4599, %v4247, %v4695
        %v4712 = vsel %vm4600, %v4248, %v4696
        %v4713 = vsel %vm4601, %v4249, %v4697
        %v4714 = vsel %vm4602, %v4250, %v4698
        %v4715 = vsel %vm4603, %v4251, %v4699
        %v4716 = vsel %vm4604, %v4252, %v4700
        %v4717 = vsel %vm4605, %v4253, %v4701
        %v4718 = vsel %vm4606, %v4254, %v4702
        %v4719 = vsel %vm4607, %v4255, %v4703
        %v4720 = vsel %vm4576, %v2895, %v4704
        %v4721 = vsel %vm4577, %v2896, %v4705
        %v4722 = vsel %vm4578, %v2897, %v4706
        %v4723 = vsel %vm4579, %v2898, %v4707
        %v4724 = vsel %vm4580, %v2899, %v4708
        %v4725 = vsel %vm4581, %v2900, %v4709
        %v4726 = vsel %vm4582, %v2901, %v4710
        %v4727 = vsel %vm4583, %v2902, %v4711
        %v4728 = vsel %vm4584, %v2903, %v4712
        %v4729 = vsel %vm4585, %v2904, %v4713
        %v4730 = vsel %vm4586, %v2905, %v4714
        %v4731 = vsel %vm4587, %v2906, %v4715
        %v4732 = vsel %vm4588, %v2907, %v4716
        %v4733 = vsel %vm4589, %v2908, %v4717
        %v4734 = vsel %vm4590, %v2909, %v4718
        %v4735 = vsel %vm4591, %v2910, %v4719
        %v4736 = vsel %vm4624, %v4240, %v4192
        %v4737 = vsel %vm4625, %v4241, %v4193
        %v4738 = vsel %vm4626, %v4242, %v4194
        %v4739 = vsel %vm4627, %v4243, %v4195
        %v4740 = vsel %vm4628, %v4244, %v4196
        %v4741 = vsel %vm4629, %v4245, %v4197
        %v4742 = vsel %vm4630, %v4246, %v4198
        %v4743 = vsel %vm4631, %v4247, %v4199
        %v4744 = vsel %vm4632, %v4248, %v4200
        %v4745 = vsel %vm4633, %v4249, %v4201
        %v4746 = vsel %vm4634, %v4250, %v4202
        %v4747 = vsel %vm4635, %v4251, %v4203
        %v4748 = vsel %vm4636, %v4252, %v4204
        %v4749 = vsel %vm4637, %v4253, %v4205
        %v4750 = vsel %vm4638, %v4254, %v4206
        %v4751 = vsel %vm4639, %v4255, %v4207
        %v4752 = vsel %vm4608, %v2895, %v4736
        %v4753 = vsel %vm4609, %v2896, %v4737
        %v4754 = vsel %vm4610, %v2897, %v4738
        %v4755 = vsel %vm4611, %v2898, %v4739
        %v4756 = vsel %vm4612, %v2899, %v4740
        %v4757 = vsel %vm4613, %v2900, %v4741
        %v4758 = vsel %vm4614, %v2901, %v4742
        %v4759 = vsel %vm4615, %v2902, %v4743
        %v4760 = vsel %vm4616, %v2903, %v4744
        %v4761 = vsel %vm4617, %v2904, %v4745
        %v4762 = vsel %vm4618, %v2905, %v4746
        %v4763 = vsel %vm4619, %v2906, %v4747
        %v4764 = vsel %vm4620, %v2907, %v4748
        %v4765 = vsel %vm4621, %v2908, %v4749
        %v4766 = vsel %vm4622, %v2909, %v4750
        %v4767 = vsel %vm4623, %v2910, %v4751
        %v4768 = vsel %vm4592, %v2895, %v4752
        %v4769 = vsel %vm4593, %v2896, %v4753
        %v4770 = vsel %vm4594, %v2897, %v4754
        %v4771 = vsel %vm4595, %v2898, %v4755
        %v4772 = vsel %vm4596, %v2899, %v4756
        %v4773 = vsel %vm4597, %v2900, %v4757
        %v4774 = vsel %vm4598, %v2901, %v4758
        %v4775 = vsel %vm4599, %v2902, %v4759
        %v4776 = vsel %vm4600, %v2903, %v4760
        %v4777 = vsel %vm4601, %v2904, %v4761
        %v4778 = vsel %vm4602, %v2905, %v4762
        %v4779 = vsel %vm4603, %v2906, %v4763
        %v4780 = vsel %vm4604, %v2907, %v4764
        %v4781 = vsel %vm4605, %v2908, %v4765
        %v4782 = vsel %vm4606, %v2909, %v4766
        %v4783 = vsel %vm4607, %v2910, %v4767
        %v4784 = vsel %vm4576, %v4304, %v4768
        %v4785 = vsel %vm4577, %v4305, %v4769
        %v4786 = vsel %vm4578, %v4306, %v4770
        %v4787 = vsel %vm4579, %v4307, %v4771
        %v4788 = vsel %vm4580, %v4308, %v4772
        %v4789 = vsel %vm4581, %v4309, %v4773
        %v4790 = vsel %vm4582, %v4310, %v4774
        %v4791 = vsel %vm4583, %v4311, %v4775
        %v4792 = vsel %vm4584, %v4312, %v4776
        %v4793 = vsel %vm4585, %v4313, %v4777
        %v4794 = vsel %vm4586, %v4314, %v4778
        %v4795 = vsel %vm4587, %v4315, %v4779
        %v4796 = vsel %vm4588, %v4316, %v4780
        %v4797 = vsel %vm4589, %v4317, %v4781
        %v4798 = vsel %vm4590, %v4318, %v4782
        %v4799 = vsel %vm4591, %v4319, %v4783
        %v4800 = vsel %vm4640, %v2895, %v4240
        %v4801 = vsel %vm4641, %v2896, %v4241
        %v4802 = vsel %vm4642, %v2897, %v4242
        %v4803 = vsel %vm4643, %v2898, %v4243
        %v4804 = vsel %vm4644, %v2899, %v4244
        %v4805 = vsel %vm4645, %v2900, %v4245
        %v4806 = vsel %vm4646, %v2901, %v4246
        %v4807 = vsel %vm4647, %v2902, %v4247
        %v4808 = vsel %vm4648, %v2903, %v4248
        %v4809 = vsel %vm4649, %v2904, %v4249
        %v4810 = vsel %vm4650, %v2905, %v4250
        %v4811 = vsel %vm4651, %v2906, %v4251
        %v4812 = vsel %vm4652, %v2907, %v4252
        %v4813 = vsel %vm4653, %v2908, %v4253
        %v4814 = vsel %vm4654, %v2909, %v4254
        %v4815 = vsel %vm4655, %v2910, %v4255
        %v4816 = vsel %vm4624, %v2895, %v4800
        %v4817 = vsel %vm4625, %v2896, %v4801
        %v4818 = vsel %vm4626, %v2897, %v4802
        %v4819 = vsel %vm4627, %v2898, %v4803
        %v4820 = vsel %vm4628, %v2899, %v4804
        %v4821 = vsel %vm4629, %v2900, %v4805
        %v4822 = vsel %vm4630, %v2901, %v4806
        %v4823 = vsel %vm4631, %v2902, %v4807
        %v4824 = vsel %vm4632, %v2903, %v4808
        %v4825 = vsel %vm4633, %v2904, %v4809
        %v4826 = vsel %vm4634, %v2905, %v4810
        %v4827 = vsel %vm4635, %v2906, %v4811
        %v4828 = vsel %vm4636, %v2907, %v4812
        %v4829 = vsel %vm4637, %v2908, %v4813
        %v4830 = vsel %vm4638, %v2909, %v4814
        %v4831 = vsel %vm4639, %v2910, %v4815
        %v4832 = vsel %vm4608, %v4304, %v4816
        %v4833 = vsel %vm4609, %v4305, %v4817
        %v4834 = vsel %vm4610, %v4306, %v4818
        %v4835 = vsel %vm4611, %v4307, %v4819
        %v4836 = vsel %vm4612, %v4308, %v4820
        %v4837 = vsel %vm4613, %v4309, %v4821
        %v4838 = vsel %vm4614, %v4310, %v4822
        %v4839 = vsel %vm4615, %v4311, %v4823
        %v4840 = vsel %vm4616, %v4312, %v4824
        %v4841 = vsel %vm4617, %v4313, %v4825
        %v4842 = vsel %vm4618, %v4314, %v4826
        %v4843 = vsel %vm4619, %v4315, %v4827
        %v4844 = vsel %vm4620, %v4316, %v4828
        %v4845 = vsel %vm4621, %v4317, %v4829
        %v4846 = vsel %vm4622, %v4318, %v4830
        %v4847 = vsel %vm4623, %v4319, %v4831
        %v4848 = vsel %vm4592, %v4192, %v4832
        %v4849 = vsel %vm4593, %v4193, %v4833
        %v4850 = vsel %vm4594, %v4194, %v4834
        %v4851 = vsel %vm4595, %v4195, %v4835
        %v4852 = vsel %vm4596, %v4196, %v4836
        %v4853 = vsel %vm4597, %v4197, %v4837
        %v4854 = vsel %vm4598, %v4198, %v4838
        %v4855 = vsel %vm4599, %v4199, %v4839
        %v4856 = vsel %vm4600, %v4200, %v4840
        %v4857 = vsel %vm4601, %v4201, %v4841
        %v4858 = vsel %vm4602, %v4202, %v4842
        %v4859 = vsel %vm4603, %v4203, %v4843
        %v4860 = vsel %vm4604, %v4204, %v4844
        %v4861 = vsel %vm4605, %v4205, %v4845
        %v4862 = vsel %vm4606, %v4206, %v4846
        %v4863 = vsel %vm4607, %v4207, %v4847
        %v4864 = vsel %vm4576, %v4192, %v4848
        %v4865 = vsel %vm4577, %v4193, %v4849
        %v4866 = vsel %vm4578, %v4194, %v4850
        %v4867 = vsel %vm4579, %v4195, %v4851
        %v4868 = vsel %vm4580, %v4196, %v4852
        %v4869 = vsel %vm4581, %v4197, %v4853
        %v4870 = vsel %vm4582, %v4198, %v4854
        %v4871 = vsel %vm4583, %v4199, %v4855
        %v4872 = vsel %vm4584, %v4200, %v4856
        %v4873 = vsel %vm4585, %v4201, %v4857
        %v4874 = vsel %vm4586, %v4202, %v4858
        %v4875 = vsel %vm4587, %v4203, %v4859
        %v4876 = vsel %vm4588, %v4204, %v4860
        %v4877 = vsel %vm4589, %v4205, %v4861
        %v4878 = vsel %vm4590, %v4206, %v4862
        %v4879 = vsel %vm4591, %v4207, %v4863
        %vm4880 = vcmp.gt.f32.partialorder %v477, 0.5
        %vm4881 = vcmp.gt.f32.partialorder %v478, 0.5
        %vm4882 = vcmp.gt.f32.partialorder %v479, 0.5
        %vm4883 = vcmp.gt.f32.partialorder %v480, 0.5
        %v4884 = vsel %vm4880, 1, 0
        %v4885 = vsel %vm4881, 1, 0
        %v4886 = vsel %vm4882, 1, 0
        %v4887 = vsel %vm4883, 1, 0
        %v4888 = vlaneseq
        %v4889 = vshrl.u32 %v4888, 7
        %v4890 = vsub.s32 0, %v4889
        %v4891 = vrot.slane %v4884, %v4890
        %v4892 = vlaneseq
        %v4893 = vshrl.u32 %v4892, 7
        %v4894 = vsub.s32 0, %v4893
        %v4895 = vrot.slane %v4885, %v4894
        %v4896 = vlaneseq
        %v4897 = vshrl.u32 %v4896, 7
        %v4898 = vsub.s32 0, %v4897
        %v4899 = vrot.slane %v4886, %v4898
        %v4900 = vlaneseq
        %v4901 = vshrl.u32 %v4900, 7
        %v4902 = vsub.s32 0, %v4901
        %v4903 = vrot.slane %v4887, %v4902
        %4904 = vset.pattern.permute.xlu0 0
        %4905 = vperm.xlu0 %4904, %v4891
        %v4906 = vpop.permute.xlu0 %4905
        %4907 = vset.pattern.permute.xlu0 0
        %4908 = vperm.xlu0 %4907, %v4895
        %v4909 = vpop.permute.xlu0 %4908
        %4910 = vset.pattern.permute.xlu0 0
        %4911 = vperm.xlu0 %4910, %v4899
        %v4912 = vpop.permute.xlu0 %4911
        %4913 = vset.pattern.permute.xlu0 0
        %4914 = vperm.xlu0 %4913, %v4903
        %v4915 = vpop.permute.xlu0 %4914
        %vm4916 = vcmp.eq.s32.totalorder %v4906, 1
        %vm4917 = vcmp.eq.s32.totalorder %v4909, 1
        %vm4918 = vcmp.eq.s32.totalorder %v4912, 1
        %vm4919 = vcmp.eq.s32.totalorder %v4915, 1
        %v4920 = vsel %vm4916, %v4720, %v1666
        %v4921 = vsel %vm4916, %v4721, %v1667
        %v4922 = vsel %vm4916, %v4722, %v1668
        %v4923 = vsel %vm4916, %v4723, %v1669
        %v4924 = vsel %vm4917, %v4724, %v1670
        %v4925 = vsel %vm4917, %v4725, %v1671
        %v4926 = vsel %vm4917, %v4726, %v1672
        %v4927 = vsel %vm4917, %v4727, %v1673
        %v4928 = vsel %vm4918, %v4728, %v1674
        %v4929 = vsel %vm4918, %v4729, %v1675
        %v4930 = vsel %vm4918, %v4730, %v1676
        %v4931 = vsel %vm4918, %v4731, %v1677
        %v4932 = vsel %vm4919, %v4732, %v1678
        %v4933 = vsel %vm4919, %v4733, %v1679
        %v4934 = vsel %vm4919, %v4734, %v1680
        %v4935 = vsel %vm4919, %v4735, %v1681
        %4952 = vrot.lane.b32.xlu0 %v1666, 96
        %v4953 = vpop.permute.xlu0 %4952
        %4954 = vrot.lane.b32.xlu0 %v1667, 96
        %v4955 = vpop.permute.xlu0 %4954
        %4956 = vrot.lane.b32.xlu0 %v1668, 96
        %v4957 = vpop.permute.xlu0 %4956
        %4958 = vrot.lane.b32.xlu0 %v1669, 96
        %v4959 = vpop.permute.xlu0 %4958
        %4960 = vrot.lane.b32.xlu0 %v1670, 96
        %v4961 = vpop.permute.xlu0 %4960
        %4962 = vrot.lane.b32.xlu0 %v1671, 96
        %v4963 = vpop.permute.xlu0 %4962
        %4964 = vrot.lane.b32.xlu0 %v1672, 96
        %v4965 = vpop.permute.xlu0 %4964
        %4966 = vrot.lane.b32.xlu0 %v1673, 96
        %v4967 = vpop.permute.xlu0 %4966
        %4968 = vrot.lane.b32.xlu0 %v1674, 96
        %v4969 = vpop.permute.xlu0 %4968
        %4970 = vrot.lane.b32.xlu0 %v1675, 96
        %v4971 = vpop.permute.xlu0 %4970
        %4972 = vrot.lane.b32.xlu0 %v1676, 96
        %v4973 = vpop.permute.xlu0 %4972
        %4974 = vrot.lane.b32.xlu0 %v1677, 96
        %v4975 = vpop.permute.xlu0 %4974
        %4976 = vrot.lane.b32.xlu0 %v1678, 96
        %v4977 = vpop.permute.xlu0 %4976
        %4978 = vrot.lane.b32.xlu0 %v1679, 96
        %v4979 = vpop.permute.xlu0 %4978
        %4980 = vrot.lane.b32.xlu0 %v1680, 96
        %v4981 = vpop.permute.xlu0 %4980
        %4982 = vrot.lane.b32.xlu0 %v1681, 96
        %v4983 = vpop.permute.xlu0 %4982
        %v5000 = vsel %vm4916, %v4784, %v4953
        %v5001 = vsel %vm4916, %v4785, %v4955
        %v5002 = vsel %vm4916, %v4786, %v4957
        %v5003 = vsel %vm4916, %v4787, %v4959
        %v5004 = vsel %vm4917, %v4788, %v4961
        %v5005 = vsel %vm4917, %v4789, %v4963
        %v5006 = vsel %vm4917, %v4790, %v4965
        %v5007 = vsel %vm4917, %v4791, %v4967
        %v5008 = vsel %vm4918, %v4792, %v4969
        %v5009 = vsel %vm4918, %v4793, %v4971
        %v5010 = vsel %vm4918, %v4794, %v4973
        %v5011 = vsel %vm4918, %v4795, %v4975
        %v5012 = vsel %vm4919, %v4796, %v4977
        %v5013 = vsel %vm4919, %v4797, %v4979
        %v5014 = vsel %vm4919, %v4798, %v4981
        %v5015 = vsel %vm4919, %v4799, %v4983
        %5016 = vrot.lane.b32.xlu0 %v1666, 64
        %v5017 = vpop.permute.xlu0 %5016
        %5018 = vrot.lane.b32.xlu0 %v1667, 64
        %v5019 = vpop.permute.xlu0 %5018
        %5020 = vrot.lane.b32.xlu0 %v1668, 64
        %v5021 = vpop.permute.xlu0 %5020
        %5022 = vrot.lane.b32.xlu0 %v1669, 64
        %v5023 = vpop.permute.xlu0 %5022
        %5024 = vrot.lane.b32.xlu0 %v1670, 64
        %v5025 = vpop.permute.xlu0 %5024
        %5026 = vrot.lane.b32.xlu0 %v1671, 64
        %v5027 = vpop.permute.xlu0 %5026
        %5028 = vrot.lane.b32.xlu0 %v1672, 64
        %v5029 = vpop.permute.xlu0 %5028
        %5030 = vrot.lane.b32.xlu0 %v1673, 64
        %v5031 = vpop.permute.xlu0 %5030
        %5032 = vrot.lane.b32.xlu0 %v1674, 64
        %v5033 = vpop.permute.xlu0 %5032
        %5034 = vrot.lane.b32.xlu0 %v1675, 64
        %v5035 = vpop.permute.xlu0 %5034
        %5036 = vrot.lane.b32.xlu0 %v1676, 64
        %v5037 = vpop.permute.xlu0 %5036
        %5038 = vrot.lane.b32.xlu0 %v1677, 64
        %v5039 = vpop.permute.xlu0 %5038
        %5040 = vrot.lane.b32.xlu0 %v1678, 64
        %v5041 = vpop.permute.xlu0 %5040
        %5042 = vrot.lane.b32.xlu0 %v1679, 64
        %v5043 = vpop.permute.xlu0 %5042
        %5044 = vrot.lane.b32.xlu0 %v1680, 64
        %v5045 = vpop.permute.xlu0 %5044
        %5046 = vrot.lane.b32.xlu0 %v1681, 64
        %v5047 = vpop.permute.xlu0 %5046
        %v5064 = vsel %vm4916, %v4864, %v5017
        %v5065 = vsel %vm4916, %v4865, %v5019
        %v5066 = vsel %vm4916, %v4866, %v5021
        %v5067 = vsel %vm4916, %v4867, %v5023
        %v5068 = vsel %vm4917, %v4868, %v5025
        %v5069 = vsel %vm4917, %v4869, %v5027
        %v5070 = vsel %vm4917, %v4870, %v5029
        %v5071 = vsel %vm4917, %v4871, %v5031
        %v5072 = vsel %vm4918, %v4872, %v5033
        %v5073 = vsel %vm4918, %v4873, %v5035
        %v5074 = vsel %vm4918, %v4874, %v5037
        %v5075 = vsel %vm4918, %v4875, %v5039
        %v5076 = vsel %vm4919, %v4876, %v5041
        %v5077 = vsel %vm4919, %v4877, %v5043
        %v5078 = vsel %vm4919, %v4878, %v5045
        %v5079 = vsel %vm4919, %v4879, %v5047
        %v5080 = vmul.f32 %v4920, 0.2989
        %v5081 = vmul.f32 %v4921, 0.2989
        %v5082 = vmul.f32 %v4922, 0.2989
        %v5083 = vmul.f32 %v4923, 0.2989
        %v5084 = vmul.f32 %v4924, 0.2989
        %v5085 = vmul.f32 %v4925, 0.2989
        %v5086 = vmul.f32 %v4926, 0.2989
        %v5087 = vmul.f32 %v4927, 0.2989
        %v5088 = vmul.f32 %v4928, 0.2989
        %v5089 = vmul.f32 %v4929, 0.2989
        %v5090 = vmul.f32 %v4930, 0.2989
        %v5091 = vmul.f32 %v4931, 0.2989
        %v5092 = vmul.f32 %v4932, 0.2989
        %v5093 = vmul.f32 %v4933, 0.2989
        %v5094 = vmul.f32 %v4934, 0.2989
        %v5095 = vmul.f32 %v4935, 0.2989
        %v5096 = vmul.f32 %v5000, 0.587
        %v5097 = vmul.f32 %v5001, 0.587
        %v5098 = vmul.f32 %v5002, 0.587
        %v5099 = vmul.f32 %v5003, 0.587
        %v5100 = vmul.f32 %v5004, 0.587
        %v5101 = vmul.f32 %v5005, 0.587
        %v5102 = vmul.f32 %v5006, 0.587
        %v5103 = vmul.f32 %v5007, 0.587
        %v5104 = vmul.f32 %v5008, 0.587
        %v5105 = vmul.f32 %v5009, 0.587
        %v5106 = vmul.f32 %v5010, 0.587
        %v5107 = vmul.f32 %v5011, 0.587
        %v5108 = vmul.f32 %v5012, 0.587
        %v5109 = vmul.f32 %v5013, 0.587
        %v5110 = vmul.f32 %v5014, 0.587
        %v5111 = vmul.f32 %v5015, 0.587
        %v5112 = vadd.f32 %v5080, %v5096
        %v5113 = vadd.f32 %v5081, %v5097
        %v5114 = vadd.f32 %v5082, %v5098
        %v5115 = vadd.f32 %v5083, %v5099
        %v5116 = vadd.f32 %v5084, %v5100
        %v5117 = vadd.f32 %v5085, %v5101
        %v5118 = vadd.f32 %v5086, %v5102
        %v5119 = vadd.f32 %v5087, %v5103
        %v5120 = vadd.f32 %v5088, %v5104
        %v5121 = vadd.f32 %v5089, %v5105
        %v5122 = vadd.f32 %v5090, %v5106
        %v5123 = vadd.f32 %v5091, %v5107
        %v5124 = vadd.f32 %v5092, %v5108
        %v5125 = vadd.f32 %v5093, %v5109
        %v5126 = vadd.f32 %v5094, %v5110
        %v5127 = vadd.f32 %v5095, %v5111
        %v5128 = vmul.f32 %v5064, 0.114
        %v5129 = vmul.f32 %v5065, 0.114
        %v5130 = vmul.f32 %v5066, 0.114
        %v5131 = vmul.f32 %v5067, 0.114
        %v5132 = vmul.f32 %v5068, 0.114
        %v5133 = vmul.f32 %v5069, 0.114
        %v5134 = vmul.f32 %v5070, 0.114
        %v5135 = vmul.f32 %v5071, 0.114
        %v5136 = vmul.f32 %v5072, 0.114
        %v5137 = vmul.f32 %v5073, 0.114
        %v5138 = vmul.f32 %v5074, 0.114
        %v5139 = vmul.f32 %v5075, 0.114
        %v5140 = vmul.f32 %v5076, 0.114
        %v5141 = vmul.f32 %v5077, 0.114
        %v5142 = vmul.f32 %v5078, 0.114
        %v5143 = vmul.f32 %v5079, 0.114
        %v5144 = vadd.f32 %v5112, %v5128
        %v5145 = vadd.f32 %v5113, %v5129
        %v5146 = vadd.f32 %v5114, %v5130
        %v5147 = vadd.f32 %v5115, %v5131
        %v5148 = vadd.f32 %v5116, %v5132
        %v5149 = vadd.f32 %v5117, %v5133
        %v5150 = vadd.f32 %v5118, %v5134
        %v5151 = vadd.f32 %v5119, %v5135
        %v5152 = vadd.f32 %v5120, %v5136
        %v5153 = vadd.f32 %v5121, %v5137
        %v5154 = vadd.f32 %v5122, %v5138
        %v5155 = vadd.f32 %v5123, %v5139
        %v5156 = vadd.f32 %v5124, %v5140
        %v5157 = vadd.f32 %v5125, %v5141
        %v5158 = vadd.f32 %v5126, %v5142
        %v5159 = vadd.f32 %v5127, %v5143
        %5160 = vset.pattern.permute.xlu0 5
        %5161 = vperm.xlu0 %5160, %v4891
        %v5162 = vpop.permute.xlu0 %5161
        %5163 = vset.pattern.permute.xlu0 5
        %5164 = vperm.xlu0 %5163, %v4895
        %v5165 = vpop.permute.xlu0 %5164
        %5166 = vset.pattern.permute.xlu0 5
        %5167 = vperm.xlu0 %5166, %v4899
        %v5168 = vpop.permute.xlu0 %5167
        %5169 = vset.pattern.permute.xlu0 5
        %5170 = vperm.xlu0 %5169, %v4903
        %v5171 = vpop.permute.xlu0 %5170
        %vm5172 = vcmp.eq.s32.totalorder %v5162, 1
        %vm5173 = vcmp.eq.s32.totalorder %v5165, 1
        %vm5174 = vcmp.eq.s32.totalorder %v5168, 1
        %vm5175 = vcmp.eq.s32.totalorder %v5171, 1
        %v5176 = vsel %vm5172, %v5144, %v4920
        %v5177 = vsel %vm5172, %v5145, %v4921
        %v5178 = vsel %vm5172, %v5146, %v4922
        %v5179 = vsel %vm5172, %v5147, %v4923
        %v5180 = vsel %vm5173, %v5148, %v4924
        %v5181 = vsel %vm5173, %v5149, %v4925
        %v5182 = vsel %vm5173, %v5150, %v4926
        %v5183 = vsel %vm5173, %v5151, %v4927
        %v5184 = vsel %vm5174, %v5152, %v4928
        %v5185 = vsel %vm5174, %v5153, %v4929
        %v5186 = vsel %vm5174, %v5154, %v4930
        %v5187 = vsel %vm5174, %v5155, %v4931
        %v5188 = vsel %vm5175, %v5156, %v4932
        %v5189 = vsel %vm5175, %v5157, %v4933
        %v5190 = vsel %vm5175, %v5158, %v4934
        %v5191 = vsel %vm5175, %v5159, %v4935
        %v5192 = vsel %vm5172, %v5144, %v5000
        %v5193 = vsel %vm5172, %v5145, %v5001
        %v5194 = vsel %vm5172, %v5146, %v5002
        %v5195 = vsel %vm5172, %v5147, %v5003
        %v5196 = vsel %vm5173, %v5148, %v5004
        %v5197 = vsel %vm5173, %v5149, %v5005
        %v5198 = vsel %vm5173, %v5150, %v5006
        %v5199 = vsel %vm5173, %v5151, %v5007
        %v5200 = vsel %vm5174, %v5152, %v5008
        %v5201 = vsel %vm5174, %v5153, %v5009
        %v5202 = vsel %vm5174, %v5154, %v5010
        %v5203 = vsel %vm5174, %v5155, %v5011
        %v5204 = vsel %vm5175, %v5156, %v5012
        %v5205 = vsel %vm5175, %v5157, %v5013
        %v5206 = vsel %vm5175, %v5158, %v5014
        %v5207 = vsel %vm5175, %v5159, %v5015
        %v5208 = vsel %vm5172, %v5144, %v5064
        %v5209 = vsel %vm5172, %v5145, %v5065
        %v5210 = vsel %vm5172, %v5146, %v5066
        %v5211 = vsel %vm5172, %v5147, %v5067
        %v5212 = vsel %vm5173, %v5148, %v5068
        %v5213 = vsel %vm5173, %v5149, %v5069
        %v5214 = vsel %vm5173, %v5150, %v5070
        %v5215 = vsel %vm5173, %v5151, %v5071
        %v5216 = vsel %vm5174, %v5152, %v5072
        %v5217 = vsel %vm5174, %v5153, %v5073
        %v5218 = vsel %vm5174, %v5154, %v5074
        %v5219 = vsel %vm5174, %v5155, %v5075
        %v5220 = vsel %vm5175, %v5156, %v5076
        %v5221 = vsel %vm5175, %v5157, %v5077
        %v5222 = vsel %vm5175, %v5158, %v5078
        %v5223 = vsel %vm5175, %v5159, %v5079
        %5240 = vrot.lane.b32.xlu0 %v5192, 32
        %v5241 = vpop.permute.xlu0 %5240
        %5242 = vrot.lane.b32.xlu0 %v5193, 32
        %v5243 = vpop.permute.xlu0 %5242
        %5244 = vrot.lane.b32.xlu0 %v5194, 32
        %v5245 = vpop.permute.xlu0 %5244
        %5246 = vrot.lane.b32.xlu0 %v5195, 32
        %v5247 = vpop.permute.xlu0 %5246
        %5248 = vrot.lane.b32.xlu0 %v5196, 32
        %v5249 = vpop.permute.xlu0 %5248
        %5250 = vrot.lane.b32.xlu0 %v5197, 32
        %v5251 = vpop.permute.xlu0 %5250
        %5252 = vrot.lane.b32.xlu0 %v5198, 32
        %v5253 = vpop.permute.xlu0 %5252
        %5254 = vrot.lane.b32.xlu0 %v5199, 32
        %v5255 = vpop.permute.xlu0 %5254
        %5256 = vrot.lane.b32.xlu0 %v5200, 32
        %v5257 = vpop.permute.xlu0 %5256
        %5258 = vrot.lane.b32.xlu0 %v5201, 32
        %v5259 = vpop.permute.xlu0 %5258
        %5260 = vrot.lane.b32.xlu0 %v5202, 32
        %v5261 = vpop.permute.xlu0 %5260
        %5262 = vrot.lane.b32.xlu0 %v5203, 32
        %v5263 = vpop.permute.xlu0 %5262
        %5264 = vrot.lane.b32.xlu0 %v5204, 32
        %v5265 = vpop.permute.xlu0 %5264
        %5266 = vrot.lane.b32.xlu0 %v5205, 32
        %v5267 = vpop.permute.xlu0 %5266
        %5268 = vrot.lane.b32.xlu0 %v5206, 32
        %v5269 = vpop.permute.xlu0 %5268
        %5270 = vrot.lane.b32.xlu0 %v5207, 32
        %v5271 = vpop.permute.xlu0 %5270
        %5304 = vrot.lane.b32.xlu0 %v5208, 64
        %v5305 = vpop.permute.xlu0 %5304
        %5306 = vrot.lane.b32.xlu0 %v5209, 64
        %v5307 = vpop.permute.xlu0 %5306
        %5308 = vrot.lane.b32.xlu0 %v5210, 64
        %v5309 = vpop.permute.xlu0 %5308
        %5310 = vrot.lane.b32.xlu0 %v5211, 64
        %v5311 = vpop.permute.xlu0 %5310
        %5312 = vrot.lane.b32.xlu0 %v5212, 64
        %v5313 = vpop.permute.xlu0 %5312
        %5314 = vrot.lane.b32.xlu0 %v5213, 64
        %v5315 = vpop.permute.xlu0 %5314
        %5316 = vrot.lane.b32.xlu0 %v5214, 64
        %v5317 = vpop.permute.xlu0 %5316
        %5318 = vrot.lane.b32.xlu0 %v5215, 64
        %v5319 = vpop.permute.xlu0 %5318
        %5320 = vrot.lane.b32.xlu0 %v5216, 64
        %v5321 = vpop.permute.xlu0 %5320
        %5322 = vrot.lane.b32.xlu0 %v5217, 64
        %v5323 = vpop.permute.xlu0 %5322
        %5324 = vrot.lane.b32.xlu0 %v5218, 64
        %v5325 = vpop.permute.xlu0 %5324
        %5326 = vrot.lane.b32.xlu0 %v5219, 64
        %v5327 = vpop.permute.xlu0 %5326
        %5328 = vrot.lane.b32.xlu0 %v5220, 64
        %v5329 = vpop.permute.xlu0 %5328
        %5330 = vrot.lane.b32.xlu0 %v5221, 64
        %v5331 = vpop.permute.xlu0 %5330
        %5332 = vrot.lane.b32.xlu0 %v5222, 64
        %v5333 = vpop.permute.xlu0 %5332
        %5334 = vrot.lane.b32.xlu0 %v5223, 64
        %v5335 = vpop.permute.xlu0 %5334
        %v5352 = vsel %vm911, %v5176, %v5241
        %v5353 = vsel %vm911, %v5177, %v5243
        %v5354 = vsel %vm911, %v5178, %v5245
        %v5355 = vsel %vm911, %v5179, %v5247
        %v5356 = vsel %vm911, %v5180, %v5249
        %v5357 = vsel %vm911, %v5181, %v5251
        %v5358 = vsel %vm911, %v5182, %v5253
        %v5359 = vsel %vm911, %v5183, %v5255
        %v5360 = vsel %vm911, %v5184, %v5257
        %v5361 = vsel %vm911, %v5185, %v5259
        %v5362 = vsel %vm911, %v5186, %v5261
        %v5363 = vsel %vm911, %v5187, %v5263
        %v5364 = vsel %vm911, %v5188, %v5265
        %v5365 = vsel %vm911, %v5189, %v5267
        %v5366 = vsel %vm911, %v5190, %v5269
        %v5367 = vsel %vm911, %v5191, %v5271
        %v5368 = vsel %vm928, %v5352, %v5305
        %v5369 = vsel %vm928, %v5353, %v5307
        %v5370 = vsel %vm928, %v5354, %v5309
        %v5371 = vsel %vm928, %v5355, %v5311
        %v5372 = vsel %vm928, %v5356, %v5313
        %v5373 = vsel %vm928, %v5357, %v5315
        %v5374 = vsel %vm928, %v5358, %v5317
        %v5375 = vsel %vm928, %v5359, %v5319
        %v5376 = vsel %vm928, %v5360, %v5321
        %v5377 = vsel %vm928, %v5361, %v5323
        %v5378 = vsel %vm928, %v5362, %v5325
        %v5379 = vsel %vm928, %v5363, %v5327
        %v5380 = vsel %vm928, %v5364, %v5329
        %v5381 = vsel %vm928, %v5365, %v5331
        %v5382 = vsel %vm928, %v5366, %v5333
        %v5383 = vsel %vm928, %v5367, %v5335
        %v5384 = vpack.c.bf16 %v5369, %v5368
        %v5385 = vpack.c.bf16 %v5371, %v5370
        %v5386 = vpack.c.bf16 %v5373, %v5372
        %v5387 = vpack.c.bf16 %v5375, %v5374
        %v5388 = vpack.c.bf16 %v5377, %v5376
        %v5389 = vpack.c.bf16 %v5379, %v5378
        %v5390 = vpack.c.bf16 %v5381, %v5380
        %v5391 = vpack.c.bf16 %v5383, %v5382
        %v5392 = vld [vmem:[%s406] sm:$0xf]
        %v5393 = vld [vmem:[%s406 + $0x4] sm:$0xf]
        %v5394 = vld [vmem:[%s406 + $0x8] sm:$0xf]
        %v5395 = vld [vmem:[%s406 + $0xc] sm:$0xf]
        %v5396 = vld [vmem:[%s406 + $0x10] sm:$0xf]
        %v5397 = vld [vmem:[%s406 + $0x14] sm:$0xf]
        %v5398 = vld [vmem:[%s406 + $0x18] sm:$0xf]
        %v5399 = vld [vmem:[%s406 + $0x1c] sm:$0xf]
        %v5400 = vld [vmem:[%s406 + $0x20] sm:$0xf]
        %v5401 = vld [vmem:[%s406 + $0x24] sm:$0xf]
        %v5402 = vld [vmem:[%s406 + $0x28] sm:$0xf]
        %v5403 = vld [vmem:[%s406 + $0x2c] sm:$0xf]
        %v5404 = vld [vmem:[%s406 + $0x30] sm:$0xf]
        %v5405 = vld [vmem:[%s406 + $0x34] sm:$0xf]
        %v5406 = vld [vmem:[%s406 + $0x38] sm:$0xf]
        %v5407 = vld [vmem:[%s406 + $0x3c] sm:$0xf]
        %v5412 = vunpack.c.l.b16 %v5392
        %v5413 = vunpack.c.l.b16 %v5393
        %v5414 = vunpack.c.l.b16 %v5394
        %v5415 = vunpack.c.l.b16 %v5395
        %v5416 = vpack.c.b16 %v5413, %v5412
        %v5417 = vpack.c.b16 %v5415, %v5414
        %v5419 = vsel %vm911, %v5416, 0
        %v5422 = vsel %vm911, %v5417, 0
        %5424 = vmatprep.subr.bf16.mxu0 0
        %5425 = vmatpush1.bf16.msra.mxu0 %v5384
        %5426 = vmatprep.subr.bf16.mxu0 0
        %5427 = vmatpush1.bf16.msra.mxu0 %v5385
        %5428 = vmatprep.subr.bf16.mxu0 0
        %5429 = vmatpush1.bf16.msra.mxu0 0
        %5430 = vmatprep.subr.bf16.mxu0 0
        %5431 = vmatpush1.bf16.msra.mxu0 0
        %5432 = vmatprep.subr.bf16.mxu0 0
        %5433 = vmatpush1.bf16.msra.mxu0 0
        %5434 = vmatprep.subr.bf16.mxu0 0
        %5435 = vmatpush1.bf16.msra.mxu0 0
        %5436 = vmatprep.subr.bf16.mxu0 0
        %5437 = vmatpush1.bf16.msra.mxu0 0
        %5438 = vmatprep.subr.bf16.mxu0 0
        %5439 = vmatpush1.bf16.msra.mxu0 0
        %5440 = vmatprep.subr.bf16.mxu0 0
        %5441 = vmatpush1.bf16.msra.mxu0 0
        %5442 = vmatprep.subr.bf16.mxu0 0
        %5443 = vmatpush1.bf16.msra.mxu0 0
        %5444 = vmatprep.subr.bf16.mxu0 0
        %5445 = vmatpush1.bf16.msra.mxu0 0
        %5446 = vmatprep.subr.bf16.mxu0 0
        %5447 = vmatpush1.bf16.msra.mxu0 0
        %5448 = vmatprep.subr.bf16.mxu0 0
        %5449 = vmatpush1.bf16.msra.mxu0 0
        %5450 = vmatprep.subr.bf16.mxu0 0
        %5451 = vmatpush1.bf16.msra.mxu0 0
        %5452 = vmatprep.subr.bf16.mxu0 0
        %5453 = vmatpush1.bf16.msra.mxu0 0
        %5454 = vmatprep.subr.bf16.mxu0 0
        %5455 = vmatpush1.bf16.msra.mxu0 0
        %5456 = vmatprep.mubr.bf16.mxu0 0
        %5457 = vmatmul.mubr.bf16.gmra.mrb[0].mxu0 %v5419
        %v5458 = vpop.f32.mrb[0].mxu0
        %v5459 = vadd.f32 0.0, %v5458
        %v5460 = vpop.f32.mrb[0].mxu0
        %v5461 = vpop.f32.mrb[0].mxu0
        %v5462 = vadd.f32 0.0, %v5461
        %v5463 = vpop.f32.mrb[0].mxu0
        %5464 = vmatprep.mubr.bf16.mxu0 0
        %5465 = vmatmul.mubr.bf16.gmra.mrb[0].mxu0 %v5422
        %v5466 = vpop.f32.mrb[0].mxu0
        %v5467 = vadd.f32 0.0, %v5466
        %v5468 = vpop.f32.mrb[0].mxu0
        %v5469 = vpop.f32.mrb[0].mxu0
        %v5470 = vadd.f32 0.0, %v5469
        %v5471 = vpop.f32.mrb[0].mxu0
        %5472 = vdwg.mxu0
        %v5477 = vunpack.c.l.b16 %v5396
        %v5478 = vunpack.c.l.b16 %v5397
        %v5479 = vunpack.c.l.b16 %v5398
        %v5480 = vunpack.c.l.b16 %v5399
        %v5481 = vpack.c.b16 %v5478, %v5477
        %v5482 = vpack.c.b16 %v5480, %v5479
        %v5484 = vsel %vm911, %v5481, 0
        %v5487 = vsel %vm911, %v5482, 0
        %5489 = vmatprep.subr.bf16.mxu0 0
        %5490 = vmatpush1.bf16.msra.mxu0 %v5386
        %5491 = vmatprep.subr.bf16.mxu0 0
        %5492 = vmatpush1.bf16.msra.mxu0 %v5387
        %5493 = vmatprep.subr.bf16.mxu0 0
        %5494 = vmatpush1.bf16.msra.mxu0 0
        %5495 = vmatprep.subr.bf16.mxu0 0
        %5496 = vmatpush1.bf16.msra.mxu0 0
        %5497 = vmatprep.subr.bf16.mxu0 0
        %5498 = vmatpush1.bf16.msra.mxu0 0
        %5499 = vmatprep.subr.bf16.mxu0 0
        %5500 = vmatpush1.bf16.msra.mxu0 0
        %5501 = vmatprep.subr.bf16.mxu0 0
        %5502 = vmatpush1.bf16.msra.mxu0 0
        %5503 = vmatprep.subr.bf16.mxu0 0
        %5504 = vmatpush1.bf16.msra.mxu0 0
        %5505 = vmatprep.subr.bf16.mxu0 0
        %5506 = vmatpush1.bf16.msra.mxu0 0
        %5507 = vmatprep.subr.bf16.mxu0 0
        %5508 = vmatpush1.bf16.msra.mxu0 0
        %5509 = vmatprep.subr.bf16.mxu0 0
        %5510 = vmatpush1.bf16.msra.mxu0 0
        %5511 = vmatprep.subr.bf16.mxu0 0
        %5512 = vmatpush1.bf16.msra.mxu0 0
        %5513 = vmatprep.subr.bf16.mxu0 0
        %5514 = vmatpush1.bf16.msra.mxu0 0
        %5515 = vmatprep.subr.bf16.mxu0 0
        %5516 = vmatpush1.bf16.msra.mxu0 0
        %5517 = vmatprep.subr.bf16.mxu0 0
        %5518 = vmatpush1.bf16.msra.mxu0 0
        %5519 = vmatprep.subr.bf16.mxu0 0
        %5520 = vmatpush1.bf16.msra.mxu0 0
        %5521 = vmatprep.mubr.bf16.mxu0 0
        %5522 = vmatmul.mubr.bf16.gmra.mrb[0].mxu0 %v5484
        %v5523 = vpop.f32.mrb[0].mxu0
        %v5524 = vadd.f32 0.0, %v5523
        %v5525 = vpop.f32.mrb[0].mxu0
        %v5526 = vpop.f32.mrb[0].mxu0
        %v5527 = vadd.f32 0.0, %v5526
        %v5528 = vpop.f32.mrb[0].mxu0
        %5529 = vmatprep.mubr.bf16.mxu0 0
        %5530 = vmatmul.mubr.bf16.gmra.mrb[0].mxu0 %v5487
        %v5531 = vpop.f32.mrb[0].mxu0
        %v5532 = vadd.f32 0.0, %v5531
        %v5533 = vpop.f32.mrb[0].mxu0
        %v5534 = vpop.f32.mrb[0].mxu0
        %v5535 = vadd.f32 0.0, %v5534
        %v5536 = vpop.f32.mrb[0].mxu0
        %5537 = vdwg.mxu0
        %v5542 = vunpack.c.l.b16 %v5400
        %v5543 = vunpack.c.l.b16 %v5401
        %v5544 = vunpack.c.l.b16 %v5402
        %v5545 = vunpack.c.l.b16 %v5403
        %v5546 = vpack.c.b16 %v5543, %v5542
        %v5547 = vpack.c.b16 %v5545, %v5544
        %v5549 = vsel %vm911, %v5546, 0
        %v5552 = vsel %vm911, %v5547, 0
        %5554 = vmatprep.subr.bf16.mxu0 0
        %5555 = vmatpush1.bf16.msra.mxu0 %v5388
        %5556 = vmatprep.subr.bf16.mxu0 0
        %5557 = vmatpush1.bf16.msra.mxu0 %v5389
        %5558 = vmatprep.subr.bf16.mxu0 0
        %5559 = vmatpush1.bf16.msra.mxu0 0
        %5560 = vmatprep.subr.bf16.mxu0 0
        %5561 = vmatpush1.bf16.msra.mxu0 0
        %5562 = vmatprep.subr.bf16.mxu0 0
        %5563 = vmatpush1.bf16.msra.mxu0 0
        %5564 = vmatprep.subr.bf16.mxu0 0
        %5565 = vmatpush1.bf16.msra.mxu0 0
        %5566 = vmatprep.subr.bf16.mxu0 0
        %5567 = vmatpush1.bf16.msra.mxu0 0
        %5568 = vmatprep.subr.bf16.mxu0 0
        %5569 = vmatpush1.bf16.msra.mxu0 0
        %5570 = vmatprep.subr.bf16.mxu0 0
        %5571 = vmatpush1.bf16.msra.mxu0 0
        %5572 = vmatprep.subr.bf16.mxu0 0
        %5573 = vmatpush1.bf16.msra.mxu0 0
        %5574 = vmatprep.subr.bf16.mxu0 0
        %5575 = vmatpush1.bf16.msra.mxu0 0
        %5576 = vmatprep.subr.bf16.mxu0 0
        %5577 = vmatpush1.bf16.msra.mxu0 0
        %5578 = vmatprep.subr.bf16.mxu0 0
        %5579 = vmatpush1.bf16.msra.mxu0 0
        %5580 = vmatprep.subr.bf16.mxu0 0
        %5581 = vmatpush1.bf16.msra.mxu0 0
        %5582 = vmatprep.subr.bf16.mxu0 0
        %5583 = vmatpush1.bf16.msra.mxu0 0
        %5584 = vmatprep.subr.bf16.mxu0 0
        %5585 = vmatpush1.bf16.msra.mxu0 0
        %5586 = vmatprep.mubr.bf16.mxu0 0
        %5587 = vmatmul.mubr.bf16.gmra.mrb[0].mxu0 %v5549
        %v5588 = vpop.f32.mrb[0].mxu0
        %v5589 = vadd.f32 0.0, %v5588
        %v5590 = vpop.f32.mrb[0].mxu0
        %v5591 = vpop.f32.mrb[0].mxu0
        %v5592 = vadd.f32 0.0, %v5591
        %v5593 = vpop.f32.mrb[0].mxu0
        %5594 = vmatprep.mubr.bf16.mxu0 0
        %5595 = vmatmul.mubr.bf16.gmra.mrb[0].mxu0 %v5552
        %v5596 = vpop.f32.mrb[0].mxu0
        %v5597 = vadd.f32 0.0, %v5596
        %v5598 = vpop.f32.mrb[0].mxu0
        %v5599 = vpop.f32.mrb[0].mxu0
        %v5600 = vadd.f32 0.0, %v5599
        %v5601 = vpop.f32.mrb[0].mxu0
        %5602 = vdwg.mxu0
        %v5607 = vunpack.c.l.b16 %v5404
        %v5608 = vunpack.c.l.b16 %v5405
        %v5609 = vunpack.c.l.b16 %v5406
        %v5610 = vunpack.c.l.b16 %v5407
        %v5611 = vpack.c.b16 %v5608, %v5607
        %v5612 = vpack.c.b16 %v5610, %v5609
        %v5614 = vsel %vm911, %v5611, 0
        %v5617 = vsel %vm911, %v5612, 0
        %5619 = vmatprep.subr.bf16.mxu0 0
        %5620 = vmatpush1.bf16.msra.mxu0 %v5390
        %5621 = vmatprep.subr.bf16.mxu0 0
        %5622 = vmatpush1.bf16.msra.mxu0 %v5391
        %5623 = vmatprep.subr.bf16.mxu0 0
        %5624 = vmatpush1.bf16.msra.mxu0 0
        %5625 = vmatprep.subr.bf16.mxu0 0
        %5626 = vmatpush1.bf16.msra.mxu0 0
        %5627 = vmatprep.subr.bf16.mxu0 0
        %5628 = vmatpush1.bf16.msra.mxu0 0
        %5629 = vmatprep.subr.bf16.mxu0 0
        %5630 = vmatpush1.bf16.msra.mxu0 0
        %5631 = vmatprep.subr.bf16.mxu0 0
        %5632 = vmatpush1.bf16.msra.mxu0 0
        %5633 = vmatprep.subr.bf16.mxu0 0
        %5634 = vmatpush1.bf16.msra.mxu0 0
        %5635 = vmatprep.subr.bf16.mxu0 0
        %5636 = vmatpush1.bf16.msra.mxu0 0
        %5637 = vmatprep.subr.bf16.mxu0 0
        %5638 = vmatpush1.bf16.msra.mxu0 0
        %5639 = vmatprep.subr.bf16.mxu0 0
        %5640 = vmatpush1.bf16.msra.mxu0 0
        %5641 = vmatprep.subr.bf16.mxu0 0
        %5642 = vmatpush1.bf16.msra.mxu0 0
        %5643 = vmatprep.subr.bf16.mxu0 0
        %5644 = vmatpush1.bf16.msra.mxu0 0
        %5645 = vmatprep.subr.bf16.mxu0 0
        %5646 = vmatpush1.bf16.msra.mxu0 0
        %5647 = vmatprep.subr.bf16.mxu0 0
        %5648 = vmatpush1.bf16.msra.mxu0 0
        %5649 = vmatprep.subr.bf16.mxu0 0
        %5650 = vmatpush1.bf16.msra.mxu0 0
        %5651 = vmatprep.mubr.bf16.mxu0 0
        %5652 = vmatmul.mubr.bf16.gmra.mrb[0].mxu0 %v5614
        %v5653 = vpop.f32.mrb[0].mxu0
        %v5654 = vadd.f32 0.0, %v5653
        %v5655 = vpop.f32.mrb[0].mxu0
        %v5656 = vpop.f32.mrb[0].mxu0
        %v5657 = vadd.f32 0.0, %v5656
        %v5658 = vpop.f32.mrb[0].mxu0
        %5659 = vmatprep.mubr.bf16.mxu0 0
        %5660 = vmatmul.mubr.bf16.gmra.mrb[0].mxu0 %v5617
        %v5661 = vpop.f32.mrb[0].mxu0
        %v5662 = vadd.f32 0.0, %v5661
        %v5663 = vpop.f32.mrb[0].mxu0
        %v5664 = vpop.f32.mrb[0].mxu0
        %v5665 = vadd.f32 0.0, %v5664
        %v5666 = vpop.f32.mrb[0].mxu0
        %5667 = vdwg.mxu0
        %v5668 = vpack.c.bf16 %v5462, %v5459
        %v5669 = vpack.c.bf16 %v5470, %v5467
        %v5670 = vpack.c.bf16 %v5527, %v5524
        %v5671 = vpack.c.bf16 %v5535, %v5532
        %v5672 = vpack.c.bf16 %v5592, %v5589
        %v5673 = vpack.c.bf16 %v5600, %v5597
        %v5674 = vpack.c.bf16 %v5657, %v5654
        %v5675 = vpack.c.bf16 %v5665, %v5662
        %v5676 = vld [vmem:[%s415] sm:$0xf]
        %v5677 = vld [vmem:[%s415 + $0x4] sm:$0xf]
        %v5678 = vld [vmem:[%s415 + $0x8] sm:$0xf]
        %v5679 = vld [vmem:[%s415 + $0xc] sm:$0xf]
        %v5680 = vld [vmem:[%s415 + $0x10] sm:$0xf]
        %v5681 = vld [vmem:[%s415 + $0x14] sm:$0xf]
        %v5682 = vld [vmem:[%s415 + $0x18] sm:$0xf]
        %v5683 = vld [vmem:[%s415 + $0x1c] sm:$0xf]
        %v5684 = vld [vmem:[%s415 + $0x20] sm:$0xf]
        %v5685 = vld [vmem:[%s415 + $0x24] sm:$0xf]
        %v5686 = vld [vmem:[%s415 + $0x28] sm:$0xf]
        %v5687 = vld [vmem:[%s415 + $0x2c] sm:$0xf]
        %v5688 = vld [vmem:[%s415 + $0x30] sm:$0xf]
        %v5689 = vld [vmem:[%s415 + $0x34] sm:$0xf]
        %v5690 = vld [vmem:[%s415 + $0x38] sm:$0xf]
        %v5691 = vld [vmem:[%s415 + $0x3c] sm:$0xf]
        %v5692 = vld [vmem:[%s415 + $0x40] sm:$0xf]
        %v5693 = vld [vmem:[%s415 + $0x44] sm:$0xf]
        %v5694 = vld [vmem:[%s415 + $0x48] sm:$0xf]
        %v5695 = vld [vmem:[%s415 + $0x4c] sm:$0xf]
        %v5696 = vld [vmem:[%s415 + $0x50] sm:$0xf]
        %v5697 = vld [vmem:[%s415 + $0x54] sm:$0xf]
        %v5698 = vld [vmem:[%s415 + $0x58] sm:$0xf]
        %v5699 = vld [vmem:[%s415 + $0x5c] sm:$0xf]
        %v5700 = vld [vmem:[%s415 + $0x60] sm:$0xf]
        %v5701 = vld [vmem:[%s415 + $0x64] sm:$0xf]
        %v5702 = vld [vmem:[%s415 + $0x68] sm:$0xf]
        %v5703 = vld [vmem:[%s415 + $0x6c] sm:$0xf]
        %v5704 = vld [vmem:[%s415 + $0x70] sm:$0xf]
        %v5705 = vld [vmem:[%s415 + $0x74] sm:$0xf]
        %v5706 = vld [vmem:[%s415 + $0x78] sm:$0xf]
        %v5707 = vld [vmem:[%s415 + $0x7c] sm:$0xf]
        %v5708 = vld [vmem:[%s415 + $0x80] sm:$0xf]
        %v5709 = vld [vmem:[%s415 + $0x84] sm:$0xf]
        %v5710 = vld [vmem:[%s415 + $0x88] sm:$0xf]
        %v5711 = vld [vmem:[%s415 + $0x8c] sm:$0xf]
        %v5712 = vld [vmem:[%s415 + $0x90] sm:$0xf]
        %v5713 = vld [vmem:[%s415 + $0x94] sm:$0xf]
        %v5714 = vld [vmem:[%s415 + $0x98] sm:$0xf]
        %v5715 = vld [vmem:[%s415 + $0x9c] sm:$0xf]
        %v5716 = vld [vmem:[%s415 + $0xa0] sm:$0xf]
        %v5717 = vld [vmem:[%s415 + $0xa4] sm:$0xf]
        %v5718 = vld [vmem:[%s415 + $0xa8] sm:$0xf]
        %v5719 = vld [vmem:[%s415 + $0xac] sm:$0xf]
        %v5720 = vld [vmem:[%s415 + $0xb0] sm:$0xf]
        %v5721 = vld [vmem:[%s415 + $0xb4] sm:$0xf]
        %v5722 = vld [vmem:[%s415 + $0xb8] sm:$0xf]
        %v5723 = vld [vmem:[%s415 + $0xbc] sm:$0xf]
        %v5736 = vunpack.c.l.b16 %v5676
        %v5737 = vunpack.c.l.b16 %v5677
        %v5738 = vunpack.c.l.b16 %v5678
        %v5739 = vunpack.c.l.b16 %v5679
        %v5740 = vunpack.c.l.b16 %v5680
        %v5741 = vunpack.c.l.b16 %v5681
        %v5742 = vunpack.c.l.b16 %v5682
        %v5743 = vunpack.c.l.b16 %v5683
        %v5744 = vunpack.c.l.b16 %v5684
        %v5745 = vunpack.c.l.b16 %v5685
        %v5746 = vunpack.c.l.b16 %v5686
        %v5747 = vunpack.c.l.b16 %v5687
        %v5748 = vpack.c.b16 %v5737, %v5736
        %v5749 = vpack.c.b16 %v5739, %v5738
        %v5750 = vpack.c.b16 %v5741, %v5740
        %v5751 = vpack.c.b16 %v5743, %v5742
        %v5752 = vpack.c.b16 %v5745, %v5744
        %v5753 = vpack.c.b16 %v5747, %v5746
        %v5761 = vsel %vm1321, %v5668, 0
        %v5764 = vsel %vm1321, %v5669, 0
        %5766 = vmatprep.subr.bf16.mxu0 0
        %5767 = vmatpush1.bf16.msra.mxu0 %v5748
        %5768 = vmatprep.subr.bf16.mxu0 0
        %5769 = vmatpush1.bf16.msra.mxu0 %v5749
        %5770 = vmatprep.subr.bf16.mxu0 0
        %5771 = vmatpush1.bf16.msra.mxu0 %v5750
        %5772 = vmatprep.subr.bf16.mxu0 0
        %5773 = vmatpush1.bf16.msra.mxu0 %v5751
        %5774 = vmatprep.subr.bf16.mxu0 0
        %5775 = vmatpush1.bf16.msra.mxu0 %v5752
        %5776 = vmatprep.subr.bf16.mxu0 0
        %5777 = vmatpush1.bf16.msra.mxu0 %v5753
        %5778 = vmatprep.subr.bf16.mxu0 0
        %5779 = vmatpush1.bf16.msra.mxu0 0
        %5780 = vmatprep.subr.bf16.mxu0 0
        %5781 = vmatpush1.bf16.msra.mxu0 0
        %5782 = vmatprep.subr.bf16.mxu0 0
        %5783 = vmatpush1.bf16.msra.mxu0 0
        %5784 = vmatprep.subr.bf16.mxu0 0
        %5785 = vmatpush1.bf16.msra.mxu0 0
        %5786 = vmatprep.subr.bf16.mxu0 0
        %5787 = vmatpush1.bf16.msra.mxu0 0
        %5788 = vmatprep.subr.bf16.mxu0 0
        %5789 = vmatpush1.bf16.msra.mxu0 0
        %5790 = vmatprep.subr.bf16.mxu0 0
        %5791 = vmatpush1.bf16.msra.mxu0 0
        %5792 = vmatprep.subr.bf16.mxu0 0
        %5793 = vmatpush1.bf16.msra.mxu0 0
        %5794 = vmatprep.subr.bf16.mxu0 0
        %5795 = vmatpush1.bf16.msra.mxu0 0
        %5796 = vmatprep.subr.bf16.mxu0 0
        %5797 = vmatpush1.bf16.msra.mxu0 0
        %5798 = vmatprep.mubr.bf16.mxu0 0
        %5799 = vmatmul.mubr.bf16.gmra.mrb[0].mxu0 %v5761
        %v5800 = vpop.f32.mrb[0].mxu0
        %v5801 = vadd.f32 0.0, %v5800
        %v5802 = vpop.f32.mrb[0].mxu0
        %v5803 = vpop.f32.mrb[0].mxu0
        %v5804 = vadd.f32 0.0, %v5803
        %v5805 = vpop.f32.mrb[0].mxu0
        %5806 = vmatprep.mubr.bf16.mxu0 0
        %5807 = vmatmul.mubr.bf16.gmra.mrb[0].mxu0 %v5764
        %v5808 = vpop.f32.mrb[0].mxu0
        %v5809 = vadd.f32 0.0, %v5808
        %v5810 = vpop.f32.mrb[0].mxu0
        %v5811 = vpop.f32.mrb[0].mxu0
        %v5812 = vadd.f32 0.0, %v5811
        %v5813 = vpop.f32.mrb[0].mxu0
        %5814 = vdwg.mxu0
        %v5827 = vunpack.c.l.b16 %v5688
        %v5828 = vunpack.c.l.b16 %v5689
        %v5829 = vunpack.c.l.b16 %v5690
        %v5830 = vunpack.c.l.b16 %v5691
        %v5831 = vunpack.c.l.b16 %v5692
        %v5832 = vunpack.c.l.b16 %v5693
        %v5833 = vunpack.c.l.b16 %v5694
        %v5834 = vunpack.c.l.b16 %v5695
        %v5835 = vunpack.c.l.b16 %v5696
        %v5836 = vunpack.c.l.b16 %v5697
        %v5837 = vunpack.c.l.b16 %v5698
        %v5838 = vunpack.c.l.b16 %v5699
        %v5839 = vpack.c.b16 %v5828, %v5827
        %v5840 = vpack.c.b16 %v5830, %v5829
        %v5841 = vpack.c.b16 %v5832, %v5831
        %v5842 = vpack.c.b16 %v5834, %v5833
        %v5843 = vpack.c.b16 %v5836, %v5835
        %v5844 = vpack.c.b16 %v5838, %v5837
        %v5852 = vsel %vm1321, %v5670, 0
        %v5855 = vsel %vm1321, %v5671, 0
        %5857 = vmatprep.subr.bf16.mxu0 0
        %5858 = vmatpush1.bf16.msra.mxu0 %v5839
        %5859 = vmatprep.subr.bf16.mxu0 0
        %5860 = vmatpush1.bf16.msra.mxu0 %v5840
        %5861 = vmatprep.subr.bf16.mxu0 0
        %5862 = vmatpush1.bf16.msra.mxu0 %v5841
        %5863 = vmatprep.subr.bf16.mxu0 0
        %5864 = vmatpush1.bf16.msra.mxu0 %v5842
        %5865 = vmatprep.subr.bf16.mxu0 0
        %5866 = vmatpush1.bf16.msra.mxu0 %v5843
        %5867 = vmatprep.subr.bf16.mxu0 0
        %5868 = vmatpush1.bf16.msra.mxu0 %v5844
        %5869 = vmatprep.subr.bf16.mxu0 0
        %5870 = vmatpush1.bf16.msra.mxu0 0
        %5871 = vmatprep.subr.bf16.mxu0 0
        %5872 = vmatpush1.bf16.msra.mxu0 0
        %5873 = vmatprep.subr.bf16.mxu0 0
        %5874 = vmatpush1.bf16.msra.mxu0 0
        %5875 = vmatprep.subr.bf16.mxu0 0
        %5876 = vmatpush1.bf16.msra.mxu0 0
        %5877 = vmatprep.subr.bf16.mxu0 0
        %5878 = vmatpush1.bf16.msra.mxu0 0
        %5879 = vmatprep.subr.bf16.mxu0 0
        %5880 = vmatpush1.bf16.msra.mxu0 0
        %5881 = vmatprep.subr.bf16.mxu0 0
        %5882 = vmatpush1.bf16.msra.mxu0 0
        %5883 = vmatprep.subr.bf16.mxu0 0
        %5884 = vmatpush1.bf16.msra.mxu0 0
        %5885 = vmatprep.subr.bf16.mxu0 0
        %5886 = vmatpush1.bf16.msra.mxu0 0
        %5887 = vmatprep.subr.bf16.mxu0 0
        %5888 = vmatpush1.bf16.msra.mxu0 0
        %5889 = vmatprep.mubr.bf16.mxu0 0
        %5890 = vmatmul.mubr.bf16.gmra.mrb[0].mxu0 %v5852
        %v5891 = vpop.f32.mrb[0].mxu0
        %v5892 = vadd.f32 0.0, %v5891
        %v5893 = vpop.f32.mrb[0].mxu0
        %v5894 = vpop.f32.mrb[0].mxu0
        %v5895 = vadd.f32 0.0, %v5894
        %v5896 = vpop.f32.mrb[0].mxu0
        %5897 = vmatprep.mubr.bf16.mxu0 0
        %5898 = vmatmul.mubr.bf16.gmra.mrb[0].mxu0 %v5855
        %v5899 = vpop.f32.mrb[0].mxu0
        %v5900 = vadd.f32 0.0, %v5899
        %v5901 = vpop.f32.mrb[0].mxu0
        %v5902 = vpop.f32.mrb[0].mxu0
        %v5903 = vadd.f32 0.0, %v5902
        %v5904 = vpop.f32.mrb[0].mxu0
        %5905 = vdwg.mxu0
        %v5918 = vunpack.c.l.b16 %v5700
        %v5919 = vunpack.c.l.b16 %v5701
        %v5920 = vunpack.c.l.b16 %v5702
        %v5921 = vunpack.c.l.b16 %v5703
        %v5922 = vunpack.c.l.b16 %v5704
        %v5923 = vunpack.c.l.b16 %v5705
        %v5924 = vunpack.c.l.b16 %v5706
        %v5925 = vunpack.c.l.b16 %v5707
        %v5926 = vunpack.c.l.b16 %v5708
        %v5927 = vunpack.c.l.b16 %v5709
        %v5928 = vunpack.c.l.b16 %v5710
        %v5929 = vunpack.c.l.b16 %v5711
        %v5930 = vpack.c.b16 %v5919, %v5918
        %v5931 = vpack.c.b16 %v5921, %v5920
        %v5932 = vpack.c.b16 %v5923, %v5922
        %v5933 = vpack.c.b16 %v5925, %v5924
        %v5934 = vpack.c.b16 %v5927, %v5926
        %v5935 = vpack.c.b16 %v5929, %v5928
        %v5943 = vsel %vm1321, %v5672, 0
        %v5946 = vsel %vm1321, %v5673, 0
        %5948 = vmatprep.subr.bf16.mxu0 0
        %5949 = vmatpush1.bf16.msra.mxu0 %v5930
        %5950 = vmatprep.subr.bf16.mxu0 0
        %5951 = vmatpush1.bf16.msra.mxu0 %v5931
        %5952 = vmatprep.subr.bf16.mxu0 0
        %5953 = vmatpush1.bf16.msra.mxu0 %v5932
        %5954 = vmatprep.subr.bf16.mxu0 0
        %5955 = vmatpush1.bf16.msra.mxu0 %v5933
        %5956 = vmatprep.subr.bf16.mxu0 0
        %5957 = vmatpush1.bf16.msra.mxu0 %v5934
        %5958 = vmatprep.subr.bf16.mxu0 0
        %5959 = vmatpush1.bf16.msra.mxu0 %v5935
        %5960 = vmatprep.subr.bf16.mxu0 0
        %5961 = vmatpush1.bf16.msra.mxu0 0
        %5962 = vmatprep.subr.bf16.mxu0 0
        %5963 = vmatpush1.bf16.msra.mxu0 0
        %5964 = vmatprep.subr.bf16.mxu0 0
        %5965 = vmatpush1.bf16.msra.mxu0 0
        %5966 = vmatprep.subr.bf16.mxu0 0
        %5967 = vmatpush1.bf16.msra.mxu0 0
        %5968 = vmatprep.subr.bf16.mxu0 0
        %5969 = vmatpush1.bf16.msra.mxu0 0
        %5970 = vmatprep.subr.bf16.mxu0 0
        %5971 = vmatpush1.bf16.msra.mxu0 0
        %5972 = vmatprep.subr.bf16.mxu0 0
        %5973 = vmatpush1.bf16.msra.mxu0 0
        %5974 = vmatprep.subr.bf16.mxu0 0
        %5975 = vmatpush1.bf16.msra.mxu0 0
        %5976 = vmatprep.subr.bf16.mxu0 0
        %5977 = vmatpush1.bf16.msra.mxu0 0
        %5978 = vmatprep.subr.bf16.mxu0 0
        %5979 = vmatpush1.bf16.msra.mxu0 0
        %5980 = vmatprep.mubr.bf16.mxu0 0
        %5981 = vmatmul.mubr.bf16.gmra.mrb[0].mxu0 %v5943
        %v5982 = vpop.f32.mrb[0].mxu0
        %v5983 = vadd.f32 0.0, %v5982
        %v5984 = vpop.f32.mrb[0].mxu0
        %v5985 = vpop.f32.mrb[0].mxu0
        %v5986 = vadd.f32 0.0, %v5985
        %v5987 = vpop.f32.mrb[0].mxu0
        %5988 = vmatprep.mubr.bf16.mxu0 0
        %5989 = vmatmul.mubr.bf16.gmra.mrb[0].mxu0 %v5946
        %v5990 = vpop.f32.mrb[0].mxu0
        %v5991 = vadd.f32 0.0, %v5990
        %v5992 = vpop.f32.mrb[0].mxu0
        %v5993 = vpop.f32.mrb[0].mxu0
        %v5994 = vadd.f32 0.0, %v5993
        %v5995 = vpop.f32.mrb[0].mxu0
        %5996 = vdwg.mxu0
        %v6009 = vunpack.c.l.b16 %v5712
        %v6010 = vunpack.c.l.b16 %v5713
        %v6011 = vunpack.c.l.b16 %v5714
        %v6012 = vunpack.c.l.b16 %v5715
        %v6013 = vunpack.c.l.b16 %v5716
        %v6014 = vunpack.c.l.b16 %v5717
        %v6015 = vunpack.c.l.b16 %v5718
        %v6016 = vunpack.c.l.b16 %v5719
        %v6017 = vunpack.c.l.b16 %v5720
        %v6018 = vunpack.c.l.b16 %v5721
        %v6019 = vunpack.c.l.b16 %v5722
        %v6020 = vunpack.c.l.b16 %v5723
        %v6021 = vpack.c.b16 %v6010, %v6009
        %v6022 = vpack.c.b16 %v6012, %v6011
        %v6023 = vpack.c.b16 %v6014, %v6013
        %v6024 = vpack.c.b16 %v6016, %v6015
        %v6025 = vpack.c.b16 %v6018, %v6017
        %v6026 = vpack.c.b16 %v6020, %v6019
        %v6034 = vsel %vm1321, %v5674, 0
        %v6037 = vsel %vm1321, %v5675, 0
        %6039 = vmatprep.subr.bf16.mxu0 0
        %6040 = vmatpush1.bf16.msra.mxu0 %v6021
        %6041 = vmatprep.subr.bf16.mxu0 0
        %6042 = vmatpush1.bf16.msra.mxu0 %v6022
        %6043 = vmatprep.subr.bf16.mxu0 0
        %6044 = vmatpush1.bf16.msra.mxu0 %v6023
        %6045 = vmatprep.subr.bf16.mxu0 0
        %6046 = vmatpush1.bf16.msra.mxu0 %v6024
        %6047 = vmatprep.subr.bf16.mxu0 0
        %6048 = vmatpush1.bf16.msra.mxu0 %v6025
        %6049 = vmatprep.subr.bf16.mxu0 0
        %6050 = vmatpush1.bf16.msra.mxu0 %v6026
        %6051 = vmatprep.subr.bf16.mxu0 0
        %6052 = vmatpush1.bf16.msra.mxu0 0
        %6053 = vmatprep.subr.bf16.mxu0 0
        %6054 = vmatpush1.bf16.msra.mxu0 0
        %6055 = vmatprep.subr.bf16.mxu0 0
        %6056 = vmatpush1.bf16.msra.mxu0 0
        %6057 = vmatprep.subr.bf16.mxu0 0
        %6058 = vmatpush1.bf16.msra.mxu0 0
        %6059 = vmatprep.subr.bf16.mxu0 0
        %6060 = vmatpush1.bf16.msra.mxu0 0
        %6061 = vmatprep.subr.bf16.mxu0 0
        %6062 = vmatpush1.bf16.msra.mxu0 0
        %6063 = vmatprep.subr.bf16.mxu0 0
        %6064 = vmatpush1.bf16.msra.mxu0 0
        %6065 = vmatprep.subr.bf16.mxu0 0
        %6066 = vmatpush1.bf16.msra.mxu0 0
        %6067 = vmatprep.subr.bf16.mxu0 0
        %6068 = vmatpush1.bf16.msra.mxu0 0
        %6069 = vmatprep.subr.bf16.mxu0 0
        %6070 = vmatpush1.bf16.msra.mxu0 0
        %6071 = vmatprep.mubr.bf16.mxu0 0
        %6072 = vmatmul.mubr.bf16.gmra.mrb[0].mxu0 %v6034
        %v6073 = vpop.f32.mrb[0].mxu0
        %v6074 = vadd.f32 0.0, %v6073
        %v6075 = vpop.f32.mrb[0].mxu0
        %v6076 = vpop.f32.mrb[0].mxu0
        %v6077 = vadd.f32 0.0, %v6076
        %v6078 = vpop.f32.mrb[0].mxu0
        %6079 = vmatprep.mubr.bf16.mxu0 0
        %6080 = vmatmul.mubr.bf16.gmra.mrb[0].mxu0 %v6037
        %v6081 = vpop.f32.mrb[0].mxu0
        %v6082 = vadd.f32 0.0, %v6081
        %v6083 = vpop.f32.mrb[0].mxu0
        %v6084 = vpop.f32.mrb[0].mxu0
        %v6085 = vadd.f32 0.0, %v6084
        %v6086 = vpop.f32.mrb[0].mxu0
        %6087 = vdwg.mxu0
        %v6088 = vmax.f32 %v5801, 0.0
        %v6089 = vmax.f32 %v5804, 0.0
        %v6090 = vmax.f32 %v5809, 0.0
        %v6091 = vmax.f32 %v5812, 0.0
        %v6092 = vmax.f32 %v5892, 0.0
        %v6093 = vmax.f32 %v5895, 0.0
        %v6094 = vmax.f32 %v5900, 0.0
        %v6095 = vmax.f32 %v5903, 0.0
        %v6096 = vmax.f32 %v5983, 0.0
        %v6097 = vmax.f32 %v5986, 0.0
        %v6098 = vmax.f32 %v5991, 0.0
        %v6099 = vmax.f32 %v5994, 0.0
        %v6100 = vmax.f32 %v6074, 0.0
        %v6101 = vmax.f32 %v6077, 0.0
        %v6102 = vmax.f32 %v6082, 0.0
        %v6103 = vmax.f32 %v6085, 0.0
        %v6104 = vmin.f32 %v6088, 1.0
        %v6105 = vmin.f32 %v6089, 1.0
        %v6106 = vmin.f32 %v6090, 1.0
        %v6107 = vmin.f32 %v6091, 1.0
        %v6108 = vmin.f32 %v6092, 1.0
        %v6109 = vmin.f32 %v6093, 1.0
        %v6110 = vmin.f32 %v6094, 1.0
        %v6111 = vmin.f32 %v6095, 1.0
        %v6112 = vmin.f32 %v6096, 1.0
        %v6113 = vmin.f32 %v6097, 1.0
        %v6114 = vmin.f32 %v6098, 1.0
        %v6115 = vmin.f32 %v6099, 1.0
        %v6116 = vmin.f32 %v6100, 1.0
        %v6117 = vmin.f32 %v6101, 1.0
        %v6118 = vmin.f32 %v6102, 1.0
        %v6119 = vmin.f32 %v6103, 1.0
        %v6120 = vsub.f32 %v6104, 0.4914
        %v6121 = vsub.f32 %v6105, 0.4914
        %v6122 = vsub.f32 %v6106, 0.4914
        %v6123 = vsub.f32 %v6107, 0.4914
        %v6124 = vsub.f32 %v6108, 0.4914
        %v6125 = vsub.f32 %v6109, 0.4914
        %v6126 = vsub.f32 %v6110, 0.4914
        %v6127 = vsub.f32 %v6111, 0.4914
        %v6128 = vsub.f32 %v6112, 0.4914
        %v6129 = vsub.f32 %v6113, 0.4914
        %v6130 = vsub.f32 %v6114, 0.4914
        %v6131 = vsub.f32 %v6115, 0.4914
        %v6132 = vsub.f32 %v6116, 0.4914
        %v6133 = vsub.f32 %v6117, 0.4914
        %v6134 = vsub.f32 %v6118, 0.4914
        %v6135 = vsub.f32 %v6119, 0.4914
        %v6136 = vmul.f32 %v6120, 4.943154
        %v6137 = vmul.f32 %v6121, 4.943154
        %v6138 = vmul.f32 %v6122, 4.943154
        %v6139 = vmul.f32 %v6123, 4.943154
        %v6140 = vmul.f32 %v6124, 4.943154
        %v6141 = vmul.f32 %v6125, 4.943154
        %v6142 = vmul.f32 %v6126, 4.943154
        %v6143 = vmul.f32 %v6127, 4.943154
        %v6144 = vmul.f32 %v6128, 4.943154
        %v6145 = vmul.f32 %v6129, 4.943154
        %v6146 = vmul.f32 %v6130, 4.943154
        %v6147 = vmul.f32 %v6131, 4.943154
        %v6148 = vmul.f32 %v6132, 4.943154
        %v6149 = vmul.f32 %v6133, 4.943154
        %v6150 = vmul.f32 %v6134, 4.943154
        %v6151 = vmul.f32 %v6135, 4.943154
        %6152 = vst.msk [vmem:[%s468] sm:$0xff] %vm911, %v6136
        %6153 = vst.msk [vmem:[%s468 + $0x8] sm:$0xff] %vm911, %v6137
        %6154 = vst.msk [vmem:[%s468 + $0x10] sm:$0xff] %vm911, %v6138
        %6155 = vst.msk [vmem:[%s468 + $0x18] sm:$0xff] %vm911, %v6139
        %6156 = vst.msk [vmem:[%s468 + $0x60] sm:$0xff] %vm911, %v6140
        %6157 = vst.msk [vmem:[%s468 + $0x68] sm:$0xff] %vm911, %v6141
        %6158 = vst.msk [vmem:[%s468 + $0x70] sm:$0xff] %vm911, %v6142
        %6159 = vst.msk [vmem:[%s468 + $0x78] sm:$0xff] %vm911, %v6143
        %6160 = vst.msk [vmem:[%s468 + $0xc0] sm:$0xff] %vm911, %v6144
        %6161 = vst.msk [vmem:[%s468 + $0xc8] sm:$0xff] %vm911, %v6145
        %6162 = vst.msk [vmem:[%s468 + $0xd0] sm:$0xff] %vm911, %v6146
        %6163 = vst.msk [vmem:[%s468 + $0xd8] sm:$0xff] %vm911, %v6147
        %6164 = vst.msk [vmem:[%s468 + $0x120] sm:$0xff] %vm911, %v6148
        %6165 = vst.msk [vmem:[%s468 + $0x128] sm:$0xff] %vm911, %v6149
        %6166 = vst.msk [vmem:[%s468 + $0x130] sm:$0xff] %vm911, %v6150
        %6167 = vst.msk [vmem:[%s468 + $0x138] sm:$0xff] %vm911, %v6151
        %v6168 = vsub.f32 %v6104, 0.4822
        %v6169 = vsub.f32 %v6105, 0.4822
        %v6170 = vsub.f32 %v6106, 0.4822
        %v6171 = vsub.f32 %v6107, 0.4822
        %v6172 = vsub.f32 %v6108, 0.4822
        %v6173 = vsub.f32 %v6109, 0.4822
        %v6174 = vsub.f32 %v6110, 0.4822
        %v6175 = vsub.f32 %v6111, 0.4822
        %v6176 = vsub.f32 %v6112, 0.4822
        %v6177 = vsub.f32 %v6113, 0.4822
        %v6178 = vsub.f32 %v6114, 0.4822
        %v6179 = vsub.f32 %v6115, 0.4822
        %v6180 = vsub.f32 %v6116, 0.4822
        %v6181 = vsub.f32 %v6117, 0.4822
        %v6182 = vsub.f32 %v6118, 0.4822
        %v6183 = vsub.f32 %v6119, 0.4822
        %v6184 = vmul.f32 %v6168, 5.015045
        %v6185 = vmul.f32 %v6169, 5.015045
        %v6186 = vmul.f32 %v6170, 5.015045
        %v6187 = vmul.f32 %v6171, 5.015045
        %v6188 = vmul.f32 %v6172, 5.015045
        %v6189 = vmul.f32 %v6173, 5.015045
        %v6190 = vmul.f32 %v6174, 5.015045
        %v6191 = vmul.f32 %v6175, 5.015045
        %v6192 = vmul.f32 %v6176, 5.015045
        %v6193 = vmul.f32 %v6177, 5.015045
        %v6194 = vmul.f32 %v6178, 5.015045
        %v6195 = vmul.f32 %v6179, 5.015045
        %v6196 = vmul.f32 %v6180, 5.015045
        %v6197 = vmul.f32 %v6181, 5.015045
        %v6198 = vmul.f32 %v6182, 5.015045
        %v6199 = vmul.f32 %v6183, 5.015045
        %6216 = vrot.lane.b32.xlu0 %v6184, 96
        %v6217 = vpop.permute.xlu0 %6216
        %6218 = vrot.lane.b32.xlu0 %v6185, 96
        %v6219 = vpop.permute.xlu0 %6218
        %6220 = vrot.lane.b32.xlu0 %v6186, 96
        %v6221 = vpop.permute.xlu0 %6220
        %6222 = vrot.lane.b32.xlu0 %v6187, 96
        %v6223 = vpop.permute.xlu0 %6222
        %6224 = vrot.lane.b32.xlu0 %v6188, 96
        %v6225 = vpop.permute.xlu0 %6224
        %6226 = vrot.lane.b32.xlu0 %v6189, 96
        %v6227 = vpop.permute.xlu0 %6226
        %6228 = vrot.lane.b32.xlu0 %v6190, 96
        %v6229 = vpop.permute.xlu0 %6228
        %6230 = vrot.lane.b32.xlu0 %v6191, 96
        %v6231 = vpop.permute.xlu0 %6230
        %6232 = vrot.lane.b32.xlu0 %v6192, 96
        %v6233 = vpop.permute.xlu0 %6232
        %6234 = vrot.lane.b32.xlu0 %v6193, 96
        %v6235 = vpop.permute.xlu0 %6234
        %6236 = vrot.lane.b32.xlu0 %v6194, 96
        %v6237 = vpop.permute.xlu0 %6236
        %6238 = vrot.lane.b32.xlu0 %v6195, 96
        %v6239 = vpop.permute.xlu0 %6238
        %6240 = vrot.lane.b32.xlu0 %v6196, 96
        %v6241 = vpop.permute.xlu0 %6240
        %6242 = vrot.lane.b32.xlu0 %v6197, 96
        %v6243 = vpop.permute.xlu0 %6242
        %6244 = vrot.lane.b32.xlu0 %v6198, 96
        %v6245 = vpop.permute.xlu0 %6244
        %6246 = vrot.lane.b32.xlu0 %v6199, 96
        %v6247 = vpop.permute.xlu0 %6246
        %s6264 = scalar_lea.vmem %s468, 32 [#allocation13]
        %6265 = vst.msk [vmem:[%s6264] sm:$0xff] %vm911, %v6217
        %6266 = vst.msk [vmem:[%s6264 + $0x8] sm:$0xff] %vm911, %v6219
        %6267 = vst.msk [vmem:[%s6264 + $0x10] sm:$0xff] %vm911, %v6221
        %6268 = vst.msk [vmem:[%s6264 + $0x18] sm:$0xff] %vm911, %v6223
        %6269 = vst.msk [vmem:[%s6264 + $0x60] sm:$0xff] %vm911, %v6225
        %6270 = vst.msk [vmem:[%s6264 + $0x68] sm:$0xff] %vm911, %v6227
        %6271 = vst.msk [vmem:[%s6264 + $0x70] sm:$0xff] %vm911, %v6229
        %6272 = vst.msk [vmem:[%s6264 + $0x78] sm:$0xff] %vm911, %v6231
        %6273 = vst.msk [vmem:[%s6264 + $0xc0] sm:$0xff] %vm911, %v6233
        %6274 = vst.msk [vmem:[%s6264 + $0xc8] sm:$0xff] %vm911, %v6235
        %6275 = vst.msk [vmem:[%s6264 + $0xd0] sm:$0xff] %vm911, %v6237
        %6276 = vst.msk [vmem:[%s6264 + $0xd8] sm:$0xff] %vm911, %v6239
        %6277 = vst.msk [vmem:[%s6264 + $0x120] sm:$0xff] %vm911, %v6241
        %6278 = vst.msk [vmem:[%s6264 + $0x128] sm:$0xff] %vm911, %v6243
        %6279 = vst.msk [vmem:[%s6264 + $0x130] sm:$0xff] %vm911, %v6245
        %6280 = vst.msk [vmem:[%s6264 + $0x138] sm:$0xff] %vm911, %v6247
        %v6281 = vsub.f32 %v6104, 0.4465
        %v6282 = vsub.f32 %v6105, 0.4465
        %v6283 = vsub.f32 %v6106, 0.4465
        %v6284 = vsub.f32 %v6107, 0.4465
        %v6285 = vsub.f32 %v6108, 0.4465
        %v6286 = vsub.f32 %v6109, 0.4465
        %v6287 = vsub.f32 %v6110, 0.4465
        %v6288 = vsub.f32 %v6111, 0.4465
        %v6289 = vsub.f32 %v6112, 0.4465
        %v6290 = vsub.f32 %v6113, 0.4465
        %v6291 = vsub.f32 %v6114, 0.4465
        %v6292 = vsub.f32 %v6115, 0.4465
        %v6293 = vsub.f32 %v6116, 0.4465
        %v6294 = vsub.f32 %v6117, 0.4465
        %v6295 = vsub.f32 %v6118, 0.4465
        %v6296 = vsub.f32 %v6119, 0.4465
        %v6297 = vmul.f32 %v6281, 4.9751244
        %v6298 = vmul.f32 %v6282, 4.9751244
        %v6299 = vmul.f32 %v6283, 4.9751244
        %v6300 = vmul.f32 %v6284, 4.9751244
        %v6301 = vmul.f32 %v6285, 4.9751244
        %v6302 = vmul.f32 %v6286, 4.9751244
        %v6303 = vmul.f32 %v6287, 4.9751244
        %v6304 = vmul.f32 %v6288, 4.9751244
        %v6305 = vmul.f32 %v6289, 4.9751244
        %v6306 = vmul.f32 %v6290, 4.9751244
        %v6307 = vmul.f32 %v6291, 4.9751244
        %v6308 = vmul.f32 %v6292, 4.9751244
        %v6309 = vmul.f32 %v6293, 4.9751244
        %v6310 = vmul.f32 %v6294, 4.9751244
        %v6311 = vmul.f32 %v6295, 4.9751244
        %v6312 = vmul.f32 %v6296, 4.9751244
        %6329 = vrot.lane.b32.xlu0 %v6297, 64
        %v6330 = vpop.permute.xlu0 %6329
        %6331 = vrot.lane.b32.xlu0 %v6298, 64
        %v6332 = vpop.permute.xlu0 %6331
        %6333 = vrot.lane.b32.xlu0 %v6299, 64
        %v6334 = vpop.permute.xlu0 %6333
        %6335 = vrot.lane.b32.xlu0 %v6300, 64
        %v6336 = vpop.permute.xlu0 %6335
        %6337 = vrot.lane.b32.xlu0 %v6301, 64
        %v6338 = vpop.permute.xlu0 %6337
        %6339 = vrot.lane.b32.xlu0 %v6302, 64
        %v6340 = vpop.permute.xlu0 %6339
        %6341 = vrot.lane.b32.xlu0 %v6303, 64
        %v6342 = vpop.permute.xlu0 %6341
        %6343 = vrot.lane.b32.xlu0 %v6304, 64
        %v6344 = vpop.permute.xlu0 %6343
        %6345 = vrot.lane.b32.xlu0 %v6305, 64
        %v6346 = vpop.permute.xlu0 %6345
        %6347 = vrot.lane.b32.xlu0 %v6306, 64
        %v6348 = vpop.permute.xlu0 %6347
        %6349 = vrot.lane.b32.xlu0 %v6307, 64
        %v6350 = vpop.permute.xlu0 %6349
        %6351 = vrot.lane.b32.xlu0 %v6308, 64
        %v6352 = vpop.permute.xlu0 %6351
        %6353 = vrot.lane.b32.xlu0 %v6309, 64
        %v6354 = vpop.permute.xlu0 %6353
        %6355 = vrot.lane.b32.xlu0 %v6310, 64
        %v6356 = vpop.permute.xlu0 %6355
        %6357 = vrot.lane.b32.xlu0 %v6311, 64
        %v6358 = vpop.permute.xlu0 %6357
        %6359 = vrot.lane.b32.xlu0 %v6312, 64
        %v6360 = vpop.permute.xlu0 %6359
        %s6377 = scalar_lea.vmem %s468, 64 [#allocation13]
        %6378 = vst.msk [vmem:[%s6377] sm:$0xff] %vm911, %v6330
        %6379 = vst.msk [vmem:[%s6377 + $0x8] sm:$0xff] %vm911, %v6332
        %6380 = vst.msk [vmem:[%s6377 + $0x10] sm:$0xff] %vm911, %v6334
        %6381 = vst.msk [vmem:[%s6377 + $0x18] sm:$0xff] %vm911, %v6336
        %6382 = vst.msk [vmem:[%s6377 + $0x60] sm:$0xff] %vm911, %v6338
        %6383 = vst.msk [vmem:[%s6377 + $0x68] sm:$0xff] %vm911, %v6340
        %6384 = vst.msk [vmem:[%s6377 + $0x70] sm:$0xff] %vm911, %v6342
        %6385 = vst.msk [vmem:[%s6377 + $0x78] sm:$0xff] %vm911, %v6344
        %6386 = vst.msk [vmem:[%s6377 + $0xc0] sm:$0xff] %vm911, %v6346
        %6387 = vst.msk [vmem:[%s6377 + $0xc8] sm:$0xff] %vm911, %v6348
        %6388 = vst.msk [vmem:[%s6377 + $0xd0] sm:$0xff] %vm911, %v6350
        %6389 = vst.msk [vmem:[%s6377 + $0xd8] sm:$0xff] %vm911, %v6352
        %6390 = vst.msk [vmem:[%s6377 + $0x120] sm:$0xff] %vm911, %v6354
        %6391 = vst.msk [vmem:[%s6377 + $0x128] sm:$0xff] %vm911, %v6356
        %6392 = vst.msk [vmem:[%s6377 + $0x130] sm:$0xff] %vm911, %v6358
        %6393 = vst.msk [vmem:[%s6377 + $0x138] sm:$0xff] %vm911, %v6360
        %s6394 = sand.u32 %s196, 1
        %s6395 = scalar_lea.sflag [#allocation4], %s6394
        %s6396 = sand.u32 %s196, 1
        %s6397 = smul.addr %s6396, 384
        %s6398 = scalar_lea.vmem [#allocation13], %s6397
        // Predicated region
        $region69: #{tpu_custom_call.1} parent=43 // pred_check
          %p6399 = pneg %p206
        $region70: #{tpu_custom_call.1} parent=43 // pred_check_branch
          %6401 = sbr.rel (%p6399) target = $region72
        $region71: #{tpu_custom_call.1} parent=43 // pred_region
          %s6402 = smul.u32 4, %s32
          %s6404 = ssub.s32 6144, 6144
          %6405 = vsyncadd %s6395, %s6404
          %s6406 = smul.addr %s6402, 12
          %s6407 = smul.addr %s6406, 128
          %s6408 = scalar_lea.hbm %s6, %s6407
          %s6409 = sshll.u32 %s6398, 4
          %s6410 = int_to_ptr.vmem [resolvable:$true] %s6409
          %6415 = dma.vmem_to_hbm [thread:$0]  %s6410, 6144, %s6408, %s6395, 128, 128, 8
        $region72: #{tpu_custom_call.1} parent=43 // pred_fallthru
          _
      $region44: #{tpu_custom_call.1} parent=5 // pred_fallthru
        _
      %p6416 = scmp.le.s32.totalorder 2, %s27
      // Predicated region
      $region73: #{tpu_custom_call.1} parent=5 // pred_check
        %p6417 = pneg %p6416
      $region74: #{tpu_custom_call.1} parent=5 // pred_check_branch
        %6419 = sbr.rel (%p6417) target = $region76
      $region75: #{tpu_custom_call.1} parent=5 // pred_region
        %s6420 = ssub.s32 %s27, 2
        // Predicated region
        $region77: #{tpu_custom_call.1} parent=75 // pred_check
          %p6421 = pneg %p212
        $region78: #{tpu_custom_call.1} parent=75 // pred_check_branch
          %6423 = sbr.rel (%p6421) target = $region80
        $region79: #{tpu_custom_call.1} parent=75 // pred_region
          %s6424 = sand.u32 %s197, 1
          %s6425 = scalar_lea.sflag [#allocation4], %s6424
          %s6426 = sand.u32 %s197, 1
          %s6427 = smul.addr %s6426, 384
          %s6428 = scalar_lea.vmem [#allocation13], %s6427
          %6429 = dma.done %s6425, 6144
        $region80: #{tpu_custom_call.1} parent=75 // pred_fallthru
          _
      $region76: #{tpu_custom_call.1} parent=5 // pred_fallthru
        _
    $region6: #{tpu_custom_call.1} parent=1 // loop_footer
      %s31 = sadd.s32 1, %s27
    $region7: #{tpu_custom_call.1} parent=1 // loop_footer_branch
      %26 = sbr.rel target = $region3
    $region8: #{tpu_custom_call.1} parent=1 // loop_exit
      _
    %6430 = vsyncpa [#allocation3], 1
    %s6431 = scalar_lea.sflag [#allocation3], 1
    %6432 = vsyncpa %s6431, 1
    %6433 = vsyncpa [#allocation6], 1
    %s6434 = scalar_lea.sflag [#allocation6], 1
    %6435 = vsyncpa %s6434, 1
    %6436 = vsyncpa [#allocation9], 1
    %s6437 = scalar_lea.sflag [#allocation9], 1
    %6438 = vsyncpa %s6437, 1
    %6439 = vsyncpa [#allocation12], 1
    %s6440 = scalar_lea.sflag [#allocation12], 1
    %6441 = vsyncpa %s6440, 1
    %6442 = vsyncpa [#allocation4], 1
    %s6443 = scalar_lea.sflag [#allocation4], 1
    %6444 = vsyncpa %s6443, 1

</llo_original>
